<compile_context>
chip_gen: v7x
topology: tpu7x:2x2x1
jax: 0.10.0
libtpu: 0.0.40
codegen_flags: <defaults>
</compile_context>

<pallas_src>
import functools

import jax
import jax.numpy as jnp
from jax.experimental import pallas as pl
from jax.experimental.pallas import tpu as pltpu


# ---------------------------------------------------------------------------
# In-kernel helpers
# ---------------------------------------------------------------------------
def _conv_pool(a, w_ref, b_ref, relu):
    # a: (NB, T, Cin) f32 activations ; w_ref: (3, Cin, Cout) bf16 ; b_ref: (1, Cout) f32
    NB, T, Cin = a.shape
    Cout = w_ref.shape[-1]
    # Time-shifted views with zero padding (Conv1d k=3, pad=1).
    z = jnp.zeros((NB, 1, Cin), jnp.float32)
    left = jnp.concatenate([z, a[:, : T - 1, :]], axis=1)     # x[t-1]  (tap k=0)
    right = jnp.concatenate([a[:, 1:, :], z], axis=1)         # x[t+1]  (tap k=2)

    def tap(v, k):
        # bf16 operands, f32 accumulation on the MXU.
        return jnp.dot(v.reshape(NB * T, Cin).astype(jnp.bfloat16), w_ref[k],
                       preferred_element_type=jnp.float32)

    # 3 accumulated K=Cin pushes instead of a lane-unaligned im2col concat.
    y = tap(left, 0) + tap(a, 1) + tap(right, 2) + b_ref[...]
    if relu:
        y = jnp.maximum(y, 0.0)
    # MaxPool1d(2) over time: pair adjacent rows (T even -> pairs never cross batch).
    y = y.reshape(NB * T // 2, 2, Cout)
    y = jnp.maximum(y[:, 0, :], y[:, 1, :])
    return y.reshape(NB, T // 2, Cout)


def fused_cnn_kernel(x_ref, w1, b1, w2, b2, w3, b3, w4, b4,
                     fw1, fb1, fw2, fb2, o_ref):
    a = x_ref[...].astype(jnp.float32)                 # (TB, L, D), caller dtype -> f32
    a = _conv_pool(a, w1, b1, relu=False)              # conv1 -> maxpool
    a = _conv_pool(a, w2, b2, relu=False)              # conv2 -> maxpool
    a = _conv_pool(a, w3, b3, relu=True)               # conv3 -> relu -> maxpool
    a = _conv_pool(a, w4, b4, relu=True)               # conv4 -> relu -> maxpool
    NB, T16, _ = a.shape
    # fc1: the time-major flatten is folded into the weight, which is shipped as
    # (T16, C, 1024); h = sum_t a[:, t, :] @ fw1[t]  (no lane-concat relayout).
    h = jnp.zeros((NB, fw1.shape[-1]), jnp.float32)
    for t in range(T16):                               # static unroll (T16 = length // 16)
        h = h + jnp.dot(a[:, t, :].astype(jnp.bfloat16), fw1[t],
                        preferred_element_type=jnp.float32)
    h = jnp.maximum(h + fb1[...], 0.0)                 # fc1 + ReLU
    logits = jnp.dot(h.astype(jnp.bfloat16), fw2[...],
                     preferred_element_type=jnp.float32) + fb2[...]
    o_ref[...] = logits.astype(o_ref.dtype)            # lane-dense (128-padded) store


# ---------------------------------------------------------------------------
# Batch-tile choice
# ---------------------------------------------------------------------------
def _pick_batch_tile(nb, length):
    # Aim for M = TB*length >= 256 rows in the first conv matmul (MXU-sized), while
    # TB divides the batch and the (TB, 128) logits block stays sublane-aligned
    # (TB % 8 == 0 or TB == NB).
    target = max(8, (256 + length - 1) // length)
    target = min(target, nb)
    for tb in range(target, 0, -1):
        if nb % tb == 0 and (tb % 8 == 0 or tb == nb):
            return tb
    return nb


# ---------------------------------------------------------------------------
# Wrapper: single fused pallas_call over a batch-tiled grid
# ---------------------------------------------------------------------------
def cnn_classifier_forward(params, x, length, dim, num_class):
    # TODO(synk): PyTorch MaxPool1d(2) floor-divides odd lengths; only length % 16 == 0
    # is supported here.
    assert length % 16 == 0, "length must be divisible by 16 (4 maxpools of 2)"
    N = x.shape[0]
    x = x.reshape(-1, length, dim)                     # input.view(-1, L, D); keep caller dtype
    NB = x.shape[0]
    TB = _pick_batch_tile(NB, length)
    T16 = length // 16
    kpad = max(128, ((num_class + 127) // 128) * 128)  # lane-dense logits tile

    def conv_args(name):
        w, b = params[name]                            # w: (3, Cin, Cout), b: (Cout,)
        return w.astype(jnp.bfloat16), b.reshape(1, -1).astype(jnp.float32)

    w1, b1 = conv_args("conv1")
    w2, b2 = conv_args("conv2")
    w3, b3 = conv_args("conv3")
    w4, b4 = conv_args("conv4")
    fw1, fb1 = params["fc1"]
    fw2, fb2 = params["fc2"]
    # fc1 weight reshaped so the kernel never materializes the flattened feature:
    # row index of the (fc_in, 1024) weight is t*dim + c  (time-major flatten).
    fw1r = fw1.reshape(T16, dim, fw1.shape[-1]).astype(jnp.bfloat16)
    fb1r = fb1.reshape(1, -1).astype(jnp.float32)
    fw2p = jnp.pad(fw2, ((0, 0), (0, kpad - num_class))).astype(jnp.bfloat16)
    fb2p = jnp.pad(fb2, ((0, kpad - num_class),)).reshape(1, -1).astype(jnp.float32)

    weight_args = (w1, b1, w2, b2, w3, b3, w4, b4, fw1r, fb1r, fw2p, fb2p)

    def const_spec(a):
        # Constant index_map across the batch grid -> DMA'd once, resident in VMEM.
        nd = a.ndim
        return pl.BlockSpec(a.shape, lambda b, _nd=nd: (0,) * _nd)

    out = pl.pallas_call(
        fused_cnn_kernel,
        out_shape=jax.ShapeDtypeStruct((NB, kpad), x.dtype),
        grid=(NB // TB,),
        in_specs=[pl.BlockSpec((TB, length, dim), lambda b: (b, 0, 0))]
                 + [const_spec(a) for a in weight_args],
        out_specs=pl.BlockSpec((TB, kpad), lambda b: (b, 0)),
        compiler_params=pltpu.CompilerParams(
            # batch tiles are independent -> parallel (uses both v7x TensorCores)
            dimension_semantics=("parallel",),
            # explicit scoped-VMEM budget (v5e default is only 16 MiB).
            # TODO(synk): K-tile fc1 over fc_in if dim*length/16*1024 weights outgrow VMEM.
            vmem_limit_bytes=32 * 1024 * 1024),
    )(x, *weight_args)
    # slice the 128-lane-padded logits back to num_class outside the kernel
    return out[:, :num_class].reshape(N, num_class)


# ---------------------------------------------------------------------------
# Parameter init (deterministic; JAX layout — PyTorch ckpts need transposing)
# ---------------------------------------------------------------------------
def init_params(key, num_class, length, dim):
    d4 = dim // 4
    ks = jax.random.split(key, 12)

    def conv_w(k, cin, cout):
        # stored as (K=3, Cin, Cout); PyTorch layout is (Cout, Cin, K)
        return jax.random.normal(k, (3, cin, cout), jnp.float32) * (1.0 / (3 * cin) ** 0.5)

    def lin_w(k, din, dout):
        # stored as (in, out); PyTorch layout is (out, in)
        return jax.random.normal(k, (din, dout), jnp.float32) * (1.0 / din ** 0.5)

    fc_in = dim * length // 16
    return {
        "conv1": (conv_w(ks[0], dim, d4), jax.random.normal(ks[1], (d4,)) * 0.01),
        "conv2": (conv_w(ks[2], d4, dim), jax.random.normal(ks[3], (dim,)) * 0.01),
        "conv3": (conv_w(ks[4], dim, d4), jax.random.normal(ks[5], (d4,)) * 0.01),
        "conv4": (conv_w(ks[6], d4, dim), jax.random.normal(ks[7], (dim,)) * 0.01),
        "fc1": (lin_w(ks[8], fc_in, 1024), jax.random.normal(ks[9], (1024,)) * 0.01),
        "fc2": (lin_w(ks[10], 1024, num_class), jax.random.normal(ks[11], (num_class,)) * 0.01),
    }


# ---------------------------------------------------------------------------
# Pure-JAX reference (same math incl. bf16 matmul operands) for a sanity check
# ---------------------------------------------------------------------------
def _conv_ref(x, w, b, relu):
    T = x.shape[1]
    xp = jnp.pad(x, ((0, 0), (1, 1), (0, 0)))
    wb = w.astype(jnp.bfloat16)
    y = sum(jnp.einsum("ntc,cd->ntd", xp[:, k:k + T, :].astype(jnp.bfloat16), wb[k],
                       preferred_element_type=jnp.float32) for k in range(3)) + b
    if relu:
        y = jnp.maximum(y, 0.0)
    return jnp.max(y.reshape(y.shape[0], T // 2, 2, -1), axis=2)


def _forward_ref(params, x, length, dim):
    N = x.shape[0]
    f = x.reshape(-1, length, dim).astype(jnp.float32)
    f = _conv_ref(f, *params["conv1"], relu=False)
    f = _conv_ref(f, *params["conv2"], relu=False)
    f = _conv_ref(f, *params["conv3"], relu=True)
    f = _conv_ref(f, *params["conv4"], relu=True)
    out = f.reshape(N, -1)
    w1, b1 = params["fc1"]
    w2, b2 = params["fc2"]
    h = jnp.maximum(jnp.dot(out.astype(jnp.bfloat16), w1.astype(jnp.bfloat16),
                            preferred_element_type=jnp.float32) + b1, 0.0)
    return jnp.dot(h.astype(jnp.bfloat16), w2.astype(jnp.bfloat16),
                   preferred_element_type=jnp.float32) + b2


if __name__ == "__main__":
    # Small shapes consistent with the module: length=32 (divisible by 16), dim=64,
    # 10 classes; batch 16 so the batch-tiled grid actually has >1 step (TB=8).
    NUM_CLASS, LENGTH, DIM, N = 10, 32, 64, 16

    key = jax.random.PRNGKey(0)
    pkey, xkey = jax.random.split(key)
    params = init_params(pkey, NUM_CLASS, LENGTH, DIM)
    x = jax.random.normal(xkey, (N, LENGTH, DIM), jnp.float32)

    fwd = jax.jit(functools.partial(cnn_classifier_forward,
                                    length=LENGTH, dim=DIM, num_class=NUM_CLASS))
    out = jax.block_until_ready(fwd(params, x))
    assert out.shape == (N, NUM_CLASS), out.shape

    ref = jax.block_until_ready(_forward_ref(params, x, LENGTH, DIM))
    err = float(jnp.max(jnp.abs(out - ref)))
    assert jnp.allclose(out, ref, atol=1e-2, rtol=1e-2), f"mismatch vs. JAX reference (max|diff|={err})"

    print("KERNEL_OK")
</pallas_src>

<mosaic_0001>
module attributes {stable_mosaic.version = 11 : i64} {
  func.func @fused_cnn_kernel(%arg0: i32, %arg1: memref<8x32x64xf32, #tpu.memory_space<vmem>>, %arg2: memref<3x64x16xbf16, #tpu.memory_space<vmem>>, %arg3: memref<1x16xf32, #tpu.memory_space<vmem>>, %arg4: memref<3x16x64xbf16, #tpu.memory_space<vmem>>, %arg5: memref<1x64xf32, #tpu.memory_space<vmem>>, %arg6: memref<3x64x16xbf16, #tpu.memory_space<vmem>>, %arg7: memref<1x16xf32, #tpu.memory_space<vmem>>, %arg8: memref<3x16x64xbf16, #tpu.memory_space<vmem>>, %arg9: memref<1x64xf32, #tpu.memory_space<vmem>>, %arg10: memref<2x64x1024xbf16, #tpu.memory_space<vmem>>, %arg11: memref<1x1024xf32, #tpu.memory_space<vmem>>, %arg12: memref<1024x128xbf16, #tpu.memory_space<vmem>>, %arg13: memref<1x128xf32, #tpu.memory_space<vmem>>, %arg14: memref<8x128xf32, #tpu.memory_space<vmem>>) attributes {dimension_semantics = [#tpu.dimension_semantics<parallel>], iteration_bounds = array<i64: 2>, scalar_prefetch = 0 : i64, scratch_operands = 0 : i64, tpu.core_type = #tpu.core_type<tc>, window_params = [{transform_indices = @transform_0, window_bounds = array<i64: 8, 32, 64>}, {pipeline_mode = #tpu.pipeline_mode<synchronous>, transform_indices = @transform_1, window_bounds = array<i64: 3, 64, 16>}, {pipeline_mode = #tpu.pipeline_mode<synchronous>, transform_indices = @transform_2, window_bounds = array<i64: 1, 16>}, {pipeline_mode = #tpu.pipeline_mode<synchronous>, transform_indices = @transform_3, window_bounds = array<i64: 3, 16, 64>}, {pipeline_mode = #tpu.pipeline_mode<synchronous>, transform_indices = @transform_4, window_bounds = array<i64: 1, 64>}, {pipeline_mode = #tpu.pipeline_mode<synchronous>, transform_indices = @transform_5, window_bounds = array<i64: 3, 64, 16>}, {pipeline_mode = #tpu.pipeline_mode<synchronous>, transform_indices = @transform_6, window_bounds = array<i64: 1, 16>}, {pipeline_mode = #tpu.pipeline_mode<synchronous>, transform_indices = @transform_7, window_bounds = array<i64: 3, 16, 64>}, {pipeline_mode = #tpu.pipeline_mode<synchronous>, transform_indices = @transform_8, window_bounds = array<i64: 1, 64>}, {pipeline_mode = #tpu.pipeline_mode<synchronous>, transform_indices = @transform_9, window_bounds = array<i64: 2, 64, 1024>}, {pipeline_mode = #tpu.pipeline_mode<synchronous>, transform_indices = @transform_10, window_bounds = array<i64: 1, 1024>}, {pipeline_mode = #tpu.pipeline_mode<synchronous>, transform_indices = @transform_11, window_bounds = array<i64: 1024, 128>}, {pipeline_mode = #tpu.pipeline_mode<synchronous>, transform_indices = @transform_12, window_bounds = array<i64: 1, 128>}, {transform_indices = @transform_13, window_bounds = array<i64: 8, 128>}]} {
    %c0 = arith.constant 0 : index
    %c0_0 = arith.constant 0 : index
    %c0_1 = arith.constant 0 : index
    %0 = vector.load %arg1[%c0, %c0_0, %c0_1] : memref<8x32x64xf32, #tpu.memory_space<vmem>>, vector<8x32x64xf32>
    %cst = arith.constant 0.000000e+00 : f32
    %1 = vector.broadcast %cst : f32 to vector<8x1x64xf32>
    %2 = vector.extract_strided_slice %0 {offsets = [0, 0, 0], sizes = [8, 31, 64], strides = [1, 1, 1]} : vector<8x32x64xf32> to vector<8x31x64xf32>
    %3 = tpu.concatenate %1, %2 in 1 : vector<8x1x64xf32>, vector<8x31x64xf32> -> vector<8x32x64xf32>
    %4 = vector.extract_strided_slice %0 {offsets = [0, 1, 0], sizes = [8, 31, 64], strides = [1, 1, 1]} : vector<8x32x64xf32> to vector<8x31x64xf32>
    %5 = tpu.concatenate %4, %1 in 1 : vector<8x31x64xf32>, vector<8x1x64xf32> -> vector<8x32x64xf32>
    %6 = vector.shape_cast %3 : vector<8x32x64xf32> to vector<256x64xf32>
    %7 = arith.truncf %6 : vector<256x64xf32> to vector<256x64xbf16>
    %c0_2 = arith.constant 0 : index
    %c0_3 = arith.constant 0 : index
    %c0_4 = arith.constant 0 : index
    %8 = vector.load %arg2[%c0_2, %c0_3, %c0_4] : memref<3x64x16xbf16, #tpu.memory_space<vmem>>, vector<1x64x16xbf16>
    %9 = vector.shape_cast %8 : vector<1x64x16xbf16> to vector<64x16xbf16>
    %cst_5 = arith.constant dense<0.000000e+00> : vector<256x16xf32>
    %10 = tpu.matmul %7, %9, %cst_5 {dimension_numbers = #tpu.dot_dimension_numbers<[1], [0], [0], [1], [0, 0, 1, 1], [], []>} : vector<256x64xbf16>, vector<64x16xbf16>, vector<256x16xf32> -> vector<256x16xf32>
    %11 = vector.shape_cast %0 : vector<8x32x64xf32> to vector<256x64xf32>
    %12 = arith.truncf %11 : vector<256x64xf32> to vector<256x64xbf16>
    %c1 = arith.constant 1 : index
    %c0_6 = arith.constant 0 : index
    %c0_7 = arith.constant 0 : index
    %13 = vector.load %arg2[%c1, %c0_6, %c0_7] : memref<3x64x16xbf16, #tpu.memory_space<vmem>>, vector<1x64x16xbf16>
    %14 = vector.shape_cast %13 : vector<1x64x16xbf16> to vector<64x16xbf16>
    %cst_8 = arith.constant dense<0.000000e+00> : vector<256x16xf32>
    %15 = tpu.matmul %12, %14, %cst_8 {dimension_numbers = #tpu.dot_dimension_numbers<[1], [0], [0], [1], [0, 0, 1, 1], [], []>} : vector<256x64xbf16>, vector<64x16xbf16>, vector<256x16xf32> -> vector<256x16xf32>
    %16 = arith.addf %10, %15 : vector<256x16xf32>
    %17 = vector.shape_cast %5 : vector<8x32x64xf32> to vector<256x64xf32>
    %18 = arith.truncf %17 : vector<256x64xf32> to vector<256x64xbf16>
    %c2 = arith.constant 2 : index
    %c0_9 = arith.constant 0 : index
    %c0_10 = arith.constant 0 : index
    %19 = vector.load %arg2[%c2, %c0_9, %c0_10] : memref<3x64x16xbf16, #tpu.memory_space<vmem>>, vector<1x64x16xbf16>
    %20 = vector.shape_cast %19 : vector<1x64x16xbf16> to vector<64x16xbf16>
    %cst_11 = arith.constant dense<0.000000e+00> : vector<256x16xf32>
    %21 = tpu.matmul %18, %20, %cst_11 {dimension_numbers = #tpu.dot_dimension_numbers<[1], [0], [0], [1], [0, 0, 1, 1], [], []>} : vector<256x64xbf16>, vector<64x16xbf16>, vector<256x16xf32> -> vector<256x16xf32>
    %22 = arith.addf %16, %21 : vector<256x16xf32>
    %c0_12 = arith.constant 0 : index
    %c0_13 = arith.constant 0 : index
    %23 = vector.load %arg3[%c0_12, %c0_13] : memref<1x16xf32, #tpu.memory_space<vmem>>, vector<1x16xf32>
    %24 = vector.broadcast %23 : vector<1x16xf32> to vector<256x16xf32>
    %25 = arith.addf %22, %24 : vector<256x16xf32>
    %26 = vector.shape_cast %25 : vector<256x16xf32> to vector<128x2x16xf32>
    %27 = vector.extract_strided_slice %26 {offsets = [0, 0, 0], sizes = [128, 1, 16], strides = [1, 1, 1]} : vector<128x2x16xf32> to vector<128x1x16xf32>
    %28 = vector.shape_cast %27 : vector<128x1x16xf32> to vector<128x16xf32>
    %29 = vector.extract_strided_slice %26 {offsets = [0, 1, 0], sizes = [128, 1, 16], strides = [1, 1, 1]} : vector<128x2x16xf32> to vector<128x1x16xf32>
    %30 = vector.shape_cast %29 : vector<128x1x16xf32> to vector<128x16xf32>
    %31 = arith.maximumf %28, %30 : vector<128x16xf32>
    %32 = vector.shape_cast %31 : vector<128x16xf32> to vector<8x16x16xf32>
    %cst_14 = arith.constant 0.000000e+00 : f32
    %33 = vector.broadcast %cst_14 : f32 to vector<8x1x16xf32>
    %34 = vector.extract_strided_slice %32 {offsets = [0, 0, 0], sizes = [8, 15, 16], strides = [1, 1, 1]} : vector<8x16x16xf32> to vector<8x15x16xf32>
    %35 = tpu.concatenate %33, %34 in 1 : vector<8x1x16xf32>, vector<8x15x16xf32> -> vector<8x16x16xf32>
    %36 = vector.extract_strided_slice %32 {offsets = [0, 1, 0], sizes = [8, 15, 16], strides = [1, 1, 1]} : vector<8x16x16xf32> to vector<8x15x16xf32>
    %37 = tpu.concatenate %36, %33 in 1 : vector<8x15x16xf32>, vector<8x1x16xf32> -> vector<8x16x16xf32>
    %38 = vector.shape_cast %35 : vector<8x16x16xf32> to vector<128x16xf32>
    %39 = arith.truncf %38 : vector<128x16xf32> to vector<128x16xbf16>
    %c0_15 = arith.constant 0 : index
    %c0_16 = arith.constant 0 : index
    %c0_17 = arith.constant 0 : index
    %40 = vector.load %arg4[%c0_15, %c0_16, %c0_17] : memref<3x16x64xbf16, #tpu.memory_space<vmem>>, vector<1x16x64xbf16>
    %41 = vector.shape_cast %40 : vector<1x16x64xbf16> to vector<16x64xbf16>
    %cst_18 = arith.constant dense<0.000000e+00> : vector<128x64xf32>
    %42 = tpu.matmul %39, %41, %cst_18 {dimension_numbers = #tpu.dot_dimension_numbers<[1], [0], [0], [1], [0, 0, 1, 1], [], []>} : vector<128x16xbf16>, vector<16x64xbf16>, vector<128x64xf32> -> vector<128x64xf32>
    %43 = vector.shape_cast %32 : vector<8x16x16xf32> to vector<128x16xf32>
    %44 = arith.truncf %43 : vector<128x16xf32> to vector<128x16xbf16>
    %c1_19 = arith.constant 1 : index
    %c0_20 = arith.constant 0 : index
    %c0_21 = arith.constant 0 : index
    %45 = vector.load %arg4[%c1_19, %c0_20, %c0_21] : memref<3x16x64xbf16, #tpu.memory_space<vmem>>, vector<1x16x64xbf16>
    %46 = vector.shape_cast %45 : vector<1x16x64xbf16> to vector<16x64xbf16>
    %cst_22 = arith.constant dense<0.000000e+00> : vector<128x64xf32>
    %47 = tpu.matmul %44, %46, %cst_22 {dimension_numbers = #tpu.dot_dimension_numbers<[1], [0], [0], [1], [0, 0, 1, 1], [], []>} : vector<128x16xbf16>, vector<16x64xbf16>, vector<128x64xf32> -> vector<128x64xf32>
    %48 = arith.addf %42, %47 : vector<128x64xf32>
    %49 = vector.shape_cast %37 : vector<8x16x16xf32> to vector<128x16xf32>
    %50 = arith.truncf %49 : vector<128x16xf32> to vector<128x16xbf16>
    %c2_23 = arith.constant 2 : index
    %c0_24 = arith.constant 0 : index
    %c0_25 = arith.constant 0 : index
    %51 = vector.load %arg4[%c2_23, %c0_24, %c0_25] : memref<3x16x64xbf16, #tpu.memory_space<vmem>>, vector<1x16x64xbf16>
    %52 = vector.shape_cast %51 : vector<1x16x64xbf16> to vector<16x64xbf16>
    %cst_26 = arith.constant dense<0.000000e+00> : vector<128x64xf32>
    %53 = tpu.matmul %50, %52, %cst_26 {dimension_numbers = #tpu.dot_dimension_numbers<[1], [0], [0], [1], [0, 0, 1, 1], [], []>} : vector<128x16xbf16>, vector<16x64xbf16>, vector<128x64xf32> -> vector<128x64xf32>
    %54 = arith.addf %48, %53 : vector<128x64xf32>
    %c0_27 = arith.constant 0 : index
    %c0_28 = arith.constant 0 : index
    %55 = vector.load %arg5[%c0_27, %c0_28] : memref<1x64xf32, #tpu.memory_space<vmem>>, vector<1x64xf32>
    %56 = vector.broadcast %55 : vector<1x64xf32> to vector<128x64xf32>
    %57 = arith.addf %54, %56 : vector<128x64xf32>
    %58 = vector.shape_cast %57 : vector<128x64xf32> to vector<64x2x64xf32>
    %59 = vector.extract_strided_slice %58 {offsets = [0, 0, 0], sizes = [64, 1, 64], strides = [1, 1, 1]} : vector<64x2x64xf32> to vector<64x1x64xf32>
    %60 = vector.shape_cast %59 : vector<64x1x64xf32> to vector<64x64xf32>
    %61 = vector.extract_strided_slice %58 {offsets = [0, 1, 0], sizes = [64, 1, 64], strides = [1, 1, 1]} : vector<64x2x64xf32> to vector<64x1x64xf32>
    %62 = vector.shape_cast %61 : vector<64x1x64xf32> to vector<64x64xf32>
    %63 = arith.maximumf %60, %62 : vector<64x64xf32>
    %64 = vector.shape_cast %63 : vector<64x64xf32> to vector<8x8x64xf32>
    %cst_29 = arith.constant 0.000000e+00 : f32
    %65 = vector.broadcast %cst_29 : f32 to vector<8x1x64xf32>
    %66 = vector.extract_strided_slice %64 {offsets = [0, 0, 0], sizes = [8, 7, 64], strides = [1, 1, 1]} : vector<8x8x64xf32> to vector<8x7x64xf32>
    %67 = tpu.concatenate %65, %66 in 1 : vector<8x1x64xf32>, vector<8x7x64xf32> -> vector<8x8x64xf32>
    %68 = vector.extract_strided_slice %64 {offsets = [0, 1, 0], sizes = [8, 7, 64], strides = [1, 1, 1]} : vector<8x8x64xf32> to vector<8x7x64xf32>
    %69 = tpu.concatenate %68, %65 in 1 : vector<8x7x64xf32>, vector<8x1x64xf32> -> vector<8x8x64xf32>
    %70 = vector.shape_cast %67 : vector<8x8x64xf32> to vector<64x64xf32>
    %71 = arith.truncf %70 : vector<64x64xf32> to vector<64x64xbf16>
    %c0_30 = arith.constant 0 : index
    %c0_31 = arith.constant 0 : index
    %c0_32 = arith.constant 0 : index
    %72 = vector.load %arg6[%c0_30, %c0_31, %c0_32] : memref<3x64x16xbf16, #tpu.memory_space<vmem>>, vector<1x64x16xbf16>
    %73 = vector.shape_cast %72 : vector<1x64x16xbf16> to vector<64x16xbf16>
    %cst_33 = arith.constant dense<0.000000e+00> : vector<64x16xf32>
    %74 = tpu.matmul %71, %73, %cst_33 {dimension_numbers = #tpu.dot_dimension_numbers<[1], [0], [0], [1], [0, 0, 1, 1], [], []>} : vector<64x64xbf16>, vector<64x16xbf16>, vector<64x16xf32> -> vector<64x16xf32>
    %75 = vector.shape_cast %64 : vector<8x8x64xf32> to vector<64x64xf32>
    %76 = arith.truncf %75 : vector<64x64xf32> to vector<64x64xbf16>
    %c1_34 = arith.constant 1 : index
    %c0_35 = arith.constant 0 : index
    %c0_36 = arith.constant 0 : index
    %77 = vector.load %arg6[%c1_34, %c0_35, %c0_36] : memref<3x64x16xbf16, #tpu.memory_space<vmem>>, vector<1x64x16xbf16>
    %78 = vector.shape_cast %77 : vector<1x64x16xbf16> to vector<64x16xbf16>
    %cst_37 = arith.constant dense<0.000000e+00> : vector<64x16xf32>
    %79 = tpu.matmul %76, %78, %cst_37 {dimension_numbers = #tpu.dot_dimension_numbers<[1], [0], [0], [1], [0, 0, 1, 1], [], []>} : vector<64x64xbf16>, vector<64x16xbf16>, vector<64x16xf32> -> vector<64x16xf32>
    %80 = arith.addf %74, %79 : vector<64x16xf32>
    %81 = vector.shape_cast %69 : vector<8x8x64xf32> to vector<64x64xf32>
    %82 = arith.truncf %81 : vector<64x64xf32> to vector<64x64xbf16>
    %c2_38 = arith.constant 2 : index
    %c0_39 = arith.constant 0 : index
    %c0_40 = arith.constant 0 : index
    %83 = vector.load %arg6[%c2_38, %c0_39, %c0_40] : memref<3x64x16xbf16, #tpu.memory_space<vmem>>, vector<1x64x16xbf16>
    %84 = vector.shape_cast %83 : vector<1x64x16xbf16> to vector<64x16xbf16>
    %cst_41 = arith.constant dense<0.000000e+00> : vector<64x16xf32>
    %85 = tpu.matmul %82, %84, %cst_41 {dimension_numbers = #tpu.dot_dimension_numbers<[1], [0], [0], [1], [0, 0, 1, 1], [], []>} : vector<64x64xbf16>, vector<64x16xbf16>, vector<64x16xf32> -> vector<64x16xf32>
    %86 = arith.addf %80, %85 : vector<64x16xf32>
    %c0_42 = arith.constant 0 : index
    %c0_43 = arith.constant 0 : index
    %87 = vector.load %arg7[%c0_42, %c0_43] : memref<1x16xf32, #tpu.memory_space<vmem>>, vector<1x16xf32>
    %88 = vector.broadcast %87 : vector<1x16xf32> to vector<64x16xf32>
    %89 = arith.addf %86, %88 : vector<64x16xf32>
    %cst_44 = arith.constant 0.000000e+00 : f32
    %90 = vector.broadcast %cst_44 : f32 to vector<64x16xf32>
    %91 = arith.maximumf %89, %90 : vector<64x16xf32>
    %92 = vector.shape_cast %91 : vector<64x16xf32> to vector<32x2x16xf32>
    %93 = vector.extract_strided_slice %92 {offsets = [0, 0, 0], sizes = [32, 1, 16], strides = [1, 1, 1]} : vector<32x2x16xf32> to vector<32x1x16xf32>
    %94 = vector.shape_cast %93 : vector<32x1x16xf32> to vector<32x16xf32>
    %95 = vector.extract_strided_slice %92 {offsets = [0, 1, 0], sizes = [32, 1, 16], strides = [1, 1, 1]} : vector<32x2x16xf32> to vector<32x1x16xf32>
    %96 = vector.shape_cast %95 : vector<32x1x16xf32> to vector<32x16xf32>
    %97 = arith.maximumf %94, %96 : vector<32x16xf32>
    %98 = vector.shape_cast %97 : vector<32x16xf32> to vector<8x4x16xf32>
    %cst_45 = arith.constant 0.000000e+00 : f32
    %99 = vector.broadcast %cst_45 : f32 to vector<8x1x16xf32>
    %100 = vector.extract_strided_slice %98 {offsets = [0, 0, 0], sizes = [8, 3, 16], strides = [1, 1, 1]} : vector<8x4x16xf32> to vector<8x3x16xf32>
    %101 = tpu.concatenate %99, %100 in 1 : vector<8x1x16xf32>, vector<8x3x16xf32> -> vector<8x4x16xf32>
    %102 = vector.extract_strided_slice %98 {offsets = [0, 1, 0], sizes = [8, 3, 16], strides = [1, 1, 1]} : vector<8x4x16xf32> to vector<8x3x16xf32>
    %103 = tpu.concatenate %102, %99 in 1 : vector<8x3x16xf32>, vector<8x1x16xf32> -> vector<8x4x16xf32>
    %104 = vector.shape_cast %101 : vector<8x4x16xf32> to vector<32x16xf32>
    %105 = arith.truncf %104 : vector<32x16xf32> to vector<32x16xbf16>
    %c0_46 = arith.constant 0 : index
    %c0_47 = arith.constant 0 : index
    %c0_48 = arith.constant 0 : index
    %106 = vector.load %arg8[%c0_46, %c0_47, %c0_48] : memref<3x16x64xbf16, #tpu.memory_space<vmem>>, vector<1x16x64xbf16>
    %107 = vector.shape_cast %106 : vector<1x16x64xbf16> to vector<16x64xbf16>
    %cst_49 = arith.constant dense<0.000000e+00> : vector<32x64xf32>
    %108 = tpu.matmul %105, %107, %cst_49 {dimension_numbers = #tpu.dot_dimension_numbers<[1], [0], [0], [1], [0, 0, 1, 1], [], []>} : vector<32x16xbf16>, vector<16x64xbf16>, vector<32x64xf32> -> vector<32x64xf32>
    %109 = vector.shape_cast %98 : vector<8x4x16xf32> to vector<32x16xf32>
    %110 = arith.truncf %109 : vector<32x16xf32> to vector<32x16xbf16>
    %c1_50 = arith.constant 1 : index
    %c0_51 = arith.constant 0 : index
    %c0_52 = arith.constant 0 : index
    %111 = vector.load %arg8[%c1_50, %c0_51, %c0_52] : memref<3x16x64xbf16, #tpu.memory_space<vmem>>, vector<1x16x64xbf16>
    %112 = vector.shape_cast %111 : vector<1x16x64xbf16> to vector<16x64xbf16>
    %cst_53 = arith.constant dense<0.000000e+00> : vector<32x64xf32>
    %113 = tpu.matmul %110, %112, %cst_53 {dimension_numbers = #tpu.dot_dimension_numbers<[1], [0], [0], [1], [0, 0, 1, 1], [], []>} : vector<32x16xbf16>, vector<16x64xbf16>, vector<32x64xf32> -> vector<32x64xf32>
    %114 = arith.addf %108, %113 : vector<32x64xf32>
    %115 = vector.shape_cast %103 : vector<8x4x16xf32> to vector<32x16xf32>
    %116 = arith.truncf %115 : vector<32x16xf32> to vector<32x16xbf16>
    %c2_54 = arith.constant 2 : index
    %c0_55 = arith.constant 0 : index
    %c0_56 = arith.constant 0 : index
    %117 = vector.load %arg8[%c2_54, %c0_55, %c0_56] : memref<3x16x64xbf16, #tpu.memory_space<vmem>>, vector<1x16x64xbf16>
    %118 = vector.shape_cast %117 : vector<1x16x64xbf16> to vector<16x64xbf16>
    %cst_57 = arith.constant dense<0.000000e+00> : vector<32x64xf32>
    %119 = tpu.matmul %116, %118, %cst_57 {dimension_numbers = #tpu.dot_dimension_numbers<[1], [0], [0], [1], [0, 0, 1, 1], [], []>} : vector<32x16xbf16>, vector<16x64xbf16>, vector<32x64xf32> -> vector<32x64xf32>
    %120 = arith.addf %114, %119 : vector<32x64xf32>
    %c0_58 = arith.constant 0 : index
    %c0_59 = arith.constant 0 : index
    %121 = vector.load %arg9[%c0_58, %c0_59] : memref<1x64xf32, #tpu.memory_space<vmem>>, vector<1x64xf32>
    %122 = vector.broadcast %121 : vector<1x64xf32> to vector<32x64xf32>
    %123 = arith.addf %120, %122 : vector<32x64xf32>
    %cst_60 = arith.constant 0.000000e+00 : f32
    %124 = vector.broadcast %cst_60 : f32 to vector<32x64xf32>
    %125 = arith.maximumf %123, %124 : vector<32x64xf32>
    %126 = vector.shape_cast %125 : vector<32x64xf32> to vector<16x2x64xf32>
    %127 = vector.extract_strided_slice %126 {offsets = [0, 0, 0], sizes = [16, 1, 64], strides = [1, 1, 1]} : vector<16x2x64xf32> to vector<16x1x64xf32>
    %128 = vector.shape_cast %127 : vector<16x1x64xf32> to vector<16x64xf32>
    %129 = vector.extract_strided_slice %126 {offsets = [0, 1, 0], sizes = [16, 1, 64], strides = [1, 1, 1]} : vector<16x2x64xf32> to vector<16x1x64xf32>
    %130 = vector.shape_cast %129 : vector<16x1x64xf32> to vector<16x64xf32>
    %131 = arith.maximumf %128, %130 : vector<16x64xf32>
    %132 = vector.shape_cast %131 : vector<16x64xf32> to vector<8x2x64xf32>
    %cst_61 = arith.constant 0.000000e+00 : f32
    %133 = vector.broadcast %cst_61 : f32 to vector<8x1024xf32>
    %134 = vector.extract_strided_slice %132 {offsets = [0, 0, 0], sizes = [8, 1, 64], strides = [1, 1, 1]} : vector<8x2x64xf32> to vector<8x1x64xf32>
    %135 = vector.shape_cast %134 : vector<8x1x64xf32> to vector<8x64xf32>
    %136 = arith.truncf %135 : vector<8x64xf32> to vector<8x64xbf16>
    %c0_62 = arith.constant 0 : index
    %c0_63 = arith.constant 0 : index
    %c0_64 = arith.constant 0 : index
    %137 = vector.load %arg10[%c0_62, %c0_63, %c0_64] : memref<2x64x1024xbf16, #tpu.memory_space<vmem>>, vector<1x64x1024xbf16>
    %138 = vector.shape_cast %137 : vector<1x64x1024xbf16> to vector<64x1024xbf16>
    %cst_65 = arith.constant dense<0.000000e+00> : vector<8x1024xf32>
    %139 = tpu.matmul %136, %138, %cst_65 {dimension_numbers = #tpu.dot_dimension_numbers<[1], [0], [0], [1], [0, 0, 1, 1], [], []>} : vector<8x64xbf16>, vector<64x1024xbf16>, vector<8x1024xf32> -> vector<8x1024xf32>
    %140 = arith.addf %133, %139 : vector<8x1024xf32>
    %141 = vector.extract_strided_slice %132 {offsets = [0, 1, 0], sizes = [8, 1, 64], strides = [1, 1, 1]} : vector<8x2x64xf32> to vector<8x1x64xf32>
    %142 = vector.shape_cast %141 : vector<8x1x64xf32> to vector<8x64xf32>
    %143 = arith.truncf %142 : vector<8x64xf32> to vector<8x64xbf16>
    %c1_66 = arith.constant 1 : index
    %c0_67 = arith.constant 0 : index
    %c0_68 = arith.constant 0 : index
    %144 = vector.load %arg10[%c1_66, %c0_67, %c0_68] : memref<2x64x1024xbf16, #tpu.memory_space<vmem>>, vector<1x64x1024xbf16>
    %145 = vector.shape_cast %144 : vector<1x64x1024xbf16> to vector<64x1024xbf16>
    %cst_69 = arith.constant dense<0.000000e+00> : vector<8x1024xf32>
    %146 = tpu.matmul %143, %145, %cst_69 {dimension_numbers = #tpu.dot_dimension_numbers<[1], [0], [0], [1], [0, 0, 1, 1], [], []>} : vector<8x64xbf16>, vector<64x1024xbf16>, vector<8x1024xf32> -> vector<8x1024xf32>
    %147 = arith.addf %140, %146 : vector<8x1024xf32>
    %c0_70 = arith.constant 0 : index
    %c0_71 = arith.constant 0 : index
    %148 = vector.load %arg11[%c0_70, %c0_71] : memref<1x1024xf32, #tpu.memory_space<vmem>>, vector<1x1024xf32>
    %149 = vector.broadcast %148 : vector<1x1024xf32> to vector<8x1024xf32>
    %150 = arith.addf %147, %149 : vector<8x1024xf32>
    %cst_72 = arith.constant 0.000000e+00 : f32
    %151 = vector.broadcast %cst_72 : f32 to vector<8x1024xf32>
    %152 = arith.maximumf %150, %151 : vector<8x1024xf32>
    %153 = arith.truncf %152 : vector<8x1024xf32> to vector<8x1024xbf16>
    %c0_73 = arith.constant 0 : index
    %c0_74 = arith.constant 0 : index
    %154 = vector.load %arg12[%c0_73, %c0_74] : memref<1024x128xbf16, #tpu.memory_space<vmem>>, vector<1024x128xbf16>
    %cst_75 = arith.constant dense<0.000000e+00> : vector<8x128xf32>
    %155 = tpu.matmul %153, %154, %cst_75 {dimension_numbers = #tpu.dot_dimension_numbers<[1], [0], [0], [1], [0, 0, 1, 1], [], []>} : vector<8x1024xbf16>, vector<1024x128xbf16>, vector<8x128xf32> -> vector<8x128xf32>
    %c0_76 = arith.constant 0 : index
    %c0_77 = arith.constant 0 : index
    %156 = vector.load %arg13[%c0_76, %c0_77] : memref<1x128xf32, #tpu.memory_space<vmem>>, vector<1x128xf32>
    %157 = vector.broadcast %156 : vector<1x128xf32> to vector<8x128xf32>
    %158 = arith.addf %155, %157 : vector<8x128xf32>
    %c0_78 = arith.constant 0 : index
    %c0_79 = arith.constant 0 : index
    %159 = vector.load %arg14[%c0_78, %c0_79] : memref<8x128xf32, #tpu.memory_space<vmem>>, vector<8x128xf32>
    tpu.vector_store %arg14[%c0_78, %c0_79], %158 {strides = array<i32>} : memref<8x128xf32, #tpu.memory_space<vmem>>, vector<8x128xf32>,
    return
  }
  func.func @transform_0(%arg0: i32) -> (i32, i32, i32) {
    %c0_i32 = arith.constant 0 : i32
    %c0_i32_0 = arith.constant 0 : i32
    %c0_i32_1 = arith.constant 0 : i32
    return %arg0, %c0_i32, %c0_i32_0 : i32, i32, i32
  }
  func.func @transform_1(%arg0: i32) -> (i32, i32, i32) {
    %c0_i32 = arith.constant 0 : i32
    %c0_i32_0 = arith.constant 0 : i32
    %c0_i32_1 = arith.constant 0 : i32
    %c0_i32_2 = arith.constant 0 : i32
    return %c0_i32, %c0_i32_0, %c0_i32_1 : i32, i32, i32
  }
  func.func @transform_2(%arg0: i32) -> (i32, i32) {
    %c0_i32 = arith.constant 0 : i32
    %c0_i32_0 = arith.constant 0 : i32
    %c0_i32_1 = arith.constant 0 : i32
    return %c0_i32, %c0_i32_0 : i32, i32
  }
  func.func @transform_3(%arg0: i32) -> (i32, i32, i32) {
    %c0_i32 = arith.constant 0 : i32
    %c0_i32_0 = arith.constant 0 : i32
    %c0_i32_1 = arith.constant 0 : i32
    %c0_i32_2 = arith.constant 0 : i32
    return %c0_i32, %c0_i32_0, %c0_i32_1 : i32, i32, i32
  }
  func.func @transform_4(%arg0: i32) -> (i32, i32) {
    %c0_i32 = arith.constant 0 : i32
    %c0_i32_0 = arith.constant 0 : i32
    %c0_i32_1 = arith.constant 0 : i32
    return %c0_i32, %c0_i32_0 : i32, i32
  }
  func.func @transform_5(%arg0: i32) -> (i32, i32, i32) {
    %c0_i32 = arith.constant 0 : i32
    %c0_i32_0 = arith.constant 0 : i32
    %c0_i32_1 = arith.constant 0 : i32
    %c0_i32_2 = arith.constant 0 : i32
    return %c0_i32, %c0_i32_0, %c0_i32_1 : i32, i32, i32
  }
  func.func @transform_6(%arg0: i32) -> (i32, i32) {
    %c0_i32 = arith.constant 0 : i32
    %c0_i32_0 = arith.constant 0 : i32
    %c0_i32_1 = arith.constant 0 : i32
    return %c0_i32, %c0_i32_0 : i32, i32
  }
  func.func @transform_7(%arg0: i32) -> (i32, i32, i32) {
    %c0_i32 = arith.constant 0 : i32
    %c0_i32_0 = arith.constant 0 : i32
    %c0_i32_1 = arith.constant 0 : i32
    %c0_i32_2 = arith.constant 0 : i32
    return %c0_i32, %c0_i32_0, %c0_i32_1 : i32, i32, i32
  }
  func.func @transform_8(%arg0: i32) -> (i32, i32) {
    %c0_i32 = arith.constant 0 : i32
    %c0_i32_0 = arith.constant 0 : i32
    %c0_i32_1 = arith.constant 0 : i32
    return %c0_i32, %c0_i32_0 : i32, i32
  }
  func.func @transform_9(%arg0: i32) -> (i32, i32, i32) {
    %c0_i32 = arith.constant 0 : i32
    %c0_i32_0 = arith.constant 0 : i32
    %c0_i32_1 = arith.constant 0 : i32
    %c0_i32_2 = arith.constant 0 : i32
    return %c0_i32, %c0_i32_0, %c0_i32_1 : i32, i32, i32
  }
  func.func @transform_10(%arg0: i32) -> (i32, i32) {
    %c0_i32 = arith.constant 0 : i32
    %c0_i32_0 = arith.constant 0 : i32
    %c0_i32_1 = arith.constant 0 : i32
    return %c0_i32, %c0_i32_0 : i32, i32
  }
  func.func @transform_11(%arg0: i32) -> (i32, i32) {
    %c0_i32 = arith.constant 0 : i32
    %c0_i32_0 = arith.constant 0 : i32
    %c0_i32_1 = arith.constant 0 : i32
    return %c0_i32, %c0_i32_0 : i32, i32
  }
  func.func @transform_12(%arg0: i32) -> (i32, i32) {
    %c0_i32 = arith.constant 0 : i32
    %c0_i32_0 = arith.constant 0 : i32
    %c0_i32_1 = arith.constant 0 : i32
    return %c0_i32, %c0_i32_0 : i32, i32
  }
  func.func @transform_13(%arg0: i32) -> (i32, i32) {
    %c0_i32 = arith.constant 0 : i32
    %c0_i32_0 = arith.constant 0 : i32
    return %arg0, %c0_i32 : i32, i32
  }
}

</mosaic_0001>

<llo_original>
// kernel: cnn_classifier_forward.1
$region0: #{cnn_classifier_forward.1}
  #allocation0 [shape = 'u32[]', space=smem, size = 0x4, offset = 0x4, fixed_abs, tag = 'smem constant byte address 0x4 - core index']
  #allocation1 [shape = 'u32[144,128]{1,0:T(1,128)}', space=vmem, size = 0x12000, scoped, tag = 'internal scratch']
  %s0 = inlined_call_operand.vmem [shape: f32[16,32,64], index: 0, kind: input, shape index: {}]
  %s1 = inlined_call_operand.vmem [shape: bf16[3,64,16], index: 1, kind: input, shape index: {}]
  %s2 = inlined_call_operand.vmem [shape: f32[1,16], index: 2, kind: input, shape index: {}]
  %s3 = inlined_call_operand.vmem [shape: bf16[3,16,64], index: 3, kind: input, shape index: {}]
  %s4 = inlined_call_operand.vmem [shape: f32[1,64], index: 4, kind: input, shape index: {}]
  %s5 = inlined_call_operand.vmem [shape: bf16[3,64,16], index: 5, kind: input, shape index: {}]
  %s6 = inlined_call_operand.vmem [shape: f32[1,16], index: 6, kind: input, shape index: {}]
  %s7 = inlined_call_operand.vmem [shape: bf16[3,16,64], index: 7, kind: input, shape index: {}]
  %s8 = inlined_call_operand.vmem [shape: f32[1,64], index: 8, kind: input, shape index: {}]
  %s9 = inlined_call_operand.vmem [shape: bf16[2,64,1024], index: 9, kind: input, shape index: {}]
  %s10 = inlined_call_operand.vmem [shape: f32[1,1024], index: 10, kind: input, shape index: {}]
  %s11 = inlined_call_operand.vmem [shape: bf16[1024,128], index: 11, kind: input, shape index: {}]
  %s12 = inlined_call_operand.vmem [shape: f32[1,128], index: 12, kind: input, shape index: {}]
  %s13 = inlined_call_operand.hbm [shape: f32[16,128], index: 13, kind: output, shape index: {}]
  %s14 = sld [smem:[#allocation0]]
  $region85: #{cnn_classifier_forward.1} parent=0
    _
  %s16 = ssub.s32 1, %s14
  %s17 = scalar_select 0, %s16, %s14
  $region1: #{cnn_classifier_forward.1} parent=0
    #allocation2 [shape = 'u8[8192]{0}', space=vmem, size = 0x2000, scoped, tag = 'output window, operand 0']
    #allocation3 [shape = 's32[2]{0}', space=sflag, size = 0x8, scoped, tag = 'scoped memory for cnn_classifier_forward.1']
    %18 = vsyncpa [#allocation3], 0
    %s19 = scalar_lea.sflag [#allocation3], 1
    %20 = vsyncpa %s19, 0
    loop: start=0, step=1, limit=4
    $region2: #{cnn_classifier_forward.1} parent=1 // loop_pre_header
      _
    $region3: #{cnn_classifier_forward.1} parent=1 // loop_header
      %s22 = sphi 0, %s26
      %p23 = scmp.ge.s32.totalorder %s22, 4
      %s32 = sphi 0, %s34
      %s35 = sphi 0, %s32
      %s36 = sphi 0, %s35
      %s52 = sphi 0, %s36
      %s56 = sphi 0, %s56
      %s58 = sphi 0, %s56
      %s59 = sphi 0, %s58
      %s73 = sphi 0, %s59
      %s77 = sphi 0, %s77
      %s79 = sphi 0, %s77
      %s80 = sphi 0, %s79
      %s94 = sphi 0, %s80
      %s98 = sphi 0, %s98
      %s100 = sphi 0, %s98
      %s101 = sphi 0, %s100
      %s115 = sphi 0, %s101
      %s119 = sphi 0, %s119
      %s121 = sphi 0, %s119
      %s122 = sphi 0, %s121
      %s136 = sphi 0, %s122
      %s140 = sphi 0, %s140
      %s142 = sphi 0, %s140
      %s143 = sphi 0, %s142
      %s157 = sphi 0, %s143
      %s161 = sphi 0, %s161
      %s163 = sphi 0, %s161
      %s164 = sphi 0, %s163
      %s178 = sphi 0, %s164
      %s182 = sphi 0, %s182
      %s184 = sphi 0, %s182
      %s185 = sphi 0, %s184
      %s199 = sphi 0, %s185
      %s203 = sphi 0, %s203
      %s205 = sphi 0, %s203
      %s206 = sphi 0, %s205
      %s220 = sphi 0, %s206
      %s224 = sphi 0, %s224
      %s226 = sphi 0, %s224
      %s227 = sphi 0, %s226
      %s241 = sphi 0, %s227
      %s245 = sphi 0, %s245
      %s247 = sphi 0, %s245
      %s248 = sphi 0, %s247
      %s262 = sphi 0, %s248
      %s266 = sphi 0, %s266
      %s268 = sphi 0, %s266
      %s269 = sphi 0, %s268
      %s283 = sphi 0, %s269
      %s287 = sphi 0, %s287
      %s289 = sphi 0, %s287
      %s290 = sphi 0, %s289
      %s304 = sphi 0, %s290
      %s310 = sphi 0, %s312
      %s313 = sphi 0, %s310
      %s314 = sphi 0, %s313
      %s330 = sphi 0, %s314
    $region4: #{cnn_classifier_forward.1} parent=1 // loop_header_branch
      %25 = sbr.rel (%p23) target = $region8
    $region5: #{cnn_classifier_forward.1} parent=1 // loop_body
      %s27 = ssub.s32 %s22, 1
      %s28 = ssub.s32 %s22, 2
      %s29 = sadd.s32 %s22, 1
      %s30 = ssub.s32 %s22, %s29
      %p31 = scmp.eq.s32.totalorder %s30, 0
      %s33 = sadd.s32 %s32, 1
      %s34 = scalar_select %p31, %s32, %s33
      %p37 = pneg %p31
      %p38 = scmp.eq.s32.totalorder %s22, 1
      %p39 = por %p37, %p38
      %p40 = scmp.ne.s32.totalorder %s32, %s35
      %p41 = scmp.eq.s32.totalorder %s22, 0
      %p42 = por %p40, %p41
      %p43 = scmp.ne.s32.totalorder %s32, %s35
      %p44 = scmp.eq.s32.totalorder %s27, 1
      %p45 = por %p43, %p44
      %p46 = scmp.ne.s32.totalorder %s35, %s36
      %p47 = scmp.eq.s32.totalorder %s27, 0
      %p48 = por %p46, %p47
      %p49 = scmp.ne.s32.totalorder %s35, %s36
      %p50 = scmp.eq.s32.totalorder %s28, 1
      %p51 = por %p49, %p50
      %p53 = scmp.ne.s32.totalorder %s36, %s52
      %p54 = scmp.eq.s32.totalorder %s28, 0
      %p55 = por %p53, %p54
      %s57 = sadd.s32 %s56, 1
      %p60 = scmp.eq.s32.totalorder %s22, 1
      %p61 = scmp.ne.s32.totalorder %s56, %s58
      %p62 = scmp.eq.s32.totalorder %s22, 0
      %p63 = por %p61, %p62
      %p64 = scmp.ne.s32.totalorder %s56, %s58
      %p65 = scmp.eq.s32.totalorder %s27, 1
      %p66 = por %p64, %p65
      %p67 = scmp.ne.s32.totalorder %s58, %s59
      %p68 = scmp.eq.s32.totalorder %s27, 0
      %p69 = por %p67, %p68
      %p70 = scmp.ne.s32.totalorder %s58, %s59
      %p71 = scmp.eq.s32.totalorder %s28, 1
      %p72 = por %p70, %p71
      %p74 = scmp.ne.s32.totalorder %s59, %s73
      %p75 = scmp.eq.s32.totalorder %s28, 0
      %p76 = por %p74, %p75
      %s78 = sadd.s32 %s77, 1
      %p81 = scmp.eq.s32.totalorder %s22, 1
      %p82 = scmp.ne.s32.totalorder %s77, %s79
      %p83 = scmp.eq.s32.totalorder %s22, 0
      %p84 = por %p82, %p83
      %p85 = scmp.ne.s32.totalorder %s77, %s79
      %p86 = scmp.eq.s32.totalorder %s27, 1
      %p87 = por %p85, %p86
      %p88 = scmp.ne.s32.totalorder %s79, %s80
      %p89 = scmp.eq.s32.totalorder %s27, 0
      %p90 = por %p88, %p89
      %p91 = scmp.ne.s32.totalorder %s79, %s80
      %p92 = scmp.eq.s32.totalorder %s28, 1
      %p93 = por %p91, %p92
      %p95 = scmp.ne.s32.totalorder %s80, %s94
      %p96 = scmp.eq.s32.totalorder %s28, 0
      %p97 = por %p95, %p96
      %s99 = sadd.s32 %s98, 1
      %p102 = scmp.eq.s32.totalorder %s22, 1
      %p103 = scmp.ne.s32.totalorder %s98, %s100
      %p104 = scmp.eq.s32.totalorder %s22, 0
      %p105 = por %p103, %p104
      %p106 = scmp.ne.s32.totalorder %s98, %s100
      %p107 = scmp.eq.s32.totalorder %s27, 1
      %p108 = por %p106, %p107
      %p109 = scmp.ne.s32.totalorder %s100, %s101
      %p110 = scmp.eq.s32.totalorder %s27, 0
      %p111 = por %p109, %p110
      %p112 = scmp.ne.s32.totalorder %s100, %s101
      %p113 = scmp.eq.s32.totalorder %s28, 1
      %p114 = por %p112, %p113
      %p116 = scmp.ne.s32.totalorder %s101, %s115
      %p117 = scmp.eq.s32.totalorder %s28, 0
      %p118 = por %p116, %p117
      %s120 = sadd.s32 %s119, 1
      %p123 = scmp.eq.s32.totalorder %s22, 1
      %p124 = scmp.ne.s32.totalorder %s119, %s121
      %p125 = scmp.eq.s32.totalorder %s22, 0
      %p126 = por %p124, %p125
      %p127 = scmp.ne.s32.totalorder %s119, %s121
      %p128 = scmp.eq.s32.totalorder %s27, 1
      %p129 = por %p127, %p128
      %p130 = scmp.ne.s32.totalorder %s121, %s122
      %p131 = scmp.eq.s32.totalorder %s27, 0
      %p132 = por %p130, %p131
      %p133 = scmp.ne.s32.totalorder %s121, %s122
      %p134 = scmp.eq.s32.totalorder %s28, 1
      %p135 = por %p133, %p134
      %p137 = scmp.ne.s32.totalorder %s122, %s136
      %p138 = scmp.eq.s32.totalorder %s28, 0
      %p139 = por %p137, %p138
      %s141 = sadd.s32 %s140, 1
      %p144 = scmp.eq.s32.totalorder %s22, 1
      %p145 = scmp.ne.s32.totalorder %s140, %s142
      %p146 = scmp.eq.s32.totalorder %s22, 0
      %p147 = por %p145, %p146
      %p148 = scmp.ne.s32.totalorder %s140, %s142
      %p149 = scmp.eq.s32.totalorder %s27, 1
      %p150 = por %p148, %p149
      %p151 = scmp.ne.s32.totalorder %s142, %s143
      %p152 = scmp.eq.s32.totalorder %s27, 0
      %p153 = por %p151, %p152
      %p154 = scmp.ne.s32.totalorder %s142, %s143
      %p155 = scmp.eq.s32.totalorder %s28, 1
      %p156 = por %p154, %p155
      %p158 = scmp.ne.s32.totalorder %s143, %s157
      %p159 = scmp.eq.s32.totalorder %s28, 0
      %p160 = por %p158, %p159
      %s162 = sadd.s32 %s161, 1
      %p165 = scmp.eq.s32.totalorder %s22, 1
      %p166 = scmp.ne.s32.totalorder %s161, %s163
      %p167 = scmp.eq.s32.totalorder %s22, 0
      %p168 = por %p166, %p167
      %p169 = scmp.ne.s32.totalorder %s161, %s163
      %p170 = scmp.eq.s32.totalorder %s27, 1
      %p171 = por %p169, %p170
      %p172 = scmp.ne.s32.totalorder %s163, %s164
      %p173 = scmp.eq.s32.totalorder %s27, 0
      %p174 = por %p172, %p173
      %p175 = scmp.ne.s32.totalorder %s163, %s164
      %p176 = scmp.eq.s32.totalorder %s28, 1
      %p177 = por %p175, %p176
      %p179 = scmp.ne.s32.totalorder %s164, %s178
      %p180 = scmp.eq.s32.totalorder %s28, 0
      %p181 = por %p179, %p180
      %s183 = sadd.s32 %s182, 1
      %p186 = scmp.eq.s32.totalorder %s22, 1
      %p187 = scmp.ne.s32.totalorder %s182, %s184
      %p188 = scmp.eq.s32.totalorder %s22, 0
      %p189 = por %p187, %p188
      %p190 = scmp.ne.s32.totalorder %s182, %s184
      %p191 = scmp.eq.s32.totalorder %s27, 1
      %p192 = por %p190, %p191
      %p193 = scmp.ne.s32.totalorder %s184, %s185
      %p194 = scmp.eq.s32.totalorder %s27, 0
      %p195 = por %p193, %p194
      %p196 = scmp.ne.s32.totalorder %s184, %s185
      %p197 = scmp.eq.s32.totalorder %s28, 1
      %p198 = por %p196, %p197
      %p200 = scmp.ne.s32.totalorder %s185, %s199
      %p201 = scmp.eq.s32.totalorder %s28, 0
      %p202 = por %p200, %p201
      %s204 = sadd.s32 %s203, 1
      %p207 = scmp.eq.s32.totalorder %s22, 1
      %p208 = scmp.ne.s32.totalorder %s203, %s205
      %p209 = scmp.eq.s32.totalorder %s22, 0
      %p210 = por %p208, %p209
      %p211 = scmp.ne.s32.totalorder %s203, %s205
      %p212 = scmp.eq.s32.totalorder %s27, 1
      %p213 = por %p211, %p212
      %p214 = scmp.ne.s32.totalorder %s205, %s206
      %p215 = scmp.eq.s32.totalorder %s27, 0
      %p216 = por %p214, %p215
      %p217 = scmp.ne.s32.totalorder %s205, %s206
      %p218 = scmp.eq.s32.totalorder %s28, 1
      %p219 = por %p217, %p218
      %p221 = scmp.ne.s32.totalorder %s206, %s220
      %p222 = scmp.eq.s32.totalorder %s28, 0
      %p223 = por %p221, %p222
      %s225 = sadd.s32 %s224, 1
      %p228 = scmp.eq.s32.totalorder %s22, 1
      %p229 = scmp.ne.s32.totalorder %s224, %s226
      %p230 = scmp.eq.s32.totalorder %s22, 0
      %p231 = por %p229, %p230
      %p232 = scmp.ne.s32.totalorder %s224, %s226
      %p233 = scmp.eq.s32.totalorder %s27, 1
      %p234 = por %p232, %p233
      %p235 = scmp.ne.s32.totalorder %s226, %s227
      %p236 = scmp.eq.s32.totalorder %s27, 0
      %p237 = por %p235, %p236
      %p238 = scmp.ne.s32.totalorder %s226, %s227
      %p239 = scmp.eq.s32.totalorder %s28, 1
      %p240 = por %p238, %p239
      %p242 = scmp.ne.s32.totalorder %s227, %s241
      %p243 = scmp.eq.s32.totalorder %s28, 0
      %p244 = por %p242, %p243
      %s246 = sadd.s32 %s245, 1
      %p249 = scmp.eq.s32.totalorder %s22, 1
      %p250 = scmp.ne.s32.totalorder %s245, %s247
      %p251 = scmp.eq.s32.totalorder %s22, 0
      %p252 = por %p250, %p251
      %p253 = scmp.ne.s32.totalorder %s245, %s247
      %p254 = scmp.eq.s32.totalorder %s27, 1
      %p255 = por %p253, %p254
      %p256 = scmp.ne.s32.totalorder %s247, %s248
      %p257 = scmp.eq.s32.totalorder %s27, 0
      %p258 = por %p256, %p257
      %p259 = scmp.ne.s32.totalorder %s247, %s248
      %p260 = scmp.eq.s32.totalorder %s28, 1
      %p261 = por %p259, %p260
      %p263 = scmp.ne.s32.totalorder %s248, %s262
      %p264 = scmp.eq.s32.totalorder %s28, 0
      %p265 = por %p263, %p264
      %s267 = sadd.s32 %s266, 1
      %p270 = scmp.eq.s32.totalorder %s22, 1
      %p271 = scmp.ne.s32.totalorder %s266, %s268
      %p272 = scmp.eq.s32.totalorder %s22, 0
      %p273 = por %p271, %p272
      %p274 = scmp.ne.s32.totalorder %s266, %s268
      %p275 = scmp.eq.s32.totalorder %s27, 1
      %p276 = por %p274, %p275
      %p277 = scmp.ne.s32.totalorder %s268, %s269
      %p278 = scmp.eq.s32.totalorder %s27, 0
      %p279 = por %p277, %p278
      %p280 = scmp.ne.s32.totalorder %s268, %s269
      %p281 = scmp.eq.s32.totalorder %s28, 1
      %p282 = por %p280, %p281
      %p284 = scmp.ne.s32.totalorder %s269, %s283
      %p285 = scmp.eq.s32.totalorder %s28, 0
      %p286 = por %p284, %p285
      %s288 = sadd.s32 %s287, 1
      %p291 = scmp.eq.s32.totalorder %s22, 1
      %p292 = scmp.ne.s32.totalorder %s287, %s289
      %p293 = scmp.eq.s32.totalorder %s22, 0
      %p294 = por %p292, %p293
      %p295 = scmp.ne.s32.totalorder %s287, %s289
      %p296 = scmp.eq.s32.totalorder %s27, 1
      %p297 = por %p295, %p296
      %p298 = scmp.ne.s32.totalorder %s289, %s290
      %p299 = scmp.eq.s32.totalorder %s27, 0
      %p300 = por %p298, %p299
      %p301 = scmp.ne.s32.totalorder %s289, %s290
      %p302 = scmp.eq.s32.totalorder %s28, 1
      %p303 = por %p301, %p302
      %p305 = scmp.ne.s32.totalorder %s290, %s304
      %p306 = scmp.eq.s32.totalorder %s28, 0
      %p307 = por %p305, %p306
      %s308 = ssub.s32 %s22, %s29
      %p309 = scmp.eq.s32.totalorder %s308, 0
      %s311 = sadd.s32 %s310, 1
      %s312 = scalar_select %p309, %s310, %s311
      %p315 = pneg %p309
      %p316 = scmp.eq.s32.totalorder %s22, 1
      %p317 = por %p315, %p316
      %p318 = scmp.ne.s32.totalorder %s310, %s313
      %p319 = scmp.eq.s32.totalorder %s22, 0
      %p320 = por %p318, %p319
      %p321 = scmp.ne.s32.totalorder %s310, %s313
      %p322 = scmp.eq.s32.totalorder %s27, 1
      %p323 = por %p321, %p322
      %p324 = scmp.ne.s32.totalorder %s313, %s314
      %p325 = scmp.eq.s32.totalorder %s27, 0
      %p326 = por %p324, %p325
      %p327 = scmp.ne.s32.totalorder %s313, %s314
      %p328 = scmp.eq.s32.totalorder %s28, 1
      %p329 = por %p327, %p328
      %p331 = scmp.ne.s32.totalorder %s314, %s330
      %p332 = scmp.eq.s32.totalorder %s28, 0
      %p333 = por %p331, %p332
      %p334 = scmp.le.s32.totalorder 1, %s22
      %p335 = scmp.lt.s32.totalorder %s22, 3
      %p336 = pnand %p334, %p335
      %p337 = pneg %p336
      // Predicated region
      $region9: #{cnn_classifier_forward.1} parent=5 // pred_check
        _
      $region10: #{cnn_classifier_forward.1} parent=5 // pred_check_branch
        %339 = sbr.rel (%p336) target = $region12
      $region11: #{cnn_classifier_forward.1} parent=5 // pred_region
        %s340 = ssub.s32 %s22, 1
        // Predicated region
        $region13: #{cnn_classifier_forward.1} parent=11 // pred_check
          %p341 = pneg %p69
        $region14: #{cnn_classifier_forward.1} parent=11 // pred_check_branch
          %343 = sbr.rel (%p341) target = $region16
        $region15: #{cnn_classifier_forward.1} parent=11 // pred_region
          _
        $region16: #{cnn_classifier_forward.1} parent=11 // pred_fallthru
          _
        // Predicated region
        $region17: #{cnn_classifier_forward.1} parent=11 // pred_check
          %p344 = pneg %p90
        $region18: #{cnn_classifier_forward.1} parent=11 // pred_check_branch
          %346 = sbr.rel (%p344) target = $region20
        $region19: #{cnn_classifier_forward.1} parent=11 // pred_region
          _
        $region20: #{cnn_classifier_forward.1} parent=11 // pred_fallthru
          _
        // Predicated region
        $region21: #{cnn_classifier_forward.1} parent=11 // pred_check
          %p347 = pneg %p111
        $region22: #{cnn_classifier_forward.1} parent=11 // pred_check_branch
          %349 = sbr.rel (%p347) target = $region24
        $region23: #{cnn_classifier_forward.1} parent=11 // pred_region
          _
        $region24: #{cnn_classifier_forward.1} parent=11 // pred_fallthru
          _
        // Predicated region
        $region25: #{cnn_classifier_forward.1} parent=11 // pred_check
          %p350 = pneg %p132
        $region26: #{cnn_classifier_forward.1} parent=11 // pred_check_branch
          %352 = sbr.rel (%p350) target = $region28
        $region27: #{cnn_classifier_forward.1} parent=11 // pred_region
          _
        $region28: #{cnn_classifier_forward.1} parent=11 // pred_fallthru
          _
        // Predicated region
        $region29: #{cnn_classifier_forward.1} parent=11 // pred_check
          %p353 = pneg %p153
        $region30: #{cnn_classifier_forward.1} parent=11 // pred_check_branch
          %355 = sbr.rel (%p353) target = $region32
        $region31: #{cnn_classifier_forward.1} parent=11 // pred_region
          _
        $region32: #{cnn_classifier_forward.1} parent=11 // pred_fallthru
          _
        // Predicated region
        $region33: #{cnn_classifier_forward.1} parent=11 // pred_check
          %p356 = pneg %p174
        $region34: #{cnn_classifier_forward.1} parent=11 // pred_check_branch
          %358 = sbr.rel (%p356) target = $region36
        $region35: #{cnn_classifier_forward.1} parent=11 // pred_region
          _
        $region36: #{cnn_classifier_forward.1} parent=11 // pred_fallthru
          _
        // Predicated region
        $region37: #{cnn_classifier_forward.1} parent=11 // pred_check
          %p359 = pneg %p195
        $region38: #{cnn_classifier_forward.1} parent=11 // pred_check_branch
          %361 = sbr.rel (%p359) target = $region40
        $region39: #{cnn_classifier_forward.1} parent=11 // pred_region
          _
        $region40: #{cnn_classifier_forward.1} parent=11 // pred_fallthru
          _
        // Predicated region
        $region41: #{cnn_classifier_forward.1} parent=11 // pred_check
          %p362 = pneg %p216
        $region42: #{cnn_classifier_forward.1} parent=11 // pred_check_branch
          %364 = sbr.rel (%p362) target = $region44
        $region43: #{cnn_classifier_forward.1} parent=11 // pred_region
          _
        $region44: #{cnn_classifier_forward.1} parent=11 // pred_fallthru
          _
        // Predicated region
        $region45: #{cnn_classifier_forward.1} parent=11 // pred_check
          %p365 = pneg %p237
        $region46: #{cnn_classifier_forward.1} parent=11 // pred_check_branch
          %367 = sbr.rel (%p365) target = $region48
        $region47: #{cnn_classifier_forward.1} parent=11 // pred_region
          _
        $region48: #{cnn_classifier_forward.1} parent=11 // pred_fallthru
          _
        // Predicated region
        $region49: #{cnn_classifier_forward.1} parent=11 // pred_check
          %p368 = pneg %p258
        $region50: #{cnn_classifier_forward.1} parent=11 // pred_check_branch
          %370 = sbr.rel (%p368) target = $region52
        $region51: #{cnn_classifier_forward.1} parent=11 // pred_region
          _
        $region52: #{cnn_classifier_forward.1} parent=11 // pred_fallthru
          _
        // Predicated region
        $region53: #{cnn_classifier_forward.1} parent=11 // pred_check
          %p371 = pneg %p279
        $region54: #{cnn_classifier_forward.1} parent=11 // pred_check_branch
          %373 = sbr.rel (%p371) target = $region56
        $region55: #{cnn_classifier_forward.1} parent=11 // pred_region
          _
        $region56: #{cnn_classifier_forward.1} parent=11 // pred_fallthru
          _
        // Predicated region
        $region57: #{cnn_classifier_forward.1} parent=11 // pred_check
          %p374 = pneg %p300
        $region58: #{cnn_classifier_forward.1} parent=11 // pred_check_branch
          %376 = sbr.rel (%p374) target = $region60
        $region59: #{cnn_classifier_forward.1} parent=11 // pred_region
          _
        $region60: #{cnn_classifier_forward.1} parent=11 // pred_fallthru
          _
      $region12: #{cnn_classifier_forward.1} parent=5 // pred_fallthru
        _
      %p377 = scmp.lt.s32.totalorder %s22, 2
      // Predicated region
      $region61: #{cnn_classifier_forward.1} parent=5 // pred_check
        %p378 = pneg %p377
      $region62: #{cnn_classifier_forward.1} parent=5 // pred_check_branch
        %380 = sbr.rel (%p378) target = $region64
      $region63: #{cnn_classifier_forward.1} parent=5 // pred_region
        // Predicated region
        $region65: #{cnn_classifier_forward.1} parent=63 // pred_check
          %p381 = pneg %p42
        $region66: #{cnn_classifier_forward.1} parent=63 // pred_check_branch
          %383 = sbr.rel (%p381) target = $region68
        $region67: #{cnn_classifier_forward.1} parent=63 // pred_region
          %s384 = smul.u32 8, %s22
          %p385 = scmp.lt.s32.totalorder %s384, 15
          %s386 = scalar_select %p385, %s384, 15
          %s387 = smul.addr %s386, 4
          %s388 = smul.addr %s387, 8
          %s389 = scalar_lea.vmem %s0, %s388
          %s390 = smul.u32 8, %s22
        $region68: #{cnn_classifier_forward.1} parent=63 // pred_fallthru
          _
      $region64: #{cnn_classifier_forward.1} parent=5 // pred_fallthru
        _
      %p391 = scmp.le.s32.totalorder 1, %s22
      %p392 = scmp.lt.s32.totalorder %s22, 3
      %p393 = pnand %p391, %p392
      %p394 = pneg %p393
      // Predicated region
      $region69: #{cnn_classifier_forward.1} parent=5 // pred_check
        _
      $region70: #{cnn_classifier_forward.1} parent=5 // pred_check_branch
        %396 = sbr.rel (%p393) target = $region72
      $region71: #{cnn_classifier_forward.1} parent=5 // pred_region
        %s397 = ssub.s32 %s22, 1
        %s398 = smul.u32 8, %s27
        %p399 = scmp.lt.s32.totalorder %s398, 15
        %s400 = scalar_select %p399, %s398, 15
        %s401 = smul.addr %s400, 4
        %s402 = smul.addr %s401, 8
        %s403 = scalar_lea.vmem %s0, %s402
        %p404 = pneg %p48
        %p405 = pneg %p45
        %p406 = pneg %p69
        %p407 = pneg %p66
        %p408 = pneg %p90
        %p409 = pneg %p87
        %p410 = pneg %p111
        %p411 = pneg %p108
        %p412 = pneg %p132
        %p413 = pneg %p129
        %p414 = pneg %p153
        %p415 = pneg %p150
        %p416 = pneg %p174
        %p417 = pneg %p171
        %p418 = pneg %p195
        %p419 = pneg %p192
        %p420 = pneg %p216
        %p421 = pneg %p213
        %p422 = pneg %p237
        %p423 = pneg %p234
        %p424 = pneg %p258
        %p425 = pneg %p255
        %p426 = pneg %p279
        %p427 = pneg %p276
        %p428 = pneg %p300
        %p429 = pneg %p297
        %p430 = pneg %p326
        %p431 = pneg %p323
        %s432 = sand.u32 %s313, 1
        %s433 = scalar_lea.sflag [#allocation3], %s432
        %s434 = sand.u32 %s313, 1
        %s435 = smul.addr %s434, 8
        %s436 = scalar_lea.vmem [#allocation2], %s435
        %s437 = smul.u32 8, %s27
        %p438 = scmp.lt.s32.totalorder %s437, 15
        %s439 = scalar_select %p438, %s437, 15
        %s440 = smul.addr %s439, 4
        %s441 = smul.addr %s440, 8
        %s442 = scalar_lea.vmem %s0, %s441
        %s443 = smul.u32 8, %s27
        %v445 = vld [vmem:[%s442] sm:$0xff]
        %v446 = vld [vmem:[%s442 + $0x8] sm:$0xff]
        %v447 = vld [vmem:[%s442 + $0x10] sm:$0xff]
        %v448 = vld [vmem:[%s442 + $0x18] sm:$0xff]
        %v449 = vld [vmem:[%s442 + $0x20] sm:$0xff]
        %v450 = vld [vmem:[%s442 + $0x28] sm:$0xff]
        %v451 = vld [vmem:[%s442 + $0x30] sm:$0xff]
        %v452 = vld [vmem:[%s442 + $0x38] sm:$0xff]
        %v453 = vld [vmem:[%s442 + $0x40] sm:$0xff]
        %v454 = vld [vmem:[%s442 + $0x48] sm:$0xff]
        %v455 = vld [vmem:[%s442 + $0x50] sm:$0xff]
        %v456 = vld [vmem:[%s442 + $0x58] sm:$0xff]
        %v457 = vld [vmem:[%s442 + $0x60] sm:$0xff]
        %v458 = vld [vmem:[%s442 + $0x68] sm:$0xff]
        %v459 = vld [vmem:[%s442 + $0x70] sm:$0xff]
        %v460 = vld [vmem:[%s442 + $0x78] sm:$0xff]
        %v461 = vld [vmem:[%s442 + $0x80] sm:$0xff]
        %v462 = vld [vmem:[%s442 + $0x88] sm:$0xff]
        %v463 = vld [vmem:[%s442 + $0x90] sm:$0xff]
        %v464 = vld [vmem:[%s442 + $0x98] sm:$0xff]
        %v465 = vld [vmem:[%s442 + $0xa0] sm:$0xff]
        %v466 = vld [vmem:[%s442 + $0xa8] sm:$0xff]
        %v467 = vld [vmem:[%s442 + $0xb0] sm:$0xff]
        %v468 = vld [vmem:[%s442 + $0xb8] sm:$0xff]
        %v469 = vld [vmem:[%s442 + $0xc0] sm:$0xff]
        %v470 = vld [vmem:[%s442 + $0xc8] sm:$0xff]
        %v471 = vld [vmem:[%s442 + $0xd0] sm:$0xff]
        %v472 = vld [vmem:[%s442 + $0xd8] sm:$0xff]
        %v473 = vld [vmem:[%s442 + $0xe0] sm:$0xff]
        %v474 = vld [vmem:[%s442 + $0xe8] sm:$0xff]
        %v475 = vld [vmem:[%s442 + $0xf0] sm:$0xff]
        %v476 = vld [vmem:[%s442 + $0xf8] sm:$0xff]
        %vm509 = vcmask 1040384
        %v510 = vrot.slane %v445, 7
        %v511 = vrot.slane %v446, 7
        %v512 = vsel %vm509, %v510, %v511
        %v513 = vrot.slane %v447, 7
        %v514 = vsel %vm509, %v511, %v513
        %v515 = vrot.slane %v448, 7
        %v516 = vsel %vm509, %v513, %v515
        %v517 = vrot.slane %v449, 7
        %v518 = vrot.slane %v450, 7
        %v519 = vsel %vm509, %v517, %v518
        %v520 = vrot.slane %v451, 7
        %v521 = vsel %vm509, %v518, %v520
        %v522 = vrot.slane %v452, 7
        %v523 = vsel %vm509, %v520, %v522
        %v524 = vrot.slane %v453, 7
        %v525 = vrot.slane %v454, 7
        %v526 = vsel %vm509, %v524, %v525
        %v527 = vrot.slane %v455, 7
        %v528 = vsel %vm509, %v525, %v527
        %v529 = vrot.slane %v456, 7
        %v530 = vsel %vm509, %v527, %v529
        %v531 = vrot.slane %v457, 7
        %v532 = vrot.slane %v458, 7
        %v533 = vsel %vm509, %v531, %v532
        %v534 = vrot.slane %v459, 7
        %v535 = vsel %vm509, %v532, %v534
        %v536 = vrot.slane %v460, 7
        %v537 = vsel %vm509, %v534, %v536
        %v538 = vrot.slane %v461, 7
        %v539 = vrot.slane %v462, 7
        %v540 = vsel %vm509, %v538, %v539
        %v541 = vrot.slane %v463, 7
        %v542 = vsel %vm509, %v539, %v541
        %v543 = vrot.slane %v464, 7
        %v544 = vsel %vm509, %v541, %v543
        %v545 = vrot.slane %v465, 7
        %v546 = vrot.slane %v466, 7
        %v547 = vsel %vm509, %v545, %v546
        %v548 = vrot.slane %v467, 7
        %v549 = vsel %vm509, %v546, %v548
        %v550 = vrot.slane %v468, 7
        %v551 = vsel %vm509, %v548, %v550
        %v552 = vrot.slane %v469, 7
        %v553 = vrot.slane %v470, 7
        %v554 = vsel %vm509, %v552, %v553
        %v555 = vrot.slane %v471, 7
        %v556 = vsel %vm509, %v553, %v555
        %v557 = vrot.slane %v472, 7
        %v558 = vsel %vm509, %v555, %v557
        %v559 = vrot.slane %v473, 7
        %v560 = vrot.slane %v474, 7
        %v561 = vsel %vm509, %v559, %v560
        %v562 = vrot.slane %v475, 7
        %v563 = vsel %vm509, %v560, %v562
        %v564 = vrot.slane %v476, 7
        %v565 = vsel %vm509, %v562, %v564
        %v598 = vsel %vm509, 0.0, %v510
        %v599 = vsel %vm509, 0.0, %v517
        %v600 = vsel %vm509, 0.0, %v524
        %v601 = vsel %vm509, 0.0, %v531
        %v602 = vsel %vm509, 0.0, %v538
        %v603 = vsel %vm509, 0.0, %v545
        %v604 = vsel %vm509, 0.0, %v552
        %v605 = vsel %vm509, 0.0, %v559
        %vm606 = vcmask 1046528
        %v607 = vrot.slane %v445, 1
        %v608 = vrot.slane %v446, 1
        %v609 = vsel %vm606, %v607, %v608
        %v610 = vrot.slane %v447, 1
        %v611 = vsel %vm606, %v608, %v610
        %v612 = vrot.slane %v448, 1
        %v613 = vsel %vm606, %v610, %v612
        %v614 = vrot.slane %v449, 1
        %v615 = vrot.slane %v450, 1
        %v616 = vsel %vm606, %v614, %v615
        %v617 = vrot.slane %v451, 1
        %v618 = vsel %vm606, %v615, %v617
        %v619 = vrot.slane %v452, 1
        %v620 = vsel %vm606, %v617, %v619
        %v621 = vrot.slane %v453, 1
        %v622 = vrot.slane %v454, 1
        %v623 = vsel %vm606, %v621, %v622
        %v624 = vrot.slane %v455, 1
        %v625 = vsel %vm606, %v622, %v624
        %v626 = vrot.slane %v456, 1
        %v627 = vsel %vm606, %v624, %v626
        %v628 = vrot.slane %v457, 1
        %v629 = vrot.slane %v458, 1
        %v630 = vsel %vm606, %v628, %v629
        %v631 = vrot.slane %v459, 1
        %v632 = vsel %vm606, %v629, %v631
        %v633 = vrot.slane %v460, 1
        %v634 = vsel %vm606, %v631, %v633
        %v635 = vrot.slane %v461, 1
        %v636 = vrot.slane %v462, 1
        %v637 = vsel %vm606, %v635, %v636
        %v638 = vrot.slane %v463, 1
        %v639 = vsel %vm606, %v636, %v638
        %v640 = vrot.slane %v464, 1
        %v641 = vsel %vm606, %v638, %v640
        %v642 = vrot.slane %v465, 1
        %v643 = vrot.slane %v466, 1
        %v644 = vsel %vm606, %v642, %v643
        %v645 = vrot.slane %v467, 1
        %v646 = vsel %vm606, %v643, %v645
        %v647 = vrot.slane %v468, 1
        %v648 = vsel %vm606, %v645, %v647
        %v649 = vrot.slane %v469, 1
        %v650 = vrot.slane %v470, 1
        %v651 = vsel %vm606, %v649, %v650
        %v652 = vrot.slane %v471, 1
        %v653 = vsel %vm606, %v650, %v652
        %v654 = vrot.slane %v472, 1
        %v655 = vsel %vm606, %v652, %v654
        %v656 = vrot.slane %v473, 1
        %v657 = vrot.slane %v474, 1
        %v658 = vsel %vm606, %v656, %v657
        %v659 = vrot.slane %v475, 1
        %v660 = vsel %vm606, %v657, %v659
        %v661 = vrot.slane %v476, 1
        %v662 = vsel %vm606, %v659, %v661
        %v695 = vsel %vm606, %v612, 0.0
        %v696 = vsel %vm606, %v619, 0.0
        %v697 = vsel %vm606, %v626, 0.0
        %v698 = vsel %vm606, %v633, 0.0
        %v699 = vsel %vm606, %v640, 0.0
        %v700 = vsel %vm606, %v647, 0.0
        %v701 = vsel %vm606, %v654, 0.0
        %v702 = vsel %vm606, %v661, 0.0
        %v703 = vpack.c.bf16 %v512, %v598
        %v704 = vpack.c.bf16 %v516, %v514
        %v705 = vpack.c.bf16 %v519, %v599
        %v706 = vpack.c.bf16 %v523, %v521
        %v707 = vpack.c.bf16 %v526, %v600
        %v708 = vpack.c.bf16 %v530, %v528
        %v709 = vpack.c.bf16 %v533, %v601
        %v710 = vpack.c.bf16 %v537, %v535
        %v711 = vpack.c.bf16 %v540, %v602
        %v712 = vpack.c.bf16 %v544, %v542
        %v713 = vpack.c.bf16 %v547, %v603
        %v714 = vpack.c.bf16 %v551, %v549
        %v715 = vpack.c.bf16 %v554, %v604
        %v716 = vpack.c.bf16 %v558, %v556
        %v717 = vpack.c.bf16 %v561, %v605
        %v718 = vpack.c.bf16 %v565, %v563
        %v719 = vld [vmem:[%s1] sm:$0xf]
        %v720 = vld [vmem:[%s1 + $0x4] sm:$0xf]
        %v721 = vld [vmem:[%s1 + $0x8] sm:$0xf]
        %v722 = vld [vmem:[%s1 + $0xc] sm:$0xf]
        %v723 = vld [vmem:[%s1 + $0x10] sm:$0xf]
        %v724 = vld [vmem:[%s1 + $0x14] sm:$0xf]
        %v725 = vld [vmem:[%s1 + $0x18] sm:$0xf]
        %v726 = vld [vmem:[%s1 + $0x1c] sm:$0xf]
        %v727 = vpack.c.bf16 %v446, %v445
        %v728 = vpack.c.bf16 %v448, %v447
        %v729 = vpack.c.bf16 %v450, %v449
        %v730 = vpack.c.bf16 %v452, %v451
        %v731 = vpack.c.bf16 %v454, %v453
        %v732 = vpack.c.bf16 %v456, %v455
        %v733 = vpack.c.bf16 %v458, %v457
        %v734 = vpack.c.bf16 %v460, %v459
        %v735 = vpack.c.bf16 %v462, %v461
        %v736 = vpack.c.bf16 %v464, %v463
        %v737 = vpack.c.bf16 %v466, %v465
        %v738 = vpack.c.bf16 %v468, %v467
        %v739 = vpack.c.bf16 %v470, %v469
        %v740 = vpack.c.bf16 %v472, %v471
        %v741 = vpack.c.bf16 %v474, %v473
        %v742 = vpack.c.bf16 %v476, %v475
        %s743 = scalar_lea.vmem %s1, 32
        %v744 = vld [vmem:[%s743] sm:$0xf]
        %v745 = vld [vmem:[%s743 + $0x4] sm:$0xf]
        %v746 = vld [vmem:[%s743 + $0x8] sm:$0xf]
        %v747 = vld [vmem:[%s743 + $0xc] sm:$0xf]
        %v748 = vld [vmem:[%s743 + $0x10] sm:$0xf]
        %v749 = vld [vmem:[%s743 + $0x14] sm:$0xf]
        %v750 = vld [vmem:[%s743 + $0x18] sm:$0xf]
        %v751 = vld [vmem:[%s743 + $0x1c] sm:$0xf]
        %v760 = vunpack.c.l.b16 %v744
        %v761 = vunpack.c.l.b16 %v745
        %v762 = vunpack.c.l.b16 %v746
        %v763 = vunpack.c.l.b16 %v747
        %v764 = vunpack.c.l.b16 %v748
        %v765 = vunpack.c.l.b16 %v749
        %v766 = vunpack.c.l.b16 %v750
        %v767 = vunpack.c.l.b16 %v751
        %v768 = vpack.c.b16 %v761, %v760
        %v769 = vpack.c.b16 %v763, %v762
        %v770 = vpack.c.b16 %v765, %v764
        %v771 = vpack.c.b16 %v767, %v766
        %vm776 = vcmask 523264
        %v778 = vsel %vm776, %v727, 0
        %v781 = vsel %vm776, %v728, 0
        %v784 = vsel %vm776, %v729, 0
        %v787 = vsel %vm776, %v730, 0
        %v790 = vsel %vm776, %v731, 0
        %v793 = vsel %vm776, %v732, 0
        %v796 = vsel %vm776, %v733, 0
        %v799 = vsel %vm776, %v734, 0
        %v802 = vsel %vm776, %v735, 0
        %v805 = vsel %vm776, %v736, 0
        %v808 = vsel %vm776, %v737, 0
        %v811 = vsel %vm776, %v738, 0
        %v814 = vsel %vm776, %v739, 0
        %v817 = vsel %vm776, %v740, 0
        %v820 = vsel %vm776, %v741, 0
        %v823 = vsel %vm776, %v742, 0
        %825 = vmatprep.subr.bf16.mxu0 0
        %826 = vmatpush1.bf16.msra.mxu0 %v768
        %827 = vmatprep.subr.bf16.mxu0 0
        %828 = vmatpush1.bf16.msra.mxu0 %v769
        %829 = vmatprep.subr.bf16.mxu0 0
        %830 = vmatpush1.bf16.msra.mxu0 %v770
        %831 = vmatprep.subr.bf16.mxu0 0
        %832 = vmatpush1.bf16.msra.mxu0 %v771
        %833 = vmatprep.subr.bf16.mxu0 0
        %834 = vmatpush1.bf16.msra.mxu0 0
        %835 = vmatprep.subr.bf16.mxu0 0
        %836 = vmatpush1.bf16.msra.mxu0 0
        %837 = vmatprep.subr.bf16.mxu0 0
        %838 = vmatpush1.bf16.msra.mxu0 0
        %839 = vmatprep.subr.bf16.mxu0 0
        %840 = vmatpush1.bf16.msra.mxu0 0
        %841 = vmatprep.subr.bf16.mxu0 0
        %842 = vmatpush1.bf16.msra.mxu0 0
        %843 = vmatprep.subr.bf16.mxu0 0
        %844 = vmatpush1.bf16.msra.mxu0 0
        %845 = vmatprep.subr.bf16.mxu0 0
        %846 = vmatpush1.bf16.msra.mxu0 0
        %847 = vmatprep.subr.bf16.mxu0 0
        %848 = vmatpush1.bf16.msra.mxu0 0
        %849 = vmatprep.subr.bf16.mxu0 0
        %850 = vmatpush1.bf16.msra.mxu0 0
        %851 = vmatprep.subr.bf16.mxu0 0
        %852 = vmatpush1.bf16.msra.mxu0 0
        %853 = vmatprep.subr.bf16.mxu0 0
        %854 = vmatpush1.bf16.msra.mxu0 0
        %855 = vmatprep.subr.bf16.mxu0 0
        %856 = vmatpush1.bf16.msra.mxu0 0
        %857 = vmatprep.mubr.bf16.mxu0 0
        %858 = vmatmul.mubr.bf16.gmra.mrb[0].mxu0 %v778
        %v859 = vpop.f32.mrb[0].mxu0
        %v860 = vadd.f32 0.0, %v859
        %v861 = vpop.f32.mrb[0].mxu0
        %v862 = vpop.f32.mrb[0].mxu0
        %v863 = vadd.f32 0.0, %v862
        %v864 = vpop.f32.mrb[0].mxu0
        %865 = vmatprep.mubr.bf16.mxu0 0
        %866 = vmatmul.mubr.bf16.gmra.mrb[0].mxu0 %v781
        %v867 = vpop.f32.mrb[0].mxu0
        %v868 = vadd.f32 0.0, %v867
        %v869 = vpop.f32.mrb[0].mxu0
        %v870 = vpop.f32.mrb[0].mxu0
        %v871 = vadd.f32 0.0, %v870
        %v872 = vpop.f32.mrb[0].mxu0
        %873 = vmatprep.mubr.bf16.mxu0 0
        %874 = vmatmul.mubr.bf16.gmra.mrb[0].mxu0 %v784
        %v875 = vpop.f32.mrb[0].mxu0
        %v876 = vadd.f32 0.0, %v875
        %v877 = vpop.f32.mrb[0].mxu0
        %v878 = vpop.f32.mrb[0].mxu0
        %v879 = vadd.f32 0.0, %v878
        %v880 = vpop.f32.mrb[0].mxu0
        %881 = vmatprep.mubr.bf16.mxu0 0
        %882 = vmatmul.mubr.bf16.gmra.mrb[0].mxu0 %v787
        %v883 = vpop.f32.mrb[0].mxu0
        %v884 = vadd.f32 0.0, %v883
        %v885 = vpop.f32.mrb[0].mxu0
        %v886 = vpop.f32.mrb[0].mxu0
        %v887 = vadd.f32 0.0, %v886
        %v888 = vpop.f32.mrb[0].mxu0
        %889 = vmatprep.mubr.bf16.mxu0 0
        %890 = vmatmul.mubr.bf16.gmra.mrb[0].mxu0 %v790
        %v891 = vpop.f32.mrb[0].mxu0
        %v892 = vadd.f32 0.0, %v891
        %v893 = vpop.f32.mrb[0].mxu0
        %v894 = vpop.f32.mrb[0].mxu0
        %v895 = vadd.f32 0.0, %v894
        %v896 = vpop.f32.mrb[0].mxu0
        %897 = vmatprep.mubr.bf16.mxu0 0
        %898 = vmatmul.mubr.bf16.gmra.mrb[0].mxu0 %v793
        %v899 = vpop.f32.mrb[0].mxu0
        %v900 = vadd.f32 0.0, %v899
        %v901 = vpop.f32.mrb[0].mxu0
        %v902 = vpop.f32.mrb[0].mxu0
        %v903 = vadd.f32 0.0, %v902
        %v904 = vpop.f32.mrb[0].mxu0
        %905 = vmatprep.mubr.bf16.mxu0 0
        %906 = vmatmul.mubr.bf16.gmra.mrb[0].mxu0 %v796
        %v907 = vpop.f32.mrb[0].mxu0
        %v908 = vadd.f32 0.0, %v907
        %v909 = vpop.f32.mrb[0].mxu0
        %v910 = vpop.f32.mrb[0].mxu0
        %v911 = vadd.f32 0.0, %v910
        %v912 = vpop.f32.mrb[0].mxu0
        %913 = vmatprep.mubr.bf16.mxu0 0
        %914 = vmatmul.mubr.bf16.gmra.mrb[0].mxu0 %v799
        %v915 = vpop.f32.mrb[0].mxu0
        %v916 = vadd.f32 0.0, %v915
        %v917 = vpop.f32.mrb[0].mxu0
        %v918 = vpop.f32.mrb[0].mxu0
        %v919 = vadd.f32 0.0, %v918
        %v920 = vpop.f32.mrb[0].mxu0
        %921 = vmatprep.mubr.bf16.mxu0 0
        %922 = vmatmul.mubr.bf16.gmra.mrb[0].mxu0 %v802
        %v923 = vpop.f32.mrb[0].mxu0
        %v924 = vadd.f32 0.0, %v923
        %v925 = vpop.f32.mrb[0].mxu0
        %v926 = vpop.f32.mrb[0].mxu0
        %v927 = vadd.f32 0.0, %v926
        %v928 = vpop.f32.mrb[0].mxu0
        %929 = vmatprep.mubr.bf16.mxu0 0
        %930 = vmatmul.mubr.bf16.gmra.mrb[0].mxu0 %v805
        %v931 = vpop.f32.mrb[0].mxu0
        %v932 = vadd.f32 0.0, %v931
        %v933 = vpop.f32.mrb[0].mxu0
        %v934 = vpop.f32.mrb[0].mxu0
        %v935 = vadd.f32 0.0, %v934
        %v936 = vpop.f32.mrb[0].mxu0
        %937 = vmatprep.mubr.bf16.mxu0 0
        %938 = vmatmul.mubr.bf16.gmra.mrb[0].mxu0 %v808
        %v939 = vpop.f32.mrb[0].mxu0
        %v940 = vadd.f32 0.0, %v939
        %v941 = vpop.f32.mrb[0].mxu0
        %v942 = vpop.f32.mrb[0].mxu0
        %v943 = vadd.f32 0.0, %v942
        %v944 = vpop.f32.mrb[0].mxu0
        %945 = vmatprep.mubr.bf16.mxu0 0
        %946 = vmatmul.mubr.bf16.gmra.mrb[0].mxu0 %v811
        %v947 = vpop.f32.mrb[0].mxu0
        %v948 = vadd.f32 0.0, %v947
        %v949 = vpop.f32.mrb[0].mxu0
        %v950 = vpop.f32.mrb[0].mxu0
        %v951 = vadd.f32 0.0, %v950
        %v952 = vpop.f32.mrb[0].mxu0
        %953 = vmatprep.mubr.bf16.mxu0 0
        %954 = vmatmul.mubr.bf16.gmra.mrb[0].mxu0 %v814
        %v955 = vpop.f32.mrb[0].mxu0
        %v956 = vadd.f32 0.0, %v955
        %v957 = vpop.f32.mrb[0].mxu0
        %v958 = vpop.f32.mrb[0].mxu0
        %v959 = vadd.f32 0.0, %v958
        %v960 = vpop.f32.mrb[0].mxu0
        %961 = vmatprep.mubr.bf16.mxu0 0
        %962 = vmatmul.mubr.bf16.gmra.mrb[0].mxu0 %v817
        %v963 = vpop.f32.mrb[0].mxu0
        %v964 = vadd.f32 0.0, %v963
        %v965 = vpop.f32.mrb[0].mxu0
        %v966 = vpop.f32.mrb[0].mxu0
        %v967 = vadd.f32 0.0, %v966
        %v968 = vpop.f32.mrb[0].mxu0
        %969 = vmatprep.mubr.bf16.mxu0 0
        %970 = vmatmul.mubr.bf16.gmra.mrb[0].mxu0 %v820
        %v971 = vpop.f32.mrb[0].mxu0
        %v972 = vadd.f32 0.0, %v971
        %v973 = vpop.f32.mrb[0].mxu0
        %v974 = vpop.f32.mrb[0].mxu0
        %v975 = vadd.f32 0.0, %v974
        %v976 = vpop.f32.mrb[0].mxu0
        %977 = vmatprep.mubr.bf16.mxu0 0
        %978 = vmatmul.mubr.bf16.gmra.mrb[0].mxu0 %v823
        %v979 = vpop.f32.mrb[0].mxu0
        %v980 = vadd.f32 0.0, %v979
        %v981 = vpop.f32.mrb[0].mxu0
        %v982 = vpop.f32.mrb[0].mxu0
        %v983 = vadd.f32 0.0, %v982
        %v984 = vpop.f32.mrb[0].mxu0
        %985 = vdwg.mxu0
        %v994 = vunpack.c.l.b16 %v719
        %v995 = vunpack.c.l.b16 %v720
        %v996 = vunpack.c.l.b16 %v721
        %v997 = vunpack.c.l.b16 %v722
        %v998 = vunpack.c.l.b16 %v723
        %v999 = vunpack.c.l.b16 %v724
        %v1000 = vunpack.c.l.b16 %v725
        %v1001 = vunpack.c.l.b16 %v726
        %v1002 = vpack.c.b16 %v995, %v994
        %v1003 = vpack.c.b16 %v997, %v996
        %v1004 = vpack.c.b16 %v999, %v998
        %v1005 = vpack.c.b16 %v1001, %v1000
        %v1011 = vsel %vm776, %v703, 0
        %v1014 = vsel %vm776, %v704, 0
        %v1017 = vsel %vm776, %v705, 0
        %v1020 = vsel %vm776, %v706, 0
        %v1023 = vsel %vm776, %v707, 0
        %v1026 = vsel %vm776, %v708, 0
        %v1029 = vsel %vm776, %v709, 0
        %v1032 = vsel %vm776, %v710, 0
        %v1035 = vsel %vm776, %v711, 0
        %v1038 = vsel %vm776, %v712, 0
        %v1041 = vsel %vm776, %v713, 0
        %v1044 = vsel %vm776, %v714, 0
        %v1047 = vsel %vm776, %v715, 0
        %v1050 = vsel %vm776, %v716, 0
        %v1053 = vsel %vm776, %v717, 0
        %v1056 = vsel %vm776, %v718, 0
        %1058 = vmatprep.subr.bf16.mxu0 0
        %1059 = vmatpush1.bf16.msra.mxu0 %v1002
        %1060 = vmatprep.subr.bf16.mxu0 0
        %1061 = vmatpush1.bf16.msra.mxu0 %v1003
        %1062 = vmatprep.subr.bf16.mxu0 0
        %1063 = vmatpush1.bf16.msra.mxu0 %v1004
        %1064 = vmatprep.subr.bf16.mxu0 0
        %1065 = vmatpush1.bf16.msra.mxu0 %v1005
        %1066 = vmatprep.subr.bf16.mxu0 0
        %1067 = vmatpush1.bf16.msra.mxu0 0
        %1068 = vmatprep.subr.bf16.mxu0 0
        %1069 = vmatpush1.bf16.msra.mxu0 0
        %1070 = vmatprep.subr.bf16.mxu0 0
        %1071 = vmatpush1.bf16.msra.mxu0 0
        %1072 = vmatprep.subr.bf16.mxu0 0
        %1073 = vmatpush1.bf16.msra.mxu0 0
        %1074 = vmatprep.subr.bf16.mxu0 0
        %1075 = vmatpush1.bf16.msra.mxu0 0
        %1076 = vmatprep.subr.bf16.mxu0 0
        %1077 = vmatpush1.bf16.msra.mxu0 0
        %1078 = vmatprep.subr.bf16.mxu0 0
        %1079 = vmatpush1.bf16.msra.mxu0 0
        %1080 = vmatprep.subr.bf16.mxu0 0
        %1081 = vmatpush1.bf16.msra.mxu0 0
        %1082 = vmatprep.subr.bf16.mxu0 0
        %1083 = vmatpush1.bf16.msra.mxu0 0
        %1084 = vmatprep.subr.bf16.mxu0 0
        %1085 = vmatpush1.bf16.msra.mxu0 0
        %1086 = vmatprep.subr.bf16.mxu0 0
        %1087 = vmatpush1.bf16.msra.mxu0 0
        %1088 = vmatprep.subr.bf16.mxu0 0
        %1089 = vmatpush1.bf16.msra.mxu0 0
        %1090 = vmatprep.mubr.bf16.mxu0 0
        %1091 = vmatmul.mubr.bf16.gmra.mrb[0].mxu0 %v1011
        %v1092 = vpop.f32.mrb[0].mxu0
        %v1093 = vadd.f32 %v860, %v1092
        %v1094 = vpop.f32.mrb[0].mxu0
        %v1095 = vpop.f32.mrb[0].mxu0
        %v1096 = vadd.f32 %v863, %v1095
        %v1097 = vpop.f32.mrb[0].mxu0
        %1098 = vmatprep.mubr.bf16.mxu0 0
        %1099 = vmatmul.mubr.bf16.gmra.mrb[0].mxu0 %v1014
        %v1100 = vpop.f32.mrb[0].mxu0
        %v1101 = vadd.f32 %v868, %v1100
        %v1102 = vpop.f32.mrb[0].mxu0
        %v1103 = vpop.f32.mrb[0].mxu0
        %v1104 = vadd.f32 %v871, %v1103
        %v1105 = vpop.f32.mrb[0].mxu0
        %1106 = vmatprep.mubr.bf16.mxu0 0
        %1107 = vmatmul.mubr.bf16.gmra.mrb[0].mxu0 %v1017
        %v1108 = vpop.f32.mrb[0].mxu0
        %v1109 = vadd.f32 %v876, %v1108
        %v1110 = vpop.f32.mrb[0].mxu0
        %v1111 = vpop.f32.mrb[0].mxu0
        %v1112 = vadd.f32 %v879, %v1111
        %v1113 = vpop.f32.mrb[0].mxu0
        %1114 = vmatprep.mubr.bf16.mxu0 0
        %1115 = vmatmul.mubr.bf16.gmra.mrb[0].mxu0 %v1020
        %v1116 = vpop.f32.mrb[0].mxu0
        %v1117 = vadd.f32 %v884, %v1116
        %v1118 = vpop.f32.mrb[0].mxu0
        %v1119 = vpop.f32.mrb[0].mxu0
        %v1120 = vadd.f32 %v887, %v1119
        %v1121 = vpop.f32.mrb[0].mxu0
        %1122 = vmatprep.mubr.bf16.mxu0 0
        %1123 = vmatmul.mubr.bf16.gmra.mrb[0].mxu0 %v1023
        %v1124 = vpop.f32.mrb[0].mxu0
        %v1125 = vadd.f32 %v892, %v1124
        %v1126 = vpop.f32.mrb[0].mxu0
        %v1127 = vpop.f32.mrb[0].mxu0
        %v1128 = vadd.f32 %v895, %v1127
        %v1129 = vpop.f32.mrb[0].mxu0
        %1130 = vmatprep.mubr.bf16.mxu0 0
        %1131 = vmatmul.mubr.bf16.gmra.mrb[0].mxu0 %v1026
        %v1132 = vpop.f32.mrb[0].mxu0
        %v1133 = vadd.f32 %v900, %v1132
        %v1134 = vpop.f32.mrb[0].mxu0
        %v1135 = vpop.f32.mrb[0].mxu0
        %v1136 = vadd.f32 %v903, %v1135
        %v1137 = vpop.f32.mrb[0].mxu0
        %1138 = vmatprep.mubr.bf16.mxu0 0
        %1139 = vmatmul.mubr.bf16.gmra.mrb[0].mxu0 %v1029
        %v1140 = vpop.f32.mrb[0].mxu0
        %v1141 = vadd.f32 %v908, %v1140
        %v1142 = vpop.f32.mrb[0].mxu0
        %v1143 = vpop.f32.mrb[0].mxu0
        %v1144 = vadd.f32 %v911, %v1143
        %v1145 = vpop.f32.mrb[0].mxu0
        %1146 = vmatprep.mubr.bf16.mxu0 0
        %1147 = vmatmul.mubr.bf16.gmra.mrb[0].mxu0 %v1032
        %v1148 = vpop.f32.mrb[0].mxu0
        %v1149 = vadd.f32 %v916, %v1148
        %v1150 = vpop.f32.mrb[0].mxu0
        %v1151 = vpop.f32.mrb[0].mxu0
        %v1152 = vadd.f32 %v919, %v1151
        %v1153 = vpop.f32.mrb[0].mxu0
        %1154 = vmatprep.mubr.bf16.mxu0 0
        %1155 = vmatmul.mubr.bf16.gmra.mrb[0].mxu0 %v1035
        %v1156 = vpop.f32.mrb[0].mxu0
        %v1157 = vadd.f32 %v924, %v1156
        %v1158 = vpop.f32.mrb[0].mxu0
        %v1159 = vpop.f32.mrb[0].mxu0
        %v1160 = vadd.f32 %v927, %v1159
        %v1161 = vpop.f32.mrb[0].mxu0
        %1162 = vmatprep.mubr.bf16.mxu0 0
        %1163 = vmatmul.mubr.bf16.gmra.mrb[0].mxu0 %v1038
        %v1164 = vpop.f32.mrb[0].mxu0
        %v1165 = vadd.f32 %v932, %v1164
        %v1166 = vpop.f32.mrb[0].mxu0
        %v1167 = vpop.f32.mrb[0].mxu0
        %v1168 = vadd.f32 %v935, %v1167
        %v1169 = vpop.f32.mrb[0].mxu0
        %1170 = vmatprep.mubr.bf16.mxu0 0
        %1171 = vmatmul.mubr.bf16.gmra.mrb[0].mxu0 %v1041
        %v1172 = vpop.f32.mrb[0].mxu0
        %v1173 = vadd.f32 %v940, %v1172
        %v1174 = vpop.f32.mrb[0].mxu0
        %v1175 = vpop.f32.mrb[0].mxu0
        %v1176 = vadd.f32 %v943, %v1175
        %v1177 = vpop.f32.mrb[0].mxu0
        %1178 = vmatprep.mubr.bf16.mxu0 0
        %1179 = vmatmul.mubr.bf16.gmra.mrb[0].mxu0 %v1044
        %v1180 = vpop.f32.mrb[0].mxu0
        %v1181 = vadd.f32 %v948, %v1180
        %v1182 = vpop.f32.mrb[0].mxu0
        %v1183 = vpop.f32.mrb[0].mxu0
        %v1184 = vadd.f32 %v951, %v1183
        %v1185 = vpop.f32.mrb[0].mxu0
        %1186 = vmatprep.mubr.bf16.mxu0 0
        %1187 = vmatmul.mubr.bf16.gmra.mrb[0].mxu0 %v1047
        %v1188 = vpop.f32.mrb[0].mxu0
        %v1189 = vadd.f32 %v956, %v1188
        %v1190 = vpop.f32.mrb[0].mxu0
        %v1191 = vpop.f32.mrb[0].mxu0
        %v1192 = vadd.f32 %v959, %v1191
        %v1193 = vpop.f32.mrb[0].mxu0
        %1194 = vmatprep.mubr.bf16.mxu0 0
        %1195 = vmatmul.mubr.bf16.gmra.mrb[0].mxu0 %v1050
        %v1196 = vpop.f32.mrb[0].mxu0
        %v1197 = vadd.f32 %v964, %v1196
        %v1198 = vpop.f32.mrb[0].mxu0
        %v1199 = vpop.f32.mrb[0].mxu0
        %v1200 = vadd.f32 %v967, %v1199
        %v1201 = vpop.f32.mrb[0].mxu0
        %1202 = vmatprep.mubr.bf16.mxu0 0
        %1203 = vmatmul.mubr.bf16.gmra.mrb[0].mxu0 %v1053
        %v1204 = vpop.f32.mrb[0].mxu0
        %v1205 = vadd.f32 %v972, %v1204
        %v1206 = vpop.f32.mrb[0].mxu0
        %v1207 = vpop.f32.mrb[0].mxu0
        %v1208 = vadd.f32 %v975, %v1207
        %v1209 = vpop.f32.mrb[0].mxu0
        %1210 = vmatprep.mubr.bf16.mxu0 0
        %1211 = vmatmul.mubr.bf16.gmra.mrb[0].mxu0 %v1056
        %v1212 = vpop.f32.mrb[0].mxu0
        %v1213 = vadd.f32 %v980, %v1212
        %v1214 = vpop.f32.mrb[0].mxu0
        %v1215 = vpop.f32.mrb[0].mxu0
        %v1216 = vadd.f32 %v983, %v1215
        %v1217 = vpop.f32.mrb[0].mxu0
        %1218 = vdwg.mxu0
        %v1219 = vpack.c.bf16 %v611, %v609
        %v1220 = vpack.c.bf16 %v695, %v613
        %v1221 = vpack.c.bf16 %v618, %v616
        %v1222 = vpack.c.bf16 %v696, %v620
        %v1223 = vpack.c.bf16 %v625, %v623
        %v1224 = vpack.c.bf16 %v697, %v627
        %v1225 = vpack.c.bf16 %v632, %v630
        %v1226 = vpack.c.bf16 %v698, %v634
        %v1227 = vpack.c.bf16 %v639, %v637
        %v1228 = vpack.c.bf16 %v699, %v641
        %v1229 = vpack.c.bf16 %v646, %v644
        %v1230 = vpack.c.bf16 %v700, %v648
        %v1231 = vpack.c.bf16 %v653, %v651
        %v1232 = vpack.c.bf16 %v701, %v655
        %v1233 = vpack.c.bf16 %v660, %v658
        %v1234 = vpack.c.bf16 %v702, %v662
        %s1235 = scalar_lea.vmem %s1, 64
        %v1236 = vld [vmem:[%s1235] sm:$0xf]
        %v1237 = vld [vmem:[%s1235 + $0x4] sm:$0xf]
        %v1238 = vld [vmem:[%s1235 + $0x8] sm:$0xf]
        %v1239 = vld [vmem:[%s1235 + $0xc] sm:$0xf]
        %v1240 = vld [vmem:[%s1235 + $0x10] sm:$0xf]
        %v1241 = vld [vmem:[%s1235 + $0x14] sm:$0xf]
        %v1242 = vld [vmem:[%s1235 + $0x18] sm:$0xf]
        %v1243 = vld [vmem:[%s1235 + $0x1c] sm:$0xf]
        %v1252 = vunpack.c.l.b16 %v1236
        %v1253 = vunpack.c.l.b16 %v1237
        %v1254 = vunpack.c.l.b16 %v1238
        %v1255 = vunpack.c.l.b16 %v1239
        %v1256 = vunpack.c.l.b16 %v1240
        %v1257 = vunpack.c.l.b16 %v1241
        %v1258 = vunpack.c.l.b16 %v1242
        %v1259 = vunpack.c.l.b16 %v1243
        %v1260 = vpack.c.b16 %v1253, %v1252
        %v1261 = vpack.c.b16 %v1255, %v1254
        %v1262 = vpack.c.b16 %v1257, %v1256
        %v1263 = vpack.c.b16 %v1259, %v1258
        %v1269 = vsel %vm776, %v1219, 0
        %v1272 = vsel %vm776, %v1220, 0
        %v1275 = vsel %vm776, %v1221, 0
        %v1278 = vsel %vm776, %v1222, 0
        %v1281 = vsel %vm776, %v1223, 0
        %v1284 = vsel %vm776, %v1224, 0
        %v1287 = vsel %vm776, %v1225, 0
        %v1290 = vsel %vm776, %v1226, 0
        %v1293 = vsel %vm776, %v1227, 0
        %v1296 = vsel %vm776, %v1228, 0
        %v1299 = vsel %vm776, %v1229, 0
        %v1302 = vsel %vm776, %v1230, 0
        %v1305 = vsel %vm776, %v1231, 0
        %v1308 = vsel %vm776, %v1232, 0
        %v1311 = vsel %vm776, %v1233, 0
        %v1314 = vsel %vm776, %v1234, 0
        %1316 = vmatprep.subr.bf16.mxu0 0
        %1317 = vmatpush1.bf16.msra.mxu0 %v1260
        %1318 = vmatprep.subr.bf16.mxu0 0
        %1319 = vmatpush1.bf16.msra.mxu0 %v1261
        %1320 = vmatprep.subr.bf16.mxu0 0
        %1321 = vmatpush1.bf16.msra.mxu0 %v1262
        %1322 = vmatprep.subr.bf16.mxu0 0
        %1323 = vmatpush1.bf16.msra.mxu0 %v1263
        %1324 = vmatprep.subr.bf16.mxu0 0
        %1325 = vmatpush1.bf16.msra.mxu0 0
        %1326 = vmatprep.subr.bf16.mxu0 0
        %1327 = vmatpush1.bf16.msra.mxu0 0
        %1328 = vmatprep.subr.bf16.mxu0 0
        %1329 = vmatpush1.bf16.msra.mxu0 0
        %1330 = vmatprep.subr.bf16.mxu0 0
        %1331 = vmatpush1.bf16.msra.mxu0 0
        %1332 = vmatprep.subr.bf16.mxu0 0
        %1333 = vmatpush1.bf16.msra.mxu0 0
        %1334 = vmatprep.subr.bf16.mxu0 0
        %1335 = vmatpush1.bf16.msra.mxu0 0
        %1336 = vmatprep.subr.bf16.mxu0 0
        %1337 = vmatpush1.bf16.msra.mxu0 0
        %1338 = vmatprep.subr.bf16.mxu0 0
        %1339 = vmatpush1.bf16.msra.mxu0 0
        %1340 = vmatprep.subr.bf16.mxu0 0
        %1341 = vmatpush1.bf16.msra.mxu0 0
        %1342 = vmatprep.subr.bf16.mxu0 0
        %1343 = vmatpush1.bf16.msra.mxu0 0
        %1344 = vmatprep.subr.bf16.mxu0 0
        %1345 = vmatpush1.bf16.msra.mxu0 0
        %1346 = vmatprep.subr.bf16.mxu0 0
        %1347 = vmatpush1.bf16.msra.mxu0 0
        %1348 = vmatprep.mubr.bf16.mxu0 0
        %1349 = vmatmul.mubr.bf16.gmra.mrb[0].mxu0 %v1269
        %v1350 = vpop.f32.mrb[0].mxu0
        %v1351 = vadd.f32 0.0, %v1350
        %v1352 = vpop.f32.mrb[0].mxu0
        %v1353 = vpop.f32.mrb[0].mxu0
        %v1354 = vadd.f32 0.0, %v1353
        %v1355 = vpop.f32.mrb[0].mxu0
        %1356 = vmatprep.mubr.bf16.mxu0 0
        %1357 = vmatmul.mubr.bf16.gmra.mrb[0].mxu0 %v1272
        %v1358 = vpop.f32.mrb[0].mxu0
        %v1359 = vadd.f32 0.0, %v1358
        %v1360 = vpop.f32.mrb[0].mxu0
        %v1361 = vpop.f32.mrb[0].mxu0
        %v1362 = vadd.f32 0.0, %v1361
        %v1363 = vpop.f32.mrb[0].mxu0
        %1364 = vmatprep.mubr.bf16.mxu0 0
        %1365 = vmatmul.mubr.bf16.gmra.mrb[0].mxu0 %v1275
        %v1366 = vpop.f32.mrb[0].mxu0
        %v1367 = vadd.f32 0.0, %v1366
        %v1368 = vpop.f32.mrb[0].mxu0
        %v1369 = vpop.f32.mrb[0].mxu0
        %v1370 = vadd.f32 0.0, %v1369
        %v1371 = vpop.f32.mrb[0].mxu0
        %1372 = vmatprep.mubr.bf16.mxu0 0
        %1373 = vmatmul.mubr.bf16.gmra.mrb[0].mxu0 %v1278
        %v1374 = vpop.f32.mrb[0].mxu0
        %v1375 = vadd.f32 0.0, %v1374
        %v1376 = vpop.f32.mrb[0].mxu0
        %v1377 = vpop.f32.mrb[0].mxu0
        %v1378 = vadd.f32 0.0, %v1377
        %v1379 = vpop.f32.mrb[0].mxu0
        %1380 = vmatprep.mubr.bf16.mxu0 0
        %1381 = vmatmul.mubr.bf16.gmra.mrb[0].mxu0 %v1281
        %v1382 = vpop.f32.mrb[0].mxu0
        %v1383 = vadd.f32 0.0, %v1382
        %v1384 = vpop.f32.mrb[0].mxu0
        %v1385 = vpop.f32.mrb[0].mxu0
        %v1386 = vadd.f32 0.0, %v1385
        %v1387 = vpop.f32.mrb[0].mxu0
        %1388 = vmatprep.mubr.bf16.mxu0 0
        %1389 = vmatmul.mubr.bf16.gmra.mrb[0].mxu0 %v1284
        %v1390 = vpop.f32.mrb[0].mxu0
        %v1391 = vadd.f32 0.0, %v1390
        %v1392 = vpop.f32.mrb[0].mxu0
        %v1393 = vpop.f32.mrb[0].mxu0
        %v1394 = vadd.f32 0.0, %v1393
        %v1395 = vpop.f32.mrb[0].mxu0
        %1396 = vmatprep.mubr.bf16.mxu0 0
        %1397 = vmatmul.mubr.bf16.gmra.mrb[0].mxu0 %v1287
        %v1398 = vpop.f32.mrb[0].mxu0
        %v1399 = vadd.f32 0.0, %v1398
        %v1400 = vpop.f32.mrb[0].mxu0
        %v1401 = vpop.f32.mrb[0].mxu0
        %v1402 = vadd.f32 0.0, %v1401
        %v1403 = vpop.f32.mrb[0].mxu0
        %1404 = vmatprep.mubr.bf16.mxu0 0
        %1405 = vmatmul.mubr.bf16.gmra.mrb[0].mxu0 %v1290
        %v1406 = vpop.f32.mrb[0].mxu0
        %v1407 = vadd.f32 0.0, %v1406
        %v1408 = vpop.f32.mrb[0].mxu0
        %v1409 = vpop.f32.mrb[0].mxu0
        %v1410 = vadd.f32 0.0, %v1409
        %v1411 = vpop.f32.mrb[0].mxu0
        %1412 = vmatprep.mubr.bf16.mxu0 0
        %1413 = vmatmul.mubr.bf16.gmra.mrb[0].mxu0 %v1293
        %v1414 = vpop.f32.mrb[0].mxu0
        %v1415 = vadd.f32 0.0, %v1414
        %v1416 = vpop.f32.mrb[0].mxu0
        %v1417 = vpop.f32.mrb[0].mxu0
        %v1418 = vadd.f32 0.0, %v1417
        %v1419 = vpop.f32.mrb[0].mxu0
        %1420 = vmatprep.mubr.bf16.mxu0 0
        %1421 = vmatmul.mubr.bf16.gmra.mrb[0].mxu0 %v1296
        %v1422 = vpop.f32.mrb[0].mxu0
        %v1423 = vadd.f32 0.0, %v1422
        %v1424 = vpop.f32.mrb[0].mxu0
        %v1425 = vpop.f32.mrb[0].mxu0
        %v1426 = vadd.f32 0.0, %v1425
        %v1427 = vpop.f32.mrb[0].mxu0
        %1428 = vmatprep.mubr.bf16.mxu0 0
        %1429 = vmatmul.mubr.bf16.gmra.mrb[0].mxu0 %v1299
        %v1430 = vpop.f32.mrb[0].mxu0
        %v1431 = vadd.f32 0.0, %v1430
        %v1432 = vpop.f32.mrb[0].mxu0
        %v1433 = vpop.f32.mrb[0].mxu0
        %v1434 = vadd.f32 0.0, %v1433
        %v1435 = vpop.f32.mrb[0].mxu0
        %1436 = vmatprep.mubr.bf16.mxu0 0
        %1437 = vmatmul.mubr.bf16.gmra.mrb[0].mxu0 %v1302
        %v1438 = vpop.f32.mrb[0].mxu0
        %v1439 = vadd.f32 0.0, %v1438
        %v1440 = vpop.f32.mrb[0].mxu0
        %v1441 = vpop.f32.mrb[0].mxu0
        %v1442 = vadd.f32 0.0, %v1441
        %v1443 = vpop.f32.mrb[0].mxu0
        %1444 = vmatprep.mubr.bf16.mxu0 0
        %1445 = vmatmul.mubr.bf16.gmra.mrb[0].mxu0 %v1305
        %v1446 = vpop.f32.mrb[0].mxu0
        %v1447 = vadd.f32 0.0, %v1446
        %v1448 = vpop.f32.mrb[0].mxu0
        %v1449 = vpop.f32.mrb[0].mxu0
        %v1450 = vadd.f32 0.0, %v1449
        %v1451 = vpop.f32.mrb[0].mxu0
        %1452 = vmatprep.mubr.bf16.mxu0 0
        %1453 = vmatmul.mubr.bf16.gmra.mrb[0].mxu0 %v1308
        %v1454 = vpop.f32.mrb[0].mxu0
        %v1455 = vadd.f32 0.0, %v1454
        %v1456 = vpop.f32.mrb[0].mxu0
        %v1457 = vpop.f32.mrb[0].mxu0
        %v1458 = vadd.f32 0.0, %v1457
        %v1459 = vpop.f32.mrb[0].mxu0
        %1460 = vmatprep.mubr.bf16.mxu0 0
        %1461 = vmatmul.mubr.bf16.gmra.mrb[0].mxu0 %v1311
        %v1462 = vpop.f32.mrb[0].mxu0
        %v1463 = vadd.f32 0.0, %v1462
        %v1464 = vpop.f32.mrb[0].mxu0
        %v1465 = vpop.f32.mrb[0].mxu0
        %v1466 = vadd.f32 0.0, %v1465
        %v1467 = vpop.f32.mrb[0].mxu0
        %1468 = vmatprep.mubr.bf16.mxu0 0
        %1469 = vmatmul.mubr.bf16.gmra.mrb[0].mxu0 %v1314
        %v1470 = vpop.f32.mrb[0].mxu0
        %v1471 = vadd.f32 0.0, %v1470
        %v1472 = vpop.f32.mrb[0].mxu0
        %v1473 = vpop.f32.mrb[0].mxu0
        %v1474 = vadd.f32 0.0, %v1473
        %v1475 = vpop.f32.mrb[0].mxu0
        %1476 = vdwg.mxu0
        %v1477 = vadd.f32 %v1093, %v1351
        %v1478 = vadd.f32 %v1096, %v1354
        %v1479 = vadd.f32 %v1101, %v1359
        %v1480 = vadd.f32 %v1104, %v1362
        %v1481 = vadd.f32 %v1109, %v1367
        %v1482 = vadd.f32 %v1112, %v1370
        %v1483 = vadd.f32 %v1117, %v1375
        %v1484 = vadd.f32 %v1120, %v1378
        %v1485 = vadd.f32 %v1125, %v1383
        %v1486 = vadd.f32 %v1128, %v1386
        %v1487 = vadd.f32 %v1133, %v1391
        %v1488 = vadd.f32 %v1136, %v1394
        %v1489 = vadd.f32 %v1141, %v1399
        %v1490 = vadd.f32 %v1144, %v1402
        %v1491 = vadd.f32 %v1149, %v1407
        %v1492 = vadd.f32 %v1152, %v1410
        %v1493 = vadd.f32 %v1157, %v1415
        %v1494 = vadd.f32 %v1160, %v1418
        %v1495 = vadd.f32 %v1165, %v1423
        %v1496 = vadd.f32 %v1168, %v1426
        %v1497 = vadd.f32 %v1173, %v1431
        %v1498 = vadd.f32 %v1176, %v1434
        %v1499 = vadd.f32 %v1181, %v1439
        %v1500 = vadd.f32 %v1184, %v1442
        %v1501 = vadd.f32 %v1189, %v1447
        %v1502 = vadd.f32 %v1192, %v1450
        %v1503 = vadd.f32 %v1197, %v1455
        %v1504 = vadd.f32 %v1200, %v1458
        %v1505 = vadd.f32 %v1205, %v1463
        %v1506 = vadd.f32 %v1208, %v1466
        %v1507 = vadd.f32 %v1213, %v1471
        %v1508 = vadd.f32 %v1216, %v1474
        %v1509 = vld [vmem:[%s2] sm:$0x1]
        %v1511 = vlaneseq
        %v1512 = vshrl.u32 %v1511, 7
        %v1513 = vsub.s32 0, %v1512
        %v1514 = vrot.slane %v1509, %v1513
        %v1516 = vadd.f32 %v1477, %v1514
        %v1517 = vadd.f32 %v1478, %v1514
        %v1518 = vadd.f32 %v1479, %v1514
        %v1519 = vadd.f32 %v1480, %v1514
        %v1520 = vadd.f32 %v1481, %v1514
        %v1521 = vadd.f32 %v1482, %v1514
        %v1522 = vadd.f32 %v1483, %v1514
        %v1523 = vadd.f32 %v1484, %v1514
        %v1524 = vadd.f32 %v1485, %v1514
        %v1525 = vadd.f32 %v1486, %v1514
        %v1526 = vadd.f32 %v1487, %v1514
        %v1527 = vadd.f32 %v1488, %v1514
        %v1528 = vadd.f32 %v1489, %v1514
        %v1529 = vadd.f32 %v1490, %v1514
        %v1530 = vadd.f32 %v1491, %v1514
        %v1531 = vadd.f32 %v1492, %v1514
        %v1532 = vadd.f32 %v1493, %v1514
        %v1533 = vadd.f32 %v1494, %v1514
        %v1534 = vadd.f32 %v1495, %v1514
        %v1535 = vadd.f32 %v1496, %v1514
        %v1536 = vadd.f32 %v1497, %v1514
        %v1537 = vadd.f32 %v1498, %v1514
        %v1538 = vadd.f32 %v1499, %v1514
        %v1539 = vadd.f32 %v1500, %v1514
        %v1540 = vadd.f32 %v1501, %v1514
        %v1541 = vadd.f32 %v1502, %v1514
        %v1542 = vadd.f32 %v1503, %v1514
        %v1543 = vadd.f32 %v1504, %v1514
        %v1544 = vadd.f32 %v1505, %v1514
        %v1545 = vadd.f32 %v1506, %v1514
        %v1546 = vadd.f32 %v1507, %v1514
        %v1547 = vadd.f32 %v1508, %v1514
        %v1580 = vcombine.high %v1516, %v1516
        %v1582 = vunpack.c.l.s4 1983009808
        %v1583 = vunpack.c.0.s8 %v1582
        %v1584 = vlaneseq
        %v1585 = vshrl.u32 %v1584, 7
        %v1586 = vsub.s32 %v1583, %v1585
        %v1587 = vrot.slane %v1516, %v1586
        %v1589 = vunpack.c.l.s4 1983009808
        %v1590 = vunpack.c.0.s8 %v1589
        %v1591 = vlaneseq
        %v1592 = vshrl.u32 %v1591, 7
        %v1593 = vsub.s32 %v1590, %v1592
        %v1594 = vrot.slane %v1580, %v1593
        %v1595 = vcombine.high %v1587, %v1587
        %v1596 = vcombine.high %v1594, %v1594
        %v1597 = vcombine.high %v1517, %v1517
        %v1599 = vunpack.c.l.s4 1983009808
        %v1600 = vunpack.c.0.s8 %v1599
        %v1601 = vlaneseq
        %v1602 = vshrl.u32 %v1601, 7
        %v1603 = vsub.s32 %v1600, %v1602
        %v1604 = vrot.slane %v1517, %v1603
        %v1606 = vunpack.c.l.s4 1983009808
        %v1607 = vunpack.c.0.s8 %v1606
        %v1608 = vlaneseq
        %v1609 = vshrl.u32 %v1608, 7
        %v1610 = vsub.s32 %v1607, %v1609
        %v1611 = vrot.slane %v1597, %v1610
        %v1612 = vcombine.high %v1604, %v1604
        %v1613 = vcombine.high %v1611, %v1611
        %v1614 = vcombine.high %v1518, %v1518
        %v1616 = vunpack.c.l.s4 1983009808
        %v1617 = vunpack.c.0.s8 %v1616
        %v1618 = vlaneseq
        %v1619 = vshrl.u32 %v1618, 7
        %v1620 = vsub.s32 %v1617, %v1619
        %v1621 = vrot.slane %v1518, %v1620
        %v1623 = vunpack.c.l.s4 1983009808
        %v1624 = vunpack.c.0.s8 %v1623
        %v1625 = vlaneseq
        %v1626 = vshrl.u32 %v1625, 7
        %v1627 = vsub.s32 %v1624, %v1626
        %v1628 = vrot.slane %v1614, %v1627
        %v1629 = vcombine.high %v1621, %v1621
        %v1630 = vcombine.high %v1628, %v1628
        %v1631 = vcombine.high %v1519, %v1519
        %v1633 = vunpack.c.l.s4 1983009808
        %v1634 = vunpack.c.0.s8 %v1633
        %v1635 = vlaneseq
        %v1636 = vshrl.u32 %v1635, 7
        %v1637 = vsub.s32 %v1634, %v1636
        %v1638 = vrot.slane %v1519, %v1637
        %v1640 = vunpack.c.l.s4 1983009808
        %v1641 = vunpack.c.0.s8 %v1640
        %v1642 = vlaneseq
        %v1643 = vshrl.u32 %v1642, 7
        %v1644 = vsub.s32 %v1641, %v1643
        %v1645 = vrot.slane %v1631, %v1644
        %v1646 = vcombine.high %v1638, %v1638
        %v1647 = vcombine.high %v1645, %v1645
        %v1648 = vcombine.high %v1520, %v1520
        %v1650 = vunpack.c.l.s4 1983009808
        %v1651 = vunpack.c.0.s8 %v1650
        %v1652 = vlaneseq
        %v1653 = vshrl.u32 %v1652, 7
        %v1654 = vsub.s32 %v1651, %v1653
        %v1655 = vrot.slane %v1520, %v1654
        %v1657 = vunpack.c.l.s4 1983009808
        %v1658 = vunpack.c.0.s8 %v1657
        %v1659 = vlaneseq
        %v1660 = vshrl.u32 %v1659, 7
        %v1661 = vsub.s32 %v1658, %v1660
        %v1662 = vrot.slane %v1648, %v1661
        %v1663 = vcombine.high %v1655, %v1655
        %v1664 = vcombine.high %v1662, %v1662
        %v1665 = vcombine.high %v1521, %v1521
        %v1667 = vunpack.c.l.s4 1983009808
        %v1668 = vunpack.c.0.s8 %v1667
        %v1669 = vlaneseq
        %v1670 = vshrl.u32 %v1669, 7
        %v1671 = vsub.s32 %v1668, %v1670
        %v1672 = vrot.slane %v1521, %v1671
        %v1674 = vunpack.c.l.s4 1983009808
        %v1675 = vunpack.c.0.s8 %v1674
        %v1676 = vlaneseq
        %v1677 = vshrl.u32 %v1676, 7
        %v1678 = vsub.s32 %v1675, %v1677
        %v1679 = vrot.slane %v1665, %v1678
        %v1680 = vcombine.high %v1672, %v1672
        %v1681 = vcombine.high %v1679, %v1679
        %v1682 = vcombine.high %v1522, %v1522
        %v1684 = vunpack.c.l.s4 1983009808
        %v1685 = vunpack.c.0.s8 %v1684
        %v1686 = vlaneseq
        %v1687 = vshrl.u32 %v1686, 7
        %v1688 = vsub.s32 %v1685, %v1687
        %v1689 = vrot.slane %v1522, %v1688
        %v1691 = vunpack.c.l.s4 1983009808
        %v1692 = vunpack.c.0.s8 %v1691
        %v1693 = vlaneseq
        %v1694 = vshrl.u32 %v1693, 7
        %v1695 = vsub.s32 %v1692, %v1694
        %v1696 = vrot.slane %v1682, %v1695
        %v1697 = vcombine.high %v1689, %v1689
        %v1698 = vcombine.high %v1696, %v1696
        %v1699 = vcombine.high %v1523, %v1523
        %v1701 = vunpack.c.l.s4 1983009808
        %v1702 = vunpack.c.0.s8 %v1701
        %v1703 = vlaneseq
        %v1704 = vshrl.u32 %v1703, 7
        %v1705 = vsub.s32 %v1702, %v1704
        %v1706 = vrot.slane %v1523, %v1705
        %v1708 = vunpack.c.l.s4 1983009808
        %v1709 = vunpack.c.0.s8 %v1708
        %v1710 = vlaneseq
        %v1711 = vshrl.u32 %v1710, 7
        %v1712 = vsub.s32 %v1709, %v1711
        %v1713 = vrot.slane %v1699, %v1712
        %v1714 = vcombine.high %v1706, %v1706
        %v1715 = vcombine.high %v1713, %v1713
        %v1716 = vcombine.high %v1524, %v1524
        %v1718 = vunpack.c.l.s4 1983009808
        %v1719 = vunpack.c.0.s8 %v1718
        %v1720 = vlaneseq
        %v1721 = vshrl.u32 %v1720, 7
        %v1722 = vsub.s32 %v1719, %v1721
        %v1723 = vrot.slane %v1524, %v1722
        %v1725 = vunpack.c.l.s4 1983009808
        %v1726 = vunpack.c.0.s8 %v1725
        %v1727 = vlaneseq
        %v1728 = vshrl.u32 %v1727, 7
        %v1729 = vsub.s32 %v1726, %v1728
        %v1730 = vrot.slane %v1716, %v1729
        %v1731 = vcombine.high %v1723, %v1723
        %v1732 = vcombine.high %v1730, %v1730
        %v1733 = vcombine.high %v1525, %v1525
        %v1735 = vunpack.c.l.s4 1983009808
        %v1736 = vunpack.c.0.s8 %v1735
        %v1737 = vlaneseq
        %v1738 = vshrl.u32 %v1737, 7
        %v1739 = vsub.s32 %v1736, %v1738
        %v1740 = vrot.slane %v1525, %v1739
        %v1742 = vunpack.c.l.s4 1983009808
        %v1743 = vunpack.c.0.s8 %v1742
        %v1744 = vlaneseq
        %v1745 = vshrl.u32 %v1744, 7
        %v1746 = vsub.s32 %v1743, %v1745
        %v1747 = vrot.slane %v1733, %v1746
        %v1748 = vcombine.high %v1740, %v1740
        %v1749 = vcombine.high %v1747, %v1747
        %v1750 = vcombine.high %v1526, %v1526
        %v1752 = vunpack.c.l.s4 1983009808
        %v1753 = vunpack.c.0.s8 %v1752
        %v1754 = vlaneseq
        %v1755 = vshrl.u32 %v1754, 7
        %v1756 = vsub.s32 %v1753, %v1755
        %v1757 = vrot.slane %v1526, %v1756
        %v1759 = vunpack.c.l.s4 1983009808
        %v1760 = vunpack.c.0.s8 %v1759
        %v1761 = vlaneseq
        %v1762 = vshrl.u32 %v1761, 7
        %v1763 = vsub.s32 %v1760, %v1762
        %v1764 = vrot.slane %v1750, %v1763
        %v1765 = vcombine.high %v1757, %v1757
        %v1766 = vcombine.high %v1764, %v1764
        %v1767 = vcombine.high %v1527, %v1527
        %v1769 = vunpack.c.l.s4 1983009808
        %v1770 = vunpack.c.0.s8 %v1769
        %v1771 = vlaneseq
        %v1772 = vshrl.u32 %v1771, 7
        %v1773 = vsub.s32 %v1770, %v1772
        %v1774 = vrot.slane %v1527, %v1773
        %v1776 = vunpack.c.l.s4 1983009808
        %v1777 = vunpack.c.0.s8 %v1776
        %v1778 = vlaneseq
        %v1779 = vshrl.u32 %v1778, 7
        %v1780 = vsub.s32 %v1777, %v1779
        %v1781 = vrot.slane %v1767, %v1780
        %v1782 = vcombine.high %v1774, %v1774
        %v1783 = vcombine.high %v1781, %v1781
        %v1784 = vcombine.high %v1528, %v1528
        %v1786 = vunpack.c.l.s4 1983009808
        %v1787 = vunpack.c.0.s8 %v1786
        %v1788 = vlaneseq
        %v1789 = vshrl.u32 %v1788, 7
        %v1790 = vsub.s32 %v1787, %v1789
        %v1791 = vrot.slane %v1528, %v1790
        %v1793 = vunpack.c.l.s4 1983009808
        %v1794 = vunpack.c.0.s8 %v1793
        %v1795 = vlaneseq
        %v1796 = vshrl.u32 %v1795, 7
        %v1797 = vsub.s32 %v1794, %v1796
        %v1798 = vrot.slane %v1784, %v1797
        %v1799 = vcombine.high %v1791, %v1791
        %v1800 = vcombine.high %v1798, %v1798
        %v1801 = vcombine.high %v1529, %v1529
        %v1803 = vunpack.c.l.s4 1983009808
        %v1804 = vunpack.c.0.s8 %v1803
        %v1805 = vlaneseq
        %v1806 = vshrl.u32 %v1805, 7
        %v1807 = vsub.s32 %v1804, %v1806
        %v1808 = vrot.slane %v1529, %v1807
        %v1810 = vunpack.c.l.s4 1983009808
        %v1811 = vunpack.c.0.s8 %v1810
        %v1812 = vlaneseq
        %v1813 = vshrl.u32 %v1812, 7
        %v1814 = vsub.s32 %v1811, %v1813
        %v1815 = vrot.slane %v1801, %v1814
        %v1816 = vcombine.high %v1808, %v1808
        %v1817 = vcombine.high %v1815, %v1815
        %v1818 = vcombine.high %v1530, %v1530
        %v1820 = vunpack.c.l.s4 1983009808
        %v1821 = vunpack.c.0.s8 %v1820
        %v1822 = vlaneseq
        %v1823 = vshrl.u32 %v1822, 7
        %v1824 = vsub.s32 %v1821, %v1823
        %v1825 = vrot.slane %v1530, %v1824
        %v1827 = vunpack.c.l.s4 1983009808
        %v1828 = vunpack.c.0.s8 %v1827
        %v1829 = vlaneseq
        %v1830 = vshrl.u32 %v1829, 7
        %v1831 = vsub.s32 %v1828, %v1830
        %v1832 = vrot.slane %v1818, %v1831
        %v1833 = vcombine.high %v1825, %v1825
        %v1834 = vcombine.high %v1832, %v1832
        %v1835 = vcombine.high %v1531, %v1531
        %v1837 = vunpack.c.l.s4 1983009808
        %v1838 = vunpack.c.0.s8 %v1837
        %v1839 = vlaneseq
        %v1840 = vshrl.u32 %v1839, 7
        %v1841 = vsub.s32 %v1838, %v1840
        %v1842 = vrot.slane %v1531, %v1841
        %v1844 = vunpack.c.l.s4 1983009808
        %v1845 = vunpack.c.0.s8 %v1844
        %v1846 = vlaneseq
        %v1847 = vshrl.u32 %v1846, 7
        %v1848 = vsub.s32 %v1845, %v1847
        %v1849 = vrot.slane %v1835, %v1848
        %v1850 = vcombine.high %v1842, %v1842
        %v1851 = vcombine.high %v1849, %v1849
        %v1852 = vcombine.high %v1532, %v1532
        %v1854 = vunpack.c.l.s4 1983009808
        %v1855 = vunpack.c.0.s8 %v1854
        %v1856 = vlaneseq
        %v1857 = vshrl.u32 %v1856, 7
        %v1858 = vsub.s32 %v1855, %v1857
        %v1859 = vrot.slane %v1532, %v1858
        %v1861 = vunpack.c.l.s4 1983009808
        %v1862 = vunpack.c.0.s8 %v1861
        %v1863 = vlaneseq
        %v1864 = vshrl.u32 %v1863, 7
        %v1865 = vsub.s32 %v1862, %v1864
        %v1866 = vrot.slane %v1852, %v1865
        %v1867 = vcombine.high %v1859, %v1859
        %v1868 = vcombine.high %v1866, %v1866
        %v1869 = vcombine.high %v1533, %v1533
        %v1871 = vunpack.c.l.s4 1983009808
        %v1872 = vunpack.c.0.s8 %v1871
        %v1873 = vlaneseq
        %v1874 = vshrl.u32 %v1873, 7
        %v1875 = vsub.s32 %v1872, %v1874
        %v1876 = vrot.slane %v1533, %v1875
        %v1878 = vunpack.c.l.s4 1983009808
        %v1879 = vunpack.c.0.s8 %v1878
        %v1880 = vlaneseq
        %v1881 = vshrl.u32 %v1880, 7
        %v1882 = vsub.s32 %v1879, %v1881
        %v1883 = vrot.slane %v1869, %v1882
        %v1884 = vcombine.high %v1876, %v1876
        %v1885 = vcombine.high %v1883, %v1883
        %v1886 = vcombine.high %v1534, %v1534
        %v1888 = vunpack.c.l.s4 1983009808
        %v1889 = vunpack.c.0.s8 %v1888
        %v1890 = vlaneseq
        %v1891 = vshrl.u32 %v1890, 7
        %v1892 = vsub.s32 %v1889, %v1891
        %v1893 = vrot.slane %v1534, %v1892
        %v1895 = vunpack.c.l.s4 1983009808
        %v1896 = vunpack.c.0.s8 %v1895
        %v1897 = vlaneseq
        %v1898 = vshrl.u32 %v1897, 7
        %v1899 = vsub.s32 %v1896, %v1898
        %v1900 = vrot.slane %v1886, %v1899
        %v1901 = vcombine.high %v1893, %v1893
        %v1902 = vcombine.high %v1900, %v1900
        %v1903 = vcombine.high %v1535, %v1535
        %v1905 = vunpack.c.l.s4 1983009808
        %v1906 = vunpack.c.0.s8 %v1905
        %v1907 = vlaneseq
        %v1908 = vshrl.u32 %v1907, 7
        %v1909 = vsub.s32 %v1906, %v1908
        %v1910 = vrot.slane %v1535, %v1909
        %v1912 = vunpack.c.l.s4 1983009808
        %v1913 = vunpack.c.0.s8 %v1912
        %v1914 = vlaneseq
        %v1915 = vshrl.u32 %v1914, 7
        %v1916 = vsub.s32 %v1913, %v1915
        %v1917 = vrot.slane %v1903, %v1916
        %v1918 = vcombine.high %v1910, %v1910
        %v1919 = vcombine.high %v1917, %v1917
        %v1920 = vcombine.high %v1536, %v1536
        %v1922 = vunpack.c.l.s4 1983009808
        %v1923 = vunpack.c.0.s8 %v1922
        %v1924 = vlaneseq
        %v1925 = vshrl.u32 %v1924, 7
        %v1926 = vsub.s32 %v1923, %v1925
        %v1927 = vrot.slane %v1536, %v1926
        %v1929 = vunpack.c.l.s4 1983009808
        %v1930 = vunpack.c.0.s8 %v1929
        %v1931 = vlaneseq
        %v1932 = vshrl.u32 %v1931, 7
        %v1933 = vsub.s32 %v1930, %v1932
        %v1934 = vrot.slane %v1920, %v1933
        %v1935 = vcombine.high %v1927, %v1927
        %v1936 = vcombine.high %v1934, %v1934
        %v1937 = vcombine.high %v1537, %v1537
        %v1939 = vunpack.c.l.s4 1983009808
        %v1940 = vunpack.c.0.s8 %v1939
        %v1941 = vlaneseq
        %v1942 = vshrl.u32 %v1941, 7
        %v1943 = vsub.s32 %v1940, %v1942
        %v1944 = vrot.slane %v1537, %v1943
        %v1946 = vunpack.c.l.s4 1983009808
        %v1947 = vunpack.c.0.s8 %v1946
        %v1948 = vlaneseq
        %v1949 = vshrl.u32 %v1948, 7
        %v1950 = vsub.s32 %v1947, %v1949
        %v1951 = vrot.slane %v1937, %v1950
        %v1952 = vcombine.high %v1944, %v1944
        %v1953 = vcombine.high %v1951, %v1951
        %v1954 = vcombine.high %v1538, %v1538
        %v1956 = vunpack.c.l.s4 1983009808
        %v1957 = vunpack.c.0.s8 %v1956
        %v1958 = vlaneseq
        %v1959 = vshrl.u32 %v1958, 7
        %v1960 = vsub.s32 %v1957, %v1959
        %v1961 = vrot.slane %v1538, %v1960
        %v1963 = vunpack.c.l.s4 1983009808
        %v1964 = vunpack.c.0.s8 %v1963
        %v1965 = vlaneseq
        %v1966 = vshrl.u32 %v1965, 7
        %v1967 = vsub.s32 %v1964, %v1966
        %v1968 = vrot.slane %v1954, %v1967
        %v1969 = vcombine.high %v1961, %v1961
        %v1970 = vcombine.high %v1968, %v1968
        %v1971 = vcombine.high %v1539, %v1539
        %v1973 = vunpack.c.l.s4 1983009808
        %v1974 = vunpack.c.0.s8 %v1973
        %v1975 = vlaneseq
        %v1976 = vshrl.u32 %v1975, 7
        %v1977 = vsub.s32 %v1974, %v1976
        %v1978 = vrot.slane %v1539, %v1977
        %v1980 = vunpack.c.l.s4 1983009808
        %v1981 = vunpack.c.0.s8 %v1980
        %v1982 = vlaneseq
        %v1983 = vshrl.u32 %v1982, 7
        %v1984 = vsub.s32 %v1981, %v1983
        %v1985 = vrot.slane %v1971, %v1984
        %v1986 = vcombine.high %v1978, %v1978
        %v1987 = vcombine.high %v1985, %v1985
        %v1988 = vcombine.high %v1540, %v1540
        %v1990 = vunpack.c.l.s4 1983009808
        %v1991 = vunpack.c.0.s8 %v1990
        %v1992 = vlaneseq
        %v1993 = vshrl.u32 %v1992, 7
        %v1994 = vsub.s32 %v1991, %v1993
        %v1995 = vrot.slane %v1540, %v1994
        %v1997 = vunpack.c.l.s4 1983009808
        %v1998 = vunpack.c.0.s8 %v1997
        %v1999 = vlaneseq
        %v2000 = vshrl.u32 %v1999, 7
        %v2001 = vsub.s32 %v1998, %v2000
        %v2002 = vrot.slane %v1988, %v2001
        %v2003 = vcombine.high %v1995, %v1995
        %v2004 = vcombine.high %v2002, %v2002
        %v2005 = vcombine.high %v1541, %v1541
        %v2007 = vunpack.c.l.s4 1983009808
        %v2008 = vunpack.c.0.s8 %v2007
        %v2009 = vlaneseq
        %v2010 = vshrl.u32 %v2009, 7
        %v2011 = vsub.s32 %v2008, %v2010
        %v2012 = vrot.slane %v1541, %v2011
        %v2014 = vunpack.c.l.s4 1983009808
        %v2015 = vunpack.c.0.s8 %v2014
        %v2016 = vlaneseq
        %v2017 = vshrl.u32 %v2016, 7
        %v2018 = vsub.s32 %v2015, %v2017
        %v2019 = vrot.slane %v2005, %v2018
        %v2020 = vcombine.high %v2012, %v2012
        %v2021 = vcombine.high %v2019, %v2019
        %v2022 = vcombine.high %v1542, %v1542
        %v2024 = vunpack.c.l.s4 1983009808
        %v2025 = vunpack.c.0.s8 %v2024
        %v2026 = vlaneseq
        %v2027 = vshrl.u32 %v2026, 7
        %v2028 = vsub.s32 %v2025, %v2027
        %v2029 = vrot.slane %v1542, %v2028
        %v2031 = vunpack.c.l.s4 1983009808
        %v2032 = vunpack.c.0.s8 %v2031
        %v2033 = vlaneseq
        %v2034 = vshrl.u32 %v2033, 7
        %v2035 = vsub.s32 %v2032, %v2034
        %v2036 = vrot.slane %v2022, %v2035
        %v2037 = vcombine.high %v2029, %v2029
        %v2038 = vcombine.high %v2036, %v2036
        %v2039 = vcombine.high %v1543, %v1543
        %v2041 = vunpack.c.l.s4 1983009808
        %v2042 = vunpack.c.0.s8 %v2041
        %v2043 = vlaneseq
        %v2044 = vshrl.u32 %v2043, 7
        %v2045 = vsub.s32 %v2042, %v2044
        %v2046 = vrot.slane %v1543, %v2045
        %v2048 = vunpack.c.l.s4 1983009808
        %v2049 = vunpack.c.0.s8 %v2048
        %v2050 = vlaneseq
        %v2051 = vshrl.u32 %v2050, 7
        %v2052 = vsub.s32 %v2049, %v2051
        %v2053 = vrot.slane %v2039, %v2052
        %v2054 = vcombine.high %v2046, %v2046
        %v2055 = vcombine.high %v2053, %v2053
        %v2056 = vcombine.high %v1544, %v1544
        %v2058 = vunpack.c.l.s4 1983009808
        %v2059 = vunpack.c.0.s8 %v2058
        %v2060 = vlaneseq
        %v2061 = vshrl.u32 %v2060, 7
        %v2062 = vsub.s32 %v2059, %v2061
        %v2063 = vrot.slane %v1544, %v2062
        %v2065 = vunpack.c.l.s4 1983009808
        %v2066 = vunpack.c.0.s8 %v2065
        %v2067 = vlaneseq
        %v2068 = vshrl.u32 %v2067, 7
        %v2069 = vsub.s32 %v2066, %v2068
        %v2070 = vrot.slane %v2056, %v2069
        %v2071 = vcombine.high %v2063, %v2063
        %v2072 = vcombine.high %v2070, %v2070
        %v2073 = vcombine.high %v1545, %v1545
        %v2075 = vunpack.c.l.s4 1983009808
        %v2076 = vunpack.c.0.s8 %v2075
        %v2077 = vlaneseq
        %v2078 = vshrl.u32 %v2077, 7
        %v2079 = vsub.s32 %v2076, %v2078
        %v2080 = vrot.slane %v1545, %v2079
        %v2082 = vunpack.c.l.s4 1983009808
        %v2083 = vunpack.c.0.s8 %v2082
        %v2084 = vlaneseq
        %v2085 = vshrl.u32 %v2084, 7
        %v2086 = vsub.s32 %v2083, %v2085
        %v2087 = vrot.slane %v2073, %v2086
        %v2088 = vcombine.high %v2080, %v2080
        %v2089 = vcombine.high %v2087, %v2087
        %v2090 = vcombine.high %v1546, %v1546
        %v2092 = vunpack.c.l.s4 1983009808
        %v2093 = vunpack.c.0.s8 %v2092
        %v2094 = vlaneseq
        %v2095 = vshrl.u32 %v2094, 7
        %v2096 = vsub.s32 %v2093, %v2095
        %v2097 = vrot.slane %v1546, %v2096
        %v2099 = vunpack.c.l.s4 1983009808
        %v2100 = vunpack.c.0.s8 %v2099
        %v2101 = vlaneseq
        %v2102 = vshrl.u32 %v2101, 7
        %v2103 = vsub.s32 %v2100, %v2102
        %v2104 = vrot.slane %v2090, %v2103
        %v2105 = vcombine.high %v2097, %v2097
        %v2106 = vcombine.high %v2104, %v2104
        %v2107 = vcombine.high %v1547, %v1547
        %v2109 = vunpack.c.l.s4 1983009808
        %v2110 = vunpack.c.0.s8 %v2109
        %v2111 = vlaneseq
        %v2112 = vshrl.u32 %v2111, 7
        %v2113 = vsub.s32 %v2110, %v2112
        %v2114 = vrot.slane %v1547, %v2113
        %v2116 = vunpack.c.l.s4 1983009808
        %v2117 = vunpack.c.0.s8 %v2116
        %v2118 = vlaneseq
        %v2119 = vshrl.u32 %v2118, 7
        %v2120 = vsub.s32 %v2117, %v2119
        %v2121 = vrot.slane %v2107, %v2120
        %v2122 = vcombine.high %v2114, %v2114
        %v2123 = vcombine.high %v2121, %v2121
        %v2252 = vrot.slane %v1587, 7
        %v2253 = vrot.slane %v2252, 2
        %v2254 = vrot.slane %v1595, 7
        %v2255 = vrot.slane %v2254, 2
        %v2256 = vrot.slane %v1594, 7
        %v2257 = vrot.slane %v2256, 2
        %v2258 = vrot.slane %v1596, 7
        %v2259 = vrot.slane %v2258, 2
        %v2260 = vrot.slane %v1604, 7
        %v2261 = vrot.slane %v2260, 2
        %v2262 = vrot.slane %v1612, 7
        %v2263 = vrot.slane %v2262, 2
        %v2264 = vrot.slane %v1611, 7
        %v2265 = vrot.slane %v2264, 2
        %v2266 = vrot.slane %v1613, 7
        %v2267 = vrot.slane %v2266, 2
        %v2268 = vrot.slane %v1621, 7
        %v2269 = vrot.slane %v2268, 2
        %v2270 = vrot.slane %v1629, 7
        %v2271 = vrot.slane %v2270, 2
        %v2272 = vrot.slane %v1628, 7
        %v2273 = vrot.slane %v2272, 2
        %v2274 = vrot.slane %v1630, 7
        %v2275 = vrot.slane %v2274, 2
        %v2276 = vrot.slane %v1638, 7
        %v2277 = vrot.slane %v2276, 2
        %v2278 = vrot.slane %v1646, 7
        %v2279 = vrot.slane %v2278, 2
        %v2280 = vrot.slane %v1645, 7
        %v2281 = vrot.slane %v2280, 2
        %v2282 = vrot.slane %v1647, 7
        %v2283 = vrot.slane %v2282, 2
        %v2284 = vrot.slane %v1655, 7
        %v2285 = vrot.slane %v2284, 2
        %v2286 = vrot.slane %v1663, 7
        %v2287 = vrot.slane %v2286, 2
        %v2288 = vrot.slane %v1662, 7
        %v2289 = vrot.slane %v2288, 2
        %v2290 = vrot.slane %v1664, 7
        %v2291 = vrot.slane %v2290, 2
        %v2292 = vrot.slane %v1672, 7
        %v2293 = vrot.slane %v2292, 2
        %v2294 = vrot.slane %v1680, 7
        %v2295 = vrot.slane %v2294, 2
        %v2296 = vrot.slane %v1679, 7
        %v2297 = vrot.slane %v2296, 2
        %v2298 = vrot.slane %v1681, 7
        %v2299 = vrot.slane %v2298, 2
        %v2300 = vrot.slane %v1689, 7
        %v2301 = vrot.slane %v2300, 2
        %v2302 = vrot.slane %v1697, 7
        %v2303 = vrot.slane %v2302, 2
        %v2304 = vrot.slane %v1696, 7
        %v2305 = vrot.slane %v2304, 2
        %v2306 = vrot.slane %v1698, 7
        %v2307 = vrot.slane %v2306, 2
        %v2308 = vrot.slane %v1706, 7
        %v2309 = vrot.slane %v2308, 2
        %v2310 = vrot.slane %v1714, 7
        %v2311 = vrot.slane %v2310, 2
        %v2312 = vrot.slane %v1713, 7
        %v2313 = vrot.slane %v2312, 2
        %v2314 = vrot.slane %v1715, 7
        %v2315 = vrot.slane %v2314, 2
        %v2316 = vrot.slane %v1723, 7
        %v2317 = vrot.slane %v2316, 2
        %v2318 = vrot.slane %v1731, 7
        %v2319 = vrot.slane %v2318, 2
        %v2320 = vrot.slane %v1730, 7
        %v2321 = vrot.slane %v2320, 2
        %v2322 = vrot.slane %v1732, 7
        %v2323 = vrot.slane %v2322, 2
        %v2324 = vrot.slane %v1740, 7
        %v2325 = vrot.slane %v2324, 2
        %v2326 = vrot.slane %v1748, 7
        %v2327 = vrot.slane %v2326, 2
        %v2328 = vrot.slane %v1747, 7
        %v2329 = vrot.slane %v2328, 2
        %v2330 = vrot.slane %v1749, 7
        %v2331 = vrot.slane %v2330, 2
        %v2332 = vrot.slane %v1757, 7
        %v2333 = vrot.slane %v2332, 2
        %v2334 = vrot.slane %v1765, 7
        %v2335 = vrot.slane %v2334, 2
        %v2336 = vrot.slane %v1764, 7
        %v2337 = vrot.slane %v2336, 2
        %v2338 = vrot.slane %v1766, 7
        %v2339 = vrot.slane %v2338, 2
        %v2340 = vrot.slane %v1774, 7
        %v2341 = vrot.slane %v2340, 2
        %v2342 = vrot.slane %v1782, 7
        %v2343 = vrot.slane %v2342, 2
        %v2344 = vrot.slane %v1781, 7
        %v2345 = vrot.slane %v2344, 2
        %v2346 = vrot.slane %v1783, 7
        %v2347 = vrot.slane %v2346, 2
        %v2348 = vrot.slane %v1791, 7
        %v2349 = vrot.slane %v2348, 2
        %v2350 = vrot.slane %v1799, 7
        %v2351 = vrot.slane %v2350, 2
        %v2352 = vrot.slane %v1798, 7
        %v2353 = vrot.slane %v2352, 2
        %v2354 = vrot.slane %v1800, 7
        %v2355 = vrot.slane %v2354, 2
        %v2356 = vrot.slane %v1808, 7
        %v2357 = vrot.slane %v2356, 2
        %v2358 = vrot.slane %v1816, 7
        %v2359 = vrot.slane %v2358, 2
        %v2360 = vrot.slane %v1815, 7
        %v2361 = vrot.slane %v2360, 2
        %v2362 = vrot.slane %v1817, 7
        %v2363 = vrot.slane %v2362, 2
        %v2364 = vrot.slane %v1825, 7
        %v2365 = vrot.slane %v2364, 2
        %v2366 = vrot.slane %v1833, 7
        %v2367 = vrot.slane %v2366, 2
        %v2368 = vrot.slane %v1832, 7
        %v2369 = vrot.slane %v2368, 2
        %v2370 = vrot.slane %v1834, 7
        %v2371 = vrot.slane %v2370, 2
        %v2372 = vrot.slane %v1842, 7
        %v2373 = vrot.slane %v2372, 2
        %v2374 = vrot.slane %v1850, 7
        %v2375 = vrot.slane %v2374, 2
        %v2376 = vrot.slane %v1849, 7
        %v2377 = vrot.slane %v2376, 2
        %v2378 = vrot.slane %v1851, 7
        %v2379 = vrot.slane %v2378, 2
        %v2380 = vrot.slane %v1859, 7
        %v2381 = vrot.slane %v2380, 2
        %v2382 = vrot.slane %v1867, 7
        %v2383 = vrot.slane %v2382, 2
        %v2384 = vrot.slane %v1866, 7
        %v2385 = vrot.slane %v2384, 2
        %v2386 = vrot.slane %v1868, 7
        %v2387 = vrot.slane %v2386, 2
        %v2388 = vrot.slane %v1876, 7
        %v2389 = vrot.slane %v2388, 2
        %v2390 = vrot.slane %v1884, 7
        %v2391 = vrot.slane %v2390, 2
        %v2392 = vrot.slane %v1883, 7
        %v2393 = vrot.slane %v2392, 2
        %v2394 = vrot.slane %v1885, 7
        %v2395 = vrot.slane %v2394, 2
        %v2396 = vrot.slane %v1893, 7
        %v2397 = vrot.slane %v2396, 2
        %v2398 = vrot.slane %v1901, 7
        %v2399 = vrot.slane %v2398, 2
        %v2400 = vrot.slane %v1900, 7
        %v2401 = vrot.slane %v2400, 2
        %v2402 = vrot.slane %v1902, 7
        %v2403 = vrot.slane %v2402, 2
        %v2404 = vrot.slane %v1910, 7
        %v2405 = vrot.slane %v2404, 2
        %v2406 = vrot.slane %v1918, 7
        %v2407 = vrot.slane %v2406, 2
        %v2408 = vrot.slane %v1917, 7
        %v2409 = vrot.slane %v2408, 2
        %v2410 = vrot.slane %v1919, 7
        %v2411 = vrot.slane %v2410, 2
        %v2412 = vrot.slane %v1927, 7
        %v2413 = vrot.slane %v2412, 2
        %v2414 = vrot.slane %v1935, 7
        %v2415 = vrot.slane %v2414, 2
        %v2416 = vrot.slane %v1934, 7
        %v2417 = vrot.slane %v2416, 2
        %v2418 = vrot.slane %v1936, 7
        %v2419 = vrot.slane %v2418, 2
        %v2420 = vrot.slane %v1944, 7
        %v2421 = vrot.slane %v2420, 2
        %v2422 = vrot.slane %v1952, 7
        %v2423 = vrot.slane %v2422, 2
        %v2424 = vrot.slane %v1951, 7
        %v2425 = vrot.slane %v2424, 2
        %v2426 = vrot.slane %v1953, 7
        %v2427 = vrot.slane %v2426, 2
        %v2428 = vrot.slane %v1961, 7
        %v2429 = vrot.slane %v2428, 2
        %v2430 = vrot.slane %v1969, 7
        %v2431 = vrot.slane %v2430, 2
        %v2432 = vrot.slane %v1968, 7
        %v2433 = vrot.slane %v2432, 2
        %v2434 = vrot.slane %v1970, 7
        %v2435 = vrot.slane %v2434, 2
        %v2436 = vrot.slane %v1978, 7
        %v2437 = vrot.slane %v2436, 2
        %v2438 = vrot.slane %v1986, 7
        %v2439 = vrot.slane %v2438, 2
        %v2440 = vrot.slane %v1985, 7
        %v2441 = vrot.slane %v2440, 2
        %v2442 = vrot.slane %v1987, 7
        %v2443 = vrot.slane %v2442, 2
        %v2444 = vrot.slane %v1995, 7
        %v2445 = vrot.slane %v2444, 2
        %v2446 = vrot.slane %v2003, 7
        %v2447 = vrot.slane %v2446, 2
        %v2448 = vrot.slane %v2002, 7
        %v2449 = vrot.slane %v2448, 2
        %v2450 = vrot.slane %v2004, 7
        %v2451 = vrot.slane %v2450, 2
        %v2452 = vrot.slane %v2012, 7
        %v2453 = vrot.slane %v2452, 2
        %v2454 = vrot.slane %v2020, 7
        %v2455 = vrot.slane %v2454, 2
        %v2456 = vrot.slane %v2019, 7
        %v2457 = vrot.slane %v2456, 2
        %v2458 = vrot.slane %v2021, 7
        %v2459 = vrot.slane %v2458, 2
        %v2460 = vrot.slane %v2029, 7
        %v2461 = vrot.slane %v2460, 2
        %v2462 = vrot.slane %v2037, 7
        %v2463 = vrot.slane %v2462, 2
        %v2464 = vrot.slane %v2036, 7
        %v2465 = vrot.slane %v2464, 2
        %v2466 = vrot.slane %v2038, 7
        %v2467 = vrot.slane %v2466, 2
        %v2468 = vrot.slane %v2046, 7
        %v2469 = vrot.slane %v2468, 2
        %v2470 = vrot.slane %v2054, 7
        %v2471 = vrot.slane %v2470, 2
        %v2472 = vrot.slane %v2053, 7
        %v2473 = vrot.slane %v2472, 2
        %v2474 = vrot.slane %v2055, 7
        %v2475 = vrot.slane %v2474, 2
        %v2476 = vrot.slane %v2063, 7
        %v2477 = vrot.slane %v2476, 2
        %v2478 = vrot.slane %v2071, 7
        %v2479 = vrot.slane %v2478, 2
        %v2480 = vrot.slane %v2070, 7
        %v2481 = vrot.slane %v2480, 2
        %v2482 = vrot.slane %v2072, 7
        %v2483 = vrot.slane %v2482, 2
        %v2484 = vrot.slane %v2080, 7
        %v2485 = vrot.slane %v2484, 2
        %v2486 = vrot.slane %v2088, 7
        %v2487 = vrot.slane %v2486, 2
        %v2488 = vrot.slane %v2087, 7
        %v2489 = vrot.slane %v2488, 2
        %v2490 = vrot.slane %v2089, 7
        %v2491 = vrot.slane %v2490, 2
        %v2492 = vrot.slane %v2097, 7
        %v2493 = vrot.slane %v2492, 2
        %v2494 = vrot.slane %v2105, 7
        %v2495 = vrot.slane %v2494, 2
        %v2496 = vrot.slane %v2104, 7
        %v2497 = vrot.slane %v2496, 2
        %v2498 = vrot.slane %v2106, 7
        %v2499 = vrot.slane %v2498, 2
        %v2500 = vrot.slane %v2114, 7
        %v2501 = vrot.slane %v2500, 2
        %v2502 = vrot.slane %v2122, 7
        %v2503 = vrot.slane %v2502, 2
        %v2504 = vrot.slane %v2121, 7
        %v2505 = vrot.slane %v2504, 2
        %v2506 = vrot.slane %v2123, 7
        %v2507 = vrot.slane %v2506, 2
        %v2636 = vmax.f32 %v1587, %v2253
        %v2637 = vmax.f32 %v1595, %v2255
        %v2638 = vmax.f32 %v1594, %v2257
        %v2639 = vmax.f32 %v1596, %v2259
        %v2640 = vmax.f32 %v1604, %v2261
        %v2641 = vmax.f32 %v1612, %v2263
        %v2642 = vmax.f32 %v1611, %v2265
        %v2643 = vmax.f32 %v1613, %v2267
        %v2644 = vmax.f32 %v1621, %v2269
        %v2645 = vmax.f32 %v1629, %v2271
        %v2646 = vmax.f32 %v1628, %v2273
        %v2647 = vmax.f32 %v1630, %v2275
        %v2648 = vmax.f32 %v1638, %v2277
        %v2649 = vmax.f32 %v1646, %v2279
        %v2650 = vmax.f32 %v1645, %v2281
        %v2651 = vmax.f32 %v1647, %v2283
        %v2652 = vmax.f32 %v1655, %v2285
        %v2653 = vmax.f32 %v1663, %v2287
        %v2654 = vmax.f32 %v1662, %v2289
        %v2655 = vmax.f32 %v1664, %v2291
        %v2656 = vmax.f32 %v1672, %v2293
        %v2657 = vmax.f32 %v1680, %v2295
        %v2658 = vmax.f32 %v1679, %v2297
        %v2659 = vmax.f32 %v1681, %v2299
        %v2660 = vmax.f32 %v1689, %v2301
        %v2661 = vmax.f32 %v1697, %v2303
        %v2662 = vmax.f32 %v1696, %v2305
        %v2663 = vmax.f32 %v1698, %v2307
        %v2664 = vmax.f32 %v1706, %v2309
        %v2665 = vmax.f32 %v1714, %v2311
        %v2666 = vmax.f32 %v1713, %v2313
        %v2667 = vmax.f32 %v1715, %v2315
        %v2668 = vmax.f32 %v1723, %v2317
        %v2669 = vmax.f32 %v1731, %v2319
        %v2670 = vmax.f32 %v1730, %v2321
        %v2671 = vmax.f32 %v1732, %v2323
        %v2672 = vmax.f32 %v1740, %v2325
        %v2673 = vmax.f32 %v1748, %v2327
        %v2674 = vmax.f32 %v1747, %v2329
        %v2675 = vmax.f32 %v1749, %v2331
        %v2676 = vmax.f32 %v1757, %v2333
        %v2677 = vmax.f32 %v1765, %v2335
        %v2678 = vmax.f32 %v1764, %v2337
        %v2679 = vmax.f32 %v1766, %v2339
        %v2680 = vmax.f32 %v1774, %v2341
        %v2681 = vmax.f32 %v1782, %v2343
        %v2682 = vmax.f32 %v1781, %v2345
        %v2683 = vmax.f32 %v1783, %v2347
        %v2684 = vmax.f32 %v1791, %v2349
        %v2685 = vmax.f32 %v1799, %v2351
        %v2686 = vmax.f32 %v1798, %v2353
        %v2687 = vmax.f32 %v1800, %v2355
        %v2688 = vmax.f32 %v1808, %v2357
        %v2689 = vmax.f32 %v1816, %v2359
        %v2690 = vmax.f32 %v1815, %v2361
        %v2691 = vmax.f32 %v1817, %v2363
        %v2692 = vmax.f32 %v1825, %v2365
        %v2693 = vmax.f32 %v1833, %v2367
        %v2694 = vmax.f32 %v1832, %v2369
        %v2695 = vmax.f32 %v1834, %v2371
        %v2696 = vmax.f32 %v1842, %v2373
        %v2697 = vmax.f32 %v1850, %v2375
        %v2698 = vmax.f32 %v1849, %v2377
        %v2699 = vmax.f32 %v1851, %v2379
        %v2700 = vmax.f32 %v1859, %v2381
        %v2701 = vmax.f32 %v1867, %v2383
        %v2702 = vmax.f32 %v1866, %v2385
        %v2703 = vmax.f32 %v1868, %v2387
        %v2704 = vmax.f32 %v1876, %v2389
        %v2705 = vmax.f32 %v1884, %v2391
        %v2706 = vmax.f32 %v1883, %v2393
        %v2707 = vmax.f32 %v1885, %v2395
        %v2708 = vmax.f32 %v1893, %v2397
        %v2709 = vmax.f32 %v1901, %v2399
        %v2710 = vmax.f32 %v1900, %v2401
        %v2711 = vmax.f32 %v1902, %v2403
        %v2712 = vmax.f32 %v1910, %v2405
        %v2713 = vmax.f32 %v1918, %v2407
        %v2714 = vmax.f32 %v1917, %v2409
        %v2715 = vmax.f32 %v1919, %v2411
        %v2716 = vmax.f32 %v1927, %v2413
        %v2717 = vmax.f32 %v1935, %v2415
        %v2718 = vmax.f32 %v1934, %v2417
        %v2719 = vmax.f32 %v1936, %v2419
        %v2720 = vmax.f32 %v1944, %v2421
        %v2721 = vmax.f32 %v1952, %v2423
        %v2722 = vmax.f32 %v1951, %v2425
        %v2723 = vmax.f32 %v1953, %v2427
        %v2724 = vmax.f32 %v1961, %v2429
        %v2725 = vmax.f32 %v1969, %v2431
        %v2726 = vmax.f32 %v1968, %v2433
        %v2727 = vmax.f32 %v1970, %v2435
        %v2728 = vmax.f32 %v1978, %v2437
        %v2729 = vmax.f32 %v1986, %v2439
        %v2730 = vmax.f32 %v1985, %v2441
        %v2731 = vmax.f32 %v1987, %v2443
        %v2732 = vmax.f32 %v1995, %v2445
        %v2733 = vmax.f32 %v2003, %v2447
        %v2734 = vmax.f32 %v2002, %v2449
        %v2735 = vmax.f32 %v2004, %v2451
        %v2736 = vmax.f32 %v2012, %v2453
        %v2737 = vmax.f32 %v2020, %v2455
        %v2738 = vmax.f32 %v2019, %v2457
        %v2739 = vmax.f32 %v2021, %v2459
        %v2740 = vmax.f32 %v2029, %v2461
        %v2741 = vmax.f32 %v2037, %v2463
        %v2742 = vmax.f32 %v2036, %v2465
        %v2743 = vmax.f32 %v2038, %v2467
        %v2744 = vmax.f32 %v2046, %v2469
        %v2745 = vmax.f32 %v2054, %v2471
        %v2746 = vmax.f32 %v2053, %v2473
        %v2747 = vmax.f32 %v2055, %v2475
        %v2748 = vmax.f32 %v2063, %v2477
        %v2749 = vmax.f32 %v2071, %v2479
        %v2750 = vmax.f32 %v2070, %v2481
        %v2751 = vmax.f32 %v2072, %v2483
        %v2752 = vmax.f32 %v2080, %v2485
        %v2753 = vmax.f32 %v2088, %v2487
        %v2754 = vmax.f32 %v2087, %v2489
        %v2755 = vmax.f32 %v2089, %v2491
        %v2756 = vmax.f32 %v2097, %v2493
        %v2757 = vmax.f32 %v2105, %v2495
        %v2758 = vmax.f32 %v2104, %v2497
        %v2759 = vmax.f32 %v2106, %v2499
        %v2760 = vmax.f32 %v2114, %v2501
        %v2761 = vmax.f32 %v2122, %v2503
        %v2762 = vmax.f32 %v2121, %v2505
        %v2763 = vmax.f32 %v2123, %v2507
        %v2884 = vlaneseq
        %v2885 = vshrl.u32 %v2884, 7
        %v2886 = vsub.s32 0, %v2885
        %v2887 = vrot.slane %v2636, %v2886
        %v2888 = vlaneseq
        %v2889 = vshrl.u32 %v2888, 7
        %v2890 = vsub.s32 0, %v2889
        %v2891 = vrot.slane %v2637, %v2890
        %v2892 = vlaneseq
        %v2893 = vshrl.u32 %v2892, 7
        %v2894 = vsub.s32 0, %v2893
        %v2895 = vrot.slane %v2638, %v2894
        %v2896 = vlaneseq
        %v2897 = vshrl.u32 %v2896, 7
        %v2898 = vsub.s32 0, %v2897
        %v2899 = vrot.slane %v2639, %v2898
        %v2900 = vlaneseq
        %v2901 = vshrl.u32 %v2900, 7
        %v2902 = vsub.s32 0, %v2901
        %v2903 = vrot.slane %v2640, %v2902
        %v2904 = vlaneseq
        %v2905 = vshrl.u32 %v2904, 7
        %v2906 = vsub.s32 0, %v2905
        %v2907 = vrot.slane %v2641, %v2906
        %v2908 = vlaneseq
        %v2909 = vshrl.u32 %v2908, 7
        %v2910 = vsub.s32 0, %v2909
        %v2911 = vrot.slane %v2642, %v2910
        %v2912 = vlaneseq
        %v2913 = vshrl.u32 %v2912, 7
        %v2914 = vsub.s32 0, %v2913
        %v2915 = vrot.slane %v2643, %v2914
        %v2916 = vlaneseq
        %v2917 = vshrl.u32 %v2916, 7
        %v2918 = vsub.s32 0, %v2917
        %v2919 = vrot.slane %v2644, %v2918
        %v2920 = vlaneseq
        %v2921 = vshrl.u32 %v2920, 7
        %v2922 = vsub.s32 0, %v2921
        %v2923 = vrot.slane %v2645, %v2922
        %v2924 = vlaneseq
        %v2925 = vshrl.u32 %v2924, 7
        %v2926 = vsub.s32 0, %v2925
        %v2927 = vrot.slane %v2646, %v2926
        %v2928 = vlaneseq
        %v2929 = vshrl.u32 %v2928, 7
        %v2930 = vsub.s32 0, %v2929
        %v2931 = vrot.slane %v2647, %v2930
        %v2932 = vlaneseq
        %v2933 = vshrl.u32 %v2932, 7
        %v2934 = vsub.s32 0, %v2933
        %v2935 = vrot.slane %v2648, %v2934
        %v2936 = vlaneseq
        %v2937 = vshrl.u32 %v2936, 7
        %v2938 = vsub.s32 0, %v2937
        %v2939 = vrot.slane %v2649, %v2938
        %v2940 = vlaneseq
        %v2941 = vshrl.u32 %v2940, 7
        %v2942 = vsub.s32 0, %v2941
        %v2943 = vrot.slane %v2650, %v2942
        %v2944 = vlaneseq
        %v2945 = vshrl.u32 %v2944, 7
        %v2946 = vsub.s32 0, %v2945
        %v2947 = vrot.slane %v2652, %v2946
        %v2948 = vlaneseq
        %v2949 = vshrl.u32 %v2948, 7
        %v2950 = vsub.s32 0, %v2949
        %v2951 = vrot.slane %v2653, %v2950
        %v2952 = vlaneseq
        %v2953 = vshrl.u32 %v2952, 7
        %v2954 = vsub.s32 0, %v2953
        %v2955 = vrot.slane %v2654, %v2954
        %v2956 = vlaneseq
        %v2957 = vshrl.u32 %v2956, 7
        %v2958 = vsub.s32 0, %v2957
        %v2959 = vrot.slane %v2655, %v2958
        %v2960 = vlaneseq
        %v2961 = vshrl.u32 %v2960, 7
        %v2962 = vsub.s32 0, %v2961
        %v2963 = vrot.slane %v2656, %v2962
        %v2964 = vlaneseq
        %v2965 = vshrl.u32 %v2964, 7
        %v2966 = vsub.s32 0, %v2965
        %v2967 = vrot.slane %v2657, %v2966
        %v2968 = vlaneseq
        %v2969 = vshrl.u32 %v2968, 7
        %v2970 = vsub.s32 0, %v2969
        %v2971 = vrot.slane %v2658, %v2970
        %v2972 = vlaneseq
        %v2973 = vshrl.u32 %v2972, 7
        %v2974 = vsub.s32 0, %v2973
        %v2975 = vrot.slane %v2659, %v2974
        %v2976 = vlaneseq
        %v2977 = vshrl.u32 %v2976, 7
        %v2978 = vsub.s32 0, %v2977
        %v2979 = vrot.slane %v2660, %v2978
        %v2980 = vlaneseq
        %v2981 = vshrl.u32 %v2980, 7
        %v2982 = vsub.s32 0, %v2981
        %v2983 = vrot.slane %v2661, %v2982
        %v2984 = vlaneseq
        %v2985 = vshrl.u32 %v2984, 7
        %v2986 = vsub.s32 0, %v2985
        %v2987 = vrot.slane %v2662, %v2986
        %v2988 = vlaneseq
        %v2989 = vshrl.u32 %v2988, 7
        %v2990 = vsub.s32 0, %v2989
        %v2991 = vrot.slane %v2663, %v2990
        %v2992 = vlaneseq
        %v2993 = vshrl.u32 %v2992, 7
        %v2994 = vsub.s32 0, %v2993
        %v2995 = vrot.slane %v2664, %v2994
        %v2996 = vlaneseq
        %v2997 = vshrl.u32 %v2996, 7
        %v2998 = vsub.s32 0, %v2997
        %v2999 = vrot.slane %v2665, %v2998
        %v3000 = vlaneseq
        %v3001 = vshrl.u32 %v3000, 7
        %v3002 = vsub.s32 0, %v3001
        %v3003 = vrot.slane %v2666, %v3002
        %v3004 = vlaneseq
        %v3005 = vshrl.u32 %v3004, 7
        %v3006 = vsub.s32 0, %v3005
        %v3007 = vrot.slane %v2668, %v3006
        %v3008 = vlaneseq
        %v3009 = vshrl.u32 %v3008, 7
        %v3010 = vsub.s32 0, %v3009
        %v3011 = vrot.slane %v2669, %v3010
        %v3012 = vlaneseq
        %v3013 = vshrl.u32 %v3012, 7
        %v3014 = vsub.s32 0, %v3013
        %v3015 = vrot.slane %v2670, %v3014
        %v3016 = vlaneseq
        %v3017 = vshrl.u32 %v3016, 7
        %v3018 = vsub.s32 0, %v3017
        %v3019 = vrot.slane %v2671, %v3018
        %v3020 = vlaneseq
        %v3021 = vshrl.u32 %v3020, 7
        %v3022 = vsub.s32 0, %v3021
        %v3023 = vrot.slane %v2672, %v3022
        %v3024 = vlaneseq
        %v3025 = vshrl.u32 %v3024, 7
        %v3026 = vsub.s32 0, %v3025
        %v3027 = vrot.slane %v2673, %v3026
        %v3028 = vlaneseq
        %v3029 = vshrl.u32 %v3028, 7
        %v3030 = vsub.s32 0, %v3029
        %v3031 = vrot.slane %v2674, %v3030
        %v3032 = vlaneseq
        %v3033 = vshrl.u32 %v3032, 7
        %v3034 = vsub.s32 0, %v3033
        %v3035 = vrot.slane %v2675, %v3034
        %v3036 = vlaneseq
        %v3037 = vshrl.u32 %v3036, 7
        %v3038 = vsub.s32 0, %v3037
        %v3039 = vrot.slane %v2676, %v3038
        %v3040 = vlaneseq
        %v3041 = vshrl.u32 %v3040, 7
        %v3042 = vsub.s32 0, %v3041
        %v3043 = vrot.slane %v2677, %v3042
        %v3044 = vlaneseq
        %v3045 = vshrl.u32 %v3044, 7
        %v3046 = vsub.s32 0, %v3045
        %v3047 = vrot.slane %v2678, %v3046
        %v3048 = vlaneseq
        %v3049 = vshrl.u32 %v3048, 7
        %v3050 = vsub.s32 0, %v3049
        %v3051 = vrot.slane %v2679, %v3050
        %v3052 = vlaneseq
        %v3053 = vshrl.u32 %v3052, 7
        %v3054 = vsub.s32 0, %v3053
        %v3055 = vrot.slane %v2680, %v3054
        %v3056 = vlaneseq
        %v3057 = vshrl.u32 %v3056, 7
        %v3058 = vsub.s32 0, %v3057
        %v3059 = vrot.slane %v2681, %v3058
        %v3060 = vlaneseq
        %v3061 = vshrl.u32 %v3060, 7
        %v3062 = vsub.s32 0, %v3061
        %v3063 = vrot.slane %v2682, %v3062
        %v3064 = vlaneseq
        %v3065 = vshrl.u32 %v3064, 7
        %v3066 = vsub.s32 0, %v3065
        %v3067 = vrot.slane %v2684, %v3066
        %v3068 = vlaneseq
        %v3069 = vshrl.u32 %v3068, 7
        %v3070 = vsub.s32 0, %v3069
        %v3071 = vrot.slane %v2685, %v3070
        %v3072 = vlaneseq
        %v3073 = vshrl.u32 %v3072, 7
        %v3074 = vsub.s32 0, %v3073
        %v3075 = vrot.slane %v2686, %v3074
        %v3076 = vlaneseq
        %v3077 = vshrl.u32 %v3076, 7
        %v3078 = vsub.s32 0, %v3077
        %v3079 = vrot.slane %v2687, %v3078
        %v3080 = vlaneseq
        %v3081 = vshrl.u32 %v3080, 7
        %v3082 = vsub.s32 0, %v3081
        %v3083 = vrot.slane %v2688, %v3082
        %v3084 = vlaneseq
        %v3085 = vshrl.u32 %v3084, 7
        %v3086 = vsub.s32 0, %v3085
        %v3087 = vrot.slane %v2689, %v3086
        %v3088 = vlaneseq
        %v3089 = vshrl.u32 %v3088, 7
        %v3090 = vsub.s32 0, %v3089
        %v3091 = vrot.slane %v2690, %v3090
        %v3092 = vlaneseq
        %v3093 = vshrl.u32 %v3092, 7
        %v3094 = vsub.s32 0, %v3093
        %v3095 = vrot.slane %v2691, %v3094
        %v3096 = vlaneseq
        %v3097 = vshrl.u32 %v3096, 7
        %v3098 = vsub.s32 0, %v3097
        %v3099 = vrot.slane %v2692, %v3098
        %v3100 = vlaneseq
        %v3101 = vshrl.u32 %v3100, 7
        %v3102 = vsub.s32 0, %v3101
        %v3103 = vrot.slane %v2693, %v3102
        %v3104 = vlaneseq
        %v3105 = vshrl.u32 %v3104, 7
        %v3106 = vsub.s32 0, %v3105
        %v3107 = vrot.slane %v2694, %v3106
        %v3108 = vlaneseq
        %v3109 = vshrl.u32 %v3108, 7
        %v3110 = vsub.s32 0, %v3109
        %v3111 = vrot.slane %v2695, %v3110
        %v3112 = vlaneseq
        %v3113 = vshrl.u32 %v3112, 7
        %v3114 = vsub.s32 0, %v3113
        %v3115 = vrot.slane %v2696, %v3114
        %v3116 = vlaneseq
        %v3117 = vshrl.u32 %v3116, 7
        %v3118 = vsub.s32 0, %v3117
        %v3119 = vrot.slane %v2697, %v3118
        %v3120 = vlaneseq
        %v3121 = vshrl.u32 %v3120, 7
        %v3122 = vsub.s32 0, %v3121
        %v3123 = vrot.slane %v2698, %v3122
        %v3124 = vlaneseq
        %v3125 = vshrl.u32 %v3124, 7
        %v3126 = vsub.s32 0, %v3125
        %v3127 = vrot.slane %v2700, %v3126
        %v3128 = vlaneseq
        %v3129 = vshrl.u32 %v3128, 7
        %v3130 = vsub.s32 0, %v3129
        %v3131 = vrot.slane %v2701, %v3130
        %v3132 = vlaneseq
        %v3133 = vshrl.u32 %v3132, 7
        %v3134 = vsub.s32 0, %v3133
        %v3135 = vrot.slane %v2702, %v3134
        %v3136 = vlaneseq
        %v3137 = vshrl.u32 %v3136, 7
        %v3138 = vsub.s32 0, %v3137
        %v3139 = vrot.slane %v2703, %v3138
        %v3140 = vlaneseq
        %v3141 = vshrl.u32 %v3140, 7
        %v3142 = vsub.s32 0, %v3141
        %v3143 = vrot.slane %v2704, %v3142
        %v3144 = vlaneseq
        %v3145 = vshrl.u32 %v3144, 7
        %v3146 = vsub.s32 0, %v3145
        %v3147 = vrot.slane %v2705, %v3146
        %v3148 = vlaneseq
        %v3149 = vshrl.u32 %v3148, 7
        %v3150 = vsub.s32 0, %v3149
        %v3151 = vrot.slane %v2706, %v3150
        %v3152 = vlaneseq
        %v3153 = vshrl.u32 %v3152, 7
        %v3154 = vsub.s32 0, %v3153
        %v3155 = vrot.slane %v2707, %v3154
        %v3156 = vlaneseq
        %v3157 = vshrl.u32 %v3156, 7
        %v3158 = vsub.s32 0, %v3157
        %v3159 = vrot.slane %v2708, %v3158
        %v3160 = vlaneseq
        %v3161 = vshrl.u32 %v3160, 7
        %v3162 = vsub.s32 0, %v3161
        %v3163 = vrot.slane %v2709, %v3162
        %v3164 = vlaneseq
        %v3165 = vshrl.u32 %v3164, 7
        %v3166 = vsub.s32 0, %v3165
        %v3167 = vrot.slane %v2710, %v3166
        %v3168 = vlaneseq
        %v3169 = vshrl.u32 %v3168, 7
        %v3170 = vsub.s32 0, %v3169
        %v3171 = vrot.slane %v2711, %v3170
        %v3172 = vlaneseq
        %v3173 = vshrl.u32 %v3172, 7
        %v3174 = vsub.s32 0, %v3173
        %v3175 = vrot.slane %v2712, %v3174
        %v3176 = vlaneseq
        %v3177 = vshrl.u32 %v3176, 7
        %v3178 = vsub.s32 0, %v3177
        %v3179 = vrot.slane %v2713, %v3178
        %v3180 = vlaneseq
        %v3181 = vshrl.u32 %v3180, 7
        %v3182 = vsub.s32 0, %v3181
        %v3183 = vrot.slane %v2714, %v3182
        %v3184 = vlaneseq
        %v3185 = vshrl.u32 %v3184, 7
        %v3186 = vsub.s32 0, %v3185
        %v3187 = vrot.slane %v2716, %v3186
        %v3188 = vlaneseq
        %v3189 = vshrl.u32 %v3188, 7
        %v3190 = vsub.s32 0, %v3189
        %v3191 = vrot.slane %v2717, %v3190
        %v3192 = vlaneseq
        %v3193 = vshrl.u32 %v3192, 7
        %v3194 = vsub.s32 0, %v3193
        %v3195 = vrot.slane %v2718, %v3194
        %v3196 = vlaneseq
        %v3197 = vshrl.u32 %v3196, 7
        %v3198 = vsub.s32 0, %v3197
        %v3199 = vrot.slane %v2719, %v3198
        %v3200 = vlaneseq
        %v3201 = vshrl.u32 %v3200, 7
        %v3202 = vsub.s32 0, %v3201
        %v3203 = vrot.slane %v2720, %v3202
        %v3204 = vlaneseq
        %v3205 = vshrl.u32 %v3204, 7
        %v3206 = vsub.s32 0, %v3205
        %v3207 = vrot.slane %v2721, %v3206
        %v3208 = vlaneseq
        %v3209 = vshrl.u32 %v3208, 7
        %v3210 = vsub.s32 0, %v3209
        %v3211 = vrot.slane %v2722, %v3210
        %v3212 = vlaneseq
        %v3213 = vshrl.u32 %v3212, 7
        %v3214 = vsub.s32 0, %v3213
        %v3215 = vrot.slane %v2723, %v3214
        %v3216 = vlaneseq
        %v3217 = vshrl.u32 %v3216, 7
        %v3218 = vsub.s32 0, %v3217
        %v3219 = vrot.slane %v2724, %v3218
        %v3220 = vlaneseq
        %v3221 = vshrl.u32 %v3220, 7
        %v3222 = vsub.s32 0, %v3221
        %v3223 = vrot.slane %v2725, %v3222
        %v3224 = vlaneseq
        %v3225 = vshrl.u32 %v3224, 7
        %v3226 = vsub.s32 0, %v3225
        %v3227 = vrot.slane %v2726, %v3226
        %v3228 = vlaneseq
        %v3229 = vshrl.u32 %v3228, 7
        %v3230 = vsub.s32 0, %v3229
        %v3231 = vrot.slane %v2727, %v3230
        %v3232 = vlaneseq
        %v3233 = vshrl.u32 %v3232, 7
        %v3234 = vsub.s32 0, %v3233
        %v3235 = vrot.slane %v2728, %v3234
        %v3236 = vlaneseq
        %v3237 = vshrl.u32 %v3236, 7
        %v3238 = vsub.s32 0, %v3237
        %v3239 = vrot.slane %v2729, %v3238
        %v3240 = vlaneseq
        %v3241 = vshrl.u32 %v3240, 7
        %v3242 = vsub.s32 0, %v3241
        %v3243 = vrot.slane %v2730, %v3242
        %v3244 = vlaneseq
        %v3245 = vshrl.u32 %v3244, 7
        %v3246 = vsub.s32 0, %v3245
        %v3247 = vrot.slane %v2732, %v3246
        %v3248 = vlaneseq
        %v3249 = vshrl.u32 %v3248, 7
        %v3250 = vsub.s32 0, %v3249
        %v3251 = vrot.slane %v2733, %v3250
        %v3252 = vlaneseq
        %v3253 = vshrl.u32 %v3252, 7
        %v3254 = vsub.s32 0, %v3253
        %v3255 = vrot.slane %v2734, %v3254
        %v3256 = vlaneseq
        %v3257 = vshrl.u32 %v3256, 7
        %v3258 = vsub.s32 0, %v3257
        %v3259 = vrot.slane %v2735, %v3258
        %v3260 = vlaneseq
        %v3261 = vshrl.u32 %v3260, 7
        %v3262 = vsub.s32 0, %v3261
        %v3263 = vrot.slane %v2736, %v3262
        %v3264 = vlaneseq
        %v3265 = vshrl.u32 %v3264, 7
        %v3266 = vsub.s32 0, %v3265
        %v3267 = vrot.slane %v2737, %v3266
        %v3268 = vlaneseq
        %v3269 = vshrl.u32 %v3268, 7
        %v3270 = vsub.s32 0, %v3269
        %v3271 = vrot.slane %v2738, %v3270
        %v3272 = vlaneseq
        %v3273 = vshrl.u32 %v3272, 7
        %v3274 = vsub.s32 0, %v3273
        %v3275 = vrot.slane %v2739, %v3274
        %v3276 = vlaneseq
        %v3277 = vshrl.u32 %v3276, 7
        %v3278 = vsub.s32 0, %v3277
        %v3279 = vrot.slane %v2740, %v3278
        %v3280 = vlaneseq
        %v3281 = vshrl.u32 %v3280, 7
        %v3282 = vsub.s32 0, %v3281
        %v3283 = vrot.slane %v2741, %v3282
        %v3284 = vlaneseq
        %v3285 = vshrl.u32 %v3284, 7
        %v3286 = vsub.s32 0, %v3285
        %v3287 = vrot.slane %v2742, %v3286
        %v3288 = vlaneseq
        %v3289 = vshrl.u32 %v3288, 7
        %v3290 = vsub.s32 0, %v3289
        %v3291 = vrot.slane %v2743, %v3290
        %v3292 = vlaneseq
        %v3293 = vshrl.u32 %v3292, 7
        %v3294 = vsub.s32 0, %v3293
        %v3295 = vrot.slane %v2744, %v3294
        %v3296 = vlaneseq
        %v3297 = vshrl.u32 %v3296, 7
        %v3298 = vsub.s32 0, %v3297
        %v3299 = vrot.slane %v2745, %v3298
        %v3300 = vlaneseq
        %v3301 = vshrl.u32 %v3300, 7
        %v3302 = vsub.s32 0, %v3301
        %v3303 = vrot.slane %v2746, %v3302
        %v3304 = vlaneseq
        %v3305 = vshrl.u32 %v3304, 7
        %v3306 = vsub.s32 0, %v3305
        %v3307 = vrot.slane %v2748, %v3306
        %v3308 = vlaneseq
        %v3309 = vshrl.u32 %v3308, 7
        %v3310 = vsub.s32 0, %v3309
        %v3311 = vrot.slane %v2749, %v3310
        %v3312 = vlaneseq
        %v3313 = vshrl.u32 %v3312, 7
        %v3314 = vsub.s32 0, %v3313
        %v3315 = vrot.slane %v2750, %v3314
        %v3316 = vlaneseq
        %v3317 = vshrl.u32 %v3316, 7
        %v3318 = vsub.s32 0, %v3317
        %v3319 = vrot.slane %v2751, %v3318
        %v3320 = vlaneseq
        %v3321 = vshrl.u32 %v3320, 7
        %v3322 = vsub.s32 0, %v3321
        %v3323 = vrot.slane %v2752, %v3322
        %v3324 = vlaneseq
        %v3325 = vshrl.u32 %v3324, 7
        %v3326 = vsub.s32 0, %v3325
        %v3327 = vrot.slane %v2753, %v3326
        %v3328 = vlaneseq
        %v3329 = vshrl.u32 %v3328, 7
        %v3330 = vsub.s32 0, %v3329
        %v3331 = vrot.slane %v2754, %v3330
        %v3332 = vlaneseq
        %v3333 = vshrl.u32 %v3332, 7
        %v3334 = vsub.s32 0, %v3333
        %v3335 = vrot.slane %v2755, %v3334
        %v3336 = vlaneseq
        %v3337 = vshrl.u32 %v3336, 7
        %v3338 = vsub.s32 0, %v3337
        %v3339 = vrot.slane %v2756, %v3338
        %v3340 = vlaneseq
        %v3341 = vshrl.u32 %v3340, 7
        %v3342 = vsub.s32 0, %v3341
        %v3343 = vrot.slane %v2757, %v3342
        %v3344 = vlaneseq
        %v3345 = vshrl.u32 %v3344, 7
        %v3346 = vsub.s32 0, %v3345
        %v3347 = vrot.slane %v2758, %v3346
        %v3348 = vlaneseq
        %v3349 = vshrl.u32 %v3348, 7
        %v3350 = vsub.s32 0, %v3349
        %v3351 = vrot.slane %v2759, %v3350
        %v3352 = vlaneseq
        %v3353 = vshrl.u32 %v3352, 7
        %v3354 = vsub.s32 0, %v3353
        %v3355 = vrot.slane %v2760, %v3354
        %v3356 = vlaneseq
        %v3357 = vshrl.u32 %v3356, 7
        %v3358 = vsub.s32 0, %v3357
        %v3359 = vrot.slane %v2761, %v3358
        %v3360 = vlaneseq
        %v3361 = vshrl.u32 %v3360, 7
        %v3362 = vsub.s32 0, %v3361
        %v3363 = vrot.slane %v2762, %v3362
        %vm3364 = vcmask 1042434
        %v3365 = vsel %vm3364, %v2891, %v2887
        %vm3366 = vcmask 1043459
        %v3367 = vsel %vm3366, %v2895, %v3365
        %vm3368 = vcmask 1044484
        %v3369 = vsel %vm3368, %v2899, %v3367
        %vm3370 = vcmask 1045509
        %v3371 = vsel %vm3370, %v2903, %v3369
        %vm3372 = vcmask 1046534
        %v3373 = vsel %vm3372, %v2907, %v3371
        %vm3374 = vcmask 1047559
        %v3375 = vsel %vm3374, %v2911, %v3373
        %vm3376 = vcmask 1041409
        %v3377 = vsel %vm3376, %v2919, %v2915
        %v3378 = vsel %vm3364, %v2923, %v3377
        %v3379 = vsel %vm3366, %v2927, %v3378
        %v3380 = vsel %vm3368, %v2931, %v3379
        %v3381 = vsel %vm3370, %v2935, %v3380
        %v3382 = vsel %vm3372, %v2939, %v3381
        %v3383 = vsel %vm3374, %v2943, %v3382
        %v3384 = vsel %vm3364, %v2951, %v2947
        %v3385 = vsel %vm3366, %v2955, %v3384
        %v3386 = vsel %vm3368, %v2959, %v3385
        %v3387 = vsel %vm3370, %v2963, %v3386
        %v3388 = vsel %vm3372, %v2967, %v3387
        %v3389 = vsel %vm3374, %v2971, %v3388
        %v3390 = vsel %vm3376, %v2979, %v2975
        %v3391 = vsel %vm3364, %v2983, %v3390
        %v3392 = vsel %vm3366, %v2987, %v3391
        %v3393 = vsel %vm3368, %v2991, %v3392
        %v3394 = vsel %vm3370, %v2995, %v3393
        %v3395 = vsel %vm3372, %v2999, %v3394
        %v3396 = vsel %vm3374, %v3003, %v3395
        %v3397 = vsel %vm3364, %v3011, %v3007
        %v3398 = vsel %vm3366, %v3015, %v3397
        %v3399 = vsel %vm3368, %v3019, %v3398
        %v3400 = vsel %vm3370, %v3023, %v3399
        %v3401 = vsel %vm3372, %v3027, %v3400
        %v3402 = vsel %vm3374, %v3031, %v3401
        %v3403 = vsel %vm3376, %v3039, %v3035
        %v3404 = vsel %vm3364, %v3043, %v3403
        %v3405 = vsel %vm3366, %v3047, %v3404
        %v3406 = vsel %vm3368, %v3051, %v3405
        %v3407 = vsel %vm3370, %v3055, %v3406
        %v3408 = vsel %vm3372, %v3059, %v3407
        %v3409 = vsel %vm3374, %v3063, %v3408
        %v3410 = vsel %vm3364, %v3071, %v3067
        %v3411 = vsel %vm3366, %v3075, %v3410
        %v3412 = vsel %vm3368, %v3079, %v3411
        %v3413 = vsel %vm3370, %v3083, %v3412
        %v3414 = vsel %vm3372, %v3087, %v3413
        %v3415 = vsel %vm3374, %v3091, %v3414
        %v3416 = vsel %vm3376, %v3099, %v3095
        %v3417 = vsel %vm3364, %v3103, %v3416
        %v3418 = vsel %vm3366, %v3107, %v3417
        %v3419 = vsel %vm3368, %v3111, %v3418
        %v3420 = vsel %vm3370, %v3115, %v3419
        %v3421 = vsel %vm3372, %v3119, %v3420
        %v3422 = vsel %vm3374, %v3123, %v3421
        %v3423 = vsel %vm3364, %v3131, %v3127
        %v3424 = vsel %vm3366, %v3135, %v3423
        %v3425 = vsel %vm3368, %v3139, %v3424
        %v3426 = vsel %vm3370, %v3143, %v3425
        %v3427 = vsel %vm3372, %v3147, %v3426
        %v3428 = vsel %vm3374, %v3151, %v3427
        %v3429 = vsel %vm3376, %v3159, %v3155
        %v3430 = vsel %vm3364, %v3163, %v3429
        %v3431 = vsel %vm3366, %v3167, %v3430
        %v3432 = vsel %vm3368, %v3171, %v3431
        %v3433 = vsel %vm3370, %v3175, %v3432
        %v3434 = vsel %vm3372, %v3179, %v3433
        %v3435 = vsel %vm3374, %v3183, %v3434
        %v3436 = vsel %vm3364, %v3191, %v3187
        %v3437 = vsel %vm3366, %v3195, %v3436
        %v3438 = vsel %vm3368, %v3199, %v3437
        %v3439 = vsel %vm3370, %v3203, %v3438
        %v3440 = vsel %vm3372, %v3207, %v3439
        %v3441 = vsel %vm3374, %v3211, %v3440
        %v3442 = vsel %vm3376, %v3219, %v3215
        %v3443 = vsel %vm3364, %v3223, %v3442
        %v3444 = vsel %vm3366, %v3227, %v3443
        %v3445 = vsel %vm3368, %v3231, %v3444
        %v3446 = vsel %vm3370, %v3235, %v3445
        %v3447 = vsel %vm3372, %v3239, %v3446
        %v3448 = vsel %vm3374, %v3243, %v3447
        %v3449 = vsel %vm3364, %v3251, %v3247
        %v3450 = vsel %vm3366, %v3255, %v3449
        %v3451 = vsel %vm3368, %v3259, %v3450
        %v3452 = vsel %vm3370, %v3263, %v3451
        %v3453 = vsel %vm3372, %v3267, %v3452
        %v3454 = vsel %vm3374, %v3271, %v3453
        %v3455 = vsel %vm3376, %v3279, %v3275
        %v3456 = vsel %vm3364, %v3283, %v3455
        %v3457 = vsel %vm3366, %v3287, %v3456
        %v3458 = vsel %vm3368, %v3291, %v3457
        %v3459 = vsel %vm3370, %v3295, %v3458
        %v3460 = vsel %vm3372, %v3299, %v3459
        %v3461 = vsel %vm3374, %v3303, %v3460
        %v3462 = vsel %vm3364, %v3311, %v3307
        %v3463 = vsel %vm3366, %v3315, %v3462
        %v3464 = vsel %vm3368, %v3319, %v3463
        %v3465 = vsel %vm3370, %v3323, %v3464
        %v3466 = vsel %vm3372, %v3327, %v3465
        %v3467 = vsel %vm3374, %v3331, %v3466
        %v3468 = vsel %vm3376, %v3339, %v3335
        %v3469 = vsel %vm3364, %v3343, %v3468
        %v3470 = vsel %vm3366, %v3347, %v3469
        %v3471 = vsel %vm3368, %v3351, %v3470
        %v3472 = vsel %vm3370, %v3355, %v3471
        %v3473 = vsel %vm3372, %v3359, %v3472
        %v3474 = vsel %vm3374, %v3363, %v3473
        %v3491 = vsel %vm509, 0.0, %v3375
        %v3492 = vsel %vm509, 0.0, %v3389
        %v3493 = vsel %vm509, 0.0, %v3402
        %v3494 = vsel %vm509, 0.0, %v3415
        %v3495 = vsel %vm509, 0.0, %v3428
        %v3496 = vsel %vm509, 0.0, %v3441
        %v3497 = vsel %vm509, 0.0, %v3454
        %v3498 = vsel %vm509, 0.0, %v3467
        %v3507 = vlaneseq
        %v3508 = vshrl.u32 %v3507, 7
        %v3509 = vsub.s32 0, %v3508
        %v3510 = vrot.slane %v2651, %v3509
        %v3511 = vlaneseq
        %v3512 = vshrl.u32 %v3511, 7
        %v3513 = vsub.s32 0, %v3512
        %v3514 = vrot.slane %v2667, %v3513
        %v3515 = vlaneseq
        %v3516 = vshrl.u32 %v3515, 7
        %v3517 = vsub.s32 0, %v3516
        %v3518 = vrot.slane %v2683, %v3517
        %v3519 = vlaneseq
        %v3520 = vshrl.u32 %v3519, 7
        %v3521 = vsub.s32 0, %v3520
        %v3522 = vrot.slane %v2699, %v3521
        %v3523 = vlaneseq
        %v3524 = vshrl.u32 %v3523, 7
        %v3525 = vsub.s32 0, %v3524
        %v3526 = vrot.slane %v2715, %v3525
        %v3527 = vlaneseq
        %v3528 = vshrl.u32 %v3527, 7
        %v3529 = vsub.s32 0, %v3528
        %v3530 = vrot.slane %v2731, %v3529
        %v3531 = vlaneseq
        %v3532 = vshrl.u32 %v3531, 7
        %v3533 = vsub.s32 0, %v3532
        %v3534 = vrot.slane %v2747, %v3533
        %v3535 = vlaneseq
        %v3536 = vshrl.u32 %v3535, 7
        %v3537 = vsub.s32 0, %v3536
        %v3538 = vrot.slane %v2763, %v3537
        %v3539 = vsel %vm3376, %v2895, %v2891
        %v3540 = vsel %vm3364, %v2899, %v3539
        %v3541 = vsel %vm3366, %v2903, %v3540
        %v3542 = vsel %vm3368, %v2907, %v3541
        %v3543 = vsel %vm3370, %v2911, %v3542
        %v3544 = vsel %vm3372, %v2915, %v3543
        %v3545 = vsel %vm3374, %v2919, %v3544
        %v3546 = vsel %vm3376, %v2927, %v2923
        %v3547 = vsel %vm3364, %v2931, %v3546
        %v3548 = vsel %vm3366, %v2935, %v3547
        %v3549 = vsel %vm3368, %v2939, %v3548
        %v3550 = vsel %vm3370, %v2943, %v3549
        %v3551 = vsel %vm3372, %v3510, %v3550
        %v3552 = vsel %vm3376, %v2955, %v2951
        %v3553 = vsel %vm3364, %v2959, %v3552
        %v3554 = vsel %vm3366, %v2963, %v3553
        %v3555 = vsel %vm3368, %v2967, %v3554
        %v3556 = vsel %vm3370, %v2971, %v3555
        %v3557 = vsel %vm3372, %v2975, %v3556
        %v3558 = vsel %vm3374, %v2979, %v3557
        %v3559 = vsel %vm3376, %v2987, %v2983
        %v3560 = vsel %vm3364, %v2991, %v3559
        %v3561 = vsel %vm3366, %v2995, %v3560
        %v3562 = vsel %vm3368, %v2999, %v3561
        %v3563 = vsel %vm3370, %v3003, %v3562
        %v3564 = vsel %vm3372, %v3514, %v3563
        %v3565 = vsel %vm3376, %v3015, %v3011
        %v3566 = vsel %vm3364, %v3019, %v3565
        %v3567 = vsel %vm3366, %v3023, %v3566
        %v3568 = vsel %vm3368, %v3027, %v3567
        %v3569 = vsel %vm3370, %v3031, %v3568
        %v3570 = vsel %vm3372, %v3035, %v3569
        %v3571 = vsel %vm3374, %v3039, %v3570
        %v3572 = vsel %vm3376, %v3047, %v3043
        %v3573 = vsel %vm3364, %v3051, %v3572
        %v3574 = vsel %vm3366, %v3055, %v3573
        %v3575 = vsel %vm3368, %v3059, %v3574
        %v3576 = vsel %vm3370, %v3063, %v3575
        %v3577 = vsel %vm3372, %v3518, %v3576
        %v3578 = vsel %vm3376, %v3075, %v3071
        %v3579 = vsel %vm3364, %v3079, %v3578
        %v3580 = vsel %vm3366, %v3083, %v3579
        %v3581 = vsel %vm3368, %v3087, %v3580
        %v3582 = vsel %vm3370, %v3091, %v3581
        %v3583 = vsel %vm3372, %v3095, %v3582
        %v3584 = vsel %vm3374, %v3099, %v3583
        %v3585 = vsel %vm3376, %v3107, %v3103
        %v3586 = vsel %vm3364, %v3111, %v3585
        %v3587 = vsel %vm3366, %v3115, %v3586
        %v3588 = vsel %vm3368, %v3119, %v3587
        %v3589 = vsel %vm3370, %v3123, %v3588
        %v3590 = vsel %vm3372, %v3522, %v3589
        %v3591 = vsel %vm3376, %v3135, %v3131
        %v3592 = vsel %vm3364, %v3139, %v3591
        %v3593 = vsel %vm3366, %v3143, %v3592
        %v3594 = vsel %vm3368, %v3147, %v3593
        %v3595 = vsel %vm3370, %v3151, %v3594
        %v3596 = vsel %vm3372, %v3155, %v3595
        %v3597 = vsel %vm3374, %v3159, %v3596
        %v3598 = vsel %vm3376, %v3167, %v3163
        %v3599 = vsel %vm3364, %v3171, %v3598
        %v3600 = vsel %vm3366, %v3175, %v3599
        %v3601 = vsel %vm3368, %v3179, %v3600
        %v3602 = vsel %vm3370, %v3183, %v3601
        %v3603 = vsel %vm3372, %v3526, %v3602
        %v3604 = vsel %vm3376, %v3195, %v3191
        %v3605 = vsel %vm3364, %v3199, %v3604
        %v3606 = vsel %vm3366, %v3203, %v3605
        %v3607 = vsel %vm3368, %v3207, %v3606
        %v3608 = vsel %vm3370, %v3211, %v3607
        %v3609 = vsel %vm3372, %v3215, %v3608
        %v3610 = vsel %vm3374, %v3219, %v3609
        %v3611 = vsel %vm3376, %v3227, %v3223
        %v3612 = vsel %vm3364, %v3231, %v3611
        %v3613 = vsel %vm3366, %v3235, %v3612
        %v3614 = vsel %vm3368, %v3239, %v3613
        %v3615 = vsel %vm3370, %v3243, %v3614
        %v3616 = vsel %vm3372, %v3530, %v3615
        %v3617 = vsel %vm3376, %v3255, %v3251
        %v3618 = vsel %vm3364, %v3259, %v3617
        %v3619 = vsel %vm3366, %v3263, %v3618
        %v3620 = vsel %vm3368, %v3267, %v3619
        %v3621 = vsel %vm3370, %v3271, %v3620
        %v3622 = vsel %vm3372, %v3275, %v3621
        %v3623 = vsel %vm3374, %v3279, %v3622
        %v3624 = vsel %vm3376, %v3287, %v3283
        %v3625 = vsel %vm3364, %v3291, %v3624
        %v3626 = vsel %vm3366, %v3295, %v3625
        %v3627 = vsel %vm3368, %v3299, %v3626
        %v3628 = vsel %vm3370, %v3303, %v3627
        %v3629 = vsel %vm3372, %v3534, %v3628
        %v3630 = vsel %vm3376, %v3315, %v3311
        %v3631 = vsel %vm3364, %v3319, %v3630
        %v3632 = vsel %vm3366, %v3323, %v3631
        %v3633 = vsel %vm3368, %v3327, %v3632
        %v3634 = vsel %vm3370, %v3331, %v3633
        %v3635 = vsel %vm3372, %v3335, %v3634
        %v3636 = vsel %vm3374, %v3339, %v3635
        %v3637 = vsel %vm3376, %v3347, %v3343
        %v3638 = vsel %vm3364, %v3351, %v3637
        %v3639 = vsel %vm3366, %v3355, %v3638
        %v3640 = vsel %vm3368, %v3359, %v3639
        %v3641 = vsel %vm3370, %v3363, %v3640
        %v3642 = vsel %vm3372, %v3538, %v3641
        %v3659 = vsel %vm606, %v3551, 0.0
        %v3660 = vsel %vm606, %v3564, 0.0
        %v3661 = vsel %vm606, %v3577, 0.0
        %v3662 = vsel %vm606, %v3590, 0.0
        %v3663 = vsel %vm606, %v3603, 0.0
        %v3664 = vsel %vm606, %v3616, 0.0
        %v3665 = vsel %vm606, %v3629, 0.0
        %v3666 = vsel %vm606, %v3642, 0.0
        %v3667 = vpack.c.bf16 %v3383, %v3491
        %v3668 = vpack.c.bf16 %v3396, %v3492
        %v3669 = vpack.c.bf16 %v3409, %v3493
        %v3670 = vpack.c.bf16 %v3422, %v3494
        %v3671 = vpack.c.bf16 %v3435, %v3495
        %v3672 = vpack.c.bf16 %v3448, %v3496
        %v3673 = vpack.c.bf16 %v3461, %v3497
        %v3674 = vpack.c.bf16 %v3474, %v3498
        %v3675 = vld [vmem:[%s3] sm:$0xf]
        %v3676 = vld [vmem:[%s3 + $0x4] sm:$0xf]
        %v3677 = vpack.c.bf16 %v2636, %v2636
        %v3678 = vpack.c.bf16 %v2637, %v2637
        %v3679 = vpack.c.bf16 %v2638, %v2638
        %v3680 = vpack.c.bf16 %v2639, %v2639
        %v3681 = vpack.c.bf16 %v2640, %v2640
        %v3682 = vpack.c.bf16 %v2641, %v2641
        %v3683 = vpack.c.bf16 %v2642, %v2642
        %v3684 = vpack.c.bf16 %v2643, %v2643
        %v3685 = vpack.c.bf16 %v2644, %v2644
        %v3686 = vpack.c.bf16 %v2645, %v2645
        %v3687 = vpack.c.bf16 %v2646, %v2646
        %v3688 = vpack.c.bf16 %v2647, %v2647
        %v3689 = vpack.c.bf16 %v2648, %v2648
        %v3690 = vpack.c.bf16 %v2649, %v2649
        %v3691 = vpack.c.bf16 %v2650, %v2650
        %v3692 = vpack.c.bf16 %v2651, %v2651
        %v3693 = vpack.c.bf16 %v2652, %v2652
        %v3694 = vpack.c.bf16 %v2653, %v2653
        %v3695 = vpack.c.bf16 %v2654, %v2654
        %v3696 = vpack.c.bf16 %v2655, %v2655
        %v3697 = vpack.c.bf16 %v2656, %v2656
        %v3698 = vpack.c.bf16 %v2657, %v2657
        %v3699 = vpack.c.bf16 %v2658, %v2658
        %v3700 = vpack.c.bf16 %v2659, %v2659
        %v3701 = vpack.c.bf16 %v2660, %v2660
        %v3702 = vpack.c.bf16 %v2661, %v2661
        %v3703 = vpack.c.bf16 %v2662, %v2662
        %v3704 = vpack.c.bf16 %v2663, %v2663
        %v3705 = vpack.c.bf16 %v2664, %v2664
        %v3706 = vpack.c.bf16 %v2665, %v2665
        %v3707 = vpack.c.bf16 %v2666, %v2666
        %v3708 = vpack.c.bf16 %v2667, %v2667
        %v3709 = vpack.c.bf16 %v2668, %v2668
        %v3710 = vpack.c.bf16 %v2669, %v2669
        %v3711 = vpack.c.bf16 %v2670, %v2670
        %v3712 = vpack.c.bf16 %v2671, %v2671
        %v3713 = vpack.c.bf16 %v2672, %v2672
        %v3714 = vpack.c.bf16 %v2673, %v2673
        %v3715 = vpack.c.bf16 %v2674, %v2674
        %v3716 = vpack.c.bf16 %v2675, %v2675
        %v3717 = vpack.c.bf16 %v2676, %v2676
        %v3718 = vpack.c.bf16 %v2677, %v2677
        %v3719 = vpack.c.bf16 %v2678, %v2678
        %v3720 = vpack.c.bf16 %v2679, %v2679
        %v3721 = vpack.c.bf16 %v2680, %v2680
        %v3722 = vpack.c.bf16 %v2681, %v2681
        %v3723 = vpack.c.bf16 %v2682, %v2682
        %v3724 = vpack.c.bf16 %v2683, %v2683
        %v3725 = vpack.c.bf16 %v2684, %v2684
        %v3726 = vpack.c.bf16 %v2685, %v2685
        %v3727 = vpack.c.bf16 %v2686, %v2686
        %v3728 = vpack.c.bf16 %v2687, %v2687
        %v3729 = vpack.c.bf16 %v2688, %v2688
        %v3730 = vpack.c.bf16 %v2689, %v2689
        %v3731 = vpack.c.bf16 %v2690, %v2690
        %v3732 = vpack.c.bf16 %v2691, %v2691
        %v3733 = vpack.c.bf16 %v2692, %v2692
        %v3734 = vpack.c.bf16 %v2693, %v2693
        %v3735 = vpack.c.bf16 %v2694, %v2694
        %v3736 = vpack.c.bf16 %v2695, %v2695
        %v3737 = vpack.c.bf16 %v2696, %v2696
        %v3738 = vpack.c.bf16 %v2697, %v2697
        %v3739 = vpack.c.bf16 %v2698, %v2698
        %v3740 = vpack.c.bf16 %v2699, %v2699
        %v3741 = vpack.c.bf16 %v2700, %v2700
        %v3742 = vpack.c.bf16 %v2701, %v2701
        %v3743 = vpack.c.bf16 %v2702, %v2702
        %v3744 = vpack.c.bf16 %v2703, %v2703
        %v3745 = vpack.c.bf16 %v2704, %v2704
        %v3746 = vpack.c.bf16 %v2705, %v2705
        %v3747 = vpack.c.bf16 %v2706, %v2706
        %v3748 = vpack.c.bf16 %v2707, %v2707
        %v3749 = vpack.c.bf16 %v2708, %v2708
        %v3750 = vpack.c.bf16 %v2709, %v2709
        %v3751 = vpack.c.bf16 %v2710, %v2710
        %v3752 = vpack.c.bf16 %v2711, %v2711
        %v3753 = vpack.c.bf16 %v2712, %v2712
        %v3754 = vpack.c.bf16 %v2713, %v2713
        %v3755 = vpack.c.bf16 %v2714, %v2714
        %v3756 = vpack.c.bf16 %v2715, %v2715
        %v3757 = vpack.c.bf16 %v2716, %v2716
        %v3758 = vpack.c.bf16 %v2717, %v2717
        %v3759 = vpack.c.bf16 %v2718, %v2718
        %v3760 = vpack.c.bf16 %v2719, %v2719
        %v3761 = vpack.c.bf16 %v2720, %v2720
        %v3762 = vpack.c.bf16 %v2721, %v2721
        %v3763 = vpack.c.bf16 %v2722, %v2722
        %v3764 = vpack.c.bf16 %v2723, %v2723
        %v3765 = vpack.c.bf16 %v2724, %v2724
        %v3766 = vpack.c.bf16 %v2725, %v2725
        %v3767 = vpack.c.bf16 %v2726, %v2726
        %v3768 = vpack.c.bf16 %v2727, %v2727
        %v3769 = vpack.c.bf16 %v2728, %v2728
        %v3770 = vpack.c.bf16 %v2729, %v2729
        %v3771 = vpack.c.bf16 %v2730, %v2730
        %v3772 = vpack.c.bf16 %v2731, %v2731
        %v3773 = vpack.c.bf16 %v2732, %v2732
        %v3774 = vpack.c.bf16 %v2733, %v2733
        %v3775 = vpack.c.bf16 %v2734, %v2734
        %v3776 = vpack.c.bf16 %v2735, %v2735
        %v3777 = vpack.c.bf16 %v2736, %v2736
        %v3778 = vpack.c.bf16 %v2737, %v2737
        %v3779 = vpack.c.bf16 %v2738, %v2738
        %v3780 = vpack.c.bf16 %v2739, %v2739
        %v3781 = vpack.c.bf16 %v2740, %v2740
        %v3782 = vpack.c.bf16 %v2741, %v2741
        %v3783 = vpack.c.bf16 %v2742, %v2742
        %v3784 = vpack.c.bf16 %v2743, %v2743
        %v3785 = vpack.c.bf16 %v2744, %v2744
        %v3786 = vpack.c.bf16 %v2745, %v2745
        %v3787 = vpack.c.bf16 %v2746, %v2746
        %v3788 = vpack.c.bf16 %v2747, %v2747
        %v3789 = vpack.c.bf16 %v2748, %v2748
        %v3790 = vpack.c.bf16 %v2749, %v2749
        %v3791 = vpack.c.bf16 %v2750, %v2750
        %v3792 = vpack.c.bf16 %v2751, %v2751
        %v3793 = vpack.c.bf16 %v2752, %v2752
        %v3794 = vpack.c.bf16 %v2753, %v2753
        %v3795 = vpack.c.bf16 %v2754, %v2754
        %v3796 = vpack.c.bf16 %v2755, %v2755
        %v3797 = vpack.c.bf16 %v2756, %v2756
        %v3798 = vpack.c.bf16 %v2757, %v2757
        %v3799 = vpack.c.bf16 %v2758, %v2758
        %v3800 = vpack.c.bf16 %v2759, %v2759
        %v3801 = vpack.c.bf16 %v2760, %v2760
        %v3802 = vpack.c.bf16 %v2761, %v2761
        %v3803 = vpack.c.bf16 %v2762, %v2762
        %v3804 = vpack.c.bf16 %v2763, %v2763
        %s3805 = scalar_lea.vmem %s3, 8
        %v3806 = vld [vmem:[%s3805] sm:$0xf]
        %v3807 = vld [vmem:[%s3805 + $0x4] sm:$0xf]
        %v3936 = vunpack.c.l.b16 %v3677
        %v3937 = vunpack.c.l.b16 %v3678
        %v3938 = vunpack.c.l.b16 %v3679
        %v3939 = vunpack.c.l.b16 %v3680
        %v3940 = vunpack.c.l.b16 %v3681
        %v3941 = vunpack.c.l.b16 %v3682
        %v3942 = vunpack.c.l.b16 %v3683
        %v3943 = vunpack.c.l.b16 %v3684
        %v3944 = vunpack.c.l.b16 %v3685
        %v3945 = vunpack.c.l.b16 %v3686
        %v3946 = vunpack.c.l.b16 %v3687
        %v3947 = vunpack.c.l.b16 %v3688
        %v3948 = vunpack.c.l.b16 %v3689
        %v3949 = vunpack.c.l.b16 %v3690
        %v3950 = vunpack.c.l.b16 %v3691
        %v3951 = vunpack.c.l.b16 %v3692
        %v3952 = vunpack.c.l.b16 %v3693
        %v3953 = vunpack.c.l.b16 %v3694
        %v3954 = vunpack.c.l.b16 %v3695
        %v3955 = vunpack.c.l.b16 %v3696
        %v3956 = vunpack.c.l.b16 %v3697
        %v3957 = vunpack.c.l.b16 %v3698
        %v3958 = vunpack.c.l.b16 %v3699
        %v3959 = vunpack.c.l.b16 %v3700
        %v3960 = vunpack.c.l.b16 %v3701
        %v3961 = vunpack.c.l.b16 %v3702
        %v3962 = vunpack.c.l.b16 %v3703
        %v3963 = vunpack.c.l.b16 %v3704
        %v3964 = vunpack.c.l.b16 %v3705
        %v3965 = vunpack.c.l.b16 %v3706
        %v3966 = vunpack.c.l.b16 %v3707
        %v3967 = vunpack.c.l.b16 %v3708
        %v3968 = vunpack.c.l.b16 %v3709
        %v3969 = vunpack.c.l.b16 %v3710
        %v3970 = vunpack.c.l.b16 %v3711
        %v3971 = vunpack.c.l.b16 %v3712
        %v3972 = vunpack.c.l.b16 %v3713
        %v3973 = vunpack.c.l.b16 %v3714
        %v3974 = vunpack.c.l.b16 %v3715
        %v3975 = vunpack.c.l.b16 %v3716
        %v3976 = vunpack.c.l.b16 %v3717
        %v3977 = vunpack.c.l.b16 %v3718
        %v3978 = vunpack.c.l.b16 %v3719
        %v3979 = vunpack.c.l.b16 %v3720
        %v3980 = vunpack.c.l.b16 %v3721
        %v3981 = vunpack.c.l.b16 %v3722
        %v3982 = vunpack.c.l.b16 %v3723
        %v3983 = vunpack.c.l.b16 %v3724
        %v3984 = vunpack.c.l.b16 %v3725
        %v3985 = vunpack.c.l.b16 %v3726
        %v3986 = vunpack.c.l.b16 %v3727
        %v3987 = vunpack.c.l.b16 %v3728
        %v3988 = vunpack.c.l.b16 %v3729
        %v3989 = vunpack.c.l.b16 %v3730
        %v3990 = vunpack.c.l.b16 %v3731
        %v3991 = vunpack.c.l.b16 %v3732
        %v3992 = vunpack.c.l.b16 %v3733
        %v3993 = vunpack.c.l.b16 %v3734
        %v3994 = vunpack.c.l.b16 %v3735
        %v3995 = vunpack.c.l.b16 %v3736
        %v3996 = vunpack.c.l.b16 %v3737
        %v3997 = vunpack.c.l.b16 %v3738
        %v3998 = vunpack.c.l.b16 %v3739
        %v3999 = vunpack.c.l.b16 %v3740
        %v4000 = vunpack.c.l.b16 %v3741
        %v4001 = vunpack.c.l.b16 %v3742
        %v4002 = vunpack.c.l.b16 %v3743
        %v4003 = vunpack.c.l.b16 %v3744
        %v4004 = vunpack.c.l.b16 %v3745
        %v4005 = vunpack.c.l.b16 %v3746
        %v4006 = vunpack.c.l.b16 %v3747
        %v4007 = vunpack.c.l.b16 %v3748
        %v4008 = vunpack.c.l.b16 %v3749
        %v4009 = vunpack.c.l.b16 %v3750
        %v4010 = vunpack.c.l.b16 %v3751
        %v4011 = vunpack.c.l.b16 %v3752
        %v4012 = vunpack.c.l.b16 %v3753
        %v4013 = vunpack.c.l.b16 %v3754
        %v4014 = vunpack.c.l.b16 %v3755
        %v4015 = vunpack.c.l.b16 %v3756
        %v4016 = vunpack.c.l.b16 %v3757
        %v4017 = vunpack.c.l.b16 %v3758
        %v4018 = vunpack.c.l.b16 %v3759
        %v4019 = vunpack.c.l.b16 %v3760
        %v4020 = vunpack.c.l.b16 %v3761
        %v4021 = vunpack.c.l.b16 %v3762
        %v4022 = vunpack.c.l.b16 %v3763
        %v4023 = vunpack.c.l.b16 %v3764
        %v4024 = vunpack.c.l.b16 %v3765
        %v4025 = vunpack.c.l.b16 %v3766
        %v4026 = vunpack.c.l.b16 %v3767
        %v4027 = vunpack.c.l.b16 %v3768
        %v4028 = vunpack.c.l.b16 %v3769
        %v4029 = vunpack.c.l.b16 %v3770
        %v4030 = vunpack.c.l.b16 %v3771
        %v4031 = vunpack.c.l.b16 %v3772
        %v4032 = vunpack.c.l.b16 %v3773
        %v4033 = vunpack.c.l.b16 %v3774
        %v4034 = vunpack.c.l.b16 %v3775
        %v4035 = vunpack.c.l.b16 %v3776
        %v4036 = vunpack.c.l.b16 %v3777
        %v4037 = vunpack.c.l.b16 %v3778
        %v4038 = vunpack.c.l.b16 %v3779
        %v4039 = vunpack.c.l.b16 %v3780
        %v4040 = vunpack.c.l.b16 %v3781
        %v4041 = vunpack.c.l.b16 %v3782
        %v4042 = vunpack.c.l.b16 %v3783
        %v4043 = vunpack.c.l.b16 %v3784
        %v4044 = vunpack.c.l.b16 %v3785
        %v4045 = vunpack.c.l.b16 %v3786
        %v4046 = vunpack.c.l.b16 %v3787
        %v4047 = vunpack.c.l.b16 %v3788
        %v4048 = vunpack.c.l.b16 %v3789
        %v4049 = vunpack.c.l.b16 %v3790
        %v4050 = vunpack.c.l.b16 %v3791
        %v4051 = vunpack.c.l.b16 %v3792
        %v4052 = vunpack.c.l.b16 %v3793
        %v4053 = vunpack.c.l.b16 %v3794
        %v4054 = vunpack.c.l.b16 %v3795
        %v4055 = vunpack.c.l.b16 %v3796
        %v4056 = vunpack.c.l.b16 %v3797
        %v4057 = vunpack.c.l.b16 %v3798
        %v4058 = vunpack.c.l.b16 %v3799
        %v4059 = vunpack.c.l.b16 %v3800
        %v4060 = vunpack.c.l.b16 %v3801
        %v4061 = vunpack.c.l.b16 %v3802
        %v4062 = vunpack.c.l.b16 %v3803
        %v4063 = vunpack.c.l.b16 %v3804
        %v4064 = vrot.slane %v3937, 7
        %v4065 = vsel %vm3376, %v4064, %v3936
        %v4066 = vrot.slane %v3938, 6
        %v4067 = vsel %vm3364, %v4066, %v4065
        %v4068 = vrot.slane %v3939, 5
        %v4069 = vsel %vm3366, %v4068, %v4067
        %v4070 = vrot.slane %v3940, 4
        %v4071 = vsel %vm3368, %v4070, %v4069
        %v4072 = vrot.slane %v3941, 3
        %v4073 = vsel %vm3370, %v4072, %v4071
        %v4074 = vrot.slane %v3942, 2
        %v4075 = vsel %vm3372, %v4074, %v4073
        %v4076 = vrot.slane %v3943, 1
        %v4077 = vsel %vm3374, %v4076, %v4075
        %v4078 = vrot.slane %v3945, 7
        %v4079 = vsel %vm3376, %v4078, %v3944
        %v4080 = vrot.slane %v3946, 6
        %v4081 = vsel %vm3364, %v4080, %v4079
        %v4082 = vrot.slane %v3947, 5
        %v4083 = vsel %vm3366, %v4082, %v4081
        %v4084 = vrot.slane %v3948, 4
        %v4085 = vsel %vm3368, %v4084, %v4083
        %v4086 = vrot.slane %v3949, 3
        %v4087 = vsel %vm3370, %v4086, %v4085
        %v4088 = vrot.slane %v3950, 2
        %v4089 = vsel %vm3372, %v4088, %v4087
        %v4090 = vrot.slane %v3951, 1
        %v4091 = vsel %vm3374, %v4090, %v4089
        %v4092 = vrot.slane %v3953, 7
        %v4093 = vsel %vm3376, %v4092, %v3952
        %v4094 = vrot.slane %v3954, 6
        %v4095 = vsel %vm3364, %v4094, %v4093
        %v4096 = vrot.slane %v3955, 5
        %v4097 = vsel %vm3366, %v4096, %v4095
        %v4098 = vrot.slane %v3956, 4
        %v4099 = vsel %vm3368, %v4098, %v4097
        %v4100 = vrot.slane %v3957, 3
        %v4101 = vsel %vm3370, %v4100, %v4099
        %v4102 = vrot.slane %v3958, 2
        %v4103 = vsel %vm3372, %v4102, %v4101
        %v4104 = vrot.slane %v3959, 1
        %v4105 = vsel %vm3374, %v4104, %v4103
        %v4106 = vrot.slane %v3961, 7
        %v4107 = vsel %vm3376, %v4106, %v3960
        %v4108 = vrot.slane %v3962, 6
        %v4109 = vsel %vm3364, %v4108, %v4107
        %v4110 = vrot.slane %v3963, 5
        %v4111 = vsel %vm3366, %v4110, %v4109
        %v4112 = vrot.slane %v3964, 4
        %v4113 = vsel %vm3368, %v4112, %v4111
        %v4114 = vrot.slane %v3965, 3
        %v4115 = vsel %vm3370, %v4114, %v4113
        %v4116 = vrot.slane %v3966, 2
        %v4117 = vsel %vm3372, %v4116, %v4115
        %v4118 = vrot.slane %v3967, 1
        %v4119 = vsel %vm3374, %v4118, %v4117
        %v4120 = vrot.slane %v3969, 7
        %v4121 = vsel %vm3376, %v4120, %v3968
        %v4122 = vrot.slane %v3970, 6
        %v4123 = vsel %vm3364, %v4122, %v4121
        %v4124 = vrot.slane %v3971, 5
        %v4125 = vsel %vm3366, %v4124, %v4123
        %v4126 = vrot.slane %v3972, 4
        %v4127 = vsel %vm3368, %v4126, %v4125
        %v4128 = vrot.slane %v3973, 3
        %v4129 = vsel %vm3370, %v4128, %v4127
        %v4130 = vrot.slane %v3974, 2
        %v4131 = vsel %vm3372, %v4130, %v4129
        %v4132 = vrot.slane %v3975, 1
        %v4133 = vsel %vm3374, %v4132, %v4131
        %v4134 = vrot.slane %v3977, 7
        %v4135 = vsel %vm3376, %v4134, %v3976
        %v4136 = vrot.slane %v3978, 6
        %v4137 = vsel %vm3364, %v4136, %v4135
        %v4138 = vrot.slane %v3979, 5
        %v4139 = vsel %vm3366, %v4138, %v4137
        %v4140 = vrot.slane %v3980, 4
        %v4141 = vsel %vm3368, %v4140, %v4139
        %v4142 = vrot.slane %v3981, 3
        %v4143 = vsel %vm3370, %v4142, %v4141
        %v4144 = vrot.slane %v3982, 2
        %v4145 = vsel %vm3372, %v4144, %v4143
        %v4146 = vrot.slane %v3983, 1
        %v4147 = vsel %vm3374, %v4146, %v4145
        %v4148 = vrot.slane %v3985, 7
        %v4149 = vsel %vm3376, %v4148, %v3984
        %v4150 = vrot.slane %v3986, 6
        %v4151 = vsel %vm3364, %v4150, %v4149
        %v4152 = vrot.slane %v3987, 5
        %v4153 = vsel %vm3366, %v4152, %v4151
        %v4154 = vrot.slane %v3988, 4
        %v4155 = vsel %vm3368, %v4154, %v4153
        %v4156 = vrot.slane %v3989, 3
        %v4157 = vsel %vm3370, %v4156, %v4155
        %v4158 = vrot.slane %v3990, 2
        %v4159 = vsel %vm3372, %v4158, %v4157
        %v4160 = vrot.slane %v3991, 1
        %v4161 = vsel %vm3374, %v4160, %v4159
        %v4162 = vrot.slane %v3993, 7
        %v4163 = vsel %vm3376, %v4162, %v3992
        %v4164 = vrot.slane %v3994, 6
        %v4165 = vsel %vm3364, %v4164, %v4163
        %v4166 = vrot.slane %v3995, 5
        %v4167 = vsel %vm3366, %v4166, %v4165
        %v4168 = vrot.slane %v3996, 4
        %v4169 = vsel %vm3368, %v4168, %v4167
        %v4170 = vrot.slane %v3997, 3
        %v4171 = vsel %vm3370, %v4170, %v4169
        %v4172 = vrot.slane %v3998, 2
        %v4173 = vsel %vm3372, %v4172, %v4171
        %v4174 = vrot.slane %v3999, 1
        %v4175 = vsel %vm3374, %v4174, %v4173
        %v4176 = vrot.slane %v4001, 7
        %v4177 = vsel %vm3376, %v4176, %v4000
        %v4178 = vrot.slane %v4002, 6
        %v4179 = vsel %vm3364, %v4178, %v4177
        %v4180 = vrot.slane %v4003, 5
        %v4181 = vsel %vm3366, %v4180, %v4179
        %v4182 = vrot.slane %v4004, 4
        %v4183 = vsel %vm3368, %v4182, %v4181
        %v4184 = vrot.slane %v4005, 3
        %v4185 = vsel %vm3370, %v4184, %v4183
        %v4186 = vrot.slane %v4006, 2
        %v4187 = vsel %vm3372, %v4186, %v4185
        %v4188 = vrot.slane %v4007, 1
        %v4189 = vsel %vm3374, %v4188, %v4187
        %v4190 = vrot.slane %v4009, 7
        %v4191 = vsel %vm3376, %v4190, %v4008
        %v4192 = vrot.slane %v4010, 6
        %v4193 = vsel %vm3364, %v4192, %v4191
        %v4194 = vrot.slane %v4011, 5
        %v4195 = vsel %vm3366, %v4194, %v4193
        %v4196 = vrot.slane %v4012, 4
        %v4197 = vsel %vm3368, %v4196, %v4195
        %v4198 = vrot.slane %v4013, 3
        %v4199 = vsel %vm3370, %v4198, %v4197
        %v4200 = vrot.slane %v4014, 2
        %v4201 = vsel %vm3372, %v4200, %v4199
        %v4202 = vrot.slane %v4015, 1
        %v4203 = vsel %vm3374, %v4202, %v4201
        %v4204 = vrot.slane %v4017, 7
        %v4205 = vsel %vm3376, %v4204, %v4016
        %v4206 = vrot.slane %v4018, 6
        %v4207 = vsel %vm3364, %v4206, %v4205
        %v4208 = vrot.slane %v4019, 5
        %v4209 = vsel %vm3366, %v4208, %v4207
        %v4210 = vrot.slane %v4020, 4
        %v4211 = vsel %vm3368, %v4210, %v4209
        %v4212 = vrot.slane %v4021, 3
        %v4213 = vsel %vm3370, %v4212, %v4211
        %v4214 = vrot.slane %v4022, 2
        %v4215 = vsel %vm3372, %v4214, %v4213
        %v4216 = vrot.slane %v4023, 1
        %v4217 = vsel %vm3374, %v4216, %v4215
        %v4218 = vrot.slane %v4025, 7
        %v4219 = vsel %vm3376, %v4218, %v4024
        %v4220 = vrot.slane %v4026, 6
        %v4221 = vsel %vm3364, %v4220, %v4219
        %v4222 = vrot.slane %v4027, 5
        %v4223 = vsel %vm3366, %v4222, %v4221
        %v4224 = vrot.slane %v4028, 4
        %v4225 = vsel %vm3368, %v4224, %v4223
        %v4226 = vrot.slane %v4029, 3
        %v4227 = vsel %vm3370, %v4226, %v4225
        %v4228 = vrot.slane %v4030, 2
        %v4229 = vsel %vm3372, %v4228, %v4227
        %v4230 = vrot.slane %v4031, 1
        %v4231 = vsel %vm3374, %v4230, %v4229
        %v4232 = vrot.slane %v4033, 7
        %v4233 = vsel %vm3376, %v4232, %v4032
        %v4234 = vrot.slane %v4034, 6
        %v4235 = vsel %vm3364, %v4234, %v4233
        %v4236 = vrot.slane %v4035, 5
        %v4237 = vsel %vm3366, %v4236, %v4235
        %v4238 = vrot.slane %v4036, 4
        %v4239 = vsel %vm3368, %v4238, %v4237
        %v4240 = vrot.slane %v4037, 3
        %v4241 = vsel %vm3370, %v4240, %v4239
        %v4242 = vrot.slane %v4038, 2
        %v4243 = vsel %vm3372, %v4242, %v4241
        %v4244 = vrot.slane %v4039, 1
        %v4245 = vsel %vm3374, %v4244, %v4243
        %v4246 = vrot.slane %v4041, 7
        %v4247 = vsel %vm3376, %v4246, %v4040
        %v4248 = vrot.slane %v4042, 6
        %v4249 = vsel %vm3364, %v4248, %v4247
        %v4250 = vrot.slane %v4043, 5
        %v4251 = vsel %vm3366, %v4250, %v4249
        %v4252 = vrot.slane %v4044, 4
        %v4253 = vsel %vm3368, %v4252, %v4251
        %v4254 = vrot.slane %v4045, 3
        %v4255 = vsel %vm3370, %v4254, %v4253
        %v4256 = vrot.slane %v4046, 2
        %v4257 = vsel %vm3372, %v4256, %v4255
        %v4258 = vrot.slane %v4047, 1
        %v4259 = vsel %vm3374, %v4258, %v4257
        %v4260 = vrot.slane %v4049, 7
        %v4261 = vsel %vm3376, %v4260, %v4048
        %v4262 = vrot.slane %v4050, 6
        %v4263 = vsel %vm3364, %v4262, %v4261
        %v4264 = vrot.slane %v4051, 5
        %v4265 = vsel %vm3366, %v4264, %v4263
        %v4266 = vrot.slane %v4052, 4
        %v4267 = vsel %vm3368, %v4266, %v4265
        %v4268 = vrot.slane %v4053, 3
        %v4269 = vsel %vm3370, %v4268, %v4267
        %v4270 = vrot.slane %v4054, 2
        %v4271 = vsel %vm3372, %v4270, %v4269
        %v4272 = vrot.slane %v4055, 1
        %v4273 = vsel %vm3374, %v4272, %v4271
        %v4274 = vrot.slane %v4057, 7
        %v4275 = vsel %vm3376, %v4274, %v4056
        %v4276 = vrot.slane %v4058, 6
        %v4277 = vsel %vm3364, %v4276, %v4275
        %v4278 = vrot.slane %v4059, 5
        %v4279 = vsel %vm3366, %v4278, %v4277
        %v4280 = vrot.slane %v4060, 4
        %v4281 = vsel %vm3368, %v4280, %v4279
        %v4282 = vrot.slane %v4061, 3
        %v4283 = vsel %vm3370, %v4282, %v4281
        %v4284 = vrot.slane %v4062, 2
        %v4285 = vsel %vm3372, %v4284, %v4283
        %v4286 = vrot.slane %v4063, 1
        %v4287 = vsel %vm3374, %v4286, %v4285
        %v4288 = vpack.c.b16 %v4091, %v4077
        %v4289 = vpack.c.b16 %v4119, %v4105
        %v4290 = vpack.c.b16 %v4147, %v4133
        %v4291 = vpack.c.b16 %v4175, %v4161
        %v4292 = vpack.c.b16 %v4203, %v4189
        %v4293 = vpack.c.b16 %v4231, %v4217
        %v4294 = vpack.c.b16 %v4259, %v4245
        %v4295 = vpack.c.b16 %v4287, %v4273
        %v4298 = vunpack.c.l.b16 %v3806
        %v4299 = vunpack.c.l.b16 %v3807
        %v4300 = vpack.c.b16 %v4299, %v4298
        %vm4302 = vcmask 130048
        %v4304 = vsel %vm4302, %v4288, 0
        %v4307 = vsel %vm4302, %v4289, 0
        %v4310 = vsel %vm4302, %v4290, 0
        %v4313 = vsel %vm4302, %v4291, 0
        %v4316 = vsel %vm4302, %v4292, 0
        %v4319 = vsel %vm4302, %v4293, 0
        %v4322 = vsel %vm4302, %v4294, 0
        %v4325 = vsel %vm4302, %v4295, 0
        %4327 = vmatprep.subr.bf16.mxu0 0
        %4328 = vmatpush1.bf16.msra.mxu0 %v4300
        %4329 = vmatprep.subr.bf16.mxu0 0
        %4330 = vmatpush1.bf16.msra.mxu0 0
        %4331 = vmatprep.subr.bf16.mxu0 0
        %4332 = vmatpush1.bf16.msra.mxu0 0
        %4333 = vmatprep.subr.bf16.mxu0 0
        %4334 = vmatpush1.bf16.msra.mxu0 0
        %4335 = vmatprep.subr.bf16.mxu0 0
        %4336 = vmatpush1.bf16.msra.mxu0 0
        %4337 = vmatprep.subr.bf16.mxu0 0
        %4338 = vmatpush1.bf16.msra.mxu0 0
        %4339 = vmatprep.subr.bf16.mxu0 0
        %4340 = vmatpush1.bf16.msra.mxu0 0
        %4341 = vmatprep.subr.bf16.mxu0 0
        %4342 = vmatpush1.bf16.msra.mxu0 0
        %4343 = vmatprep.subr.bf16.mxu0 0
        %4344 = vmatpush1.bf16.msra.mxu0 0
        %4345 = vmatprep.subr.bf16.mxu0 0
        %4346 = vmatpush1.bf16.msra.mxu0 0
        %4347 = vmatprep.subr.bf16.mxu0 0
        %4348 = vmatpush1.bf16.msra.mxu0 0
        %4349 = vmatprep.subr.bf16.mxu0 0
        %4350 = vmatpush1.bf16.msra.mxu0 0
        %4351 = vmatprep.subr.bf16.mxu0 0
        %4352 = vmatpush1.bf16.msra.mxu0 0
        %4353 = vmatprep.subr.bf16.mxu0 0
        %4354 = vmatpush1.bf16.msra.mxu0 0
        %4355 = vmatprep.subr.bf16.mxu0 0
        %4356 = vmatpush1.bf16.msra.mxu0 0
        %4357 = vmatprep.subr.bf16.mxu0 0
        %4358 = vmatpush1.bf16.msra.mxu0 0
        %4359 = vmatprep.mubr.bf16.mxu0 0
        %4360 = vmatmul.mubr.bf16.gmra.mrb[0].mxu0 %v4304
        %v4361 = vpop.f32.mrb[0].mxu0
        %v4362 = vadd.f32 0.0, %v4361
        %v4363 = vpop.f32.mrb[0].mxu0
        %v4364 = vpop.f32.mrb[0].mxu0
        %v4365 = vadd.f32 0.0, %v4364
        %v4366 = vpop.f32.mrb[0].mxu0
        %4367 = vmatprep.mubr.bf16.mxu0 0
        %4368 = vmatmul.mubr.bf16.gmra.mrb[0].mxu0 %v4307
        %v4369 = vpop.f32.mrb[0].mxu0
        %v4370 = vadd.f32 0.0, %v4369
        %v4371 = vpop.f32.mrb[0].mxu0
        %v4372 = vpop.f32.mrb[0].mxu0
        %v4373 = vadd.f32 0.0, %v4372
        %v4374 = vpop.f32.mrb[0].mxu0
        %4375 = vmatprep.mubr.bf16.mxu0 0
        %4376 = vmatmul.mubr.bf16.gmra.mrb[0].mxu0 %v4310
        %v4377 = vpop.f32.mrb[0].mxu0
        %v4378 = vadd.f32 0.0, %v4377
        %v4379 = vpop.f32.mrb[0].mxu0
        %v4380 = vpop.f32.mrb[0].mxu0
        %v4381 = vadd.f32 0.0, %v4380
        %v4382 = vpop.f32.mrb[0].mxu0
        %4383 = vmatprep.mubr.bf16.mxu0 0
        %4384 = vmatmul.mubr.bf16.gmra.mrb[0].mxu0 %v4313
        %v4385 = vpop.f32.mrb[0].mxu0
        %v4386 = vadd.f32 0.0, %v4385
        %v4387 = vpop.f32.mrb[0].mxu0
        %v4388 = vpop.f32.mrb[0].mxu0
        %v4389 = vadd.f32 0.0, %v4388
        %v4390 = vpop.f32.mrb[0].mxu0
        %4391 = vmatprep.mubr.bf16.mxu0 0
        %4392 = vmatmul.mubr.bf16.gmra.mrb[0].mxu0 %v4316
        %v4393 = vpop.f32.mrb[0].mxu0
        %v4394 = vadd.f32 0.0, %v4393
        %v4395 = vpop.f32.mrb[0].mxu0
        %v4396 = vpop.f32.mrb[0].mxu0
        %v4397 = vadd.f32 0.0, %v4396
        %v4398 = vpop.f32.mrb[0].mxu0
        %4399 = vmatprep.mubr.bf16.mxu0 0
        %4400 = vmatmul.mubr.bf16.gmra.mrb[0].mxu0 %v4319
        %v4401 = vpop.f32.mrb[0].mxu0
        %v4402 = vadd.f32 0.0, %v4401
        %v4403 = vpop.f32.mrb[0].mxu0
        %v4404 = vpop.f32.mrb[0].mxu0
        %v4405 = vadd.f32 0.0, %v4404
        %v4406 = vpop.f32.mrb[0].mxu0
        %4407 = vmatprep.mubr.bf16.mxu0 0
        %4408 = vmatmul.mubr.bf16.gmra.mrb[0].mxu0 %v4322
        %v4409 = vpop.f32.mrb[0].mxu0
        %v4410 = vadd.f32 0.0, %v4409
        %v4411 = vpop.f32.mrb[0].mxu0
        %v4412 = vpop.f32.mrb[0].mxu0
        %v4413 = vadd.f32 0.0, %v4412
        %v4414 = vpop.f32.mrb[0].mxu0
        %4415 = vmatprep.mubr.bf16.mxu0 0
        %4416 = vmatmul.mubr.bf16.gmra.mrb[0].mxu0 %v4325
        %v4417 = vpop.f32.mrb[0].mxu0
        %v4418 = vadd.f32 0.0, %v4417
        %v4419 = vpop.f32.mrb[0].mxu0
        %v4420 = vpop.f32.mrb[0].mxu0
        %v4421 = vadd.f32 0.0, %v4420
        %v4422 = vpop.f32.mrb[0].mxu0
        %4423 = vdwg.mxu0
        %v4426 = vunpack.c.l.b16 %v3675
        %v4427 = vunpack.c.l.b16 %v3676
        %v4428 = vpack.c.b16 %v4427, %v4426
        %v4431 = vsel %vm4302, %v3667, 0
        %v4434 = vsel %vm4302, %v3668, 0
        %v4437 = vsel %vm4302, %v3669, 0
        %v4440 = vsel %vm4302, %v3670, 0
        %v4443 = vsel %vm4302, %v3671, 0
        %v4446 = vsel %vm4302, %v3672, 0
        %v4449 = vsel %vm4302, %v3673, 0
        %v4452 = vsel %vm4302, %v3674, 0
        %4454 = vmatprep.subr.bf16.mxu0 0
        %4455 = vmatpush1.bf16.msra.mxu0 %v4428
        %4456 = vmatprep.subr.bf16.mxu0 0
        %4457 = vmatpush1.bf16.msra.mxu0 0
        %4458 = vmatprep.subr.bf16.mxu0 0
        %4459 = vmatpush1.bf16.msra.mxu0 0
        %4460 = vmatprep.subr.bf16.mxu0 0
        %4461 = vmatpush1.bf16.msra.mxu0 0
        %4462 = vmatprep.subr.bf16.mxu0 0
        %4463 = vmatpush1.bf16.msra.mxu0 0
        %4464 = vmatprep.subr.bf16.mxu0 0
        %4465 = vmatpush1.bf16.msra.mxu0 0
        %4466 = vmatprep.subr.bf16.mxu0 0
        %4467 = vmatpush1.bf16.msra.mxu0 0
        %4468 = vmatprep.subr.bf16.mxu0 0
        %4469 = vmatpush1.bf16.msra.mxu0 0
        %4470 = vmatprep.subr.bf16.mxu0 0
        %4471 = vmatpush1.bf16.msra.mxu0 0
        %4472 = vmatprep.subr.bf16.mxu0 0
        %4473 = vmatpush1.bf16.msra.mxu0 0
        %4474 = vmatprep.subr.bf16.mxu0 0
        %4475 = vmatpush1.bf16.msra.mxu0 0
        %4476 = vmatprep.subr.bf16.mxu0 0
        %4477 = vmatpush1.bf16.msra.mxu0 0
        %4478 = vmatprep.subr.bf16.mxu0 0
        %4479 = vmatpush1.bf16.msra.mxu0 0
        %4480 = vmatprep.subr.bf16.mxu0 0
        %4481 = vmatpush1.bf16.msra.mxu0 0
        %4482 = vmatprep.subr.bf16.mxu0 0
        %4483 = vmatpush1.bf16.msra.mxu0 0
        %4484 = vmatprep.subr.bf16.mxu0 0
        %4485 = vmatpush1.bf16.msra.mxu0 0
        %4486 = vmatprep.mubr.bf16.mxu0 0
        %4487 = vmatmul.mubr.bf16.gmra.mrb[0].mxu0 %v4431
        %v4488 = vpop.f32.mrb[0].mxu0
        %v4489 = vadd.f32 %v4362, %v4488
        %v4490 = vpop.f32.mrb[0].mxu0
        %v4491 = vpop.f32.mrb[0].mxu0
        %v4492 = vadd.f32 %v4365, %v4491
        %v4493 = vpop.f32.mrb[0].mxu0
        %4494 = vmatprep.mubr.bf16.mxu0 0
        %4495 = vmatmul.mubr.bf16.gmra.mrb[0].mxu0 %v4434
        %v4496 = vpop.f32.mrb[0].mxu0
        %v4497 = vadd.f32 %v4370, %v4496
        %v4498 = vpop.f32.mrb[0].mxu0
        %v4499 = vpop.f32.mrb[0].mxu0
        %v4500 = vadd.f32 %v4373, %v4499
        %v4501 = vpop.f32.mrb[0].mxu0
        %4502 = vmatprep.mubr.bf16.mxu0 0
        %4503 = vmatmul.mubr.bf16.gmra.mrb[0].mxu0 %v4437
        %v4504 = vpop.f32.mrb[0].mxu0
        %v4505 = vadd.f32 %v4378, %v4504
        %v4506 = vpop.f32.mrb[0].mxu0
        %v4507 = vpop.f32.mrb[0].mxu0
        %v4508 = vadd.f32 %v4381, %v4507
        %v4509 = vpop.f32.mrb[0].mxu0
        %4510 = vmatprep.mubr.bf16.mxu0 0
        %4511 = vmatmul.mubr.bf16.gmra.mrb[0].mxu0 %v4440
        %v4512 = vpop.f32.mrb[0].mxu0
        %v4513 = vadd.f32 %v4386, %v4512
        %v4514 = vpop.f32.mrb[0].mxu0
        %v4515 = vpop.f32.mrb[0].mxu0
        %v4516 = vadd.f32 %v4389, %v4515
        %v4517 = vpop.f32.mrb[0].mxu0
        %4518 = vmatprep.mubr.bf16.mxu0 0
        %4519 = vmatmul.mubr.bf16.gmra.mrb[0].mxu0 %v4443
        %v4520 = vpop.f32.mrb[0].mxu0
        %v4521 = vadd.f32 %v4394, %v4520
        %v4522 = vpop.f32.mrb[0].mxu0
        %v4523 = vpop.f32.mrb[0].mxu0
        %v4524 = vadd.f32 %v4397, %v4523
        %v4525 = vpop.f32.mrb[0].mxu0
        %4526 = vmatprep.mubr.bf16.mxu0 0
        %4527 = vmatmul.mubr.bf16.gmra.mrb[0].mxu0 %v4446
        %v4528 = vpop.f32.mrb[0].mxu0
        %v4529 = vadd.f32 %v4402, %v4528
        %v4530 = vpop.f32.mrb[0].mxu0
        %v4531 = vpop.f32.mrb[0].mxu0
        %v4532 = vadd.f32 %v4405, %v4531
        %v4533 = vpop.f32.mrb[0].mxu0
        %4534 = vmatprep.mubr.bf16.mxu0 0
        %4535 = vmatmul.mubr.bf16.gmra.mrb[0].mxu0 %v4449
        %v4536 = vpop.f32.mrb[0].mxu0
        %v4537 = vadd.f32 %v4410, %v4536
        %v4538 = vpop.f32.mrb[0].mxu0
        %v4539 = vpop.f32.mrb[0].mxu0
        %v4540 = vadd.f32 %v4413, %v4539
        %v4541 = vpop.f32.mrb[0].mxu0
        %4542 = vmatprep.mubr.bf16.mxu0 0
        %4543 = vmatmul.mubr.bf16.gmra.mrb[0].mxu0 %v4452
        %v4544 = vpop.f32.mrb[0].mxu0
        %v4545 = vadd.f32 %v4418, %v4544
        %v4546 = vpop.f32.mrb[0].mxu0
        %v4547 = vpop.f32.mrb[0].mxu0
        %v4548 = vadd.f32 %v4421, %v4547
        %v4549 = vpop.f32.mrb[0].mxu0
        %4550 = vdwg.mxu0
        %v4551 = vpack.c.bf16 %v3659, %v3545
        %v4552 = vpack.c.bf16 %v3660, %v3558
        %v4553 = vpack.c.bf16 %v3661, %v3571
        %v4554 = vpack.c.bf16 %v3662, %v3584
        %v4555 = vpack.c.bf16 %v3663, %v3597
        %v4556 = vpack.c.bf16 %v3664, %v3610
        %v4557 = vpack.c.bf16 %v3665, %v3623
        %v4558 = vpack.c.bf16 %v3666, %v3636
        %s4559 = scalar_lea.vmem %s3, 16
        %v4560 = vld [vmem:[%s4559] sm:$0xf]
        %v4561 = vld [vmem:[%s4559 + $0x4] sm:$0xf]
        %v4564 = vunpack.c.l.b16 %v4560
        %v4565 = vunpack.c.l.b16 %v4561
        %v4566 = vpack.c.b16 %v4565, %v4564
        %v4569 = vsel %vm4302, %v4551, 0
        %v4572 = vsel %vm4302, %v4552, 0
        %v4575 = vsel %vm4302, %v4553, 0
        %v4578 = vsel %vm4302, %v4554, 0
        %v4581 = vsel %vm4302, %v4555, 0
        %v4584 = vsel %vm4302, %v4556, 0
        %v4587 = vsel %vm4302, %v4557, 0
        %v4590 = vsel %vm4302, %v4558, 0
        %4592 = vmatprep.subr.bf16.mxu0 0
        %4593 = vmatpush1.bf16.msra.mxu0 %v4566
        %4594 = vmatprep.subr.bf16.mxu0 0
        %4595 = vmatpush1.bf16.msra.mxu0 0
        %4596 = vmatprep.subr.bf16.mxu0 0
        %4597 = vmatpush1.bf16.msra.mxu0 0
        %4598 = vmatprep.subr.bf16.mxu0 0
        %4599 = vmatpush1.bf16.msra.mxu0 0
        %4600 = vmatprep.subr.bf16.mxu0 0
        %4601 = vmatpush1.bf16.msra.mxu0 0
        %4602 = vmatprep.subr.bf16.mxu0 0
        %4603 = vmatpush1.bf16.msra.mxu0 0
        %4604 = vmatprep.subr.bf16.mxu0 0
        %4605 = vmatpush1.bf16.msra.mxu0 0
        %4606 = vmatprep.subr.bf16.mxu0 0
        %4607 = vmatpush1.bf16.msra.mxu0 0
        %4608 = vmatprep.subr.bf16.mxu0 0
        %4609 = vmatpush1.bf16.msra.mxu0 0
        %4610 = vmatprep.subr.bf16.mxu0 0
        %4611 = vmatpush1.bf16.msra.mxu0 0
        %4612 = vmatprep.subr.bf16.mxu0 0
        %4613 = vmatpush1.bf16.msra.mxu0 0
        %4614 = vmatprep.subr.bf16.mxu0 0
        %4615 = vmatpush1.bf16.msra.mxu0 0
        %4616 = vmatprep.subr.bf16.mxu0 0
        %4617 = vmatpush1.bf16.msra.mxu0 0
        %4618 = vmatprep.subr.bf16.mxu0 0
        %4619 = vmatpush1.bf16.msra.mxu0 0
        %4620 = vmatprep.subr.bf16.mxu0 0
        %4621 = vmatpush1.bf16.msra.mxu0 0
        %4622 = vmatprep.subr.bf16.mxu0 0
        %4623 = vmatpush1.bf16.msra.mxu0 0
        %4624 = vmatprep.mubr.bf16.mxu0 0
        %4625 = vmatmul.mubr.bf16.gmra.mrb[0].mxu0 %v4569
        %v4626 = vpop.f32.mrb[0].mxu0
        %v4627 = vadd.f32 0.0, %v4626
        %v4628 = vpop.f32.mrb[0].mxu0
        %v4629 = vpop.f32.mrb[0].mxu0
        %v4630 = vadd.f32 0.0, %v4629
        %v4631 = vpop.f32.mrb[0].mxu0
        %4632 = vmatprep.mubr.bf16.mxu0 0
        %4633 = vmatmul.mubr.bf16.gmra.mrb[0].mxu0 %v4572
        %v4634 = vpop.f32.mrb[0].mxu0
        %v4635 = vadd.f32 0.0, %v4634
        %v4636 = vpop.f32.mrb[0].mxu0
        %v4637 = vpop.f32.mrb[0].mxu0
        %v4638 = vadd.f32 0.0, %v4637
        %v4639 = vpop.f32.mrb[0].mxu0
        %4640 = vmatprep.mubr.bf16.mxu0 0
        %4641 = vmatmul.mubr.bf16.gmra.mrb[0].mxu0 %v4575
        %v4642 = vpop.f32.mrb[0].mxu0
        %v4643 = vadd.f32 0.0, %v4642
        %v4644 = vpop.f32.mrb[0].mxu0
        %v4645 = vpop.f32.mrb[0].mxu0
        %v4646 = vadd.f32 0.0, %v4645
        %v4647 = vpop.f32.mrb[0].mxu0
        %4648 = vmatprep.mubr.bf16.mxu0 0
        %4649 = vmatmul.mubr.bf16.gmra.mrb[0].mxu0 %v4578
        %v4650 = vpop.f32.mrb[0].mxu0
        %v4651 = vadd.f32 0.0, %v4650
        %v4652 = vpop.f32.mrb[0].mxu0
        %v4653 = vpop.f32.mrb[0].mxu0
        %v4654 = vadd.f32 0.0, %v4653
        %v4655 = vpop.f32.mrb[0].mxu0
        %4656 = vmatprep.mubr.bf16.mxu0 0
        %4657 = vmatmul.mubr.bf16.gmra.mrb[0].mxu0 %v4581
        %v4658 = vpop.f32.mrb[0].mxu0
        %v4659 = vadd.f32 0.0, %v4658
        %v4660 = vpop.f32.mrb[0].mxu0
        %v4661 = vpop.f32.mrb[0].mxu0
        %v4662 = vadd.f32 0.0, %v4661
        %v4663 = vpop.f32.mrb[0].mxu0
        %4664 = vmatprep.mubr.bf16.mxu0 0
        %4665 = vmatmul.mubr.bf16.gmra.mrb[0].mxu0 %v4584
        %v4666 = vpop.f32.mrb[0].mxu0
        %v4667 = vadd.f32 0.0, %v4666
        %v4668 = vpop.f32.mrb[0].mxu0
        %v4669 = vpop.f32.mrb[0].mxu0
        %v4670 = vadd.f32 0.0, %v4669
        %v4671 = vpop.f32.mrb[0].mxu0
        %4672 = vmatprep.mubr.bf16.mxu0 0
        %4673 = vmatmul.mubr.bf16.gmra.mrb[0].mxu0 %v4587
        %v4674 = vpop.f32.mrb[0].mxu0
        %v4675 = vadd.f32 0.0, %v4674
        %v4676 = vpop.f32.mrb[0].mxu0
        %v4677 = vpop.f32.mrb[0].mxu0
        %v4678 = vadd.f32 0.0, %v4677
        %v4679 = vpop.f32.mrb[0].mxu0
        %4680 = vmatprep.mubr.bf16.mxu0 0
        %4681 = vmatmul.mubr.bf16.gmra.mrb[0].mxu0 %v4590
        %v4682 = vpop.f32.mrb[0].mxu0
        %v4683 = vadd.f32 0.0, %v4682
        %v4684 = vpop.f32.mrb[0].mxu0
        %v4685 = vpop.f32.mrb[0].mxu0
        %v4686 = vadd.f32 0.0, %v4685
        %v4687 = vpop.f32.mrb[0].mxu0
        %4688 = vdwg.mxu0
        %v4689 = vadd.f32 %v4489, %v4627
        %v4690 = vadd.f32 %v4492, %v4630
        %v4691 = vadd.f32 %v4497, %v4635
        %v4692 = vadd.f32 %v4500, %v4638
        %v4693 = vadd.f32 %v4505, %v4643
        %v4694 = vadd.f32 %v4508, %v4646
        %v4695 = vadd.f32 %v4513, %v4651
        %v4696 = vadd.f32 %v4516, %v4654
        %v4697 = vadd.f32 %v4521, %v4659
        %v4698 = vadd.f32 %v4524, %v4662
        %v4699 = vadd.f32 %v4529, %v4667
        %v4700 = vadd.f32 %v4532, %v4670
        %v4701 = vadd.f32 %v4537, %v4675
        %v4702 = vadd.f32 %v4540, %v4678
        %v4703 = vadd.f32 %v4545, %v4683
        %v4704 = vadd.f32 %v4548, %v4686
        %v4705 = vld [vmem:[%s4] sm:$0x1]
        %v4707 = vlaneseq
        %v4708 = vshrl.u32 %v4707, 7
        %v4709 = vsub.s32 0, %v4708
        %v4710 = vrot.slane %v4705, %v4709
        %v4712 = vadd.f32 %v4689, %v4710
        %v4713 = vadd.f32 %v4690, %v4710
        %v4714 = vadd.f32 %v4691, %v4710
        %v4715 = vadd.f32 %v4692, %v4710
        %v4716 = vadd.f32 %v4693, %v4710
        %v4717 = vadd.f32 %v4694, %v4710
        %v4718 = vadd.f32 %v4695, %v4710
        %v4719 = vadd.f32 %v4696, %v4710
        %v4720 = vadd.f32 %v4697, %v4710
        %v4721 = vadd.f32 %v4698, %v4710
        %v4722 = vadd.f32 %v4699, %v4710
        %v4723 = vadd.f32 %v4700, %v4710
        %v4724 = vadd.f32 %v4701, %v4710
        %v4725 = vadd.f32 %v4702, %v4710
        %v4726 = vadd.f32 %v4703, %v4710
        %v4727 = vadd.f32 %v4704, %v4710
        %v4744 = vcombine.high %v4712, %v4712
        %v4746 = vunpack.c.l.s4 1983009808
        %v4747 = vunpack.c.0.s8 %v4746
        %v4748 = vlaneseq
        %v4749 = vshrl.u32 %v4748, 7
        %v4750 = vsub.s32 %v4747, %v4749
        %v4751 = vrot.slane %v4712, %v4750
        %v4753 = vunpack.c.l.s4 1983009808
        %v4754 = vunpack.c.0.s8 %v4753
        %v4755 = vlaneseq
        %v4756 = vshrl.u32 %v4755, 7
        %v4757 = vsub.s32 %v4754, %v4756
        %v4758 = vrot.slane %v4744, %v4757
        %v4759 = vcombine.high %v4751, %v4751
        %v4760 = vcombine.high %v4758, %v4758
        %v4761 = vcombine.high %v4713, %v4713
        %v4763 = vunpack.c.l.s4 1983009808
        %v4764 = vunpack.c.0.s8 %v4763
        %v4765 = vlaneseq
        %v4766 = vshrl.u32 %v4765, 7
        %v4767 = vsub.s32 %v4764, %v4766
        %v4768 = vrot.slane %v4713, %v4767
        %v4770 = vunpack.c.l.s4 1983009808
        %v4771 = vunpack.c.0.s8 %v4770
        %v4772 = vlaneseq
        %v4773 = vshrl.u32 %v4772, 7
        %v4774 = vsub.s32 %v4771, %v4773
        %v4775 = vrot.slane %v4761, %v4774
        %v4776 = vcombine.high %v4768, %v4768
        %v4777 = vcombine.high %v4775, %v4775
        %v4778 = vcombine.high %v4714, %v4714
        %v4780 = vunpack.c.l.s4 1983009808
        %v4781 = vunpack.c.0.s8 %v4780
        %v4782 = vlaneseq
        %v4783 = vshrl.u32 %v4782, 7
        %v4784 = vsub.s32 %v4781, %v4783
        %v4785 = vrot.slane %v4714, %v4784
        %v4787 = vunpack.c.l.s4 1983009808
        %v4788 = vunpack.c.0.s8 %v4787
        %v4789 = vlaneseq
        %v4790 = vshrl.u32 %v4789, 7
        %v4791 = vsub.s32 %v4788, %v4790
        %v4792 = vrot.slane %v4778, %v4791
        %v4793 = vcombine.high %v4785, %v4785
        %v4794 = vcombine.high %v4792, %v4792
        %v4795 = vcombine.high %v4715, %v4715
        %v4797 = vunpack.c.l.s4 1983009808
        %v4798 = vunpack.c.0.s8 %v4797
        %v4799 = vlaneseq
        %v4800 = vshrl.u32 %v4799, 7
        %v4801 = vsub.s32 %v4798, %v4800
        %v4802 = vrot.slane %v4715, %v4801
        %v4804 = vunpack.c.l.s4 1983009808
        %v4805 = vunpack.c.0.s8 %v4804
        %v4806 = vlaneseq
        %v4807 = vshrl.u32 %v4806, 7
        %v4808 = vsub.s32 %v4805, %v4807
        %v4809 = vrot.slane %v4795, %v4808
        %v4810 = vcombine.high %v4802, %v4802
        %v4811 = vcombine.high %v4809, %v4809
        %v4812 = vcombine.high %v4716, %v4716
        %v4814 = vunpack.c.l.s4 1983009808
        %v4815 = vunpack.c.0.s8 %v4814
        %v4816 = vlaneseq
        %v4817 = vshrl.u32 %v4816, 7
        %v4818 = vsub.s32 %v4815, %v4817
        %v4819 = vrot.slane %v4716, %v4818
        %v4821 = vunpack.c.l.s4 1983009808
        %v4822 = vunpack.c.0.s8 %v4821
        %v4823 = vlaneseq
        %v4824 = vshrl.u32 %v4823, 7
        %v4825 = vsub.s32 %v4822, %v4824
        %v4826 = vrot.slane %v4812, %v4825
        %v4827 = vcombine.high %v4819, %v4819
        %v4828 = vcombine.high %v4826, %v4826
        %v4829 = vcombine.high %v4717, %v4717
        %v4831 = vunpack.c.l.s4 1983009808
        %v4832 = vunpack.c.0.s8 %v4831
        %v4833 = vlaneseq
        %v4834 = vshrl.u32 %v4833, 7
        %v4835 = vsub.s32 %v4832, %v4834
        %v4836 = vrot.slane %v4717, %v4835
        %v4838 = vunpack.c.l.s4 1983009808
        %v4839 = vunpack.c.0.s8 %v4838
        %v4840 = vlaneseq
        %v4841 = vshrl.u32 %v4840, 7
        %v4842 = vsub.s32 %v4839, %v4841
        %v4843 = vrot.slane %v4829, %v4842
        %v4844 = vcombine.high %v4836, %v4836
        %v4845 = vcombine.high %v4843, %v4843
        %v4846 = vcombine.high %v4718, %v4718
        %v4848 = vunpack.c.l.s4 1983009808
        %v4849 = vunpack.c.0.s8 %v4848
        %v4850 = vlaneseq
        %v4851 = vshrl.u32 %v4850, 7
        %v4852 = vsub.s32 %v4849, %v4851
        %v4853 = vrot.slane %v4718, %v4852
        %v4855 = vunpack.c.l.s4 1983009808
        %v4856 = vunpack.c.0.s8 %v4855
        %v4857 = vlaneseq
        %v4858 = vshrl.u32 %v4857, 7
        %v4859 = vsub.s32 %v4856, %v4858
        %v4860 = vrot.slane %v4846, %v4859
        %v4861 = vcombine.high %v4853, %v4853
        %v4862 = vcombine.high %v4860, %v4860
        %v4863 = vcombine.high %v4719, %v4719
        %v4865 = vunpack.c.l.s4 1983009808
        %v4866 = vunpack.c.0.s8 %v4865
        %v4867 = vlaneseq
        %v4868 = vshrl.u32 %v4867, 7
        %v4869 = vsub.s32 %v4866, %v4868
        %v4870 = vrot.slane %v4719, %v4869
        %v4872 = vunpack.c.l.s4 1983009808
        %v4873 = vunpack.c.0.s8 %v4872
        %v4874 = vlaneseq
        %v4875 = vshrl.u32 %v4874, 7
        %v4876 = vsub.s32 %v4873, %v4875
        %v4877 = vrot.slane %v4863, %v4876
        %v4878 = vcombine.high %v4870, %v4870
        %v4879 = vcombine.high %v4877, %v4877
        %v4880 = vcombine.high %v4720, %v4720
        %v4882 = vunpack.c.l.s4 1983009808
        %v4883 = vunpack.c.0.s8 %v4882
        %v4884 = vlaneseq
        %v4885 = vshrl.u32 %v4884, 7
        %v4886 = vsub.s32 %v4883, %v4885
        %v4887 = vrot.slane %v4720, %v4886
        %v4889 = vunpack.c.l.s4 1983009808
        %v4890 = vunpack.c.0.s8 %v4889
        %v4891 = vlaneseq
        %v4892 = vshrl.u32 %v4891, 7
        %v4893 = vsub.s32 %v4890, %v4892
        %v4894 = vrot.slane %v4880, %v4893
        %v4895 = vcombine.high %v4887, %v4887
        %v4896 = vcombine.high %v4894, %v4894
        %v4897 = vcombine.high %v4721, %v4721
        %v4899 = vunpack.c.l.s4 1983009808
        %v4900 = vunpack.c.0.s8 %v4899
        %v4901 = vlaneseq
        %v4902 = vshrl.u32 %v4901, 7
        %v4903 = vsub.s32 %v4900, %v4902
        %v4904 = vrot.slane %v4721, %v4903
        %v4906 = vunpack.c.l.s4 1983009808
        %v4907 = vunpack.c.0.s8 %v4906
        %v4908 = vlaneseq
        %v4909 = vshrl.u32 %v4908, 7
        %v4910 = vsub.s32 %v4907, %v4909
        %v4911 = vrot.slane %v4897, %v4910
        %v4912 = vcombine.high %v4904, %v4904
        %v4913 = vcombine.high %v4911, %v4911
        %v4914 = vcombine.high %v4722, %v4722
        %v4916 = vunpack.c.l.s4 1983009808
        %v4917 = vunpack.c.0.s8 %v4916
        %v4918 = vlaneseq
        %v4919 = vshrl.u32 %v4918, 7
        %v4920 = vsub.s32 %v4917, %v4919
        %v4921 = vrot.slane %v4722, %v4920
        %v4923 = vunpack.c.l.s4 1983009808
        %v4924 = vunpack.c.0.s8 %v4923
        %v4925 = vlaneseq
        %v4926 = vshrl.u32 %v4925, 7
        %v4927 = vsub.s32 %v4924, %v4926
        %v4928 = vrot.slane %v4914, %v4927
        %v4929 = vcombine.high %v4921, %v4921
        %v4930 = vcombine.high %v4928, %v4928
        %v4931 = vcombine.high %v4723, %v4723
        %v4933 = vunpack.c.l.s4 1983009808
        %v4934 = vunpack.c.0.s8 %v4933
        %v4935 = vlaneseq
        %v4936 = vshrl.u32 %v4935, 7
        %v4937 = vsub.s32 %v4934, %v4936
        %v4938 = vrot.slane %v4723, %v4937
        %v4940 = vunpack.c.l.s4 1983009808
        %v4941 = vunpack.c.0.s8 %v4940
        %v4942 = vlaneseq
        %v4943 = vshrl.u32 %v4942, 7
        %v4944 = vsub.s32 %v4941, %v4943
        %v4945 = vrot.slane %v4931, %v4944
        %v4946 = vcombine.high %v4938, %v4938
        %v4947 = vcombine.high %v4945, %v4945
        %v4948 = vcombine.high %v4724, %v4724
        %v4950 = vunpack.c.l.s4 1983009808
        %v4951 = vunpack.c.0.s8 %v4950
        %v4952 = vlaneseq
        %v4953 = vshrl.u32 %v4952, 7
        %v4954 = vsub.s32 %v4951, %v4953
        %v4955 = vrot.slane %v4724, %v4954
        %v4957 = vunpack.c.l.s4 1983009808
        %v4958 = vunpack.c.0.s8 %v4957
        %v4959 = vlaneseq
        %v4960 = vshrl.u32 %v4959, 7
        %v4961 = vsub.s32 %v4958, %v4960
        %v4962 = vrot.slane %v4948, %v4961
        %v4963 = vcombine.high %v4955, %v4955
        %v4964 = vcombine.high %v4962, %v4962
        %v4965 = vcombine.high %v4725, %v4725
        %v4967 = vunpack.c.l.s4 1983009808
        %v4968 = vunpack.c.0.s8 %v4967
        %v4969 = vlaneseq
        %v4970 = vshrl.u32 %v4969, 7
        %v4971 = vsub.s32 %v4968, %v4970
        %v4972 = vrot.slane %v4725, %v4971
        %v4974 = vunpack.c.l.s4 1983009808
        %v4975 = vunpack.c.0.s8 %v4974
        %v4976 = vlaneseq
        %v4977 = vshrl.u32 %v4976, 7
        %v4978 = vsub.s32 %v4975, %v4977
        %v4979 = vrot.slane %v4965, %v4978
        %v4980 = vcombine.high %v4972, %v4972
        %v4981 = vcombine.high %v4979, %v4979
        %v4982 = vcombine.high %v4726, %v4726
        %v4984 = vunpack.c.l.s4 1983009808
        %v4985 = vunpack.c.0.s8 %v4984
        %v4986 = vlaneseq
        %v4987 = vshrl.u32 %v4986, 7
        %v4988 = vsub.s32 %v4985, %v4987
        %v4989 = vrot.slane %v4726, %v4988
        %v4991 = vunpack.c.l.s4 1983009808
        %v4992 = vunpack.c.0.s8 %v4991
        %v4993 = vlaneseq
        %v4994 = vshrl.u32 %v4993, 7
        %v4995 = vsub.s32 %v4992, %v4994
        %v4996 = vrot.slane %v4982, %v4995
        %v4997 = vcombine.high %v4989, %v4989
        %v4998 = vcombine.high %v4996, %v4996
        %v4999 = vcombine.high %v4727, %v4727
        %v5001 = vunpack.c.l.s4 1983009808
        %v5002 = vunpack.c.0.s8 %v5001
        %v5003 = vlaneseq
        %v5004 = vshrl.u32 %v5003, 7
        %v5005 = vsub.s32 %v5002, %v5004
        %v5006 = vrot.slane %v4727, %v5005
        %v5008 = vunpack.c.l.s4 1983009808
        %v5009 = vunpack.c.0.s8 %v5008
        %v5010 = vlaneseq
        %v5011 = vshrl.u32 %v5010, 7
        %v5012 = vsub.s32 %v5009, %v5011
        %v5013 = vrot.slane %v4999, %v5012
        %v5014 = vcombine.high %v5006, %v5006
        %v5015 = vcombine.high %v5013, %v5013
        %v5080 = vrot.slane %v4751, 7
        %v5081 = vrot.slane %v5080, 2
        %v5082 = vrot.slane %v4759, 7
        %v5083 = vrot.slane %v5082, 2
        %v5084 = vrot.slane %v4758, 7
        %v5085 = vrot.slane %v5084, 2
        %v5086 = vrot.slane %v4760, 7
        %v5087 = vrot.slane %v5086, 2
        %v5088 = vrot.slane %v4768, 7
        %v5089 = vrot.slane %v5088, 2
        %v5090 = vrot.slane %v4776, 7
        %v5091 = vrot.slane %v5090, 2
        %v5092 = vrot.slane %v4775, 7
        %v5093 = vrot.slane %v5092, 2
        %v5094 = vrot.slane %v4777, 7
        %v5095 = vrot.slane %v5094, 2
        %v5096 = vrot.slane %v4785, 7
        %v5097 = vrot.slane %v5096, 2
        %v5098 = vrot.slane %v4793, 7
        %v5099 = vrot.slane %v5098, 2
        %v5100 = vrot.slane %v4792, 7
        %v5101 = vrot.slane %v5100, 2
        %v5102 = vrot.slane %v4794, 7
        %v5103 = vrot.slane %v5102, 2
        %v5104 = vrot.slane %v4802, 7
        %v5105 = vrot.slane %v5104, 2
        %v5106 = vrot.slane %v4810, 7
        %v5107 = vrot.slane %v5106, 2
        %v5108 = vrot.slane %v4809, 7
        %v5109 = vrot.slane %v5108, 2
        %v5110 = vrot.slane %v4811, 7
        %v5111 = vrot.slane %v5110, 2
        %v5112 = vrot.slane %v4819, 7
        %v5113 = vrot.slane %v5112, 2
        %v5114 = vrot.slane %v4827, 7
        %v5115 = vrot.slane %v5114, 2
        %v5116 = vrot.slane %v4826, 7
        %v5117 = vrot.slane %v5116, 2
        %v5118 = vrot.slane %v4828, 7
        %v5119 = vrot.slane %v5118, 2
        %v5120 = vrot.slane %v4836, 7
        %v5121 = vrot.slane %v5120, 2
        %v5122 = vrot.slane %v4844, 7
        %v5123 = vrot.slane %v5122, 2
        %v5124 = vrot.slane %v4843, 7
        %v5125 = vrot.slane %v5124, 2
        %v5126 = vrot.slane %v4845, 7
        %v5127 = vrot.slane %v5126, 2
        %v5128 = vrot.slane %v4853, 7
        %v5129 = vrot.slane %v5128, 2
        %v5130 = vrot.slane %v4861, 7
        %v5131 = vrot.slane %v5130, 2
        %v5132 = vrot.slane %v4860, 7
        %v5133 = vrot.slane %v5132, 2
        %v5134 = vrot.slane %v4862, 7
        %v5135 = vrot.slane %v5134, 2
        %v5136 = vrot.slane %v4870, 7
        %v5137 = vrot.slane %v5136, 2
        %v5138 = vrot.slane %v4878, 7
        %v5139 = vrot.slane %v5138, 2
        %v5140 = vrot.slane %v4877, 7
        %v5141 = vrot.slane %v5140, 2
        %v5142 = vrot.slane %v4879, 7
        %v5143 = vrot.slane %v5142, 2
        %v5144 = vrot.slane %v4887, 7
        %v5145 = vrot.slane %v5144, 2
        %v5146 = vrot.slane %v4895, 7
        %v5147 = vrot.slane %v5146, 2
        %v5148 = vrot.slane %v4894, 7
        %v5149 = vrot.slane %v5148, 2
        %v5150 = vrot.slane %v4896, 7
        %v5151 = vrot.slane %v5150, 2
        %v5152 = vrot.slane %v4904, 7
        %v5153 = vrot.slane %v5152, 2
        %v5154 = vrot.slane %v4912, 7
        %v5155 = vrot.slane %v5154, 2
        %v5156 = vrot.slane %v4911, 7
        %v5157 = vrot.slane %v5156, 2
        %v5158 = vrot.slane %v4913, 7
        %v5159 = vrot.slane %v5158, 2
        %v5160 = vrot.slane %v4921, 7
        %v5161 = vrot.slane %v5160, 2
        %v5162 = vrot.slane %v4929, 7
        %v5163 = vrot.slane %v5162, 2
        %v5164 = vrot.slane %v4928, 7
        %v5165 = vrot.slane %v5164, 2
        %v5166 = vrot.slane %v4930, 7
        %v5167 = vrot.slane %v5166, 2
        %v5168 = vrot.slane %v4938, 7
        %v5169 = vrot.slane %v5168, 2
        %v5170 = vrot.slane %v4946, 7
        %v5171 = vrot.slane %v5170, 2
        %v5172 = vrot.slane %v4945, 7
        %v5173 = vrot.slane %v5172, 2
        %v5174 = vrot.slane %v4947, 7
        %v5175 = vrot.slane %v5174, 2
        %v5176 = vrot.slane %v4955, 7
        %v5177 = vrot.slane %v5176, 2
        %v5178 = vrot.slane %v4963, 7
        %v5179 = vrot.slane %v5178, 2
        %v5180 = vrot.slane %v4962, 7
        %v5181 = vrot.slane %v5180, 2
        %v5182 = vrot.slane %v4964, 7
        %v5183 = vrot.slane %v5182, 2
        %v5184 = vrot.slane %v4972, 7
        %v5185 = vrot.slane %v5184, 2
        %v5186 = vrot.slane %v4980, 7
        %v5187 = vrot.slane %v5186, 2
        %v5188 = vrot.slane %v4979, 7
        %v5189 = vrot.slane %v5188, 2
        %v5190 = vrot.slane %v4981, 7
        %v5191 = vrot.slane %v5190, 2
        %v5192 = vrot.slane %v4989, 7
        %v5193 = vrot.slane %v5192, 2
        %v5194 = vrot.slane %v4997, 7
        %v5195 = vrot.slane %v5194, 2
        %v5196 = vrot.slane %v4996, 7
        %v5197 = vrot.slane %v5196, 2
        %v5198 = vrot.slane %v4998, 7
        %v5199 = vrot.slane %v5198, 2
        %v5200 = vrot.slane %v5006, 7
        %v5201 = vrot.slane %v5200, 2
        %v5202 = vrot.slane %v5014, 7
        %v5203 = vrot.slane %v5202, 2
        %v5204 = vrot.slane %v5013, 7
        %v5205 = vrot.slane %v5204, 2
        %v5206 = vrot.slane %v5015, 7
        %v5207 = vrot.slane %v5206, 2
        %v5272 = vmax.f32 %v4751, %v5081
        %v5273 = vmax.f32 %v4759, %v5083
        %v5274 = vmax.f32 %v4758, %v5085
        %v5275 = vmax.f32 %v4760, %v5087
        %v5276 = vmax.f32 %v4768, %v5089
        %v5277 = vmax.f32 %v4776, %v5091
        %v5278 = vmax.f32 %v4775, %v5093
        %v5279 = vmax.f32 %v4777, %v5095
        %v5280 = vmax.f32 %v4785, %v5097
        %v5281 = vmax.f32 %v4793, %v5099
        %v5282 = vmax.f32 %v4792, %v5101
        %v5283 = vmax.f32 %v4794, %v5103
        %v5284 = vmax.f32 %v4802, %v5105
        %v5285 = vmax.f32 %v4810, %v5107
        %v5286 = vmax.f32 %v4809, %v5109
        %v5287 = vmax.f32 %v4811, %v5111
        %v5288 = vmax.f32 %v4819, %v5113
        %v5289 = vmax.f32 %v4827, %v5115
        %v5290 = vmax.f32 %v4826, %v5117
        %v5291 = vmax.f32 %v4828, %v5119
        %v5292 = vmax.f32 %v4836, %v5121
        %v5293 = vmax.f32 %v4844, %v5123
        %v5294 = vmax.f32 %v4843, %v5125
        %v5295 = vmax.f32 %v4845, %v5127
        %v5296 = vmax.f32 %v4853, %v5129
        %v5297 = vmax.f32 %v4861, %v5131
        %v5298 = vmax.f32 %v4860, %v5133
        %v5299 = vmax.f32 %v4862, %v5135
        %v5300 = vmax.f32 %v4870, %v5137
        %v5301 = vmax.f32 %v4878, %v5139
        %v5302 = vmax.f32 %v4877, %v5141
        %v5303 = vmax.f32 %v4879, %v5143
        %v5304 = vmax.f32 %v4887, %v5145
        %v5305 = vmax.f32 %v4895, %v5147
        %v5306 = vmax.f32 %v4894, %v5149
        %v5307 = vmax.f32 %v4896, %v5151
        %v5308 = vmax.f32 %v4904, %v5153
        %v5309 = vmax.f32 %v4912, %v5155
        %v5310 = vmax.f32 %v4911, %v5157
        %v5311 = vmax.f32 %v4913, %v5159
        %v5312 = vmax.f32 %v4921, %v5161
        %v5313 = vmax.f32 %v4929, %v5163
        %v5314 = vmax.f32 %v4928, %v5165
        %v5315 = vmax.f32 %v4930, %v5167
        %v5316 = vmax.f32 %v4938, %v5169
        %v5317 = vmax.f32 %v4946, %v5171
        %v5318 = vmax.f32 %v4945, %v5173
        %v5319 = vmax.f32 %v4947, %v5175
        %v5320 = vmax.f32 %v4955, %v5177
        %v5321 = vmax.f32 %v4963, %v5179
        %v5322 = vmax.f32 %v4962, %v5181
        %v5323 = vmax.f32 %v4964, %v5183
        %v5324 = vmax.f32 %v4972, %v5185
        %v5325 = vmax.f32 %v4980, %v5187
        %v5326 = vmax.f32 %v4979, %v5189
        %v5327 = vmax.f32 %v4981, %v5191
        %v5328 = vmax.f32 %v4989, %v5193
        %v5329 = vmax.f32 %v4997, %v5195
        %v5330 = vmax.f32 %v4996, %v5197
        %v5331 = vmax.f32 %v4998, %v5199
        %v5332 = vmax.f32 %v5006, %v5201
        %v5333 = vmax.f32 %v5014, %v5203
        %v5334 = vmax.f32 %v5013, %v5205
        %v5335 = vmax.f32 %v5015, %v5207
        %v5392 = vlaneseq
        %v5393 = vshrl.u32 %v5392, 7
        %v5394 = vsub.s32 0, %v5393
        %v5395 = vrot.slane %v5272, %v5394
        %v5396 = vlaneseq
        %v5397 = vshrl.u32 %v5396, 7
        %v5398 = vsub.s32 0, %v5397
        %v5399 = vrot.slane %v5273, %v5398
        %v5400 = vlaneseq
        %v5401 = vshrl.u32 %v5400, 7
        %v5402 = vsub.s32 0, %v5401
        %v5403 = vrot.slane %v5274, %v5402
        %v5404 = vlaneseq
        %v5405 = vshrl.u32 %v5404, 7
        %v5406 = vsub.s32 0, %v5405
        %v5407 = vrot.slane %v5275, %v5406
        %v5408 = vlaneseq
        %v5409 = vshrl.u32 %v5408, 7
        %v5410 = vsub.s32 0, %v5409
        %v5411 = vrot.slane %v5276, %v5410
        %v5412 = vlaneseq
        %v5413 = vshrl.u32 %v5412, 7
        %v5414 = vsub.s32 0, %v5413
        %v5415 = vrot.slane %v5277, %v5414
        %v5416 = vlaneseq
        %v5417 = vshrl.u32 %v5416, 7
        %v5418 = vsub.s32 0, %v5417
        %v5419 = vrot.slane %v5278, %v5418
        %v5420 = vlaneseq
        %v5421 = vshrl.u32 %v5420, 7
        %v5422 = vsub.s32 0, %v5421
        %v5423 = vrot.slane %v5280, %v5422
        %v5424 = vlaneseq
        %v5425 = vshrl.u32 %v5424, 7
        %v5426 = vsub.s32 0, %v5425
        %v5427 = vrot.slane %v5281, %v5426
        %v5428 = vlaneseq
        %v5429 = vshrl.u32 %v5428, 7
        %v5430 = vsub.s32 0, %v5429
        %v5431 = vrot.slane %v5282, %v5430
        %v5432 = vlaneseq
        %v5433 = vshrl.u32 %v5432, 7
        %v5434 = vsub.s32 0, %v5433
        %v5435 = vrot.slane %v5283, %v5434
        %v5436 = vlaneseq
        %v5437 = vshrl.u32 %v5436, 7
        %v5438 = vsub.s32 0, %v5437
        %v5439 = vrot.slane %v5284, %v5438
        %v5440 = vlaneseq
        %v5441 = vshrl.u32 %v5440, 7
        %v5442 = vsub.s32 0, %v5441
        %v5443 = vrot.slane %v5285, %v5442
        %v5444 = vlaneseq
        %v5445 = vshrl.u32 %v5444, 7
        %v5446 = vsub.s32 0, %v5445
        %v5447 = vrot.slane %v5286, %v5446
        %v5448 = vlaneseq
        %v5449 = vshrl.u32 %v5448, 7
        %v5450 = vsub.s32 0, %v5449
        %v5451 = vrot.slane %v5288, %v5450
        %v5452 = vlaneseq
        %v5453 = vshrl.u32 %v5452, 7
        %v5454 = vsub.s32 0, %v5453
        %v5455 = vrot.slane %v5289, %v5454
        %v5456 = vlaneseq
        %v5457 = vshrl.u32 %v5456, 7
        %v5458 = vsub.s32 0, %v5457
        %v5459 = vrot.slane %v5290, %v5458
        %v5460 = vlaneseq
        %v5461 = vshrl.u32 %v5460, 7
        %v5462 = vsub.s32 0, %v5461
        %v5463 = vrot.slane %v5291, %v5462
        %v5464 = vlaneseq
        %v5465 = vshrl.u32 %v5464, 7
        %v5466 = vsub.s32 0, %v5465
        %v5467 = vrot.slane %v5292, %v5466
        %v5468 = vlaneseq
        %v5469 = vshrl.u32 %v5468, 7
        %v5470 = vsub.s32 0, %v5469
        %v5471 = vrot.slane %v5293, %v5470
        %v5472 = vlaneseq
        %v5473 = vshrl.u32 %v5472, 7
        %v5474 = vsub.s32 0, %v5473
        %v5475 = vrot.slane %v5294, %v5474
        %v5476 = vlaneseq
        %v5477 = vshrl.u32 %v5476, 7
        %v5478 = vsub.s32 0, %v5477
        %v5479 = vrot.slane %v5296, %v5478
        %v5480 = vlaneseq
        %v5481 = vshrl.u32 %v5480, 7
        %v5482 = vsub.s32 0, %v5481
        %v5483 = vrot.slane %v5297, %v5482
        %v5484 = vlaneseq
        %v5485 = vshrl.u32 %v5484, 7
        %v5486 = vsub.s32 0, %v5485
        %v5487 = vrot.slane %v5298, %v5486
        %v5488 = vlaneseq
        %v5489 = vshrl.u32 %v5488, 7
        %v5490 = vsub.s32 0, %v5489
        %v5491 = vrot.slane %v5299, %v5490
        %v5492 = vlaneseq
        %v5493 = vshrl.u32 %v5492, 7
        %v5494 = vsub.s32 0, %v5493
        %v5495 = vrot.slane %v5300, %v5494
        %v5496 = vlaneseq
        %v5497 = vshrl.u32 %v5496, 7
        %v5498 = vsub.s32 0, %v5497
        %v5499 = vrot.slane %v5301, %v5498
        %v5500 = vlaneseq
        %v5501 = vshrl.u32 %v5500, 7
        %v5502 = vsub.s32 0, %v5501
        %v5503 = vrot.slane %v5302, %v5502
        %v5504 = vlaneseq
        %v5505 = vshrl.u32 %v5504, 7
        %v5506 = vsub.s32 0, %v5505
        %v5507 = vrot.slane %v5304, %v5506
        %v5508 = vlaneseq
        %v5509 = vshrl.u32 %v5508, 7
        %v5510 = vsub.s32 0, %v5509
        %v5511 = vrot.slane %v5305, %v5510
        %v5512 = vlaneseq
        %v5513 = vshrl.u32 %v5512, 7
        %v5514 = vsub.s32 0, %v5513
        %v5515 = vrot.slane %v5306, %v5514
        %v5516 = vlaneseq
        %v5517 = vshrl.u32 %v5516, 7
        %v5518 = vsub.s32 0, %v5517
        %v5519 = vrot.slane %v5307, %v5518
        %v5520 = vlaneseq
        %v5521 = vshrl.u32 %v5520, 7
        %v5522 = vsub.s32 0, %v5521
        %v5523 = vrot.slane %v5308, %v5522
        %v5524 = vlaneseq
        %v5525 = vshrl.u32 %v5524, 7
        %v5526 = vsub.s32 0, %v5525
        %v5527 = vrot.slane %v5309, %v5526
        %v5528 = vlaneseq
        %v5529 = vshrl.u32 %v5528, 7
        %v5530 = vsub.s32 0, %v5529
        %v5531 = vrot.slane %v5310, %v5530
        %v5532 = vlaneseq
        %v5533 = vshrl.u32 %v5532, 7
        %v5534 = vsub.s32 0, %v5533
        %v5535 = vrot.slane %v5312, %v5534
        %v5536 = vlaneseq
        %v5537 = vshrl.u32 %v5536, 7
        %v5538 = vsub.s32 0, %v5537
        %v5539 = vrot.slane %v5313, %v5538
        %v5540 = vlaneseq
        %v5541 = vshrl.u32 %v5540, 7
        %v5542 = vsub.s32 0, %v5541
        %v5543 = vrot.slane %v5314, %v5542
        %v5544 = vlaneseq
        %v5545 = vshrl.u32 %v5544, 7
        %v5546 = vsub.s32 0, %v5545
        %v5547 = vrot.slane %v5315, %v5546
        %v5548 = vlaneseq
        %v5549 = vshrl.u32 %v5548, 7
        %v5550 = vsub.s32 0, %v5549
        %v5551 = vrot.slane %v5316, %v5550
        %v5552 = vlaneseq
        %v5553 = vshrl.u32 %v5552, 7
        %v5554 = vsub.s32 0, %v5553
        %v5555 = vrot.slane %v5317, %v5554
        %v5556 = vlaneseq
        %v5557 = vshrl.u32 %v5556, 7
        %v5558 = vsub.s32 0, %v5557
        %v5559 = vrot.slane %v5318, %v5558
        %v5560 = vlaneseq
        %v5561 = vshrl.u32 %v5560, 7
        %v5562 = vsub.s32 0, %v5561
        %v5563 = vrot.slane %v5320, %v5562
        %v5564 = vlaneseq
        %v5565 = vshrl.u32 %v5564, 7
        %v5566 = vsub.s32 0, %v5565
        %v5567 = vrot.slane %v5321, %v5566
        %v5568 = vlaneseq
        %v5569 = vshrl.u32 %v5568, 7
        %v5570 = vsub.s32 0, %v5569
        %v5571 = vrot.slane %v5322, %v5570
        %v5572 = vlaneseq
        %v5573 = vshrl.u32 %v5572, 7
        %v5574 = vsub.s32 0, %v5573
        %v5575 = vrot.slane %v5323, %v5574
        %v5576 = vlaneseq
        %v5577 = vshrl.u32 %v5576, 7
        %v5578 = vsub.s32 0, %v5577
        %v5579 = vrot.slane %v5324, %v5578
        %v5580 = vlaneseq
        %v5581 = vshrl.u32 %v5580, 7
        %v5582 = vsub.s32 0, %v5581
        %v5583 = vrot.slane %v5325, %v5582
        %v5584 = vlaneseq
        %v5585 = vshrl.u32 %v5584, 7
        %v5586 = vsub.s32 0, %v5585
        %v5587 = vrot.slane %v5326, %v5586
        %v5588 = vlaneseq
        %v5589 = vshrl.u32 %v5588, 7
        %v5590 = vsub.s32 0, %v5589
        %v5591 = vrot.slane %v5328, %v5590
        %v5592 = vlaneseq
        %v5593 = vshrl.u32 %v5592, 7
        %v5594 = vsub.s32 0, %v5593
        %v5595 = vrot.slane %v5329, %v5594
        %v5596 = vlaneseq
        %v5597 = vshrl.u32 %v5596, 7
        %v5598 = vsub.s32 0, %v5597
        %v5599 = vrot.slane %v5330, %v5598
        %v5600 = vlaneseq
        %v5601 = vshrl.u32 %v5600, 7
        %v5602 = vsub.s32 0, %v5601
        %v5603 = vrot.slane %v5331, %v5602
        %v5604 = vlaneseq
        %v5605 = vshrl.u32 %v5604, 7
        %v5606 = vsub.s32 0, %v5605
        %v5607 = vrot.slane %v5332, %v5606
        %v5608 = vlaneseq
        %v5609 = vshrl.u32 %v5608, 7
        %v5610 = vsub.s32 0, %v5609
        %v5611 = vrot.slane %v5333, %v5610
        %v5612 = vlaneseq
        %v5613 = vshrl.u32 %v5612, 7
        %v5614 = vsub.s32 0, %v5613
        %v5615 = vrot.slane %v5334, %v5614
        %v5616 = vsel %vm3364, %v5399, %v5395
        %v5617 = vsel %vm3366, %v5403, %v5616
        %v5618 = vsel %vm3368, %v5407, %v5617
        %v5619 = vsel %vm3370, %v5411, %v5618
        %v5620 = vsel %vm3372, %v5415, %v5619
        %v5621 = vsel %vm3374, %v5419, %v5620
        %v5622 = vsel %vm3364, %v5427, %v5423
        %v5623 = vsel %vm3366, %v5431, %v5622
        %v5624 = vsel %vm3368, %v5435, %v5623
        %v5625 = vsel %vm3370, %v5439, %v5624
        %v5626 = vsel %vm3372, %v5443, %v5625
        %v5627 = vsel %vm3374, %v5447, %v5626
        %v5628 = vsel %vm3364, %v5455, %v5451
        %v5629 = vsel %vm3366, %v5459, %v5628
        %v5630 = vsel %vm3368, %v5463, %v5629
        %v5631 = vsel %vm3370, %v5467, %v5630
        %v5632 = vsel %vm3372, %v5471, %v5631
        %v5633 = vsel %vm3374, %v5475, %v5632
        %v5634 = vsel %vm3364, %v5483, %v5479
        %v5635 = vsel %vm3366, %v5487, %v5634
        %v5636 = vsel %vm3368, %v5491, %v5635
        %v5637 = vsel %vm3370, %v5495, %v5636
        %v5638 = vsel %vm3372, %v5499, %v5637
        %v5639 = vsel %vm3374, %v5503, %v5638
        %v5640 = vsel %vm3364, %v5511, %v5507
        %v5641 = vsel %vm3366, %v5515, %v5640
        %v5642 = vsel %vm3368, %v5519, %v5641
        %v5643 = vsel %vm3370, %v5523, %v5642
        %v5644 = vsel %vm3372, %v5527, %v5643
        %v5645 = vsel %vm3374, %v5531, %v5644
        %v5646 = vsel %vm3364, %v5539, %v5535
        %v5647 = vsel %vm3366, %v5543, %v5646
        %v5648 = vsel %vm3368, %v5547, %v5647
        %v5649 = vsel %vm3370, %v5551, %v5648
        %v5650 = vsel %vm3372, %v5555, %v5649
        %v5651 = vsel %vm3374, %v5559, %v5650
        %v5652 = vsel %vm3364, %v5567, %v5563
        %v5653 = vsel %vm3366, %v5571, %v5652
        %v5654 = vsel %vm3368, %v5575, %v5653
        %v5655 = vsel %vm3370, %v5579, %v5654
        %v5656 = vsel %vm3372, %v5583, %v5655
        %v5657 = vsel %vm3374, %v5587, %v5656
        %v5658 = vsel %vm3364, %v5595, %v5591
        %v5659 = vsel %vm3366, %v5599, %v5658
        %v5660 = vsel %vm3368, %v5603, %v5659
        %v5661 = vsel %vm3370, %v5607, %v5660
        %v5662 = vsel %vm3372, %v5611, %v5661
        %v5663 = vsel %vm3374, %v5615, %v5662
        %v5672 = vsel %vm509, 0.0, %v5621
        %v5673 = vsel %vm509, 0.0, %v5627
        %v5674 = vsel %vm509, 0.0, %v5633
        %v5675 = vsel %vm509, 0.0, %v5639
        %v5676 = vsel %vm509, 0.0, %v5645
        %v5677 = vsel %vm509, 0.0, %v5651
        %v5678 = vsel %vm509, 0.0, %v5657
        %v5679 = vsel %vm509, 0.0, %v5663
        %v5688 = vlaneseq
        %v5689 = vshrl.u32 %v5688, 7
        %v5690 = vsub.s32 0, %v5689
        %v5691 = vrot.slane %v5279, %v5690
        %v5692 = vlaneseq
        %v5693 = vshrl.u32 %v5692, 7
        %v5694 = vsub.s32 0, %v5693
        %v5695 = vrot.slane %v5287, %v5694
        %v5696 = vlaneseq
        %v5697 = vshrl.u32 %v5696, 7
        %v5698 = vsub.s32 0, %v5697
        %v5699 = vrot.slane %v5295, %v5698
        %v5700 = vlaneseq
        %v5701 = vshrl.u32 %v5700, 7
        %v5702 = vsub.s32 0, %v5701
        %v5703 = vrot.slane %v5303, %v5702
        %v5704 = vlaneseq
        %v5705 = vshrl.u32 %v5704, 7
        %v5706 = vsub.s32 0, %v5705
        %v5707 = vrot.slane %v5311, %v5706
        %v5708 = vlaneseq
        %v5709 = vshrl.u32 %v5708, 7
        %v5710 = vsub.s32 0, %v5709
        %v5711 = vrot.slane %v5319, %v5710
        %v5712 = vlaneseq
        %v5713 = vshrl.u32 %v5712, 7
        %v5714 = vsub.s32 0, %v5713
        %v5715 = vrot.slane %v5327, %v5714
        %v5716 = vlaneseq
        %v5717 = vshrl.u32 %v5716, 7
        %v5718 = vsub.s32 0, %v5717
        %v5719 = vrot.slane %v5335, %v5718
        %v5720 = vsel %vm3376, %v5403, %v5399
        %v5721 = vsel %vm3364, %v5407, %v5720
        %v5722 = vsel %vm3366, %v5411, %v5721
        %v5723 = vsel %vm3368, %v5415, %v5722
        %v5724 = vsel %vm3370, %v5419, %v5723
        %v5725 = vsel %vm3372, %v5691, %v5724
        %v5726 = vsel %vm3376, %v5431, %v5427
        %v5727 = vsel %vm3364, %v5435, %v5726
        %v5728 = vsel %vm3366, %v5439, %v5727
        %v5729 = vsel %vm3368, %v5443, %v5728
        %v5730 = vsel %vm3370, %v5447, %v5729
        %v5731 = vsel %vm3372, %v5695, %v5730
        %v5732 = vsel %vm3376, %v5459, %v5455
        %v5733 = vsel %vm3364, %v5463, %v5732
        %v5734 = vsel %vm3366, %v5467, %v5733
        %v5735 = vsel %vm3368, %v5471, %v5734
        %v5736 = vsel %vm3370, %v5475, %v5735
        %v5737 = vsel %vm3372, %v5699, %v5736
        %v5738 = vsel %vm3376, %v5487, %v5483
        %v5739 = vsel %vm3364, %v5491, %v5738
        %v5740 = vsel %vm3366, %v5495, %v5739
        %v5741 = vsel %vm3368, %v5499, %v5740
        %v5742 = vsel %vm3370, %v5503, %v5741
        %v5743 = vsel %vm3372, %v5703, %v5742
        %v5744 = vsel %vm3376, %v5515, %v5511
        %v5745 = vsel %vm3364, %v5519, %v5744
        %v5746 = vsel %vm3366, %v5523, %v5745
        %v5747 = vsel %vm3368, %v5527, %v5746
        %v5748 = vsel %vm3370, %v5531, %v5747
        %v5749 = vsel %vm3372, %v5707, %v5748
        %v5750 = vsel %vm3376, %v5543, %v5539
        %v5751 = vsel %vm3364, %v5547, %v5750
        %v5752 = vsel %vm3366, %v5551, %v5751
        %v5753 = vsel %vm3368, %v5555, %v5752
        %v5754 = vsel %vm3370, %v5559, %v5753
        %v5755 = vsel %vm3372, %v5711, %v5754
        %v5756 = vsel %vm3376, %v5571, %v5567
        %v5757 = vsel %vm3364, %v5575, %v5756
        %v5758 = vsel %vm3366, %v5579, %v5757
        %v5759 = vsel %vm3368, %v5583, %v5758
        %v5760 = vsel %vm3370, %v5587, %v5759
        %v5761 = vsel %vm3372, %v5715, %v5760
        %v5762 = vsel %vm3376, %v5599, %v5595
        %v5763 = vsel %vm3364, %v5603, %v5762
        %v5764 = vsel %vm3366, %v5607, %v5763
        %v5765 = vsel %vm3368, %v5611, %v5764
        %v5766 = vsel %vm3370, %v5615, %v5765
        %v5767 = vsel %vm3372, %v5719, %v5766
        %v5776 = vsel %vm606, %v5725, 0.0
        %v5777 = vsel %vm606, %v5731, 0.0
        %v5778 = vsel %vm606, %v5737, 0.0
        %v5779 = vsel %vm606, %v5743, 0.0
        %v5780 = vsel %vm606, %v5749, 0.0
        %v5781 = vsel %vm606, %v5755, 0.0
        %v5782 = vsel %vm606, %v5761, 0.0
        %v5783 = vsel %vm606, %v5767, 0.0
        %v5784 = vpack.c.bf16 %v5673, %v5672
        %v5785 = vpack.c.bf16 %v5675, %v5674
        %v5786 = vpack.c.bf16 %v5677, %v5676
        %v5787 = vpack.c.bf16 %v5679, %v5678
        %v5788 = vld [vmem:[%s5] sm:$0xf]
        %v5789 = vld [vmem:[%s5 + $0x4] sm:$0xf]
        %v5790 = vld [vmem:[%s5 + $0x8] sm:$0xf]
        %v5791 = vld [vmem:[%s5 + $0xc] sm:$0xf]
        %v5792 = vld [vmem:[%s5 + $0x10] sm:$0xf]
        %v5793 = vld [vmem:[%s5 + $0x14] sm:$0xf]
        %v5794 = vld [vmem:[%s5 + $0x18] sm:$0xf]
        %v5795 = vld [vmem:[%s5 + $0x1c] sm:$0xf]
        %v5796 = vpack.c.bf16 %v5272, %v5272
        %v5797 = vpack.c.bf16 %v5273, %v5273
        %v5798 = vpack.c.bf16 %v5274, %v5274
        %v5799 = vpack.c.bf16 %v5275, %v5275
        %v5800 = vpack.c.bf16 %v5276, %v5276
        %v5801 = vpack.c.bf16 %v5277, %v5277
        %v5802 = vpack.c.bf16 %v5278, %v5278
        %v5803 = vpack.c.bf16 %v5279, %v5279
        %v5804 = vpack.c.bf16 %v5280, %v5280
        %v5805 = vpack.c.bf16 %v5281, %v5281
        %v5806 = vpack.c.bf16 %v5282, %v5282
        %v5807 = vpack.c.bf16 %v5283, %v5283
        %v5808 = vpack.c.bf16 %v5284, %v5284
        %v5809 = vpack.c.bf16 %v5285, %v5285
        %v5810 = vpack.c.bf16 %v5286, %v5286
        %v5811 = vpack.c.bf16 %v5287, %v5287
        %v5812 = vpack.c.bf16 %v5288, %v5288
        %v5813 = vpack.c.bf16 %v5289, %v5289
        %v5814 = vpack.c.bf16 %v5290, %v5290
        %v5815 = vpack.c.bf16 %v5291, %v5291
        %v5816 = vpack.c.bf16 %v5292, %v5292
        %v5817 = vpack.c.bf16 %v5293, %v5293
        %v5818 = vpack.c.bf16 %v5294, %v5294
        %v5819 = vpack.c.bf16 %v5295, %v5295
        %v5820 = vpack.c.bf16 %v5296, %v5296
        %v5821 = vpack.c.bf16 %v5297, %v5297
        %v5822 = vpack.c.bf16 %v5298, %v5298
        %v5823 = vpack.c.bf16 %v5299, %v5299
        %v5824 = vpack.c.bf16 %v5300, %v5300
        %v5825 = vpack.c.bf16 %v5301, %v5301
        %v5826 = vpack.c.bf16 %v5302, %v5302
        %v5827 = vpack.c.bf16 %v5303, %v5303
        %v5828 = vpack.c.bf16 %v5304, %v5304
        %v5829 = vpack.c.bf16 %v5305, %v5305
        %v5830 = vpack.c.bf16 %v5306, %v5306
        %v5831 = vpack.c.bf16 %v5307, %v5307
        %v5832 = vpack.c.bf16 %v5308, %v5308
        %v5833 = vpack.c.bf16 %v5309, %v5309
        %v5834 = vpack.c.bf16 %v5310, %v5310
        %v5835 = vpack.c.bf16 %v5311, %v5311
        %v5836 = vpack.c.bf16 %v5312, %v5312
        %v5837 = vpack.c.bf16 %v5313, %v5313
        %v5838 = vpack.c.bf16 %v5314, %v5314
        %v5839 = vpack.c.bf16 %v5315, %v5315
        %v5840 = vpack.c.bf16 %v5316, %v5316
        %v5841 = vpack.c.bf16 %v5317, %v5317
        %v5842 = vpack.c.bf16 %v5318, %v5318
        %v5843 = vpack.c.bf16 %v5319, %v5319
        %v5844 = vpack.c.bf16 %v5320, %v5320
        %v5845 = vpack.c.bf16 %v5321, %v5321
        %v5846 = vpack.c.bf16 %v5322, %v5322
        %v5847 = vpack.c.bf16 %v5323, %v5323
        %v5848 = vpack.c.bf16 %v5324, %v5324
        %v5849 = vpack.c.bf16 %v5325, %v5325
        %v5850 = vpack.c.bf16 %v5326, %v5326
        %v5851 = vpack.c.bf16 %v5327, %v5327
        %v5852 = vpack.c.bf16 %v5328, %v5328
        %v5853 = vpack.c.bf16 %v5329, %v5329
        %v5854 = vpack.c.bf16 %v5330, %v5330
        %v5855 = vpack.c.bf16 %v5331, %v5331
        %v5856 = vpack.c.bf16 %v5332, %v5332
        %v5857 = vpack.c.bf16 %v5333, %v5333
        %v5858 = vpack.c.bf16 %v5334, %v5334
        %v5859 = vpack.c.bf16 %v5335, %v5335
        %s5860 = scalar_lea.vmem %s5, 32
        %v5861 = vld [vmem:[%s5860] sm:$0xf]
        %v5862 = vld [vmem:[%s5860 + $0x4] sm:$0xf]
        %v5863 = vld [vmem:[%s5860 + $0x8] sm:$0xf]
        %v5864 = vld [vmem:[%s5860 + $0xc] sm:$0xf]
        %v5865 = vld [vmem:[%s5860 + $0x10] sm:$0xf]
        %v5866 = vld [vmem:[%s5860 + $0x14] sm:$0xf]
        %v5867 = vld [vmem:[%s5860 + $0x18] sm:$0xf]
        %v5868 = vld [vmem:[%s5860 + $0x1c] sm:$0xf]
        %v5933 = vunpack.c.l.b16 %v5796
        %v5934 = vunpack.c.l.b16 %v5797
        %v5935 = vunpack.c.l.b16 %v5798
        %v5936 = vunpack.c.l.b16 %v5799
        %v5937 = vunpack.c.l.b16 %v5800
        %v5938 = vunpack.c.l.b16 %v5801
        %v5939 = vunpack.c.l.b16 %v5802
        %v5940 = vunpack.c.l.b16 %v5803
        %v5941 = vunpack.c.l.b16 %v5804
        %v5942 = vunpack.c.l.b16 %v5805
        %v5943 = vunpack.c.l.b16 %v5806
        %v5944 = vunpack.c.l.b16 %v5807
        %v5945 = vunpack.c.l.b16 %v5808
        %v5946 = vunpack.c.l.b16 %v5809
        %v5947 = vunpack.c.l.b16 %v5810
        %v5948 = vunpack.c.l.b16 %v5811
        %v5949 = vunpack.c.l.b16 %v5812
        %v5950 = vunpack.c.l.b16 %v5813
        %v5951 = vunpack.c.l.b16 %v5814
        %v5952 = vunpack.c.l.b16 %v5815
        %v5953 = vunpack.c.l.b16 %v5816
        %v5954 = vunpack.c.l.b16 %v5817
        %v5955 = vunpack.c.l.b16 %v5818
        %v5956 = vunpack.c.l.b16 %v5819
        %v5957 = vunpack.c.l.b16 %v5820
        %v5958 = vunpack.c.l.b16 %v5821
        %v5959 = vunpack.c.l.b16 %v5822
        %v5960 = vunpack.c.l.b16 %v5823
        %v5961 = vunpack.c.l.b16 %v5824
        %v5962 = vunpack.c.l.b16 %v5825
        %v5963 = vunpack.c.l.b16 %v5826
        %v5964 = vunpack.c.l.b16 %v5827
        %v5965 = vunpack.c.l.b16 %v5828
        %v5966 = vunpack.c.l.b16 %v5829
        %v5967 = vunpack.c.l.b16 %v5830
        %v5968 = vunpack.c.l.b16 %v5831
        %v5969 = vunpack.c.l.b16 %v5832
        %v5970 = vunpack.c.l.b16 %v5833
        %v5971 = vunpack.c.l.b16 %v5834
        %v5972 = vunpack.c.l.b16 %v5835
        %v5973 = vunpack.c.l.b16 %v5836
        %v5974 = vunpack.c.l.b16 %v5837
        %v5975 = vunpack.c.l.b16 %v5838
        %v5976 = vunpack.c.l.b16 %v5839
        %v5977 = vunpack.c.l.b16 %v5840
        %v5978 = vunpack.c.l.b16 %v5841
        %v5979 = vunpack.c.l.b16 %v5842
        %v5980 = vunpack.c.l.b16 %v5843
        %v5981 = vunpack.c.l.b16 %v5844
        %v5982 = vunpack.c.l.b16 %v5845
        %v5983 = vunpack.c.l.b16 %v5846
        %v5984 = vunpack.c.l.b16 %v5847
        %v5985 = vunpack.c.l.b16 %v5848
        %v5986 = vunpack.c.l.b16 %v5849
        %v5987 = vunpack.c.l.b16 %v5850
        %v5988 = vunpack.c.l.b16 %v5851
        %v5989 = vunpack.c.l.b16 %v5852
        %v5990 = vunpack.c.l.b16 %v5853
        %v5991 = vunpack.c.l.b16 %v5854
        %v5992 = vunpack.c.l.b16 %v5855
        %v5993 = vunpack.c.l.b16 %v5856
        %v5994 = vunpack.c.l.b16 %v5857
        %v5995 = vunpack.c.l.b16 %v5858
        %v5996 = vunpack.c.l.b16 %v5859
        %v5997 = vrot.slane %v5934, 7
        %v5998 = vsel %vm3376, %v5997, %v5933
        %v5999 = vrot.slane %v5935, 6
        %v6000 = vsel %vm3364, %v5999, %v5998
        %v6001 = vrot.slane %v5936, 5
        %v6002 = vsel %vm3366, %v6001, %v6000
        %v6003 = vrot.slane %v5937, 4
        %v6004 = vsel %vm3368, %v6003, %v6002
        %v6005 = vrot.slane %v5938, 3
        %v6006 = vsel %vm3370, %v6005, %v6004
        %v6007 = vrot.slane %v5939, 2
        %v6008 = vsel %vm3372, %v6007, %v6006
        %v6009 = vrot.slane %v5940, 1
        %v6010 = vsel %vm3374, %v6009, %v6008
        %v6011 = vrot.slane %v5942, 7
        %v6012 = vsel %vm3376, %v6011, %v5941
        %v6013 = vrot.slane %v5943, 6
        %v6014 = vsel %vm3364, %v6013, %v6012
        %v6015 = vrot.slane %v5944, 5
        %v6016 = vsel %vm3366, %v6015, %v6014
        %v6017 = vrot.slane %v5945, 4
        %v6018 = vsel %vm3368, %v6017, %v6016
        %v6019 = vrot.slane %v5946, 3
        %v6020 = vsel %vm3370, %v6019, %v6018
        %v6021 = vrot.slane %v5947, 2
        %v6022 = vsel %vm3372, %v6021, %v6020
        %v6023 = vrot.slane %v5948, 1
        %v6024 = vsel %vm3374, %v6023, %v6022
        %v6025 = vrot.slane %v5950, 7
        %v6026 = vsel %vm3376, %v6025, %v5949
        %v6027 = vrot.slane %v5951, 6
        %v6028 = vsel %vm3364, %v6027, %v6026
        %v6029 = vrot.slane %v5952, 5
        %v6030 = vsel %vm3366, %v6029, %v6028
        %v6031 = vrot.slane %v5953, 4
        %v6032 = vsel %vm3368, %v6031, %v6030
        %v6033 = vrot.slane %v5954, 3
        %v6034 = vsel %vm3370, %v6033, %v6032
        %v6035 = vrot.slane %v5955, 2
        %v6036 = vsel %vm3372, %v6035, %v6034
        %v6037 = vrot.slane %v5956, 1
        %v6038 = vsel %vm3374, %v6037, %v6036
        %v6039 = vrot.slane %v5958, 7
        %v6040 = vsel %vm3376, %v6039, %v5957
        %v6041 = vrot.slane %v5959, 6
        %v6042 = vsel %vm3364, %v6041, %v6040
        %v6043 = vrot.slane %v5960, 5
        %v6044 = vsel %vm3366, %v6043, %v6042
        %v6045 = vrot.slane %v5961, 4
        %v6046 = vsel %vm3368, %v6045, %v6044
        %v6047 = vrot.slane %v5962, 3
        %v6048 = vsel %vm3370, %v6047, %v6046
        %v6049 = vrot.slane %v5963, 2
        %v6050 = vsel %vm3372, %v6049, %v6048
        %v6051 = vrot.slane %v5964, 1
        %v6052 = vsel %vm3374, %v6051, %v6050
        %v6053 = vrot.slane %v5966, 7
        %v6054 = vsel %vm3376, %v6053, %v5965
        %v6055 = vrot.slane %v5967, 6
        %v6056 = vsel %vm3364, %v6055, %v6054
        %v6057 = vrot.slane %v5968, 5
        %v6058 = vsel %vm3366, %v6057, %v6056
        %v6059 = vrot.slane %v5969, 4
        %v6060 = vsel %vm3368, %v6059, %v6058
        %v6061 = vrot.slane %v5970, 3
        %v6062 = vsel %vm3370, %v6061, %v6060
        %v6063 = vrot.slane %v5971, 2
        %v6064 = vsel %vm3372, %v6063, %v6062
        %v6065 = vrot.slane %v5972, 1
        %v6066 = vsel %vm3374, %v6065, %v6064
        %v6067 = vrot.slane %v5974, 7
        %v6068 = vsel %vm3376, %v6067, %v5973
        %v6069 = vrot.slane %v5975, 6
        %v6070 = vsel %vm3364, %v6069, %v6068
        %v6071 = vrot.slane %v5976, 5
        %v6072 = vsel %vm3366, %v6071, %v6070
        %v6073 = vrot.slane %v5977, 4
        %v6074 = vsel %vm3368, %v6073, %v6072
        %v6075 = vrot.slane %v5978, 3
        %v6076 = vsel %vm3370, %v6075, %v6074
        %v6077 = vrot.slane %v5979, 2
        %v6078 = vsel %vm3372, %v6077, %v6076
        %v6079 = vrot.slane %v5980, 1
        %v6080 = vsel %vm3374, %v6079, %v6078
        %v6081 = vrot.slane %v5982, 7
        %v6082 = vsel %vm3376, %v6081, %v5981
        %v6083 = vrot.slane %v5983, 6
        %v6084 = vsel %vm3364, %v6083, %v6082
        %v6085 = vrot.slane %v5984, 5
        %v6086 = vsel %vm3366, %v6085, %v6084
        %v6087 = vrot.slane %v5985, 4
        %v6088 = vsel %vm3368, %v6087, %v6086
        %v6089 = vrot.slane %v5986, 3
        %v6090 = vsel %vm3370, %v6089, %v6088
        %v6091 = vrot.slane %v5987, 2
        %v6092 = vsel %vm3372, %v6091, %v6090
        %v6093 = vrot.slane %v5988, 1
        %v6094 = vsel %vm3374, %v6093, %v6092
        %v6095 = vrot.slane %v5990, 7
        %v6096 = vsel %vm3376, %v6095, %v5989
        %v6097 = vrot.slane %v5991, 6
        %v6098 = vsel %vm3364, %v6097, %v6096
        %v6099 = vrot.slane %v5992, 5
        %v6100 = vsel %vm3366, %v6099, %v6098
        %v6101 = vrot.slane %v5993, 4
        %v6102 = vsel %vm3368, %v6101, %v6100
        %v6103 = vrot.slane %v5994, 3
        %v6104 = vsel %vm3370, %v6103, %v6102
        %v6105 = vrot.slane %v5995, 2
        %v6106 = vsel %vm3372, %v6105, %v6104
        %v6107 = vrot.slane %v5996, 1
        %v6108 = vsel %vm3374, %v6107, %v6106
        %v6109 = vpack.c.b16 %v6024, %v6010
        %v6110 = vpack.c.b16 %v6052, %v6038
        %v6111 = vpack.c.b16 %v6080, %v6066
        %v6112 = vpack.c.b16 %v6108, %v6094
        %v6121 = vunpack.c.l.b16 %v5861
        %v6122 = vunpack.c.l.b16 %v5862
        %v6123 = vunpack.c.l.b16 %v5863
        %v6124 = vunpack.c.l.b16 %v5864
        %v6125 = vunpack.c.l.b16 %v5865
        %v6126 = vunpack.c.l.b16 %v5866
        %v6127 = vunpack.c.l.b16 %v5867
        %v6128 = vunpack.c.l.b16 %v5868
        %v6129 = vpack.c.b16 %v6122, %v6121
        %v6130 = vpack.c.b16 %v6124, %v6123
        %v6131 = vpack.c.b16 %v6126, %v6125
        %v6132 = vpack.c.b16 %v6128, %v6127
        %v6138 = vsel %vm776, %v6109, 0
        %v6141 = vsel %vm776, %v6110, 0
        %v6144 = vsel %vm776, %v6111, 0
        %v6147 = vsel %vm776, %v6112, 0
        %6149 = vmatprep.subr.bf16.mxu0 0
        %6150 = vmatpush1.bf16.msra.mxu0 %v6129
        %6151 = vmatprep.subr.bf16.mxu0 0
        %6152 = vmatpush1.bf16.msra.mxu0 %v6130
        %6153 = vmatprep.subr.bf16.mxu0 0
        %6154 = vmatpush1.bf16.msra.mxu0 %v6131
        %6155 = vmatprep.subr.bf16.mxu0 0
        %6156 = vmatpush1.bf16.msra.mxu0 %v6132
        %6157 = vmatprep.subr.bf16.mxu0 0
        %6158 = vmatpush1.bf16.msra.mxu0 0
        %6159 = vmatprep.subr.bf16.mxu0 0
        %6160 = vmatpush1.bf16.msra.mxu0 0
        %6161 = vmatprep.subr.bf16.mxu0 0
        %6162 = vmatpush1.bf16.msra.mxu0 0
        %6163 = vmatprep.subr.bf16.mxu0 0
        %6164 = vmatpush1.bf16.msra.mxu0 0
        %6165 = vmatprep.subr.bf16.mxu0 0
        %6166 = vmatpush1.bf16.msra.mxu0 0
        %6167 = vmatprep.subr.bf16.mxu0 0
        %6168 = vmatpush1.bf16.msra.mxu0 0
        %6169 = vmatprep.subr.bf16.mxu0 0
        %6170 = vmatpush1.bf16.msra.mxu0 0
        %6171 = vmatprep.subr.bf16.mxu0 0
        %6172 = vmatpush1.bf16.msra.mxu0 0
        %6173 = vmatprep.subr.bf16.mxu0 0
        %6174 = vmatpush1.bf16.msra.mxu0 0
        %6175 = vmatprep.subr.bf16.mxu0 0
        %6176 = vmatpush1.bf16.msra.mxu0 0
        %6177 = vmatprep.subr.bf16.mxu0 0
        %6178 = vmatpush1.bf16.msra.mxu0 0
        %6179 = vmatprep.subr.bf16.mxu0 0
        %6180 = vmatpush1.bf16.msra.mxu0 0
        %6181 = vmatprep.mubr.bf16.mxu0 0
        %6182 = vmatmul.mubr.bf16.gmra.mrb[0].mxu0 %v6138
        %v6183 = vpop.f32.mrb[0].mxu0
        %v6184 = vadd.f32 0.0, %v6183
        %v6185 = vpop.f32.mrb[0].mxu0
        %v6186 = vpop.f32.mrb[0].mxu0
        %v6187 = vadd.f32 0.0, %v6186
        %v6188 = vpop.f32.mrb[0].mxu0
        %6189 = vmatprep.mubr.bf16.mxu0 0
        %6190 = vmatmul.mubr.bf16.gmra.mrb[0].mxu0 %v6141
        %v6191 = vpop.f32.mrb[0].mxu0
        %v6192 = vadd.f32 0.0, %v6191
        %v6193 = vpop.f32.mrb[0].mxu0
        %v6194 = vpop.f32.mrb[0].mxu0
        %v6195 = vadd.f32 0.0, %v6194
        %v6196 = vpop.f32.mrb[0].mxu0
        %6197 = vmatprep.mubr.bf16.mxu0 0
        %6198 = vmatmul.mubr.bf16.gmra.mrb[0].mxu0 %v6144
        %v6199 = vpop.f32.mrb[0].mxu0
        %v6200 = vadd.f32 0.0, %v6199
        %v6201 = vpop.f32.mrb[0].mxu0
        %v6202 = vpop.f32.mrb[0].mxu0
        %v6203 = vadd.f32 0.0, %v6202
        %v6204 = vpop.f32.mrb[0].mxu0
        %6205 = vmatprep.mubr.bf16.mxu0 0
        %6206 = vmatmul.mubr.bf16.gmra.mrb[0].mxu0 %v6147
        %v6207 = vpop.f32.mrb[0].mxu0
        %v6208 = vadd.f32 0.0, %v6207
        %v6209 = vpop.f32.mrb[0].mxu0
        %v6210 = vpop.f32.mrb[0].mxu0
        %v6211 = vadd.f32 0.0, %v6210
        %v6212 = vpop.f32.mrb[0].mxu0
        %6213 = vdwg.mxu0
        %v6222 = vunpack.c.l.b16 %v5788
        %v6223 = vunpack.c.l.b16 %v5789
        %v6224 = vunpack.c.l.b16 %v5790
        %v6225 = vunpack.c.l.b16 %v5791
        %v6226 = vunpack.c.l.b16 %v5792
        %v6227 = vunpack.c.l.b16 %v5793
        %v6228 = vunpack.c.l.b16 %v5794
        %v6229 = vunpack.c.l.b16 %v5795
        %v6230 = vpack.c.b16 %v6223, %v6222
        %v6231 = vpack.c.b16 %v6225, %v6224
        %v6232 = vpack.c.b16 %v6227, %v6226
        %v6233 = vpack.c.b16 %v6229, %v6228
        %v6239 = vsel %vm776, %v5784, 0
        %v6242 = vsel %vm776, %v5785, 0
        %v6245 = vsel %vm776, %v5786, 0
        %v6248 = vsel %vm776, %v5787, 0
        %6250 = vmatprep.subr.bf16.mxu0 0
        %6251 = vmatpush1.bf16.msra.mxu0 %v6230
        %6252 = vmatprep.subr.bf16.mxu0 0
        %6253 = vmatpush1.bf16.msra.mxu0 %v6231
        %6254 = vmatprep.subr.bf16.mxu0 0
        %6255 = vmatpush1.bf16.msra.mxu0 %v6232
        %6256 = vmatprep.subr.bf16.mxu0 0
        %6257 = vmatpush1.bf16.msra.mxu0 %v6233
        %6258 = vmatprep.subr.bf16.mxu0 0
        %6259 = vmatpush1.bf16.msra.mxu0 0
        %6260 = vmatprep.subr.bf16.mxu0 0
        %6261 = vmatpush1.bf16.msra.mxu0 0
        %6262 = vmatprep.subr.bf16.mxu0 0
        %6263 = vmatpush1.bf16.msra.mxu0 0
        %6264 = vmatprep.subr.bf16.mxu0 0
        %6265 = vmatpush1.bf16.msra.mxu0 0
        %6266 = vmatprep.subr.bf16.mxu0 0
        %6267 = vmatpush1.bf16.msra.mxu0 0
        %6268 = vmatprep.subr.bf16.mxu0 0
        %6269 = vmatpush1.bf16.msra.mxu0 0
        %6270 = vmatprep.subr.bf16.mxu0 0
        %6271 = vmatpush1.bf16.msra.mxu0 0
        %6272 = vmatprep.subr.bf16.mxu0 0
        %6273 = vmatpush1.bf16.msra.mxu0 0
        %6274 = vmatprep.subr.bf16.mxu0 0
        %6275 = vmatpush1.bf16.msra.mxu0 0
        %6276 = vmatprep.subr.bf16.mxu0 0
        %6277 = vmatpush1.bf16.msra.mxu0 0
        %6278 = vmatprep.subr.bf16.mxu0 0
        %6279 = vmatpush1.bf16.msra.mxu0 0
        %6280 = vmatprep.subr.bf16.mxu0 0
        %6281 = vmatpush1.bf16.msra.mxu0 0
        %6282 = vmatprep.mubr.bf16.mxu0 0
        %6283 = vmatmul.mubr.bf16.gmra.mrb[0].mxu0 %v6239
        %v6284 = vpop.f32.mrb[0].mxu0
        %v6285 = vadd.f32 %v6184, %v6284
        %v6286 = vpop.f32.mrb[0].mxu0
        %v6287 = vpop.f32.mrb[0].mxu0
        %v6288 = vadd.f32 %v6187, %v6287
        %v6289 = vpop.f32.mrb[0].mxu0
        %6290 = vmatprep.mubr.bf16.mxu0 0
        %6291 = vmatmul.mubr.bf16.gmra.mrb[0].mxu0 %v6242
        %v6292 = vpop.f32.mrb[0].mxu0
        %v6293 = vadd.f32 %v6192, %v6292
        %v6294 = vpop.f32.mrb[0].mxu0
        %v6295 = vpop.f32.mrb[0].mxu0
        %v6296 = vadd.f32 %v6195, %v6295
        %v6297 = vpop.f32.mrb[0].mxu0
        %6298 = vmatprep.mubr.bf16.mxu0 0
        %6299 = vmatmul.mubr.bf16.gmra.mrb[0].mxu0 %v6245
        %v6300 = vpop.f32.mrb[0].mxu0
        %v6301 = vadd.f32 %v6200, %v6300
        %v6302 = vpop.f32.mrb[0].mxu0
        %v6303 = vpop.f32.mrb[0].mxu0
        %v6304 = vadd.f32 %v6203, %v6303
        %v6305 = vpop.f32.mrb[0].mxu0
        %6306 = vmatprep.mubr.bf16.mxu0 0
        %6307 = vmatmul.mubr.bf16.gmra.mrb[0].mxu0 %v6248
        %v6308 = vpop.f32.mrb[0].mxu0
        %v6309 = vadd.f32 %v6208, %v6308
        %v6310 = vpop.f32.mrb[0].mxu0
        %v6311 = vpop.f32.mrb[0].mxu0
        %v6312 = vadd.f32 %v6211, %v6311
        %v6313 = vpop.f32.mrb[0].mxu0
        %6314 = vdwg.mxu0
        %v6315 = vpack.c.bf16 %v5777, %v5776
        %v6316 = vpack.c.bf16 %v5779, %v5778
        %v6317 = vpack.c.bf16 %v5781, %v5780
        %v6318 = vpack.c.bf16 %v5783, %v5782
        %s6319 = scalar_lea.vmem %s5, 64
        %v6320 = vld [vmem:[%s6319] sm:$0xf]
        %v6321 = vld [vmem:[%s6319 + $0x4] sm:$0xf]
        %v6322 = vld [vmem:[%s6319 + $0x8] sm:$0xf]
        %v6323 = vld [vmem:[%s6319 + $0xc] sm:$0xf]
        %v6324 = vld [vmem:[%s6319 + $0x10] sm:$0xf]
        %v6325 = vld [vmem:[%s6319 + $0x14] sm:$0xf]
        %v6326 = vld [vmem:[%s6319 + $0x18] sm:$0xf]
        %v6327 = vld [vmem:[%s6319 + $0x1c] sm:$0xf]
        %v6336 = vunpack.c.l.b16 %v6320
        %v6337 = vunpack.c.l.b16 %v6321
        %v6338 = vunpack.c.l.b16 %v6322
        %v6339 = vunpack.c.l.b16 %v6323
        %v6340 = vunpack.c.l.b16 %v6324
        %v6341 = vunpack.c.l.b16 %v6325
        %v6342 = vunpack.c.l.b16 %v6326
        %v6343 = vunpack.c.l.b16 %v6327
        %v6344 = vpack.c.b16 %v6337, %v6336
        %v6345 = vpack.c.b16 %v6339, %v6338
        %v6346 = vpack.c.b16 %v6341, %v6340
        %v6347 = vpack.c.b16 %v6343, %v6342
        %v6353 = vsel %vm776, %v6315, 0
        %v6356 = vsel %vm776, %v6316, 0
        %v6359 = vsel %vm776, %v6317, 0
        %v6362 = vsel %vm776, %v6318, 0
        %6364 = vmatprep.subr.bf16.mxu0 0
        %6365 = vmatpush1.bf16.msra.mxu0 %v6344
        %6366 = vmatprep.subr.bf16.mxu0 0
        %6367 = vmatpush1.bf16.msra.mxu0 %v6345
        %6368 = vmatprep.subr.bf16.mxu0 0
        %6369 = vmatpush1.bf16.msra.mxu0 %v6346
        %6370 = vmatprep.subr.bf16.mxu0 0
        %6371 = vmatpush1.bf16.msra.mxu0 %v6347
        %6372 = vmatprep.subr.bf16.mxu0 0
        %6373 = vmatpush1.bf16.msra.mxu0 0
        %6374 = vmatprep.subr.bf16.mxu0 0
        %6375 = vmatpush1.bf16.msra.mxu0 0
        %6376 = vmatprep.subr.bf16.mxu0 0
        %6377 = vmatpush1.bf16.msra.mxu0 0
        %6378 = vmatprep.subr.bf16.mxu0 0
        %6379 = vmatpush1.bf16.msra.mxu0 0
        %6380 = vmatprep.subr.bf16.mxu0 0
        %6381 = vmatpush1.bf16.msra.mxu0 0
        %6382 = vmatprep.subr.bf16.mxu0 0
        %6383 = vmatpush1.bf16.msra.mxu0 0
        %6384 = vmatprep.subr.bf16.mxu0 0
        %6385 = vmatpush1.bf16.msra.mxu0 0
        %6386 = vmatprep.subr.bf16.mxu0 0
        %6387 = vmatpush1.bf16.msra.mxu0 0
        %6388 = vmatprep.subr.bf16.mxu0 0
        %6389 = vmatpush1.bf16.msra.mxu0 0
        %6390 = vmatprep.subr.bf16.mxu0 0
        %6391 = vmatpush1.bf16.msra.mxu0 0
        %6392 = vmatprep.subr.bf16.mxu0 0
        %6393 = vmatpush1.bf16.msra.mxu0 0
        %6394 = vmatprep.subr.bf16.mxu0 0
        %6395 = vmatpush1.bf16.msra.mxu0 0
        %6396 = vmatprep.mubr.bf16.mxu0 0
        %6397 = vmatmul.mubr.bf16.gmra.mrb[0].mxu0 %v6353
        %v6398 = vpop.f32.mrb[0].mxu0
        %v6399 = vadd.f32 0.0, %v6398
        %v6400 = vpop.f32.mrb[0].mxu0
        %v6401 = vpop.f32.mrb[0].mxu0
        %v6402 = vadd.f32 0.0, %v6401
        %v6403 = vpop.f32.mrb[0].mxu0
        %6404 = vmatprep.mubr.bf16.mxu0 0
        %6405 = vmatmul.mubr.bf16.gmra.mrb[0].mxu0 %v6356
        %v6406 = vpop.f32.mrb[0].mxu0
        %v6407 = vadd.f32 0.0, %v6406
        %v6408 = vpop.f32.mrb[0].mxu0
        %v6409 = vpop.f32.mrb[0].mxu0
        %v6410 = vadd.f32 0.0, %v6409
        %v6411 = vpop.f32.mrb[0].mxu0
        %6412 = vmatprep.mubr.bf16.mxu0 0
        %6413 = vmatmul.mubr.bf16.gmra.mrb[0].mxu0 %v6359
        %v6414 = vpop.f32.mrb[0].mxu0
        %v6415 = vadd.f32 0.0, %v6414
        %v6416 = vpop.f32.mrb[0].mxu0
        %v6417 = vpop.f32.mrb[0].mxu0
        %v6418 = vadd.f32 0.0, %v6417
        %v6419 = vpop.f32.mrb[0].mxu0
        %6420 = vmatprep.mubr.bf16.mxu0 0
        %6421 = vmatmul.mubr.bf16.gmra.mrb[0].mxu0 %v6362
        %v6422 = vpop.f32.mrb[0].mxu0
        %v6423 = vadd.f32 0.0, %v6422
        %v6424 = vpop.f32.mrb[0].mxu0
        %v6425 = vpop.f32.mrb[0].mxu0
        %v6426 = vadd.f32 0.0, %v6425
        %v6427 = vpop.f32.mrb[0].mxu0
        %6428 = vdwg.mxu0
        %v6429 = vadd.f32 %v6285, %v6399
        %v6430 = vadd.f32 %v6288, %v6402
        %v6431 = vadd.f32 %v6293, %v6407
        %v6432 = vadd.f32 %v6296, %v6410
        %v6433 = vadd.f32 %v6301, %v6415
        %v6434 = vadd.f32 %v6304, %v6418
        %v6435 = vadd.f32 %v6309, %v6423
        %v6436 = vadd.f32 %v6312, %v6426
        %v6437 = vld [vmem:[%s6] sm:$0x1]
        %v6439 = vlaneseq
        %v6440 = vshrl.u32 %v6439, 7
        %v6441 = vsub.s32 0, %v6440
        %v6442 = vrot.slane %v6437, %v6441
        %v6444 = vadd.f32 %v6429, %v6442
        %v6445 = vadd.f32 %v6430, %v6442
        %v6446 = vadd.f32 %v6431, %v6442
        %v6447 = vadd.f32 %v6432, %v6442
        %v6448 = vadd.f32 %v6433, %v6442
        %v6449 = vadd.f32 %v6434, %v6442
        %v6450 = vadd.f32 %v6435, %v6442
        %v6451 = vadd.f32 %v6436, %v6442
        %v6452 = vmax.f32 %v6444, 0.0
        %v6453 = vmax.f32 %v6445, 0.0
        %v6454 = vmax.f32 %v6446, 0.0
        %v6455 = vmax.f32 %v6447, 0.0
        %v6456 = vmax.f32 %v6448, 0.0
        %v6457 = vmax.f32 %v6449, 0.0
        %v6458 = vmax.f32 %v6450, 0.0
        %v6459 = vmax.f32 %v6451, 0.0
        %v6468 = vcombine.high %v6452, %v6452
        %v6470 = vunpack.c.l.s4 1983009808
        %v6471 = vunpack.c.0.s8 %v6470
        %v6472 = vlaneseq
        %v6473 = vshrl.u32 %v6472, 7
        %v6474 = vsub.s32 %v6471, %v6473
        %v6475 = vrot.slane %v6452, %v6474
        %v6477 = vunpack.c.l.s4 1983009808
        %v6478 = vunpack.c.0.s8 %v6477
        %v6479 = vlaneseq
        %v6480 = vshrl.u32 %v6479, 7
        %v6481 = vsub.s32 %v6478, %v6480
        %v6482 = vrot.slane %v6468, %v6481
        %v6483 = vcombine.high %v6475, %v6475
        %v6484 = vcombine.high %v6482, %v6482
        %v6485 = vcombine.high %v6453, %v6453
        %v6487 = vunpack.c.l.s4 1983009808
        %v6488 = vunpack.c.0.s8 %v6487
        %v6489 = vlaneseq
        %v6490 = vshrl.u32 %v6489, 7
        %v6491 = vsub.s32 %v6488, %v6490
        %v6492 = vrot.slane %v6453, %v6491
        %v6494 = vunpack.c.l.s4 1983009808
        %v6495 = vunpack.c.0.s8 %v6494
        %v6496 = vlaneseq
        %v6497 = vshrl.u32 %v6496, 7
        %v6498 = vsub.s32 %v6495, %v6497
        %v6499 = vrot.slane %v6485, %v6498
        %v6500 = vcombine.high %v6492, %v6492
        %v6501 = vcombine.high %v6499, %v6499
        %v6502 = vcombine.high %v6454, %v6454
        %v6504 = vunpack.c.l.s4 1983009808
        %v6505 = vunpack.c.0.s8 %v6504
        %v6506 = vlaneseq
        %v6507 = vshrl.u32 %v6506, 7
        %v6508 = vsub.s32 %v6505, %v6507
        %v6509 = vrot.slane %v6454, %v6508
        %v6511 = vunpack.c.l.s4 1983009808
        %v6512 = vunpack.c.0.s8 %v6511
        %v6513 = vlaneseq
        %v6514 = vshrl.u32 %v6513, 7
        %v6515 = vsub.s32 %v6512, %v6514
        %v6516 = vrot.slane %v6502, %v6515
        %v6517 = vcombine.high %v6509, %v6509
        %v6518 = vcombine.high %v6516, %v6516
        %v6519 = vcombine.high %v6455, %v6455
        %v6521 = vunpack.c.l.s4 1983009808
        %v6522 = vunpack.c.0.s8 %v6521
        %v6523 = vlaneseq
        %v6524 = vshrl.u32 %v6523, 7
        %v6525 = vsub.s32 %v6522, %v6524
        %v6526 = vrot.slane %v6455, %v6525
        %v6528 = vunpack.c.l.s4 1983009808
        %v6529 = vunpack.c.0.s8 %v6528
        %v6530 = vlaneseq
        %v6531 = vshrl.u32 %v6530, 7
        %v6532 = vsub.s32 %v6529, %v6531
        %v6533 = vrot.slane %v6519, %v6532
        %v6534 = vcombine.high %v6526, %v6526
        %v6535 = vcombine.high %v6533, %v6533
        %v6536 = vcombine.high %v6456, %v6456
        %v6538 = vunpack.c.l.s4 1983009808
        %v6539 = vunpack.c.0.s8 %v6538
        %v6540 = vlaneseq
        %v6541 = vshrl.u32 %v6540, 7
        %v6542 = vsub.s32 %v6539, %v6541
        %v6543 = vrot.slane %v6456, %v6542
        %v6545 = vunpack.c.l.s4 1983009808
        %v6546 = vunpack.c.0.s8 %v6545
        %v6547 = vlaneseq
        %v6548 = vshrl.u32 %v6547, 7
        %v6549 = vsub.s32 %v6546, %v6548
        %v6550 = vrot.slane %v6536, %v6549
        %v6551 = vcombine.high %v6543, %v6543
        %v6552 = vcombine.high %v6550, %v6550
        %v6553 = vcombine.high %v6457, %v6457
        %v6555 = vunpack.c.l.s4 1983009808
        %v6556 = vunpack.c.0.s8 %v6555
        %v6557 = vlaneseq
        %v6558 = vshrl.u32 %v6557, 7
        %v6559 = vsub.s32 %v6556, %v6558
        %v6560 = vrot.slane %v6457, %v6559
        %v6562 = vunpack.c.l.s4 1983009808
        %v6563 = vunpack.c.0.s8 %v6562
        %v6564 = vlaneseq
        %v6565 = vshrl.u32 %v6564, 7
        %v6566 = vsub.s32 %v6563, %v6565
        %v6567 = vrot.slane %v6553, %v6566
        %v6568 = vcombine.high %v6560, %v6560
        %v6569 = vcombine.high %v6567, %v6567
        %v6570 = vcombine.high %v6458, %v6458
        %v6572 = vunpack.c.l.s4 1983009808
        %v6573 = vunpack.c.0.s8 %v6572
        %v6574 = vlaneseq
        %v6575 = vshrl.u32 %v6574, 7
        %v6576 = vsub.s32 %v6573, %v6575
        %v6577 = vrot.slane %v6458, %v6576
        %v6579 = vunpack.c.l.s4 1983009808
        %v6580 = vunpack.c.0.s8 %v6579
        %v6581 = vlaneseq
        %v6582 = vshrl.u32 %v6581, 7
        %v6583 = vsub.s32 %v6580, %v6582
        %v6584 = vrot.slane %v6570, %v6583
        %v6585 = vcombine.high %v6577, %v6577
        %v6586 = vcombine.high %v6584, %v6584
        %v6587 = vcombine.high %v6459, %v6459
        %v6589 = vunpack.c.l.s4 1983009808
        %v6590 = vunpack.c.0.s8 %v6589
        %v6591 = vlaneseq
        %v6592 = vshrl.u32 %v6591, 7
        %v6593 = vsub.s32 %v6590, %v6592
        %v6594 = vrot.slane %v6459, %v6593
        %v6596 = vunpack.c.l.s4 1983009808
        %v6597 = vunpack.c.0.s8 %v6596
        %v6598 = vlaneseq
        %v6599 = vshrl.u32 %v6598, 7
        %v6600 = vsub.s32 %v6597, %v6599
        %v6601 = vrot.slane %v6587, %v6600
        %v6602 = vcombine.high %v6594, %v6594
        %v6603 = vcombine.high %v6601, %v6601
        %v6636 = vrot.slane %v6475, 7
        %v6637 = vrot.slane %v6636, 2
        %v6638 = vrot.slane %v6483, 7
        %v6639 = vrot.slane %v6638, 2
        %v6640 = vrot.slane %v6482, 7
        %v6641 = vrot.slane %v6640, 2
        %v6642 = vrot.slane %v6484, 7
        %v6643 = vrot.slane %v6642, 2
        %v6644 = vrot.slane %v6492, 7
        %v6645 = vrot.slane %v6644, 2
        %v6646 = vrot.slane %v6500, 7
        %v6647 = vrot.slane %v6646, 2
        %v6648 = vrot.slane %v6499, 7
        %v6649 = vrot.slane %v6648, 2
        %v6650 = vrot.slane %v6501, 7
        %v6651 = vrot.slane %v6650, 2
        %v6652 = vrot.slane %v6509, 7
        %v6653 = vrot.slane %v6652, 2
        %v6654 = vrot.slane %v6517, 7
        %v6655 = vrot.slane %v6654, 2
        %v6656 = vrot.slane %v6516, 7
        %v6657 = vrot.slane %v6656, 2
        %v6658 = vrot.slane %v6518, 7
        %v6659 = vrot.slane %v6658, 2
        %v6660 = vrot.slane %v6526, 7
        %v6661 = vrot.slane %v6660, 2
        %v6662 = vrot.slane %v6534, 7
        %v6663 = vrot.slane %v6662, 2
        %v6664 = vrot.slane %v6533, 7
        %v6665 = vrot.slane %v6664, 2
        %v6666 = vrot.slane %v6535, 7
        %v6667 = vrot.slane %v6666, 2
        %v6668 = vrot.slane %v6543, 7
        %v6669 = vrot.slane %v6668, 2
        %v6670 = vrot.slane %v6551, 7
        %v6671 = vrot.slane %v6670, 2
        %v6672 = vrot.slane %v6550, 7
        %v6673 = vrot.slane %v6672, 2
        %v6674 = vrot.slane %v6552, 7
        %v6675 = vrot.slane %v6674, 2
        %v6676 = vrot.slane %v6560, 7
        %v6677 = vrot.slane %v6676, 2
        %v6678 = vrot.slane %v6568, 7
        %v6679 = vrot.slane %v6678, 2
        %v6680 = vrot.slane %v6567, 7
        %v6681 = vrot.slane %v6680, 2
        %v6682 = vrot.slane %v6569, 7
        %v6683 = vrot.slane %v6682, 2
        %v6684 = vrot.slane %v6577, 7
        %v6685 = vrot.slane %v6684, 2
        %v6686 = vrot.slane %v6585, 7
        %v6687 = vrot.slane %v6686, 2
        %v6688 = vrot.slane %v6584, 7
        %v6689 = vrot.slane %v6688, 2
        %v6690 = vrot.slane %v6586, 7
        %v6691 = vrot.slane %v6690, 2
        %v6692 = vrot.slane %v6594, 7
        %v6693 = vrot.slane %v6692, 2
        %v6694 = vrot.slane %v6602, 7
        %v6695 = vrot.slane %v6694, 2
        %v6696 = vrot.slane %v6601, 7
        %v6697 = vrot.slane %v6696, 2
        %v6698 = vrot.slane %v6603, 7
        %v6699 = vrot.slane %v6698, 2
        %v6732 = vmax.f32 %v6475, %v6637
        %v6733 = vmax.f32 %v6483, %v6639
        %v6734 = vmax.f32 %v6482, %v6641
        %v6735 = vmax.f32 %v6484, %v6643
        %v6736 = vmax.f32 %v6492, %v6645
        %v6737 = vmax.f32 %v6500, %v6647
        %v6738 = vmax.f32 %v6499, %v6649
        %v6739 = vmax.f32 %v6501, %v6651
        %v6740 = vmax.f32 %v6509, %v6653
        %v6741 = vmax.f32 %v6517, %v6655
        %v6742 = vmax.f32 %v6516, %v6657
        %v6743 = vmax.f32 %v6518, %v6659
        %v6744 = vmax.f32 %v6526, %v6661
        %v6745 = vmax.f32 %v6534, %v6663
        %v6746 = vmax.f32 %v6533, %v6665
        %v6747 = vmax.f32 %v6535, %v6667
        %v6748 = vmax.f32 %v6543, %v6669
        %v6749 = vmax.f32 %v6551, %v6671
        %v6750 = vmax.f32 %v6550, %v6673
        %v6751 = vmax.f32 %v6552, %v6675
        %v6752 = vmax.f32 %v6560, %v6677
        %v6753 = vmax.f32 %v6568, %v6679
        %v6754 = vmax.f32 %v6567, %v6681
        %v6755 = vmax.f32 %v6569, %v6683
        %v6756 = vmax.f32 %v6577, %v6685
        %v6757 = vmax.f32 %v6585, %v6687
        %v6758 = vmax.f32 %v6584, %v6689
        %v6759 = vmax.f32 %v6586, %v6691
        %v6760 = vmax.f32 %v6594, %v6693
        %v6761 = vmax.f32 %v6602, %v6695
        %v6762 = vmax.f32 %v6601, %v6697
        %v6763 = vmax.f32 %v6603, %v6699
        %v6788 = vlaneseq
        %v6789 = vshrl.u32 %v6788, 7
        %v6790 = vsub.s32 0, %v6789
        %v6791 = vrot.slane %v6732, %v6790
        %v6792 = vlaneseq
        %v6793 = vshrl.u32 %v6792, 7
        %v6794 = vsub.s32 0, %v6793
        %v6795 = vrot.slane %v6733, %v6794
        %v6796 = vlaneseq
        %v6797 = vshrl.u32 %v6796, 7
        %v6798 = vsub.s32 0, %v6797
        %v6799 = vrot.slane %v6734, %v6798
        %v6800 = vlaneseq
        %v6801 = vshrl.u32 %v6800, 7
        %v6802 = vsub.s32 0, %v6801
        %v6803 = vrot.slane %v6736, %v6802
        %v6804 = vlaneseq
        %v6805 = vshrl.u32 %v6804, 7
        %v6806 = vsub.s32 0, %v6805
        %v6807 = vrot.slane %v6737, %v6806
        %v6808 = vlaneseq
        %v6809 = vshrl.u32 %v6808, 7
        %v6810 = vsub.s32 0, %v6809
        %v6811 = vrot.slane %v6738, %v6810
        %v6812 = vlaneseq
        %v6813 = vshrl.u32 %v6812, 7
        %v6814 = vsub.s32 0, %v6813
        %v6815 = vrot.slane %v6740, %v6814
        %v6816 = vlaneseq
        %v6817 = vshrl.u32 %v6816, 7
        %v6818 = vsub.s32 0, %v6817
        %v6819 = vrot.slane %v6741, %v6818
        %v6820 = vlaneseq
        %v6821 = vshrl.u32 %v6820, 7
        %v6822 = vsub.s32 0, %v6821
        %v6823 = vrot.slane %v6742, %v6822
        %v6824 = vlaneseq
        %v6825 = vshrl.u32 %v6824, 7
        %v6826 = vsub.s32 0, %v6825
        %v6827 = vrot.slane %v6744, %v6826
        %v6828 = vlaneseq
        %v6829 = vshrl.u32 %v6828, 7
        %v6830 = vsub.s32 0, %v6829
        %v6831 = vrot.slane %v6745, %v6830
        %v6832 = vlaneseq
        %v6833 = vshrl.u32 %v6832, 7
        %v6834 = vsub.s32 0, %v6833
        %v6835 = vrot.slane %v6746, %v6834
        %v6836 = vlaneseq
        %v6837 = vshrl.u32 %v6836, 7
        %v6838 = vsub.s32 0, %v6837
        %v6839 = vrot.slane %v6748, %v6838
        %v6840 = vlaneseq
        %v6841 = vshrl.u32 %v6840, 7
        %v6842 = vsub.s32 0, %v6841
        %v6843 = vrot.slane %v6749, %v6842
        %v6844 = vlaneseq
        %v6845 = vshrl.u32 %v6844, 7
        %v6846 = vsub.s32 0, %v6845
        %v6847 = vrot.slane %v6750, %v6846
        %v6848 = vlaneseq
        %v6849 = vshrl.u32 %v6848, 7
        %v6850 = vsub.s32 0, %v6849
        %v6851 = vrot.slane %v6752, %v6850
        %v6852 = vlaneseq
        %v6853 = vshrl.u32 %v6852, 7
        %v6854 = vsub.s32 0, %v6853
        %v6855 = vrot.slane %v6753, %v6854
        %v6856 = vlaneseq
        %v6857 = vshrl.u32 %v6856, 7
        %v6858 = vsub.s32 0, %v6857
        %v6859 = vrot.slane %v6754, %v6858
        %v6860 = vlaneseq
        %v6861 = vshrl.u32 %v6860, 7
        %v6862 = vsub.s32 0, %v6861
        %v6863 = vrot.slane %v6756, %v6862
        %v6864 = vlaneseq
        %v6865 = vshrl.u32 %v6864, 7
        %v6866 = vsub.s32 0, %v6865
        %v6867 = vrot.slane %v6757, %v6866
        %v6868 = vlaneseq
        %v6869 = vshrl.u32 %v6868, 7
        %v6870 = vsub.s32 0, %v6869
        %v6871 = vrot.slane %v6758, %v6870
        %v6872 = vlaneseq
        %v6873 = vshrl.u32 %v6872, 7
        %v6874 = vsub.s32 0, %v6873
        %v6875 = vrot.slane %v6760, %v6874
        %v6876 = vlaneseq
        %v6877 = vshrl.u32 %v6876, 7
        %v6878 = vsub.s32 0, %v6877
        %v6879 = vrot.slane %v6761, %v6878
        %v6880 = vlaneseq
        %v6881 = vshrl.u32 %v6880, 7
        %v6882 = vsub.s32 0, %v6881
        %v6883 = vrot.slane %v6762, %v6882
        %v6884 = vsel %vm3364, %v6795, %v6791
        %v6885 = vsel %vm3366, %v6799, %v6884
        %v6886 = vsel %vm3364, %v6807, %v6803
        %v6887 = vsel %vm3366, %v6811, %v6886
        %v6888 = vsel %vm3364, %v6819, %v6815
        %v6889 = vsel %vm3366, %v6823, %v6888
        %v6890 = vsel %vm3364, %v6831, %v6827
        %v6891 = vsel %vm3366, %v6835, %v6890
        %v6892 = vsel %vm3364, %v6843, %v6839
        %v6893 = vsel %vm3366, %v6847, %v6892
        %v6894 = vsel %vm3364, %v6855, %v6851
        %v6895 = vsel %vm3366, %v6859, %v6894
        %v6896 = vsel %vm3364, %v6867, %v6863
        %v6897 = vsel %vm3366, %v6871, %v6896
        %v6898 = vsel %vm3364, %v6879, %v6875
        %v6899 = vsel %vm3366, %v6883, %v6898
        %v6908 = vsel %vm509, 0.0, %v6885
        %v6909 = vsel %vm509, 0.0, %v6887
        %v6910 = vsel %vm509, 0.0, %v6889
        %v6911 = vsel %vm509, 0.0, %v6891
        %v6912 = vsel %vm509, 0.0, %v6893
        %v6913 = vsel %vm509, 0.0, %v6895
        %v6914 = vsel %vm509, 0.0, %v6897
        %v6915 = vsel %vm509, 0.0, %v6899
        %v6924 = vlaneseq
        %v6925 = vshrl.u32 %v6924, 7
        %v6926 = vsub.s32 0, %v6925
        %v6927 = vrot.slane %v6735, %v6926
        %v6928 = vlaneseq
        %v6929 = vshrl.u32 %v6928, 7
        %v6930 = vsub.s32 0, %v6929
        %v6931 = vrot.slane %v6739, %v6930
        %v6932 = vlaneseq
        %v6933 = vshrl.u32 %v6932, 7
        %v6934 = vsub.s32 0, %v6933
        %v6935 = vrot.slane %v6743, %v6934
        %v6936 = vlaneseq
        %v6937 = vshrl.u32 %v6936, 7
        %v6938 = vsub.s32 0, %v6937
        %v6939 = vrot.slane %v6747, %v6938
        %v6940 = vlaneseq
        %v6941 = vshrl.u32 %v6940, 7
        %v6942 = vsub.s32 0, %v6941
        %v6943 = vrot.slane %v6751, %v6942
        %v6944 = vlaneseq
        %v6945 = vshrl.u32 %v6944, 7
        %v6946 = vsub.s32 0, %v6945
        %v6947 = vrot.slane %v6755, %v6946
        %v6948 = vlaneseq
        %v6949 = vshrl.u32 %v6948, 7
        %v6950 = vsub.s32 0, %v6949
        %v6951 = vrot.slane %v6759, %v6950
        %v6952 = vlaneseq
        %v6953 = vshrl.u32 %v6952, 7
        %v6954 = vsub.s32 0, %v6953
        %v6955 = vrot.slane %v6763, %v6954
        %v6956 = vsel %vm3376, %v6799, %v6795
        %v6957 = vsel %vm3364, %v6927, %v6956
        %v6958 = vsel %vm3376, %v6811, %v6807
        %v6959 = vsel %vm3364, %v6931, %v6958
        %v6960 = vsel %vm3376, %v6823, %v6819
        %v6961 = vsel %vm3364, %v6935, %v6960
        %v6962 = vsel %vm3376, %v6835, %v6831
        %v6963 = vsel %vm3364, %v6939, %v6962
        %v6964 = vsel %vm3376, %v6847, %v6843
        %v6965 = vsel %vm3364, %v6943, %v6964
        %v6966 = vsel %vm3376, %v6859, %v6855
        %v6967 = vsel %vm3364, %v6947, %v6966
        %v6968 = vsel %vm3376, %v6871, %v6867
        %v6969 = vsel %vm3364, %v6951, %v6968
        %v6970 = vsel %vm3376, %v6883, %v6879
        %v6971 = vsel %vm3364, %v6955, %v6970
        %vm6980 = vcmask 1042432
        %v6981 = vsel %vm6980, %v6957, 0.0
        %v6982 = vsel %vm6980, %v6959, 0.0
        %v6983 = vsel %vm6980, %v6961, 0.0
        %v6984 = vsel %vm6980, %v6963, 0.0
        %v6985 = vsel %vm6980, %v6965, 0.0
        %v6986 = vsel %vm6980, %v6967, 0.0
        %v6987 = vsel %vm6980, %v6969, 0.0
        %v6988 = vsel %vm6980, %v6971, 0.0
        %v6997 = vcombine.low %v6908, %v6909
        %v6998 = vcombine.low %v6910, %v6911
        %v6999 = vcombine.low %v6912, %v6913
        %v7000 = vcombine.low %v6914, %v6915
        %v7005 = vpack.c.bf16 %v6998, %v6997
        %v7006 = vpack.c.bf16 %v7000, %v6999
        %v7007 = vld [vmem:[%s7] sm:$0xf]
        %v7008 = vld [vmem:[%s7 + $0x4] sm:$0xf]
        %v7009 = vpack.c.bf16 %v6732, %v6732
        %v7010 = vpack.c.bf16 %v6733, %v6733
        %v7011 = vpack.c.bf16 %v6734, %v6734
        %v7012 = vpack.c.bf16 %v6735, %v6735
        %v7013 = vpack.c.bf16 %v6736, %v6736
        %v7014 = vpack.c.bf16 %v6737, %v6737
        %v7015 = vpack.c.bf16 %v6738, %v6738
        %v7016 = vpack.c.bf16 %v6739, %v6739
        %v7017 = vpack.c.bf16 %v6740, %v6740
        %v7018 = vpack.c.bf16 %v6741, %v6741
        %v7019 = vpack.c.bf16 %v6742, %v6742
        %v7020 = vpack.c.bf16 %v6743, %v6743
        %v7021 = vpack.c.bf16 %v6744, %v6744
        %v7022 = vpack.c.bf16 %v6745, %v6745
        %v7023 = vpack.c.bf16 %v6746, %v6746
        %v7024 = vpack.c.bf16 %v6747, %v6747
        %v7025 = vpack.c.bf16 %v6748, %v6748
        %v7026 = vpack.c.bf16 %v6749, %v6749
        %v7027 = vpack.c.bf16 %v6750, %v6750
        %v7028 = vpack.c.bf16 %v6751, %v6751
        %v7029 = vpack.c.bf16 %v6752, %v6752
        %v7030 = vpack.c.bf16 %v6753, %v6753
        %v7031 = vpack.c.bf16 %v6754, %v6754
        %v7032 = vpack.c.bf16 %v6755, %v6755
        %v7033 = vpack.c.bf16 %v6756, %v6756
        %v7034 = vpack.c.bf16 %v6757, %v6757
        %v7035 = vpack.c.bf16 %v6758, %v6758
        %v7036 = vpack.c.bf16 %v6759, %v6759
        %v7037 = vpack.c.bf16 %v6760, %v6760
        %v7038 = vpack.c.bf16 %v6761, %v6761
        %v7039 = vpack.c.bf16 %v6762, %v6762
        %v7040 = vpack.c.bf16 %v6763, %v6763
        %s7041 = scalar_lea.vmem %s7, 8
        %v7042 = vld [vmem:[%s7041] sm:$0xf]
        %v7043 = vld [vmem:[%s7041 + $0x4] sm:$0xf]
        %v7076 = vunpack.c.l.b16 %v7009
        %v7077 = vunpack.c.l.b16 %v7010
        %v7078 = vunpack.c.l.b16 %v7011
        %v7079 = vunpack.c.l.b16 %v7012
        %v7080 = vunpack.c.l.b16 %v7013
        %v7081 = vunpack.c.l.b16 %v7014
        %v7082 = vunpack.c.l.b16 %v7015
        %v7083 = vunpack.c.l.b16 %v7016
        %v7084 = vunpack.c.l.b16 %v7017
        %v7085 = vunpack.c.l.b16 %v7018
        %v7086 = vunpack.c.l.b16 %v7019
        %v7087 = vunpack.c.l.b16 %v7020
        %v7088 = vunpack.c.l.b16 %v7021
        %v7089 = vunpack.c.l.b16 %v7022
        %v7090 = vunpack.c.l.b16 %v7023
        %v7091 = vunpack.c.l.b16 %v7024
        %v7092 = vunpack.c.l.b16 %v7025
        %v7093 = vunpack.c.l.b16 %v7026
        %v7094 = vunpack.c.l.b16 %v7027
        %v7095 = vunpack.c.l.b16 %v7028
        %v7096 = vunpack.c.l.b16 %v7029
        %v7097 = vunpack.c.l.b16 %v7030
        %v7098 = vunpack.c.l.b16 %v7031
        %v7099 = vunpack.c.l.b16 %v7032
        %v7100 = vunpack.c.l.b16 %v7033
        %v7101 = vunpack.c.l.b16 %v7034
        %v7102 = vunpack.c.l.b16 %v7035
        %v7103 = vunpack.c.l.b16 %v7036
        %v7104 = vunpack.c.l.b16 %v7037
        %v7105 = vunpack.c.l.b16 %v7038
        %v7106 = vunpack.c.l.b16 %v7039
        %v7107 = vunpack.c.l.b16 %v7040
        %v7108 = vrot.slane %v7077, 7
        %v7109 = vsel %vm3376, %v7108, %v7076
        %v7110 = vrot.slane %v7078, 6
        %v7111 = vsel %vm3364, %v7110, %v7109
        %v7112 = vrot.slane %v7079, 5
        %v7113 = vsel %vm3366, %v7112, %v7111
        %v7114 = vrot.slane %v7080, 4
        %v7115 = vsel %vm3368, %v7114, %v7113
        %v7116 = vrot.slane %v7081, 3
        %v7117 = vsel %vm3370, %v7116, %v7115
        %v7118 = vrot.slane %v7082, 2
        %v7119 = vsel %vm3372, %v7118, %v7117
        %v7120 = vrot.slane %v7083, 1
        %v7121 = vsel %vm3374, %v7120, %v7119
        %v7122 = vrot.slane %v7085, 7
        %v7123 = vsel %vm3376, %v7122, %v7084
        %v7124 = vrot.slane %v7086, 6
        %v7125 = vsel %vm3364, %v7124, %v7123
        %v7126 = vrot.slane %v7087, 5
        %v7127 = vsel %vm3366, %v7126, %v7125
        %v7128 = vrot.slane %v7088, 4
        %v7129 = vsel %vm3368, %v7128, %v7127
        %v7130 = vrot.slane %v7089, 3
        %v7131 = vsel %vm3370, %v7130, %v7129
        %v7132 = vrot.slane %v7090, 2
        %v7133 = vsel %vm3372, %v7132, %v7131
        %v7134 = vrot.slane %v7091, 1
        %v7135 = vsel %vm3374, %v7134, %v7133
        %v7136 = vrot.slane %v7093, 7
        %v7137 = vsel %vm3376, %v7136, %v7092
        %v7138 = vrot.slane %v7094, 6
        %v7139 = vsel %vm3364, %v7138, %v7137
        %v7140 = vrot.slane %v7095, 5
        %v7141 = vsel %vm3366, %v7140, %v7139
        %v7142 = vrot.slane %v7096, 4
        %v7143 = vsel %vm3368, %v7142, %v7141
        %v7144 = vrot.slane %v7097, 3
        %v7145 = vsel %vm3370, %v7144, %v7143
        %v7146 = vrot.slane %v7098, 2
        %v7147 = vsel %vm3372, %v7146, %v7145
        %v7148 = vrot.slane %v7099, 1
        %v7149 = vsel %vm3374, %v7148, %v7147
        %v7150 = vrot.slane %v7101, 7
        %v7151 = vsel %vm3376, %v7150, %v7100
        %v7152 = vrot.slane %v7102, 6
        %v7153 = vsel %vm3364, %v7152, %v7151
        %v7154 = vrot.slane %v7103, 5
        %v7155 = vsel %vm3366, %v7154, %v7153
        %v7156 = vrot.slane %v7104, 4
        %v7157 = vsel %vm3368, %v7156, %v7155
        %v7158 = vrot.slane %v7105, 3
        %v7159 = vsel %vm3370, %v7158, %v7157
        %v7160 = vrot.slane %v7106, 2
        %v7161 = vsel %vm3372, %v7160, %v7159
        %v7162 = vrot.slane %v7107, 1
        %v7163 = vsel %vm3374, %v7162, %v7161
        %v7164 = vpack.c.b16 %v7135, %v7121
        %v7165 = vpack.c.b16 %v7163, %v7149
        %v7168 = vunpack.c.l.b16 %v7042
        %v7169 = vunpack.c.l.b16 %v7043
        %v7170 = vpack.c.b16 %v7169, %v7168
        %v7173 = vsel %vm4302, %v7164, 0
        %v7176 = vsel %vm4302, %v7165, 0
        %7178 = vmatprep.subr.bf16.mxu0 0
        %7179 = vmatpush1.bf16.msra.mxu0 %v7170
        %7180 = vmatprep.subr.bf16.mxu0 0
        %7181 = vmatpush1.bf16.msra.mxu0 0
        %7182 = vmatprep.subr.bf16.mxu0 0
        %7183 = vmatpush1.bf16.msra.mxu0 0
        %7184 = vmatprep.subr.bf16.mxu0 0
        %7185 = vmatpush1.bf16.msra.mxu0 0
        %7186 = vmatprep.subr.bf16.mxu0 0
        %7187 = vmatpush1.bf16.msra.mxu0 0
        %7188 = vmatprep.subr.bf16.mxu0 0
        %7189 = vmatpush1.bf16.msra.mxu0 0
        %7190 = vmatprep.subr.bf16.mxu0 0
        %7191 = vmatpush1.bf16.msra.mxu0 0
        %7192 = vmatprep.subr.bf16.mxu0 0
        %7193 = vmatpush1.bf16.msra.mxu0 0
        %7194 = vmatprep.subr.bf16.mxu0 0
        %7195 = vmatpush1.bf16.msra.mxu0 0
        %7196 = vmatprep.subr.bf16.mxu0 0
        %7197 = vmatpush1.bf16.msra.mxu0 0
        %7198 = vmatprep.subr.bf16.mxu0 0
        %7199 = vmatpush1.bf16.msra.mxu0 0
        %7200 = vmatprep.subr.bf16.mxu0 0
        %7201 = vmatpush1.bf16.msra.mxu0 0
        %7202 = vmatprep.subr.bf16.mxu0 0
        %7203 = vmatpush1.bf16.msra.mxu0 0
        %7204 = vmatprep.subr.bf16.mxu0 0
        %7205 = vmatpush1.bf16.msra.mxu0 0
        %7206 = vmatprep.subr.bf16.mxu0 0
        %7207 = vmatpush1.bf16.msra.mxu0 0
        %7208 = vmatprep.subr.bf16.mxu0 0
        %7209 = vmatpush1.bf16.msra.mxu0 0
        %7210 = vmatprep.mubr.bf16.mxu0 0
        %7211 = vmatmul.mubr.bf16.gmra.mrb[0].mxu0 %v7173
        %v7212 = vpop.f32.mrb[0].mxu0
        %v7213 = vadd.f32 0.0, %v7212
        %v7214 = vpop.f32.mrb[0].mxu0
        %v7215 = vpop.f32.mrb[0].mxu0
        %v7216 = vadd.f32 0.0, %v7215
        %v7217 = vpop.f32.mrb[0].mxu0
        %7218 = vmatprep.mubr.bf16.mxu0 0
        %7219 = vmatmul.mubr.bf16.gmra.mrb[0].mxu0 %v7176
        %v7220 = vpop.f32.mrb[0].mxu0
        %v7221 = vadd.f32 0.0, %v7220
        %v7222 = vpop.f32.mrb[0].mxu0
        %v7223 = vpop.f32.mrb[0].mxu0
        %v7224 = vadd.f32 0.0, %v7223
        %v7225 = vpop.f32.mrb[0].mxu0
        %7226 = vdwg.mxu0
        %v7229 = vunpack.c.l.b16 %v7007
        %v7230 = vunpack.c.l.b16 %v7008
        %v7231 = vpack.c.b16 %v7230, %v7229
        %v7234 = vsel %vm4302, %v7005, 0
        %v7237 = vsel %vm4302, %v7006, 0
        %7239 = vmatprep.subr.bf16.mxu0 0
        %7240 = vmatpush1.bf16.msra.mxu0 %v7231
        %7241 = vmatprep.subr.bf16.mxu0 0
        %7242 = vmatpush1.bf16.msra.mxu0 0
        %7243 = vmatprep.subr.bf16.mxu0 0
        %7244 = vmatpush1.bf16.msra.mxu0 0
        %7245 = vmatprep.subr.bf16.mxu0 0
        %7246 = vmatpush1.bf16.msra.mxu0 0
        %7247 = vmatprep.subr.bf16.mxu0 0
        %7248 = vmatpush1.bf16.msra.mxu0 0
        %7249 = vmatprep.subr.bf16.mxu0 0
        %7250 = vmatpush1.bf16.msra.mxu0 0
        %7251 = vmatprep.subr.bf16.mxu0 0
        %7252 = vmatpush1.bf16.msra.mxu0 0
        %7253 = vmatprep.subr.bf16.mxu0 0
        %7254 = vmatpush1.bf16.msra.mxu0 0
        %7255 = vmatprep.subr.bf16.mxu0 0
        %7256 = vmatpush1.bf16.msra.mxu0 0
        %7257 = vmatprep.subr.bf16.mxu0 0
        %7258 = vmatpush1.bf16.msra.mxu0 0
        %7259 = vmatprep.subr.bf16.mxu0 0
        %7260 = vmatpush1.bf16.msra.mxu0 0
        %7261 = vmatprep.subr.bf16.mxu0 0
        %7262 = vmatpush1.bf16.msra.mxu0 0
        %7263 = vmatprep.subr.bf16.mxu0 0
        %7264 = vmatpush1.bf16.msra.mxu0 0
        %7265 = vmatprep.subr.bf16.mxu0 0
        %7266 = vmatpush1.bf16.msra.mxu0 0
        %7267 = vmatprep.subr.bf16.mxu0 0
        %7268 = vmatpush1.bf16.msra.mxu0 0
        %7269 = vmatprep.subr.bf16.mxu0 0
        %7270 = vmatpush1.bf16.msra.mxu0 0
        %7271 = vmatprep.mubr.bf16.mxu0 0
        %7272 = vmatmul.mubr.bf16.gmra.mrb[0].mxu0 %v7234
        %v7273 = vpop.f32.mrb[0].mxu0
        %v7274 = vadd.f32 %v7213, %v7273
        %v7275 = vpop.f32.mrb[0].mxu0
        %v7276 = vpop.f32.mrb[0].mxu0
        %v7277 = vadd.f32 %v7216, %v7276
        %v7278 = vpop.f32.mrb[0].mxu0
        %7279 = vmatprep.mubr.bf16.mxu0 0
        %7280 = vmatmul.mubr.bf16.gmra.mrb[0].mxu0 %v7237
        %v7281 = vpop.f32.mrb[0].mxu0
        %v7282 = vadd.f32 %v7221, %v7281
        %v7283 = vpop.f32.mrb[0].mxu0
        %v7284 = vpop.f32.mrb[0].mxu0
        %v7285 = vadd.f32 %v7224, %v7284
        %v7286 = vpop.f32.mrb[0].mxu0
        %7287 = vdwg.mxu0
        %v7296 = vcombine.low %v6981, %v6982
        %v7297 = vcombine.low %v6983, %v6984
        %v7298 = vcombine.low %v6985, %v6986
        %v7299 = vcombine.low %v6987, %v6988
        %v7304 = vpack.c.bf16 %v7297, %v7296
        %v7305 = vpack.c.bf16 %v7299, %v7298
        %s7306 = scalar_lea.vmem %s7, 16
        %v7307 = vld [vmem:[%s7306] sm:$0xf]
        %v7308 = vld [vmem:[%s7306 + $0x4] sm:$0xf]
        %v7311 = vunpack.c.l.b16 %v7307
        %v7312 = vunpack.c.l.b16 %v7308
        %v7313 = vpack.c.b16 %v7312, %v7311
        %v7316 = vsel %vm4302, %v7304, 0
        %v7319 = vsel %vm4302, %v7305, 0
        %7321 = vmatprep.subr.bf16.mxu0 0
        %7322 = vmatpush1.bf16.msra.mxu0 %v7313
        %7323 = vmatprep.subr.bf16.mxu0 0
        %7324 = vmatpush1.bf16.msra.mxu0 0
        %7325 = vmatprep.subr.bf16.mxu0 0
        %7326 = vmatpush1.bf16.msra.mxu0 0
        %7327 = vmatprep.subr.bf16.mxu0 0
        %7328 = vmatpush1.bf16.msra.mxu0 0
        %7329 = vmatprep.subr.bf16.mxu0 0
        %7330 = vmatpush1.bf16.msra.mxu0 0
        %7331 = vmatprep.subr.bf16.mxu0 0
        %7332 = vmatpush1.bf16.msra.mxu0 0
        %7333 = vmatprep.subr.bf16.mxu0 0
        %7334 = vmatpush1.bf16.msra.mxu0 0
        %7335 = vmatprep.subr.bf16.mxu0 0
        %7336 = vmatpush1.bf16.msra.mxu0 0
        %7337 = vmatprep.subr.bf16.mxu0 0
        %7338 = vmatpush1.bf16.msra.mxu0 0
        %7339 = vmatprep.subr.bf16.mxu0 0
        %7340 = vmatpush1.bf16.msra.mxu0 0
        %7341 = vmatprep.subr.bf16.mxu0 0
        %7342 = vmatpush1.bf16.msra.mxu0 0
        %7343 = vmatprep.subr.bf16.mxu0 0
        %7344 = vmatpush1.bf16.msra.mxu0 0
        %7345 = vmatprep.subr.bf16.mxu0 0
        %7346 = vmatpush1.bf16.msra.mxu0 0
        %7347 = vmatprep.subr.bf16.mxu0 0
        %7348 = vmatpush1.bf16.msra.mxu0 0
        %7349 = vmatprep.subr.bf16.mxu0 0
        %7350 = vmatpush1.bf16.msra.mxu0 0
        %7351 = vmatprep.subr.bf16.mxu0 0
        %7352 = vmatpush1.bf16.msra.mxu0 0
        %7353 = vmatprep.mubr.bf16.mxu0 0
        %7354 = vmatmul.mubr.bf16.gmra.mrb[0].mxu0 %v7316
        %v7355 = vpop.f32.mrb[0].mxu0
        %v7356 = vadd.f32 0.0, %v7355
        %v7357 = vpop.f32.mrb[0].mxu0
        %v7358 = vpop.f32.mrb[0].mxu0
        %v7359 = vadd.f32 0.0, %v7358
        %v7360 = vpop.f32.mrb[0].mxu0
        %7361 = vmatprep.mubr.bf16.mxu0 0
        %7362 = vmatmul.mubr.bf16.gmra.mrb[0].mxu0 %v7319
        %v7363 = vpop.f32.mrb[0].mxu0
        %v7364 = vadd.f32 0.0, %v7363
        %v7365 = vpop.f32.mrb[0].mxu0
        %v7366 = vpop.f32.mrb[0].mxu0
        %v7367 = vadd.f32 0.0, %v7366
        %v7368 = vpop.f32.mrb[0].mxu0
        %7369 = vdwg.mxu0
        %v7370 = vadd.f32 %v7274, %v7356
        %v7371 = vadd.f32 %v7277, %v7359
        %v7372 = vadd.f32 %v7282, %v7364
        %v7373 = vadd.f32 %v7285, %v7367
        %v7374 = vld [vmem:[%s8] sm:$0x1]
        %v7376 = vlaneseq
        %v7377 = vshrl.u32 %v7376, 7
        %v7378 = vsub.s32 0, %v7377
        %v7379 = vrot.slane %v7374, %v7378
        %v7381 = vadd.f32 %v7370, %v7379
        %v7382 = vadd.f32 %v7371, %v7379
        %v7383 = vadd.f32 %v7372, %v7379
        %v7384 = vadd.f32 %v7373, %v7379
        %v7385 = vmax.f32 %v7381, 0.0
        %v7386 = vmax.f32 %v7382, 0.0
        %v7387 = vmax.f32 %v7383, 0.0
        %v7388 = vmax.f32 %v7384, 0.0
        %v7393 = vcombine.high %v7385, %v7385
        %v7395 = vunpack.c.l.s4 1983009808
        %v7396 = vunpack.c.0.s8 %v7395
        %v7397 = vlaneseq
        %v7398 = vshrl.u32 %v7397, 7
        %v7399 = vsub.s32 %v7396, %v7398
        %v7400 = vrot.slane %v7385, %v7399
        %v7402 = vunpack.c.l.s4 1983009808
        %v7403 = vunpack.c.0.s8 %v7402
        %v7404 = vlaneseq
        %v7405 = vshrl.u32 %v7404, 7
        %v7406 = vsub.s32 %v7403, %v7405
        %v7407 = vrot.slane %v7393, %v7406
        %v7408 = vcombine.high %v7400, %v7400
        %v7409 = vcombine.high %v7407, %v7407
        %v7410 = vcombine.high %v7386, %v7386
        %v7412 = vunpack.c.l.s4 1983009808
        %v7413 = vunpack.c.0.s8 %v7412
        %v7414 = vlaneseq
        %v7415 = vshrl.u32 %v7414, 7
        %v7416 = vsub.s32 %v7413, %v7415
        %v7417 = vrot.slane %v7386, %v7416
        %v7419 = vunpack.c.l.s4 1983009808
        %v7420 = vunpack.c.0.s8 %v7419
        %v7421 = vlaneseq
        %v7422 = vshrl.u32 %v7421, 7
        %v7423 = vsub.s32 %v7420, %v7422
        %v7424 = vrot.slane %v7410, %v7423
        %v7425 = vcombine.high %v7417, %v7417
        %v7426 = vcombine.high %v7424, %v7424
        %v7427 = vcombine.high %v7387, %v7387
        %v7429 = vunpack.c.l.s4 1983009808
        %v7430 = vunpack.c.0.s8 %v7429
        %v7431 = vlaneseq
        %v7432 = vshrl.u32 %v7431, 7
        %v7433 = vsub.s32 %v7430, %v7432
        %v7434 = vrot.slane %v7387, %v7433
        %v7436 = vunpack.c.l.s4 1983009808
        %v7437 = vunpack.c.0.s8 %v7436
        %v7438 = vlaneseq
        %v7439 = vshrl.u32 %v7438, 7
        %v7440 = vsub.s32 %v7437, %v7439
        %v7441 = vrot.slane %v7427, %v7440
        %v7442 = vcombine.high %v7434, %v7434
        %v7443 = vcombine.high %v7441, %v7441
        %v7444 = vcombine.high %v7388, %v7388
        %v7446 = vunpack.c.l.s4 1983009808
        %v7447 = vunpack.c.0.s8 %v7446
        %v7448 = vlaneseq
        %v7449 = vshrl.u32 %v7448, 7
        %v7450 = vsub.s32 %v7447, %v7449
        %v7451 = vrot.slane %v7388, %v7450
        %v7453 = vunpack.c.l.s4 1983009808
        %v7454 = vunpack.c.0.s8 %v7453
        %v7455 = vlaneseq
        %v7456 = vshrl.u32 %v7455, 7
        %v7457 = vsub.s32 %v7454, %v7456
        %v7458 = vrot.slane %v7444, %v7457
        %v7459 = vcombine.high %v7451, %v7451
        %v7460 = vcombine.high %v7458, %v7458
        %v7477 = vrot.slane %v7400, 7
        %v7478 = vrot.slane %v7477, 2
        %v7479 = vrot.slane %v7408, 7
        %v7480 = vrot.slane %v7479, 2
        %v7481 = vrot.slane %v7407, 7
        %v7482 = vrot.slane %v7481, 2
        %v7483 = vrot.slane %v7409, 7
        %v7484 = vrot.slane %v7483, 2
        %v7485 = vrot.slane %v7417, 7
        %v7486 = vrot.slane %v7485, 2
        %v7487 = vrot.slane %v7425, 7
        %v7488 = vrot.slane %v7487, 2
        %v7489 = vrot.slane %v7424, 7
        %v7490 = vrot.slane %v7489, 2
        %v7491 = vrot.slane %v7426, 7
        %v7492 = vrot.slane %v7491, 2
        %v7493 = vrot.slane %v7434, 7
        %v7494 = vrot.slane %v7493, 2
        %v7495 = vrot.slane %v7442, 7
        %v7496 = vrot.slane %v7495, 2
        %v7497 = vrot.slane %v7441, 7
        %v7498 = vrot.slane %v7497, 2
        %v7499 = vrot.slane %v7443, 7
        %v7500 = vrot.slane %v7499, 2
        %v7501 = vrot.slane %v7451, 7
        %v7502 = vrot.slane %v7501, 2
        %v7503 = vrot.slane %v7459, 7
        %v7504 = vrot.slane %v7503, 2
        %v7505 = vrot.slane %v7458, 7
        %v7506 = vrot.slane %v7505, 2
        %v7507 = vrot.slane %v7460, 7
        %v7508 = vrot.slane %v7507, 2
        %v7525 = vmax.f32 %v7400, %v7478
        %v7526 = vmax.f32 %v7408, %v7480
        %v7527 = vmax.f32 %v7407, %v7482
        %v7528 = vmax.f32 %v7409, %v7484
        %v7529 = vmax.f32 %v7417, %v7486
        %v7530 = vmax.f32 %v7425, %v7488
        %v7531 = vmax.f32 %v7424, %v7490
        %v7532 = vmax.f32 %v7426, %v7492
        %v7533 = vmax.f32 %v7434, %v7494
        %v7534 = vmax.f32 %v7442, %v7496
        %v7535 = vmax.f32 %v7441, %v7498
        %v7536 = vmax.f32 %v7443, %v7500
        %v7537 = vmax.f32 %v7451, %v7502
        %v7538 = vmax.f32 %v7459, %v7504
        %v7539 = vmax.f32 %v7458, %v7506
        %v7540 = vmax.f32 %v7460, %v7508
        %v7541 = vpack.c.bf16 %v7525, %v7525
        %v7542 = vpack.c.bf16 %v7527, %v7527
        %v7543 = vpack.c.bf16 %v7529, %v7529
        %v7544 = vpack.c.bf16 %v7531, %v7531
        %v7545 = vpack.c.bf16 %v7533, %v7533
        %v7546 = vpack.c.bf16 %v7535, %v7535
        %v7547 = vpack.c.bf16 %v7537, %v7537
        %v7548 = vpack.c.bf16 %v7539, %v7539
        %v7549 = vld [vmem:[%s9] sm:$0xff]
        %v7550 = vld [vmem:[%s9 + $0x8] sm:$0xff]
        %v7551 = vld [vmem:[%s9 + $0x10] sm:$0xff]
        %v7552 = vld [vmem:[%s9 + $0x18] sm:$0xff]
        %v7553 = vld [vmem:[%s9 + $0x20] sm:$0xff]
        %v7554 = vld [vmem:[%s9 + $0x28] sm:$0xff]
        %v7555 = vld [vmem:[%s9 + $0x30] sm:$0xff]
        %v7556 = vld [vmem:[%s9 + $0x38] sm:$0xff]
        %v7557 = vld [vmem:[%s9 + $0x40] sm:$0xff]
        %v7558 = vld [vmem:[%s9 + $0x48] sm:$0xff]
        %v7559 = vld [vmem:[%s9 + $0x50] sm:$0xff]
        %v7560 = vld [vmem:[%s9 + $0x58] sm:$0xff]
        %v7561 = vld [vmem:[%s9 + $0x60] sm:$0xff]
        %v7562 = vld [vmem:[%s9 + $0x68] sm:$0xff]
        %v7563 = vld [vmem:[%s9 + $0x70] sm:$0xff]
        %v7564 = vld [vmem:[%s9 + $0x78] sm:$0xff]
        %v7565 = vld [vmem:[%s9 + $0x80] sm:$0xff]
        %v7566 = vld [vmem:[%s9 + $0x88] sm:$0xff]
        %v7567 = vld [vmem:[%s9 + $0x90] sm:$0xff]
        %v7568 = vld [vmem:[%s9 + $0x98] sm:$0xff]
        %v7569 = vld [vmem:[%s9 + $0xa0] sm:$0xff]
        %v7570 = vld [vmem:[%s9 + $0xa8] sm:$0xff]
        %v7571 = vld [vmem:[%s9 + $0xb0] sm:$0xff]
        %v7572 = vld [vmem:[%s9 + $0xb8] sm:$0xff]
        %v7573 = vld [vmem:[%s9 + $0xc0] sm:$0xff]
        %v7574 = vld [vmem:[%s9 + $0xc8] sm:$0xff]
        %v7575 = vld [vmem:[%s9 + $0xd0] sm:$0xff]
        %v7576 = vld [vmem:[%s9 + $0xd8] sm:$0xff]
        %v7577 = vld [vmem:[%s9 + $0xe0] sm:$0xff]
        %v7578 = vld [vmem:[%s9 + $0xe8] sm:$0xff]
        %v7579 = vld [vmem:[%s9 + $0xf0] sm:$0xff]
        %v7580 = vld [vmem:[%s9 + $0xf8] sm:$0xff]
        %v7581 = vpack.c.bf16 %v7526, %v7526
        %v7582 = vpack.c.bf16 %v7528, %v7528
        %v7583 = vpack.c.bf16 %v7530, %v7530
        %v7584 = vpack.c.bf16 %v7532, %v7532
        %v7585 = vpack.c.bf16 %v7534, %v7534
        %v7586 = vpack.c.bf16 %v7536, %v7536
        %v7587 = vpack.c.bf16 %v7538, %v7538
        %v7588 = vpack.c.bf16 %v7540, %v7540
        %s7589 = scalar_lea.vmem %s9, 256
        %v7590 = vld [vmem:[%s7589] sm:$0xff]
        %v7591 = vld [vmem:[%s7589 + $0x8] sm:$0xff]
        %v7592 = vld [vmem:[%s7589 + $0x10] sm:$0xff]
        %v7593 = vld [vmem:[%s7589 + $0x18] sm:$0xff]
        %v7594 = vld [vmem:[%s7589 + $0x20] sm:$0xff]
        %v7595 = vld [vmem:[%s7589 + $0x28] sm:$0xff]
        %v7596 = vld [vmem:[%s7589 + $0x30] sm:$0xff]
        %v7597 = vld [vmem:[%s7589 + $0x38] sm:$0xff]
        %v7598 = vld [vmem:[%s7589 + $0x40] sm:$0xff]
        %v7599 = vld [vmem:[%s7589 + $0x48] sm:$0xff]
        %v7600 = vld [vmem:[%s7589 + $0x50] sm:$0xff]
        %v7601 = vld [vmem:[%s7589 + $0x58] sm:$0xff]
        %v7602 = vld [vmem:[%s7589 + $0x60] sm:$0xff]
        %v7603 = vld [vmem:[%s7589 + $0x68] sm:$0xff]
        %v7604 = vld [vmem:[%s7589 + $0x70] sm:$0xff]
        %v7605 = vld [vmem:[%s7589 + $0x78] sm:$0xff]
        %v7606 = vld [vmem:[%s7589 + $0x80] sm:$0xff]
        %v7607 = vld [vmem:[%s7589 + $0x88] sm:$0xff]
        %v7608 = vld [vmem:[%s7589 + $0x90] sm:$0xff]
        %v7609 = vld [vmem:[%s7589 + $0x98] sm:$0xff]
        %v7610 = vld [vmem:[%s7589 + $0xa0] sm:$0xff]
        %v7611 = vld [vmem:[%s7589 + $0xa8] sm:$0xff]
        %v7612 = vld [vmem:[%s7589 + $0xb0] sm:$0xff]
        %v7613 = vld [vmem:[%s7589 + $0xb8] sm:$0xff]
        %v7614 = vld [vmem:[%s7589 + $0xc0] sm:$0xff]
        %v7615 = vld [vmem:[%s7589 + $0xc8] sm:$0xff]
        %v7616 = vld [vmem:[%s7589 + $0xd0] sm:$0xff]
        %v7617 = vld [vmem:[%s7589 + $0xd8] sm:$0xff]
        %v7618 = vld [vmem:[%s7589 + $0xe0] sm:$0xff]
        %v7619 = vld [vmem:[%s7589 + $0xe8] sm:$0xff]
        %v7620 = vld [vmem:[%s7589 + $0xf0] sm:$0xff]
        %v7621 = vld [vmem:[%s7589 + $0xf8] sm:$0xff]
        %v7630 = vunpack.c.l.b16 %v7581
        %v7631 = vunpack.c.l.b16 %v7582
        %v7632 = vunpack.c.l.b16 %v7583
        %v7633 = vunpack.c.l.b16 %v7584
        %v7634 = vunpack.c.l.b16 %v7585
        %v7635 = vunpack.c.l.b16 %v7586
        %v7636 = vunpack.c.l.b16 %v7587
        %v7637 = vunpack.c.l.b16 %v7588
        %v7638 = vrot.slane %v7631, 7
        %v7639 = vsel %vm3376, %v7638, %v7630
        %v7640 = vrot.slane %v7632, 6
        %v7641 = vsel %vm3364, %v7640, %v7639
        %v7642 = vrot.slane %v7633, 5
        %v7643 = vsel %vm3366, %v7642, %v7641
        %v7644 = vrot.slane %v7634, 4
        %v7645 = vsel %vm3368, %v7644, %v7643
        %v7646 = vrot.slane %v7635, 3
        %v7647 = vsel %vm3370, %v7646, %v7645
        %v7648 = vrot.slane %v7636, 2
        %v7649 = vsel %vm3372, %v7648, %v7647
        %v7650 = vrot.slane %v7637, 1
        %v7651 = vsel %vm3374, %v7650, %v7649
        %v7652 = vpack.c.b16 %v7651, %v7651
        %v7685 = vunpack.c.l.b16 %v7590
        %v7686 = vunpack.c.h.b16 %v7590
        %v7687 = vunpack.c.l.b16 %v7591
        %v7688 = vunpack.c.h.b16 %v7591
        %v7689 = vunpack.c.l.b16 %v7592
        %v7690 = vunpack.c.h.b16 %v7592
        %v7691 = vunpack.c.l.b16 %v7593
        %v7692 = vunpack.c.h.b16 %v7593
        %v7693 = vunpack.c.l.b16 %v7594
        %v7694 = vunpack.c.h.b16 %v7594
        %v7695 = vunpack.c.l.b16 %v7595
        %v7696 = vunpack.c.h.b16 %v7595
        %v7697 = vunpack.c.l.b16 %v7596
        %v7698 = vunpack.c.h.b16 %v7596
        %v7699 = vunpack.c.l.b16 %v7597
        %v7700 = vunpack.c.h.b16 %v7597
        %v7701 = vunpack.c.l.b16 %v7598
        %v7702 = vunpack.c.h.b16 %v7598
        %v7703 = vunpack.c.l.b16 %v7599
        %v7704 = vunpack.c.h.b16 %v7599
        %v7705 = vunpack.c.l.b16 %v7600
        %v7706 = vunpack.c.h.b16 %v7600
        %v7707 = vunpack.c.l.b16 %v7601
        %v7708 = vunpack.c.h.b16 %v7601
        %v7709 = vunpack.c.l.b16 %v7602
        %v7710 = vunpack.c.h.b16 %v7602
        %v7711 = vunpack.c.l.b16 %v7603
        %v7712 = vunpack.c.h.b16 %v7603
        %v7713 = vunpack.c.l.b16 %v7604
        %v7714 = vunpack.c.h.b16 %v7604
        %v7715 = vunpack.c.l.b16 %v7605
        %v7716 = vunpack.c.h.b16 %v7605
        %v7717 = vunpack.c.l.b16 %v7606
        %v7718 = vunpack.c.h.b16 %v7606
        %v7719 = vunpack.c.l.b16 %v7607
        %v7720 = vunpack.c.h.b16 %v7607
        %v7721 = vunpack.c.l.b16 %v7608
        %v7722 = vunpack.c.h.b16 %v7608
        %v7723 = vunpack.c.l.b16 %v7609
        %v7724 = vunpack.c.h.b16 %v7609
        %v7725 = vunpack.c.l.b16 %v7610
        %v7726 = vunpack.c.h.b16 %v7610
        %v7727 = vunpack.c.l.b16 %v7611
        %v7728 = vunpack.c.h.b16 %v7611
        %v7729 = vunpack.c.l.b16 %v7612
        %v7730 = vunpack.c.h.b16 %v7612
        %v7731 = vunpack.c.l.b16 %v7613
        %v7732 = vunpack.c.h.b16 %v7613
        %v7733 = vunpack.c.l.b16 %v7614
        %v7734 = vunpack.c.h.b16 %v7614
        %v7735 = vunpack.c.l.b16 %v7615
        %v7736 = vunpack.c.h.b16 %v7615
        %v7737 = vunpack.c.l.b16 %v7616
        %v7738 = vunpack.c.h.b16 %v7616
        %v7739 = vunpack.c.l.b16 %v7617
        %v7740 = vunpack.c.h.b16 %v7617
        %v7741 = vunpack.c.l.b16 %v7618
        %v7742 = vunpack.c.h.b16 %v7618
        %v7743 = vunpack.c.l.b16 %v7619
        %v7744 = vunpack.c.h.b16 %v7619
        %v7745 = vunpack.c.l.b16 %v7620
        %v7746 = vunpack.c.h.b16 %v7620
        %v7747 = vunpack.c.l.b16 %v7621
        %v7748 = vunpack.c.h.b16 %v7621
        %v7749 = vpack.c.b16 %v7693, %v7685
        %v7750 = vpack.c.b16 %v7694, %v7686
        %v7751 = vpack.c.b16 %v7695, %v7687
        %v7752 = vpack.c.b16 %v7696, %v7688
        %v7753 = vpack.c.b16 %v7697, %v7689
        %v7754 = vpack.c.b16 %v7698, %v7690
        %v7755 = vpack.c.b16 %v7699, %v7691
        %v7756 = vpack.c.b16 %v7700, %v7692
        %v7757 = vpack.c.b16 %v7709, %v7701
        %v7758 = vpack.c.b16 %v7710, %v7702
        %v7759 = vpack.c.b16 %v7711, %v7703
        %v7760 = vpack.c.b16 %v7712, %v7704
        %v7761 = vpack.c.b16 %v7713, %v7705
        %v7762 = vpack.c.b16 %v7714, %v7706
        %v7763 = vpack.c.b16 %v7715, %v7707
        %v7764 = vpack.c.b16 %v7716, %v7708
        %v7765 = vpack.c.b16 %v7725, %v7717
        %v7766 = vpack.c.b16 %v7726, %v7718
        %v7767 = vpack.c.b16 %v7727, %v7719
        %v7768 = vpack.c.b16 %v7728, %v7720
        %v7769 = vpack.c.b16 %v7729, %v7721
        %v7770 = vpack.c.b16 %v7730, %v7722
        %v7771 = vpack.c.b16 %v7731, %v7723
        %v7772 = vpack.c.b16 %v7732, %v7724
        %v7773 = vpack.c.b16 %v7741, %v7733
        %v7774 = vpack.c.b16 %v7742, %v7734
        %v7775 = vpack.c.b16 %v7743, %v7735
        %v7776 = vpack.c.b16 %v7744, %v7736
        %v7777 = vpack.c.b16 %v7745, %v7737
        %v7778 = vpack.c.b16 %v7746, %v7738
        %v7779 = vpack.c.b16 %v7747, %v7739
        %v7780 = vpack.c.b16 %v7748, %v7740
        %v7814 = vsel %vm776, %v7652, 0
        %7816 = vmatprep.subr.bf16.mxu0 %v7750
        %7817 = vmatpush1.bf16.msra.mxu0 %v7749
        %7818 = vmatprep.subr.bf16.mxu0 %v7758
        %7819 = vmatpush1.bf16.msra.mxu0 %v7757
        %7820 = vmatprep.subr.bf16.mxu0 %v7766
        %7821 = vmatpush1.bf16.msra.mxu0 %v7765
        %7822 = vmatprep.subr.bf16.mxu0 %v7774
        %7823 = vmatpush1.bf16.msra.mxu0 %v7773
        %7824 = vmatprep.subr.bf16.mxu0 0
        %7825 = vmatpush1.bf16.msra.mxu0 0
        %7826 = vmatprep.subr.bf16.mxu0 0
        %7827 = vmatpush1.bf16.msra.mxu0 0
        %7828 = vmatprep.subr.bf16.mxu0 0
        %7829 = vmatpush1.bf16.msra.mxu0 0
        %7830 = vmatprep.subr.bf16.mxu0 0
        %7831 = vmatpush1.bf16.msra.mxu0 0
        %7832 = vmatprep.subr.bf16.mxu0 0
        %7833 = vmatpush1.bf16.msra.mxu0 0
        %7834 = vmatprep.subr.bf16.mxu0 0
        %7835 = vmatpush1.bf16.msra.mxu0 0
        %7836 = vmatprep.subr.bf16.mxu0 0
        %7837 = vmatpush1.bf16.msra.mxu0 0
        %7838 = vmatprep.subr.bf16.mxu0 0
        %7839 = vmatpush1.bf16.msra.mxu0 0
        %7840 = vmatprep.subr.bf16.mxu0 0
        %7841 = vmatpush1.bf16.msra.mxu0 0
        %7842 = vmatprep.subr.bf16.mxu0 0
        %7843 = vmatpush1.bf16.msra.mxu0 0
        %7844 = vmatprep.subr.bf16.mxu0 0
        %7845 = vmatpush1.bf16.msra.mxu0 0
        %7846 = vmatprep.subr.bf16.mxu0 0
        %7847 = vmatpush1.bf16.msra.mxu0 0
        %7848 = vmatprep.mubr.bf16.mxu0 0
        %7849 = vmatmul.mubr.bf16.gmra.mrb[0].mxu0 %v7814
        %v7850 = vpop.f32.mrb[0].mxu0
        %v7851 = vadd.f32 0.0, %v7850
        %v7852 = vpop.f32.mrb[0].mxu0
        %v7853 = vadd.f32 0.0, %v7852
        %v7854 = vpop.f32.mrb[0].mxu0
        %v7855 = vpop.f32.mrb[0].mxu0
        %7856 = vdwg.mxu0
        %7857 = vmatprep.subr.bf16.mxu0 %v7752
        %7858 = vmatpush1.bf16.msra.mxu0 %v7751
        %7859 = vmatprep.subr.bf16.mxu0 %v7760
        %7860 = vmatpush1.bf16.msra.mxu0 %v7759
        %7861 = vmatprep.subr.bf16.mxu0 %v7768
        %7862 = vmatpush1.bf16.msra.mxu0 %v7767
        %7863 = vmatprep.subr.bf16.mxu0 %v7776
        %7864 = vmatpush1.bf16.msra.mxu0 %v7775
        %7865 = vmatprep.subr.bf16.mxu0 0
        %7866 = vmatpush1.bf16.msra.mxu0 0
        %7867 = vmatprep.subr.bf16.mxu0 0
        %7868 = vmatpush1.bf16.msra.mxu0 0
        %7869 = vmatprep.subr.bf16.mxu0 0
        %7870 = vmatpush1.bf16.msra.mxu0 0
        %7871 = vmatprep.subr.bf16.mxu0 0
        %7872 = vmatpush1.bf16.msra.mxu0 0
        %7873 = vmatprep.subr.bf16.mxu0 0
        %7874 = vmatpush1.bf16.msra.mxu0 0
        %7875 = vmatprep.subr.bf16.mxu0 0
        %7876 = vmatpush1.bf16.msra.mxu0 0
        %7877 = vmatprep.subr.bf16.mxu0 0
        %7878 = vmatpush1.bf16.msra.mxu0 0
        %7879 = vmatprep.subr.bf16.mxu0 0
        %7880 = vmatpush1.bf16.msra.mxu0 0
        %7881 = vmatprep.subr.bf16.mxu0 0
        %7882 = vmatpush1.bf16.msra.mxu0 0
        %7883 = vmatprep.subr.bf16.mxu0 0
        %7884 = vmatpush1.bf16.msra.mxu0 0
        %7885 = vmatprep.subr.bf16.mxu0 0
        %7886 = vmatpush1.bf16.msra.mxu0 0
        %7887 = vmatprep.subr.bf16.mxu0 0
        %7888 = vmatpush1.bf16.msra.mxu0 0
        %7889 = vmatprep.mubr.bf16.mxu0 0
        %7890 = vmatmul.mubr.bf16.gmra.mrb[0].mxu0 %v7814
        %v7891 = vpop.f32.mrb[0].mxu0
        %v7892 = vadd.f32 0.0, %v7891
        %v7893 = vpop.f32.mrb[0].mxu0
        %v7894 = vadd.f32 0.0, %v7893
        %v7895 = vpop.f32.mrb[0].mxu0
        %v7896 = vpop.f32.mrb[0].mxu0
        %7897 = vdwg.mxu0
        %7898 = vmatprep.subr.bf16.mxu0 %v7754
        %7899 = vmatpush1.bf16.msra.mxu0 %v7753
        %7900 = vmatprep.subr.bf16.mxu0 %v7762
        %7901 = vmatpush1.bf16.msra.mxu0 %v7761
        %7902 = vmatprep.subr.bf16.mxu0 %v7770
        %7903 = vmatpush1.bf16.msra.mxu0 %v7769
        %7904 = vmatprep.subr.bf16.mxu0 %v7778
        %7905 = vmatpush1.bf16.msra.mxu0 %v7777
        %7906 = vmatprep.subr.bf16.mxu0 0
        %7907 = vmatpush1.bf16.msra.mxu0 0
        %7908 = vmatprep.subr.bf16.mxu0 0
        %7909 = vmatpush1.bf16.msra.mxu0 0
        %7910 = vmatprep.subr.bf16.mxu0 0
        %7911 = vmatpush1.bf16.msra.mxu0 0
        %7912 = vmatprep.subr.bf16.mxu0 0
        %7913 = vmatpush1.bf16.msra.mxu0 0
        %7914 = vmatprep.subr.bf16.mxu0 0
        %7915 = vmatpush1.bf16.msra.mxu0 0
        %7916 = vmatprep.subr.bf16.mxu0 0
        %7917 = vmatpush1.bf16.msra.mxu0 0
        %7918 = vmatprep.subr.bf16.mxu0 0
        %7919 = vmatpush1.bf16.msra.mxu0 0
        %7920 = vmatprep.subr.bf16.mxu0 0
        %7921 = vmatpush1.bf16.msra.mxu0 0
        %7922 = vmatprep.subr.bf16.mxu0 0
        %7923 = vmatpush1.bf16.msra.mxu0 0
        %7924 = vmatprep.subr.bf16.mxu0 0
        %7925 = vmatpush1.bf16.msra.mxu0 0
        %7926 = vmatprep.subr.bf16.mxu0 0
        %7927 = vmatpush1.bf16.msra.mxu0 0
        %7928 = vmatprep.subr.bf16.mxu0 0
        %7929 = vmatpush1.bf16.msra.mxu0 0
        %7930 = vmatprep.mubr.bf16.mxu0 0
        %7931 = vmatmul.mubr.bf16.gmra.mrb[0].mxu0 %v7814
        %v7932 = vpop.f32.mrb[0].mxu0
        %v7933 = vadd.f32 0.0, %v7932
        %v7934 = vpop.f32.mrb[0].mxu0
        %v7935 = vadd.f32 0.0, %v7934
        %v7936 = vpop.f32.mrb[0].mxu0
        %v7937 = vpop.f32.mrb[0].mxu0
        %7938 = vdwg.mxu0
        %7939 = vmatprep.subr.bf16.mxu0 %v7756
        %7940 = vmatpush1.bf16.msra.mxu0 %v7755
        %7941 = vmatprep.subr.bf16.mxu0 %v7764
        %7942 = vmatpush1.bf16.msra.mxu0 %v7763
        %7943 = vmatprep.subr.bf16.mxu0 %v7772
        %7944 = vmatpush1.bf16.msra.mxu0 %v7771
        %7945 = vmatprep.subr.bf16.mxu0 %v7780
        %7946 = vmatpush1.bf16.msra.mxu0 %v7779
        %7947 = vmatprep.subr.bf16.mxu0 0
        %7948 = vmatpush1.bf16.msra.mxu0 0
        %7949 = vmatprep.subr.bf16.mxu0 0
        %7950 = vmatpush1.bf16.msra.mxu0 0
        %7951 = vmatprep.subr.bf16.mxu0 0
        %7952 = vmatpush1.bf16.msra.mxu0 0
        %7953 = vmatprep.subr.bf16.mxu0 0
        %7954 = vmatpush1.bf16.msra.mxu0 0
        %7955 = vmatprep.subr.bf16.mxu0 0
        %7956 = vmatpush1.bf16.msra.mxu0 0
        %7957 = vmatprep.subr.bf16.mxu0 0
        %7958 = vmatpush1.bf16.msra.mxu0 0
        %7959 = vmatprep.subr.bf16.mxu0 0
        %7960 = vmatpush1.bf16.msra.mxu0 0
        %7961 = vmatprep.subr.bf16.mxu0 0
        %7962 = vmatpush1.bf16.msra.mxu0 0
        %7963 = vmatprep.subr.bf16.mxu0 0
        %7964 = vmatpush1.bf16.msra.mxu0 0
        %7965 = vmatprep.subr.bf16.mxu0 0
        %7966 = vmatpush1.bf16.msra.mxu0 0
        %7967 = vmatprep.subr.bf16.mxu0 0
        %7968 = vmatpush1.bf16.msra.mxu0 0
        %7969 = vmatprep.subr.bf16.mxu0 0
        %7970 = vmatpush1.bf16.msra.mxu0 0
        %7971 = vmatprep.mubr.bf16.mxu0 0
        %7972 = vmatmul.mubr.bf16.gmra.mrb[0].mxu0 %v7814
        %v7973 = vpop.f32.mrb[0].mxu0
        %v7974 = vadd.f32 0.0, %v7973
        %v7975 = vpop.f32.mrb[0].mxu0
        %v7976 = vadd.f32 0.0, %v7975
        %v7977 = vpop.f32.mrb[0].mxu0
        %v7978 = vpop.f32.mrb[0].mxu0
        %7979 = vdwg.mxu0
        %v7988 = vunpack.c.l.b16 %v7541
        %v7989 = vunpack.c.l.b16 %v7542
        %v7990 = vunpack.c.l.b16 %v7543
        %v7991 = vunpack.c.l.b16 %v7544
        %v7992 = vunpack.c.l.b16 %v7545
        %v7993 = vunpack.c.l.b16 %v7546
        %v7994 = vunpack.c.l.b16 %v7547
        %v7995 = vunpack.c.l.b16 %v7548
        %v7996 = vrot.slane %v7989, 7
        %v7997 = vsel %vm3376, %v7996, %v7988
        %v7998 = vrot.slane %v7990, 6
        %v7999 = vsel %vm3364, %v7998, %v7997
        %v8000 = vrot.slane %v7991, 5
        %v8001 = vsel %vm3366, %v8000, %v7999
        %v8002 = vrot.slane %v7992, 4
        %v8003 = vsel %vm3368, %v8002, %v8001
        %v8004 = vrot.slane %v7993, 3
        %v8005 = vsel %vm3370, %v8004, %v8003
        %v8006 = vrot.slane %v7994, 2
        %v8007 = vsel %vm3372, %v8006, %v8005
        %v8008 = vrot.slane %v7995, 1
        %v8009 = vsel %vm3374, %v8008, %v8007
        %v8010 = vpack.c.b16 %v8009, %v8009
        %v8043 = vunpack.c.l.b16 %v7549
        %v8044 = vunpack.c.h.b16 %v7549
        %v8045 = vunpack.c.l.b16 %v7550
        %v8046 = vunpack.c.h.b16 %v7550
        %v8047 = vunpack.c.l.b16 %v7551
        %v8048 = vunpack.c.h.b16 %v7551
        %v8049 = vunpack.c.l.b16 %v7552
        %v8050 = vunpack.c.h.b16 %v7552
        %v8051 = vunpack.c.l.b16 %v7553
        %v8052 = vunpack.c.h.b16 %v7553
        %v8053 = vunpack.c.l.b16 %v7554
        %v8054 = vunpack.c.h.b16 %v7554
        %v8055 = vunpack.c.l.b16 %v7555
        %v8056 = vunpack.c.h.b16 %v7555
        %v8057 = vunpack.c.l.b16 %v7556
        %v8058 = vunpack.c.h.b16 %v7556
        %v8059 = vunpack.c.l.b16 %v7557
        %v8060 = vunpack.c.h.b16 %v7557
        %v8061 = vunpack.c.l.b16 %v7558
        %v8062 = vunpack.c.h.b16 %v7558
        %v8063 = vunpack.c.l.b16 %v7559
        %v8064 = vunpack.c.h.b16 %v7559
        %v8065 = vunpack.c.l.b16 %v7560
        %v8066 = vunpack.c.h.b16 %v7560
        %v8067 = vunpack.c.l.b16 %v7561
        %v8068 = vunpack.c.h.b16 %v7561
        %v8069 = vunpack.c.l.b16 %v7562
        %v8070 = vunpack.c.h.b16 %v7562
        %v8071 = vunpack.c.l.b16 %v7563
        %v8072 = vunpack.c.h.b16 %v7563
        %v8073 = vunpack.c.l.b16 %v7564
        %v8074 = vunpack.c.h.b16 %v7564
        %v8075 = vunpack.c.l.b16 %v7565
        %v8076 = vunpack.c.h.b16 %v7565
        %v8077 = vunpack.c.l.b16 %v7566
        %v8078 = vunpack.c.h.b16 %v7566
        %v8079 = vunpack.c.l.b16 %v7567
        %v8080 = vunpack.c.h.b16 %v7567
        %v8081 = vunpack.c.l.b16 %v7568
        %v8082 = vunpack.c.h.b16 %v7568
        %v8083 = vunpack.c.l.b16 %v7569
        %v8084 = vunpack.c.h.b16 %v7569
        %v8085 = vunpack.c.l.b16 %v7570
        %v8086 = vunpack.c.h.b16 %v7570
        %v8087 = vunpack.c.l.b16 %v7571
        %v8088 = vunpack.c.h.b16 %v7571
        %v8089 = vunpack.c.l.b16 %v7572
        %v8090 = vunpack.c.h.b16 %v7572
        %v8091 = vunpack.c.l.b16 %v7573
        %v8092 = vunpack.c.h.b16 %v7573
        %v8093 = vunpack.c.l.b16 %v7574
        %v8094 = vunpack.c.h.b16 %v7574
        %v8095 = vunpack.c.l.b16 %v7575
        %v8096 = vunpack.c.h.b16 %v7575
        %v8097 = vunpack.c.l.b16 %v7576
        %v8098 = vunpack.c.h.b16 %v7576
        %v8099 = vunpack.c.l.b16 %v7577
        %v8100 = vunpack.c.h.b16 %v7577
        %v8101 = vunpack.c.l.b16 %v7578
        %v8102 = vunpack.c.h.b16 %v7578
        %v8103 = vunpack.c.l.b16 %v7579
        %v8104 = vunpack.c.h.b16 %v7579
        %v8105 = vunpack.c.l.b16 %v7580
        %v8106 = vunpack.c.h.b16 %v7580
        %v8107 = vpack.c.b16 %v8051, %v8043
        %v8108 = vpack.c.b16 %v8052, %v8044
        %v8109 = vpack.c.b16 %v8053, %v8045
        %v8110 = vpack.c.b16 %v8054, %v8046
        %v8111 = vpack.c.b16 %v8055, %v8047
        %v8112 = vpack.c.b16 %v8056, %v8048
        %v8113 = vpack.c.b16 %v8057, %v8049
        %v8114 = vpack.c.b16 %v8058, %v8050
        %v8115 = vpack.c.b16 %v8067, %v8059
        %v8116 = vpack.c.b16 %v8068, %v8060
        %v8117 = vpack.c.b16 %v8069, %v8061
        %v8118 = vpack.c.b16 %v8070, %v8062
        %v8119 = vpack.c.b16 %v8071, %v8063
        %v8120 = vpack.c.b16 %v8072, %v8064
        %v8121 = vpack.c.b16 %v8073, %v8065
        %v8122 = vpack.c.b16 %v8074, %v8066
        %v8123 = vpack.c.b16 %v8083, %v8075
        %v8124 = vpack.c.b16 %v8084, %v8076
        %v8125 = vpack.c.b16 %v8085, %v8077
        %v8126 = vpack.c.b16 %v8086, %v8078
        %v8127 = vpack.c.b16 %v8087, %v8079
        %v8128 = vpack.c.b16 %v8088, %v8080
        %v8129 = vpack.c.b16 %v8089, %v8081
        %v8130 = vpack.c.b16 %v8090, %v8082
        %v8131 = vpack.c.b16 %v8099, %v8091
        %v8132 = vpack.c.b16 %v8100, %v8092
        %v8133 = vpack.c.b16 %v8101, %v8093
        %v8134 = vpack.c.b16 %v8102, %v8094
        %v8135 = vpack.c.b16 %v8103, %v8095
        %v8136 = vpack.c.b16 %v8104, %v8096
        %v8137 = vpack.c.b16 %v8105, %v8097
        %v8138 = vpack.c.b16 %v8106, %v8098
        %v8172 = vsel %vm776, %v8010, 0
        %8174 = vmatprep.subr.bf16.mxu0 %v8108
        %8175 = vmatpush1.bf16.msra.mxu0 %v8107
        %8176 = vmatprep.subr.bf16.mxu0 %v8116
        %8177 = vmatpush1.bf16.msra.mxu0 %v8115
        %8178 = vmatprep.subr.bf16.mxu0 %v8124
        %8179 = vmatpush1.bf16.msra.mxu0 %v8123
        %8180 = vmatprep.subr.bf16.mxu0 %v8132
        %8181 = vmatpush1.bf16.msra.mxu0 %v8131
        %8182 = vmatprep.subr.bf16.mxu0 0
        %8183 = vmatpush1.bf16.msra.mxu0 0
        %8184 = vmatprep.subr.bf16.mxu0 0
        %8185 = vmatpush1.bf16.msra.mxu0 0
        %8186 = vmatprep.subr.bf16.mxu0 0
        %8187 = vmatpush1.bf16.msra.mxu0 0
        %8188 = vmatprep.subr.bf16.mxu0 0
        %8189 = vmatpush1.bf16.msra.mxu0 0
        %8190 = vmatprep.subr.bf16.mxu0 0
        %8191 = vmatpush1.bf16.msra.mxu0 0
        %8192 = vmatprep.subr.bf16.mxu0 0
        %8193 = vmatpush1.bf16.msra.mxu0 0
        %8194 = vmatprep.subr.bf16.mxu0 0
        %8195 = vmatpush1.bf16.msra.mxu0 0
        %8196 = vmatprep.subr.bf16.mxu0 0
        %8197 = vmatpush1.bf16.msra.mxu0 0
        %8198 = vmatprep.subr.bf16.mxu0 0
        %8199 = vmatpush1.bf16.msra.mxu0 0
        %8200 = vmatprep.subr.bf16.mxu0 0
        %8201 = vmatpush1.bf16.msra.mxu0 0
        %8202 = vmatprep.subr.bf16.mxu0 0
        %8203 = vmatpush1.bf16.msra.mxu0 0
        %8204 = vmatprep.subr.bf16.mxu0 0
        %8205 = vmatpush1.bf16.msra.mxu0 0
        %8206 = vmatprep.mubr.bf16.mxu0 0
        %8207 = vmatmul.mubr.bf16.gmra.mrb[0].mxu0 %v8172
        %v8208 = vpop.f32.mrb[0].mxu0
        %v8209 = vadd.f32 %v7851, %v8208
        %v8210 = vpop.f32.mrb[0].mxu0
        %v8211 = vadd.f32 %v7853, %v8210
        %v8212 = vpop.f32.mrb[0].mxu0
        %v8213 = vpop.f32.mrb[0].mxu0
        %8214 = vdwg.mxu0
        %8215 = vmatprep.subr.bf16.mxu0 %v8110
        %8216 = vmatpush1.bf16.msra.mxu0 %v8109
        %8217 = vmatprep.subr.bf16.mxu0 %v8118
        %8218 = vmatpush1.bf16.msra.mxu0 %v8117
        %8219 = vmatprep.subr.bf16.mxu0 %v8126
        %8220 = vmatpush1.bf16.msra.mxu0 %v8125
        %8221 = vmatprep.subr.bf16.mxu0 %v8134
        %8222 = vmatpush1.bf16.msra.mxu0 %v8133
        %8223 = vmatprep.subr.bf16.mxu0 0
        %8224 = vmatpush1.bf16.msra.mxu0 0
        %8225 = vmatprep.subr.bf16.mxu0 0
        %8226 = vmatpush1.bf16.msra.mxu0 0
        %8227 = vmatprep.subr.bf16.mxu0 0
        %8228 = vmatpush1.bf16.msra.mxu0 0
        %8229 = vmatprep.subr.bf16.mxu0 0
        %8230 = vmatpush1.bf16.msra.mxu0 0
        %8231 = vmatprep.subr.bf16.mxu0 0
        %8232 = vmatpush1.bf16.msra.mxu0 0
        %8233 = vmatprep.subr.bf16.mxu0 0
        %8234 = vmatpush1.bf16.msra.mxu0 0
        %8235 = vmatprep.subr.bf16.mxu0 0
        %8236 = vmatpush1.bf16.msra.mxu0 0
        %8237 = vmatprep.subr.bf16.mxu0 0
        %8238 = vmatpush1.bf16.msra.mxu0 0
        %8239 = vmatprep.subr.bf16.mxu0 0
        %8240 = vmatpush1.bf16.msra.mxu0 0
        %8241 = vmatprep.subr.bf16.mxu0 0
        %8242 = vmatpush1.bf16.msra.mxu0 0
        %8243 = vmatprep.subr.bf16.mxu0 0
        %8244 = vmatpush1.bf16.msra.mxu0 0
        %8245 = vmatprep.subr.bf16.mxu0 0
        %8246 = vmatpush1.bf16.msra.mxu0 0
        %8247 = vmatprep.mubr.bf16.mxu0 0
        %8248 = vmatmul.mubr.bf16.gmra.mrb[0].mxu0 %v8172
        %v8249 = vpop.f32.mrb[0].mxu0
        %v8250 = vadd.f32 %v7892, %v8249
        %v8251 = vpop.f32.mrb[0].mxu0
        %v8252 = vadd.f32 %v7894, %v8251
        %v8253 = vpop.f32.mrb[0].mxu0
        %v8254 = vpop.f32.mrb[0].mxu0
        %8255 = vdwg.mxu0
        %8256 = vmatprep.subr.bf16.mxu0 %v8112
        %8257 = vmatpush1.bf16.msra.mxu0 %v8111
        %8258 = vmatprep.subr.bf16.mxu0 %v8120
        %8259 = vmatpush1.bf16.msra.mxu0 %v8119
        %8260 = vmatprep.subr.bf16.mxu0 %v8128
        %8261 = vmatpush1.bf16.msra.mxu0 %v8127
        %8262 = vmatprep.subr.bf16.mxu0 %v8136
        %8263 = vmatpush1.bf16.msra.mxu0 %v8135
        %8264 = vmatprep.subr.bf16.mxu0 0
        %8265 = vmatpush1.bf16.msra.mxu0 0
        %8266 = vmatprep.subr.bf16.mxu0 0
        %8267 = vmatpush1.bf16.msra.mxu0 0
        %8268 = vmatprep.subr.bf16.mxu0 0
        %8269 = vmatpush1.bf16.msra.mxu0 0
        %8270 = vmatprep.subr.bf16.mxu0 0
        %8271 = vmatpush1.bf16.msra.mxu0 0
        %8272 = vmatprep.subr.bf16.mxu0 0
        %8273 = vmatpush1.bf16.msra.mxu0 0
        %8274 = vmatprep.subr.bf16.mxu0 0
        %8275 = vmatpush1.bf16.msra.mxu0 0
        %8276 = vmatprep.subr.bf16.mxu0 0
        %8277 = vmatpush1.bf16.msra.mxu0 0
        %8278 = vmatprep.subr.bf16.mxu0 0
        %8279 = vmatpush1.bf16.msra.mxu0 0
        %8280 = vmatprep.subr.bf16.mxu0 0
        %8281 = vmatpush1.bf16.msra.mxu0 0
        %8282 = vmatprep.subr.bf16.mxu0 0
        %8283 = vmatpush1.bf16.msra.mxu0 0
        %8284 = vmatprep.subr.bf16.mxu0 0
        %8285 = vmatpush1.bf16.msra.mxu0 0
        %8286 = vmatprep.subr.bf16.mxu0 0
        %8287 = vmatpush1.bf16.msra.mxu0 0
        %8288 = vmatprep.mubr.bf16.mxu0 0
        %8289 = vmatmul.mubr.bf16.gmra.mrb[0].mxu0 %v8172
        %v8290 = vpop.f32.mrb[0].mxu0
        %v8291 = vadd.f32 %v7933, %v8290
        %v8292 = vpop.f32.mrb[0].mxu0
        %v8293 = vadd.f32 %v7935, %v8292
        %v8294 = vpop.f32.mrb[0].mxu0
        %v8295 = vpop.f32.mrb[0].mxu0
        %8296 = vdwg.mxu0
        %8297 = vmatprep.subr.bf16.mxu0 %v8114
        %8298 = vmatpush1.bf16.msra.mxu0 %v8113
        %8299 = vmatprep.subr.bf16.mxu0 %v8122
        %8300 = vmatpush1.bf16.msra.mxu0 %v8121
        %8301 = vmatprep.subr.bf16.mxu0 %v8130
        %8302 = vmatpush1.bf16.msra.mxu0 %v8129
        %8303 = vmatprep.subr.bf16.mxu0 %v8138
        %8304 = vmatpush1.bf16.msra.mxu0 %v8137
        %8305 = vmatprep.subr.bf16.mxu0 0
        %8306 = vmatpush1.bf16.msra.mxu0 0
        %8307 = vmatprep.subr.bf16.mxu0 0
        %8308 = vmatpush1.bf16.msra.mxu0 0
        %8309 = vmatprep.subr.bf16.mxu0 0
        %8310 = vmatpush1.bf16.msra.mxu0 0
        %8311 = vmatprep.subr.bf16.mxu0 0
        %8312 = vmatpush1.bf16.msra.mxu0 0
        %8313 = vmatprep.subr.bf16.mxu0 0
        %8314 = vmatpush1.bf16.msra.mxu0 0
        %8315 = vmatprep.subr.bf16.mxu0 0
        %8316 = vmatpush1.bf16.msra.mxu0 0
        %8317 = vmatprep.subr.bf16.mxu0 0
        %8318 = vmatpush1.bf16.msra.mxu0 0
        %8319 = vmatprep.subr.bf16.mxu0 0
        %8320 = vmatpush1.bf16.msra.mxu0 0
        %8321 = vmatprep.subr.bf16.mxu0 0
        %8322 = vmatpush1.bf16.msra.mxu0 0
        %8323 = vmatprep.subr.bf16.mxu0 0
        %8324 = vmatpush1.bf16.msra.mxu0 0
        %8325 = vmatprep.subr.bf16.mxu0 0
        %8326 = vmatpush1.bf16.msra.mxu0 0
        %8327 = vmatprep.subr.bf16.mxu0 0
        %8328 = vmatpush1.bf16.msra.mxu0 0
        %8329 = vmatprep.mubr.bf16.mxu0 0
        %8330 = vmatmul.mubr.bf16.gmra.mrb[0].mxu0 %v8172
        %v8331 = vpop.f32.mrb[0].mxu0
        %v8332 = vadd.f32 %v7974, %v8331
        %v8333 = vpop.f32.mrb[0].mxu0
        %v8334 = vadd.f32 %v7976, %v8333
        %v8335 = vpop.f32.mrb[0].mxu0
        %v8336 = vpop.f32.mrb[0].mxu0
        %8337 = vdwg.mxu0
        %v8338 = vld [vmem:[%s10] sm:$0xff]
        %v8340 = vlaneseq
        %v8341 = vshrl.u32 %v8340, 7
        %v8342 = vsub.s32 0, %v8341
        %v8343 = vrot.slane %v8338, %v8342
        %v8344 = vlaneseq
        %v8345 = vshrl.u32 %v8344, 7
        %v8346 = vsub.s32 1, %v8345
        %v8347 = vrot.slane %v8338, %v8346
        %v8348 = vlaneseq
        %v8349 = vshrl.u32 %v8348, 7
        %v8350 = vsub.s32 2, %v8349
        %v8351 = vrot.slane %v8338, %v8350
        %v8352 = vlaneseq
        %v8353 = vshrl.u32 %v8352, 7
        %v8354 = vsub.s32 3, %v8353
        %v8355 = vrot.slane %v8338, %v8354
        %v8356 = vlaneseq
        %v8357 = vshrl.u32 %v8356, 7
        %v8358 = vsub.s32 4, %v8357
        %v8359 = vrot.slane %v8338, %v8358
        %v8360 = vlaneseq
        %v8361 = vshrl.u32 %v8360, 7
        %v8362 = vsub.s32 5, %v8361
        %v8363 = vrot.slane %v8338, %v8362
        %v8364 = vlaneseq
        %v8365 = vshrl.u32 %v8364, 7
        %v8366 = vsub.s32 6, %v8365
        %v8367 = vrot.slane %v8338, %v8366
        %v8368 = vlaneseq
        %v8369 = vshrl.u32 %v8368, 7
        %v8370 = vsub.s32 7, %v8369
        %v8371 = vrot.slane %v8338, %v8370
        %v8380 = vadd.f32 %v8209, %v8343
        %v8381 = vadd.f32 %v8211, %v8347
        %v8382 = vadd.f32 %v8250, %v8351
        %v8383 = vadd.f32 %v8252, %v8355
        %v8384 = vadd.f32 %v8291, %v8359
        %v8385 = vadd.f32 %v8293, %v8363
        %v8386 = vadd.f32 %v8332, %v8367
        %v8387 = vadd.f32 %v8334, %v8371
        %v8388 = vmax.f32 %v8380, 0.0
        %v8389 = vmax.f32 %v8381, 0.0
        %v8390 = vmax.f32 %v8382, 0.0
        %v8391 = vmax.f32 %v8383, 0.0
        %v8392 = vmax.f32 %v8384, 0.0
        %v8393 = vmax.f32 %v8385, 0.0
        %v8394 = vmax.f32 %v8386, 0.0
        %v8395 = vmax.f32 %v8387, 0.0
        %v8396 = vpack.c.bf16 %v8388, %v8388
        %v8397 = vpack.c.bf16 %v8389, %v8389
        %v8398 = vpack.c.bf16 %v8390, %v8390
        %v8399 = vpack.c.bf16 %v8391, %v8391
        %v8400 = vpack.c.bf16 %v8392, %v8392
        %v8401 = vpack.c.bf16 %v8393, %v8393
        %v8402 = vpack.c.bf16 %v8394, %v8394
        %v8403 = vpack.c.bf16 %v8395, %v8395
        %v8404 = vld [vmem:[%s11] sm:$0xf]
        %v8405 = vld [vmem:[%s11 + $0x4] sm:$0xf]
        %v8406 = vld [vmem:[%s11 + $0x8] sm:$0xf]
        %v8407 = vld [vmem:[%s11 + $0xc] sm:$0xf]
        %v8408 = vld [vmem:[%s11 + $0x10] sm:$0xf]
        %v8409 = vld [vmem:[%s11 + $0x14] sm:$0xf]
        %v8410 = vld [vmem:[%s11 + $0x18] sm:$0xf]
        %v8411 = vld [vmem:[%s11 + $0x1c] sm:$0xf]
        %v8412 = vld [vmem:[%s11 + $0x20] sm:$0xf]
        %v8413 = vld [vmem:[%s11 + $0x24] sm:$0xf]
        %v8414 = vld [vmem:[%s11 + $0x28] sm:$0xf]
        %v8415 = vld [vmem:[%s11 + $0x2c] sm:$0xf]
        %v8416 = vld [vmem:[%s11 + $0x30] sm:$0xf]
        %v8417 = vld [vmem:[%s11 + $0x34] sm:$0xf]
        %v8418 = vld [vmem:[%s11 + $0x38] sm:$0xf]
        %v8419 = vld [vmem:[%s11 + $0x3c] sm:$0xf]
        %v8420 = vld [vmem:[%s11 + $0x40] sm:$0xf]
        %v8421 = vld [vmem:[%s11 + $0x44] sm:$0xf]
        %v8422 = vld [vmem:[%s11 + $0x48] sm:$0xf]
        %v8423 = vld [vmem:[%s11 + $0x4c] sm:$0xf]
        %v8424 = vld [vmem:[%s11 + $0x50] sm:$0xf]
        %v8425 = vld [vmem:[%s11 + $0x54] sm:$0xf]
        %v8426 = vld [vmem:[%s11 + $0x58] sm:$0xf]
        %v8427 = vld [vmem:[%s11 + $0x5c] sm:$0xf]
        %v8428 = vld [vmem:[%s11 + $0x60] sm:$0xf]
        %v8429 = vld [vmem:[%s11 + $0x64] sm:$0xf]
        %v8430 = vld [vmem:[%s11 + $0x68] sm:$0xf]
        %v8431 = vld [vmem:[%s11 + $0x6c] sm:$0xf]
        %v8432 = vld [vmem:[%s11 + $0x70] sm:$0xf]
        %v8433 = vld [vmem:[%s11 + $0x74] sm:$0xf]
        %v8434 = vld [vmem:[%s11 + $0x78] sm:$0xf]
        %v8435 = vld [vmem:[%s11 + $0x7c] sm:$0xf]
        %v8436 = vld [vmem:[%s11 + $0x80] sm:$0xf]
        %v8437 = vld [vmem:[%s11 + $0x84] sm:$0xf]
        %v8438 = vld [vmem:[%s11 + $0x88] sm:$0xf]
        %v8439 = vld [vmem:[%s11 + $0x8c] sm:$0xf]
        %v8440 = vld [vmem:[%s11 + $0x90] sm:$0xf]
        %v8441 = vld [vmem:[%s11 + $0x94] sm:$0xf]
        %v8442 = vld [vmem:[%s11 + $0x98] sm:$0xf]
        %v8443 = vld [vmem:[%s11 + $0x9c] sm:$0xf]
        %v8444 = vld [vmem:[%s11 + $0xa0] sm:$0xf]
        %v8445 = vld [vmem:[%s11 + $0xa4] sm:$0xf]
        %v8446 = vld [vmem:[%s11 + $0xa8] sm:$0xf]
        %v8447 = vld [vmem:[%s11 + $0xac] sm:$0xf]
        %v8448 = vld [vmem:[%s11 + $0xb0] sm:$0xf]
        %v8449 = vld [vmem:[%s11 + $0xb4] sm:$0xf]
        %v8450 = vld [vmem:[%s11 + $0xb8] sm:$0xf]
        %v8451 = vld [vmem:[%s11 + $0xbc] sm:$0xf]
        %v8452 = vld [vmem:[%s11 + $0xc0] sm:$0xf]
        %v8453 = vld [vmem:[%s11 + $0xc4] sm:$0xf]
        %v8454 = vld [vmem:[%s11 + $0xc8] sm:$0xf]
        %v8455 = vld [vmem:[%s11 + $0xcc] sm:$0xf]
        %v8456 = vld [vmem:[%s11 + $0xd0] sm:$0xf]
        %v8457 = vld [vmem:[%s11 + $0xd4] sm:$0xf]
        %v8458 = vld [vmem:[%s11 + $0xd8] sm:$0xf]
        %v8459 = vld [vmem:[%s11 + $0xdc] sm:$0xf]
        %v8460 = vld [vmem:[%s11 + $0xe0] sm:$0xf]
        %v8461 = vld [vmem:[%s11 + $0xe4] sm:$0xf]
        %v8462 = vld [vmem:[%s11 + $0xe8] sm:$0xf]
        %v8463 = vld [vmem:[%s11 + $0xec] sm:$0xf]
        %v8464 = vld [vmem:[%s11 + $0xf0] sm:$0xf]
        %v8465 = vld [vmem:[%s11 + $0xf4] sm:$0xf]
        %v8466 = vld [vmem:[%s11 + $0xf8] sm:$0xf]
        %v8467 = vld [vmem:[%s11 + $0xfc] sm:$0xf]
        %v8468 = vld [vmem:[%s11 + $0x100] sm:$0xf]
        %v8469 = vld [vmem:[%s11 + $0x104] sm:$0xf]
        %v8470 = vld [vmem:[%s11 + $0x108] sm:$0xf]
        %v8471 = vld [vmem:[%s11 + $0x10c] sm:$0xf]
        %v8472 = vld [vmem:[%s11 + $0x110] sm:$0xf]
        %v8473 = vld [vmem:[%s11 + $0x114] sm:$0xf]
        %v8474 = vld [vmem:[%s11 + $0x118] sm:$0xf]
        %v8475 = vld [vmem:[%s11 + $0x11c] sm:$0xf]
        %v8476 = vld [vmem:[%s11 + $0x120] sm:$0xf]
        %v8477 = vld [vmem:[%s11 + $0x124] sm:$0xf]
        %v8478 = vld [vmem:[%s11 + $0x128] sm:$0xf]
        %v8479 = vld [vmem:[%s11 + $0x12c] sm:$0xf]
        %v8480 = vld [vmem:[%s11 + $0x130] sm:$0xf]
        %v8481 = vld [vmem:[%s11 + $0x134] sm:$0xf]
        %v8482 = vld [vmem:[%s11 + $0x138] sm:$0xf]
        %v8483 = vld [vmem:[%s11 + $0x13c] sm:$0xf]
        %v8484 = vld [vmem:[%s11 + $0x140] sm:$0xf]
        %v8485 = vld [vmem:[%s11 + $0x144] sm:$0xf]
        %v8486 = vld [vmem:[%s11 + $0x148] sm:$0xf]
        %v8487 = vld [vmem:[%s11 + $0x14c] sm:$0xf]
        %v8488 = vld [vmem:[%s11 + $0x150] sm:$0xf]
        %v8489 = vld [vmem:[%s11 + $0x154] sm:$0xf]
        %v8490 = vld [vmem:[%s11 + $0x158] sm:$0xf]
        %v8491 = vld [vmem:[%s11 + $0x15c] sm:$0xf]
        %v8492 = vld [vmem:[%s11 + $0x160] sm:$0xf]
        %v8493 = vld [vmem:[%s11 + $0x164] sm:$0xf]
        %v8494 = vld [vmem:[%s11 + $0x168] sm:$0xf]
        %v8495 = vld [vmem:[%s11 + $0x16c] sm:$0xf]
        %v8496 = vld [vmem:[%s11 + $0x170] sm:$0xf]
        %v8497 = vld [vmem:[%s11 + $0x174] sm:$0xf]
        %v8498 = vld [vmem:[%s11 + $0x178] sm:$0xf]
        %v8499 = vld [vmem:[%s11 + $0x17c] sm:$0xf]
        %v8500 = vld [vmem:[%s11 + $0x180] sm:$0xf]
        %v8501 = vld [vmem:[%s11 + $0x184] sm:$0xf]
        %v8502 = vld [vmem:[%s11 + $0x188] sm:$0xf]
        %v8503 = vld [vmem:[%s11 + $0x18c] sm:$0xf]
        %v8504 = vld [vmem:[%s11 + $0x190] sm:$0xf]
        %v8505 = vld [vmem:[%s11 + $0x194] sm:$0xf]
        %v8506 = vld [vmem:[%s11 + $0x198] sm:$0xf]
        %v8507 = vld [vmem:[%s11 + $0x19c] sm:$0xf]
        %v8508 = vld [vmem:[%s11 + $0x1a0] sm:$0xf]
        %v8509 = vld [vmem:[%s11 + $0x1a4] sm:$0xf]
        %v8510 = vld [vmem:[%s11 + $0x1a8] sm:$0xf]
        %v8511 = vld [vmem:[%s11 + $0x1ac] sm:$0xf]
        %v8512 = vld [vmem:[%s11 + $0x1b0] sm:$0xf]
        %v8513 = vld [vmem:[%s11 + $0x1b4] sm:$0xf]
        %v8514 = vld [vmem:[%s11 + $0x1b8] sm:$0xf]
        %v8515 = vld [vmem:[%s11 + $0x1bc] sm:$0xf]
        %v8516 = vld [vmem:[%s11 + $0x1c0] sm:$0xf]
        %v8517 = vld [vmem:[%s11 + $0x1c4] sm:$0xf]
        %v8518 = vld [vmem:[%s11 + $0x1c8] sm:$0xf]
        %v8519 = vld [vmem:[%s11 + $0x1cc] sm:$0xf]
        %v8520 = vld [vmem:[%s11 + $0x1d0] sm:$0xf]
        %v8521 = vld [vmem:[%s11 + $0x1d4] sm:$0xf]
        %v8522 = vld [vmem:[%s11 + $0x1d8] sm:$0xf]
        %v8523 = vld [vmem:[%s11 + $0x1dc] sm:$0xf]
        %v8524 = vld [vmem:[%s11 + $0x1e0] sm:$0xf]
        %v8525 = vld [vmem:[%s11 + $0x1e4] sm:$0xf]
        %v8526 = vld [vmem:[%s11 + $0x1e8] sm:$0xf]
        %v8527 = vld [vmem:[%s11 + $0x1ec] sm:$0xf]
        %v8528 = vld [vmem:[%s11 + $0x1f0] sm:$0xf]
        %v8529 = vld [vmem:[%s11 + $0x1f4] sm:$0xf]
        %v8530 = vld [vmem:[%s11 + $0x1f8] sm:$0xf]
        %v8531 = vld [vmem:[%s11 + $0x1fc] sm:$0xf]
        %v8532 = vld [vmem:[%s12] sm:$0x1]
        %v8534 = vlaneseq
        %v8535 = vshrl.u32 %v8534, 7
        %v8536 = vsub.s32 0, %v8535
        %v8537 = vrot.slane %v8532, %v8536
        %v8667 = vunpack.c.l.b16 %v8404
        %v8668 = vunpack.c.l.b16 %v8405
        %v8669 = vunpack.c.l.b16 %v8406
        %v8670 = vunpack.c.l.b16 %v8407
        %v8671 = vunpack.c.l.b16 %v8408
        %v8672 = vunpack.c.l.b16 %v8409
        %v8673 = vunpack.c.l.b16 %v8410
        %v8674 = vunpack.c.l.b16 %v8411
        %v8675 = vunpack.c.l.b16 %v8412
        %v8676 = vunpack.c.l.b16 %v8413
        %v8677 = vunpack.c.l.b16 %v8414
        %v8678 = vunpack.c.l.b16 %v8415
        %v8679 = vunpack.c.l.b16 %v8416
        %v8680 = vunpack.c.l.b16 %v8417
        %v8681 = vunpack.c.l.b16 %v8418
        %v8682 = vunpack.c.l.b16 %v8419
        %v8683 = vunpack.c.l.b16 %v8420
        %v8684 = vunpack.c.l.b16 %v8421
        %v8685 = vunpack.c.l.b16 %v8422
        %v8686 = vunpack.c.l.b16 %v8423
        %v8687 = vunpack.c.l.b16 %v8424
        %v8688 = vunpack.c.l.b16 %v8425
        %v8689 = vunpack.c.l.b16 %v8426
        %v8690 = vunpack.c.l.b16 %v8427
        %v8691 = vunpack.c.l.b16 %v8428
        %v8692 = vunpack.c.l.b16 %v8429
        %v8693 = vunpack.c.l.b16 %v8430
        %v8694 = vunpack.c.l.b16 %v8431
        %v8695 = vunpack.c.l.b16 %v8432
        %v8696 = vunpack.c.l.b16 %v8433
        %v8697 = vunpack.c.l.b16 %v8434
        %v8698 = vunpack.c.l.b16 %v8435
        %v8699 = vunpack.c.l.b16 %v8436
        %v8700 = vunpack.c.l.b16 %v8437
        %v8701 = vunpack.c.l.b16 %v8438
        %v8702 = vunpack.c.l.b16 %v8439
        %v8703 = vunpack.c.l.b16 %v8440
        %v8704 = vunpack.c.l.b16 %v8441
        %v8705 = vunpack.c.l.b16 %v8442
        %v8706 = vunpack.c.l.b16 %v8443
        %v8707 = vunpack.c.l.b16 %v8444
        %v8708 = vunpack.c.l.b16 %v8445
        %v8709 = vunpack.c.l.b16 %v8446
        %v8710 = vunpack.c.l.b16 %v8447
        %v8711 = vunpack.c.l.b16 %v8448
        %v8712 = vunpack.c.l.b16 %v8449
        %v8713 = vunpack.c.l.b16 %v8450
        %v8714 = vunpack.c.l.b16 %v8451
        %v8715 = vunpack.c.l.b16 %v8452
        %v8716 = vunpack.c.l.b16 %v8453
        %v8717 = vunpack.c.l.b16 %v8454
        %v8718 = vunpack.c.l.b16 %v8455
        %v8719 = vunpack.c.l.b16 %v8456
        %v8720 = vunpack.c.l.b16 %v8457
        %v8721 = vunpack.c.l.b16 %v8458
        %v8722 = vunpack.c.l.b16 %v8459
        %v8723 = vunpack.c.l.b16 %v8460
        %v8724 = vunpack.c.l.b16 %v8461
        %v8725 = vunpack.c.l.b16 %v8462
        %v8726 = vunpack.c.l.b16 %v8463
        %v8727 = vunpack.c.l.b16 %v8464
        %v8728 = vunpack.c.l.b16 %v8465
        %v8729 = vunpack.c.l.b16 %v8466
        %v8730 = vunpack.c.l.b16 %v8467
        %v8731 = vunpack.c.l.b16 %v8468
        %v8732 = vunpack.c.l.b16 %v8469
        %v8733 = vunpack.c.l.b16 %v8470
        %v8734 = vunpack.c.l.b16 %v8471
        %v8735 = vunpack.c.l.b16 %v8472
        %v8736 = vunpack.c.l.b16 %v8473
        %v8737 = vunpack.c.l.b16 %v8474
        %v8738 = vunpack.c.l.b16 %v8475
        %v8739 = vunpack.c.l.b16 %v8476
        %v8740 = vunpack.c.l.b16 %v8477
        %v8741 = vunpack.c.l.b16 %v8478
        %v8742 = vunpack.c.l.b16 %v8479
        %v8743 = vunpack.c.l.b16 %v8480
        %v8744 = vunpack.c.l.b16 %v8481
        %v8745 = vunpack.c.l.b16 %v8482
        %v8746 = vunpack.c.l.b16 %v8483
        %v8747 = vunpack.c.l.b16 %v8484
        %v8748 = vunpack.c.l.b16 %v8485
        %v8749 = vunpack.c.l.b16 %v8486
        %v8750 = vunpack.c.l.b16 %v8487
        %v8751 = vunpack.c.l.b16 %v8488
        %v8752 = vunpack.c.l.b16 %v8489
        %v8753 = vunpack.c.l.b16 %v8490
        %v8754 = vunpack.c.l.b16 %v8491
        %v8755 = vunpack.c.l.b16 %v8492
        %v8756 = vunpack.c.l.b16 %v8493
        %v8757 = vunpack.c.l.b16 %v8494
        %v8758 = vunpack.c.l.b16 %v8495
        %v8759 = vunpack.c.l.b16 %v8496
        %v8760 = vunpack.c.l.b16 %v8497
        %v8761 = vunpack.c.l.b16 %v8498
        %v8762 = vunpack.c.l.b16 %v8499
        %v8763 = vunpack.c.l.b16 %v8500
        %v8764 = vunpack.c.l.b16 %v8501
        %v8765 = vunpack.c.l.b16 %v8502
        %v8766 = vunpack.c.l.b16 %v8503
        %v8767 = vunpack.c.l.b16 %v8504
        %v8768 = vunpack.c.l.b16 %v8505
        %v8769 = vunpack.c.l.b16 %v8506
        %v8770 = vunpack.c.l.b16 %v8507
        %v8771 = vunpack.c.l.b16 %v8508
        %v8772 = vunpack.c.l.b16 %v8509
        %v8773 = vunpack.c.l.b16 %v8510
        %v8774 = vunpack.c.l.b16 %v8511
        %v8775 = vunpack.c.l.b16 %v8512
        %v8776 = vunpack.c.l.b16 %v8513
        %v8777 = vunpack.c.l.b16 %v8514
        %v8778 = vunpack.c.l.b16 %v8515
        %v8779 = vunpack.c.l.b16 %v8516
        %v8780 = vunpack.c.l.b16 %v8517
        %v8781 = vunpack.c.l.b16 %v8518
        %v8782 = vunpack.c.l.b16 %v8519
        %v8783 = vunpack.c.l.b16 %v8520
        %v8784 = vunpack.c.l.b16 %v8521
        %v8785 = vunpack.c.l.b16 %v8522
        %v8786 = vunpack.c.l.b16 %v8523
        %v8787 = vunpack.c.l.b16 %v8524
        %v8788 = vunpack.c.l.b16 %v8525
        %v8789 = vunpack.c.l.b16 %v8526
        %v8790 = vunpack.c.l.b16 %v8527
        %v8791 = vunpack.c.l.b16 %v8528
        %v8792 = vunpack.c.l.b16 %v8529
        %v8793 = vunpack.c.l.b16 %v8530
        %v8794 = vunpack.c.l.b16 %v8531
        %v8795 = vpack.c.b16 %v8668, %v8667
        %v8796 = vpack.c.b16 %v8670, %v8669
        %v8797 = vpack.c.b16 %v8672, %v8671
        %v8798 = vpack.c.b16 %v8674, %v8673
        %v8799 = vpack.c.b16 %v8676, %v8675
        %v8800 = vpack.c.b16 %v8678, %v8677
        %v8801 = vpack.c.b16 %v8680, %v8679
        %v8802 = vpack.c.b16 %v8682, %v8681
        %v8803 = vpack.c.b16 %v8684, %v8683
        %v8804 = vpack.c.b16 %v8686, %v8685
        %v8805 = vpack.c.b16 %v8688, %v8687
        %v8806 = vpack.c.b16 %v8690, %v8689
        %v8807 = vpack.c.b16 %v8692, %v8691
        %v8808 = vpack.c.b16 %v8694, %v8693
        %v8809 = vpack.c.b16 %v8696, %v8695
        %v8810 = vpack.c.b16 %v8698, %v8697
        %v8811 = vpack.c.b16 %v8700, %v8699
        %v8812 = vpack.c.b16 %v8702, %v8701
        %v8813 = vpack.c.b16 %v8704, %v8703
        %v8814 = vpack.c.b16 %v8706, %v8705
        %v8815 = vpack.c.b16 %v8708, %v8707
        %v8816 = vpack.c.b16 %v8710, %v8709
        %v8817 = vpack.c.b16 %v8712, %v8711
        %v8818 = vpack.c.b16 %v8714, %v8713
        %v8819 = vpack.c.b16 %v8716, %v8715
        %v8820 = vpack.c.b16 %v8718, %v8717
        %v8821 = vpack.c.b16 %v8720, %v8719
        %v8822 = vpack.c.b16 %v8722, %v8721
        %v8823 = vpack.c.b16 %v8724, %v8723
        %v8824 = vpack.c.b16 %v8726, %v8725
        %v8825 = vpack.c.b16 %v8728, %v8727
        %v8826 = vpack.c.b16 %v8730, %v8729
        %v8827 = vpack.c.b16 %v8732, %v8731
        %v8828 = vpack.c.b16 %v8734, %v8733
        %v8829 = vpack.c.b16 %v8736, %v8735
        %v8830 = vpack.c.b16 %v8738, %v8737
        %v8831 = vpack.c.b16 %v8740, %v8739
        %v8832 = vpack.c.b16 %v8742, %v8741
        %v8833 = vpack.c.b16 %v8744, %v8743
        %v8834 = vpack.c.b16 %v8746, %v8745
        %v8835 = vpack.c.b16 %v8748, %v8747
        %v8836 = vpack.c.b16 %v8750, %v8749
        %v8837 = vpack.c.b16 %v8752, %v8751
        %v8838 = vpack.c.b16 %v8754, %v8753
        %v8839 = vpack.c.b16 %v8756, %v8755
        %v8840 = vpack.c.b16 %v8758, %v8757
        %v8841 = vpack.c.b16 %v8760, %v8759
        %v8842 = vpack.c.b16 %v8762, %v8761
        %v8843 = vpack.c.b16 %v8764, %v8763
        %v8844 = vpack.c.b16 %v8766, %v8765
        %v8845 = vpack.c.b16 %v8768, %v8767
        %v8846 = vpack.c.b16 %v8770, %v8769
        %v8847 = vpack.c.b16 %v8772, %v8771
        %v8848 = vpack.c.b16 %v8774, %v8773
        %v8849 = vpack.c.b16 %v8776, %v8775
        %v8850 = vpack.c.b16 %v8778, %v8777
        %v8851 = vpack.c.b16 %v8780, %v8779
        %v8852 = vpack.c.b16 %v8782, %v8781
        %v8853 = vpack.c.b16 %v8784, %v8783
        %v8854 = vpack.c.b16 %v8786, %v8785
        %v8855 = vpack.c.b16 %v8788, %v8787
        %v8856 = vpack.c.b16 %v8790, %v8789
        %v8857 = vpack.c.b16 %v8792, %v8791
        %v8858 = vpack.c.b16 %v8794, %v8793
        %8923 = vmatprep.subr.bf16.mxu0 0
        %8924 = vmatpush1.bf16.msra.mxu0 %v8795
        %8925 = vmatprep.subr.bf16.mxu0 0
        %8926 = vmatpush1.bf16.msra.mxu0 %v8796
        %8927 = vmatprep.subr.bf16.mxu0 0
        %8928 = vmatpush1.bf16.msra.mxu0 %v8797
        %8929 = vmatprep.subr.bf16.mxu0 0
        %8930 = vmatpush1.bf16.msra.mxu0 %v8798
        %8931 = vmatprep.subr.bf16.mxu0 0
        %8932 = vmatpush1.bf16.msra.mxu0 %v8799
        %8933 = vmatprep.subr.bf16.mxu0 0
        %8934 = vmatpush1.bf16.msra.mxu0 %v8800
        %8935 = vmatprep.subr.bf16.mxu0 0
        %8936 = vmatpush1.bf16.msra.mxu0 %v8801
        %8937 = vmatprep.subr.bf16.mxu0 0
        %8938 = vmatpush1.bf16.msra.mxu0 %v8802
        %8939 = vmatprep.subr.bf16.mxu0 0
        %8940 = vmatpush1.bf16.msra.mxu0 %v8803
        %8941 = vmatprep.subr.bf16.mxu0 0
        %8942 = vmatpush1.bf16.msra.mxu0 %v8804
        %8943 = vmatprep.subr.bf16.mxu0 0
        %8944 = vmatpush1.bf16.msra.mxu0 %v8805
        %8945 = vmatprep.subr.bf16.mxu0 0
        %8946 = vmatpush1.bf16.msra.mxu0 %v8806
        %8947 = vmatprep.subr.bf16.mxu0 0
        %8948 = vmatpush1.bf16.msra.mxu0 %v8807
        %8949 = vmatprep.subr.bf16.mxu0 0
        %8950 = vmatpush1.bf16.msra.mxu0 %v8808
        %8951 = vmatprep.subr.bf16.mxu0 0
        %8952 = vmatpush1.bf16.msra.mxu0 %v8809
        %8953 = vmatprep.subr.bf16.mxu0 0
        %8954 = vmatpush1.bf16.msra.mxu0 %v8810
        %8955 = vmatprep.mubr.bf16.mxu0 %v8397
        %8956 = vmatmul.mubr.bf16.gmra.mrb[0].mxu0 %v8396
        %v8957 = vpop.f32.mrb[0].mxu0
        %v8958 = vadd.f32 %v8537, %v8957
        %v8959 = vpop.f32.mrb[0].mxu0
        %v8960 = vpop.f32.mrb[0].mxu0
        %v8961 = vpop.f32.mrb[0].mxu0
        %8962 = vdwg.mxu0
        %8963 = vmatprep.subr.bf16.mxu0 0
        %8964 = vmatpush1.bf16.msra.mxu0 %v8811
        %8965 = vmatprep.subr.bf16.mxu0 0
        %8966 = vmatpush1.bf16.msra.mxu0 %v8812
        %8967 = vmatprep.subr.bf16.mxu0 0
        %8968 = vmatpush1.bf16.msra.mxu0 %v8813
        %8969 = vmatprep.subr.bf16.mxu0 0
        %8970 = vmatpush1.bf16.msra.mxu0 %v8814
        %8971 = vmatprep.subr.bf16.mxu0 0
        %8972 = vmatpush1.bf16.msra.mxu0 %v8815
        %8973 = vmatprep.subr.bf16.mxu0 0
        %8974 = vmatpush1.bf16.msra.mxu0 %v8816
        %8975 = vmatprep.subr.bf16.mxu0 0
        %8976 = vmatpush1.bf16.msra.mxu0 %v8817
        %8977 = vmatprep.subr.bf16.mxu0 0
        %8978 = vmatpush1.bf16.msra.mxu0 %v8818
        %8979 = vmatprep.subr.bf16.mxu0 0
        %8980 = vmatpush1.bf16.msra.mxu0 %v8819
        %8981 = vmatprep.subr.bf16.mxu0 0
        %8982 = vmatpush1.bf16.msra.mxu0 %v8820
        %8983 = vmatprep.subr.bf16.mxu0 0
        %8984 = vmatpush1.bf16.msra.mxu0 %v8821
        %8985 = vmatprep.subr.bf16.mxu0 0
        %8986 = vmatpush1.bf16.msra.mxu0 %v8822
        %8987 = vmatprep.subr.bf16.mxu0 0
        %8988 = vmatpush1.bf16.msra.mxu0 %v8823
        %8989 = vmatprep.subr.bf16.mxu0 0
        %8990 = vmatpush1.bf16.msra.mxu0 %v8824
        %8991 = vmatprep.subr.bf16.mxu0 0
        %8992 = vmatpush1.bf16.msra.mxu0 %v8825
        %8993 = vmatprep.subr.bf16.mxu0 0
        %8994 = vmatpush1.bf16.msra.mxu0 %v8826
        %8995 = vmatprep.mubr.bf16.mxu0 %v8399
        %8996 = vmatmul.mubr.bf16.gmra.mrb[0].mxu0 %v8398
        %v8997 = vpop.f32.mrb[0].mxu0
        %v8998 = vadd.f32 %v8958, %v8997
        %v8999 = vpop.f32.mrb[0].mxu0
        %v9000 = vpop.f32.mrb[0].mxu0
        %v9001 = vpop.f32.mrb[0].mxu0
        %9002 = vdwg.mxu0
        %9003 = vmatprep.subr.bf16.mxu0 0
        %9004 = vmatpush1.bf16.msra.mxu0 %v8827
        %9005 = vmatprep.subr.bf16.mxu0 0
        %9006 = vmatpush1.bf16.msra.mxu0 %v8828
        %9007 = vmatprep.subr.bf16.mxu0 0
        %9008 = vmatpush1.bf16.msra.mxu0 %v8829
        %9009 = vmatprep.subr.bf16.mxu0 0
        %9010 = vmatpush1.bf16.msra.mxu0 %v8830
        %9011 = vmatprep.subr.bf16.mxu0 0
        %9012 = vmatpush1.bf16.msra.mxu0 %v8831
        %9013 = vmatprep.subr.bf16.mxu0 0
        %9014 = vmatpush1.bf16.msra.mxu0 %v8832
        %9015 = vmatprep.subr.bf16.mxu0 0
        %9016 = vmatpush1.bf16.msra.mxu0 %v8833
        %9017 = vmatprep.subr.bf16.mxu0 0
        %9018 = vmatpush1.bf16.msra.mxu0 %v8834
        %9019 = vmatprep.subr.bf16.mxu0 0
        %9020 = vmatpush1.bf16.msra.mxu0 %v8835
        %9021 = vmatprep.subr.bf16.mxu0 0
        %9022 = vmatpush1.bf16.msra.mxu0 %v8836
        %9023 = vmatprep.subr.bf16.mxu0 0
        %9024 = vmatpush1.bf16.msra.mxu0 %v8837
        %9025 = vmatprep.subr.bf16.mxu0 0
        %9026 = vmatpush1.bf16.msra.mxu0 %v8838
        %9027 = vmatprep.subr.bf16.mxu0 0
        %9028 = vmatpush1.bf16.msra.mxu0 %v8839
        %9029 = vmatprep.subr.bf16.mxu0 0
        %9030 = vmatpush1.bf16.msra.mxu0 %v8840
        %9031 = vmatprep.subr.bf16.mxu0 0
        %9032 = vmatpush1.bf16.msra.mxu0 %v8841
        %9033 = vmatprep.subr.bf16.mxu0 0
        %9034 = vmatpush1.bf16.msra.mxu0 %v8842
        %9035 = vmatprep.mubr.bf16.mxu0 %v8401
        %9036 = vmatmul.mubr.bf16.gmra.mrb[0].mxu0 %v8400
        %v9037 = vpop.f32.mrb[0].mxu0
        %v9038 = vadd.f32 %v8998, %v9037
        %v9039 = vpop.f32.mrb[0].mxu0
        %v9040 = vpop.f32.mrb[0].mxu0
        %v9041 = vpop.f32.mrb[0].mxu0
        %9042 = vdwg.mxu0
        %9043 = vmatprep.subr.bf16.mxu0 0
        %9044 = vmatpush1.bf16.msra.mxu0 %v8843
        %9045 = vmatprep.subr.bf16.mxu0 0
        %9046 = vmatpush1.bf16.msra.mxu0 %v8844
        %9047 = vmatprep.subr.bf16.mxu0 0
        %9048 = vmatpush1.bf16.msra.mxu0 %v8845
        %9049 = vmatprep.subr.bf16.mxu0 0
        %9050 = vmatpush1.bf16.msra.mxu0 %v8846
        %9051 = vmatprep.subr.bf16.mxu0 0
        %9052 = vmatpush1.bf16.msra.mxu0 %v8847
        %9053 = vmatprep.subr.bf16.mxu0 0
        %9054 = vmatpush1.bf16.msra.mxu0 %v8848
        %9055 = vmatprep.subr.bf16.mxu0 0
        %9056 = vmatpush1.bf16.msra.mxu0 %v8849
        %9057 = vmatprep.subr.bf16.mxu0 0
        %9058 = vmatpush1.bf16.msra.mxu0 %v8850
        %9059 = vmatprep.subr.bf16.mxu0 0
        %9060 = vmatpush1.bf16.msra.mxu0 %v8851
        %9061 = vmatprep.subr.bf16.mxu0 0
        %9062 = vmatpush1.bf16.msra.mxu0 %v8852
        %9063 = vmatprep.subr.bf16.mxu0 0
        %9064 = vmatpush1.bf16.msra.mxu0 %v8853
        %9065 = vmatprep.subr.bf16.mxu0 0
        %9066 = vmatpush1.bf16.msra.mxu0 %v8854
        %9067 = vmatprep.subr.bf16.mxu0 0
        %9068 = vmatpush1.bf16.msra.mxu0 %v8855
        %9069 = vmatprep.subr.bf16.mxu0 0
        %9070 = vmatpush1.bf16.msra.mxu0 %v8856
        %9071 = vmatprep.subr.bf16.mxu0 0
        %9072 = vmatpush1.bf16.msra.mxu0 %v8857
        %9073 = vmatprep.subr.bf16.mxu0 0
        %9074 = vmatpush1.bf16.msra.mxu0 %v8858
        %9075 = vmatprep.mubr.bf16.mxu0 %v8403
        %9076 = vmatmul.mubr.bf16.gmra.mrb[0].mxu0 %v8402
        %v9077 = vpop.f32.mrb[0].mxu0
        %v9078 = vadd.f32 %v9038, %v9077
        %v9079 = vpop.f32.mrb[0].mxu0
        %v9080 = vpop.f32.mrb[0].mxu0
        %v9081 = vpop.f32.mrb[0].mxu0
        %9082 = vdwg.mxu0
        %9083 = vst [vmem:[%s436] sm:$0xff] %v9078
        %s9084 = sand.u32 %s313, 1
        %s9085 = scalar_lea.sflag [#allocation3], %s9084
        %s9086 = sand.u32 %s313, 1
        %s9087 = smul.addr %s9086, 8
        %s9088 = scalar_lea.vmem [#allocation2], %s9087
        // Predicated region
        $region73: #{cnn_classifier_forward.1} parent=71 // pred_check
          %p9089 = pneg %p323
        $region74: #{cnn_classifier_forward.1} parent=71 // pred_check_branch
          %9091 = sbr.rel (%p9089) target = $region76
        $region75: #{cnn_classifier_forward.1} parent=71 // pred_region
          %s9093 = ssub.s32 128, 128
          %9094 = vsyncadd %s9085, %s9093
          %s9095 = smul.addr %s27, 128
          %s9096 = scalar_lea.hbm %s13, %s9095
          %s9098 = sshll.u32 %s9088, 4
          %s9099 = int_to_ptr.vmem [resolvable:$true] %s9098
          %9101 = dma.vmem_to_hbm [thread:$0]  %s9099, 128, %s9096, %s9085
        $region76: #{cnn_classifier_forward.1} parent=71 // pred_fallthru
          _
      $region72: #{cnn_classifier_forward.1} parent=5 // pred_fallthru
        _
      %p9102 = scmp.le.s32.totalorder 2, %s22
      // Predicated region
      $region77: #{cnn_classifier_forward.1} parent=5 // pred_check
        %p9103 = pneg %p9102
      $region78: #{cnn_classifier_forward.1} parent=5 // pred_check_branch
        %9105 = sbr.rel (%p9103) target = $region80
      $region79: #{cnn_classifier_forward.1} parent=5 // pred_region
        %s9106 = ssub.s32 %s22, 2
        // Predicated region
        $region81: #{cnn_classifier_forward.1} parent=79 // pred_check
          %p9107 = pneg %p329
        $region82: #{cnn_classifier_forward.1} parent=79 // pred_check_branch
          %9109 = sbr.rel (%p9107) target = $region84
        $region83: #{cnn_classifier_forward.1} parent=79 // pred_region
          %s9110 = sand.u32 %s314, 1
          %s9111 = scalar_lea.sflag [#allocation3], %s9110
          %s9112 = sand.u32 %s314, 1
          %s9113 = smul.addr %s9112, 8
          %s9114 = scalar_lea.vmem [#allocation2], %s9113
          %9115 = dma.done %s9111, 128
        $region84: #{cnn_classifier_forward.1} parent=79 // pred_fallthru
          _
      $region80: #{cnn_classifier_forward.1} parent=5 // pred_fallthru
        _
    $region6: #{cnn_classifier_forward.1} parent=1 // loop_footer
      %s26 = sadd.s32 1, %s22
    $region7: #{cnn_classifier_forward.1} parent=1 // loop_footer_branch
      %21 = sbr.rel target = $region3
    $region8: #{cnn_classifier_forward.1} parent=1 // loop_exit
      _
    %9116 = vsyncpa [#allocation3], 1
    %s9117 = scalar_lea.sflag [#allocation3], 1
    %9118 = vsyncpa %s9117, 1

</llo_original>
